<compile_context>
chip_gen: v5e
topology: v5e:2x2
jax: 0.10.0
libtpu: 0.0.40
codegen_flags: <defaults>
</compile_context>

<pallas_src>
import functools

import jax
import jax.numpy as jnp
from jax.experimental import pallas as pl
from jax.experimental.pallas import tpu as pltpu


_VMEM_SPEC = pl.BlockSpec(memory_space=pltpu.MemorySpace.VMEM)
_VMEM_LIMIT = 64 * 1024 * 1024  # explicit budget; fits v5e/v6e/v7x physical VMEM


def _round_up(x, m):
    return ((x + m - 1) // m) * m


def _unrolled_loop(lo, hi, body, carry):
    # Trip counts here are tiny & static -> fully unroll at trace time
    # (equivalent to lax.fori_loop(..., unroll=True); gives LLO scheduler
    # full visibility and removes loop/branch overhead).
    for t in range(lo, hi):
        carry = body(t, carry)
    return carry


# ----------------------------------------------------------------------------
# Pallas kernels
# ----------------------------------------------------------------------------
def _linear_kernel(x_ref, w_ref, b_ref, o_ref):
    # x: (tm, K), w: (tn, K) [PyTorch (out, in) layout — no wrapper transpose],
    # b: (1, tn)  ->  o: (tm, tn) = x @ w.T + b
    o_ref[...] = (
        jax.lax.dot_general(
            x_ref[...], w_ref[...], (((1,), (1,)), ((), ())),
            preferred_element_type=jnp.float32)
        + b_ref[...]
    )


def _lstm_cell(gate_in, h, c, whh, bias, Hp):
    """One LSTM step. Weights are per-gate lane-padded to Hp; PyTorch i,f,g,o."""
    gates = jax.lax.dot_general(
        h, whh, (((1,), (1,)), ((), ())),
        preferred_element_type=jnp.float32) + bias
    if gate_in is not None:
        gates = gates + gate_in
    i_g = jax.nn.sigmoid(gates[:, 0 * Hp:1 * Hp])
    f_g = jax.nn.sigmoid(gates[:, 1 * Hp:2 * Hp])
    g_g = jnp.tanh(gates[:, 2 * Hp:3 * Hp])
    o_g = jax.nn.sigmoid(gates[:, 3 * Hp:4 * Hp])
    c_new = f_g * c + i_g * g_g
    h_new = o_g * jnp.tanh(c_new)
    return h_new, c_new


def _enc_lstm_kernel(x_ref, wih_ref, whh_ref, b_ref, o_ref, xw_ref):
    # x:   (T, Bp, Hp)   projected video features, time-major, lane-padded
    # wih: (4Hp, Hp), whh: (4Hp, Hp), b: (1, 4Hp)   (b = b_ih + b_hh)
    # o:   (S, Bp, Hp)   S = 2T-1 hidden states (all consumed by the decoder)
    # xw:  (T, Bp, 4Hp)  VMEM scratch for the hoisted input projection
    T, Bp, Hp = x_ref.shape
    S = o_ref.shape[0]
    G4 = wih_ref.shape[0]

    # Phase 1: one big MXU matmul over all real frames.  The zero-padded tail
    # (t >= T) is never materialized — those steps are bias-only below.
    xw = jax.lax.dot_general(
        x_ref[...].reshape(T * Bp, Hp), wih_ref[...],
        (((1,), (1,)), ((), ())), preferred_element_type=jnp.float32)
    xw_ref[...] = xw.reshape(T, Bp, G4)

    # Hoisted loop-invariant loads / broadcast.
    whh = whh_ref[...]
    bias = jnp.broadcast_to(b_ref[...], (Bp, G4))

    h0 = jnp.zeros((Bp, Hp), jnp.float32)
    c0 = jnp.zeros((Bp, Hp), jnp.float32)

    def step_real(t, carry):
        h, c = _lstm_cell(xw_ref[t], carry[0], carry[1], whh, bias, Hp)
        o_ref[t] = h
        return (h, c)

    carry = _unrolled_loop(0, T, step_real, (h0, c0))

    def step_pad(t, carry):  # zero-input steps: gate preactivation = bias only
        h, c = _lstm_cell(None, carry[0], carry[1], whh, bias, Hp)
        o_ref[t] = h
        return (h, c)

    _unrolled_loop(T, S, step_pad, carry)


def _dec_lstm_kernel(vid_ref, cap_ref, wih_cap_ref, wih_vid_ref, whh_ref, b_ref,
                     o_ref, xw_ref):
    # vid: (S, Bp, Hp)    encoder hidden states (time-major)
    # cap: (T-1, Bp, Hp)  caption embeddings for the last T-1 steps
    # wih_cap / wih_vid / whh: (4Hp, Hp), b: (1, 4Hp)
    # o:   (T-1, Bp, Hp)  only the last T-1 hidden states (the used ones)
    # xw:  (S, Bp, 4Hp)   scratch for the hoisted input projection
    S, Bp, Hp = vid_ref.shape
    Tm1 = cap_ref.shape[0]
    T = Tm1 + 1
    G4 = whh_ref.shape[0]

    # Phase 1: hoisted input projections.  No (B, 2T-1, 2H) concat is built:
    # the video half covers all S steps, the caption half only steps >= T.
    xw_vid = jax.lax.dot_general(
        vid_ref[...].reshape(S * Bp, Hp), wih_vid_ref[...],
        (((1,), (1,)), ((), ())), preferred_element_type=jnp.float32
    ).reshape(S, Bp, G4)
    xw_cap = jax.lax.dot_general(
        cap_ref[...].reshape(Tm1 * Bp, Hp), wih_cap_ref[...],
        (((1,), (1,)), ((), ())), preferred_element_type=jnp.float32
    ).reshape(Tm1, Bp, G4)
    xw_ref[0:T] = xw_vid[0:T]
    xw_ref[T:S] = xw_vid[T:S] + xw_cap

    whh = whh_ref[...]
    bias = jnp.broadcast_to(b_ref[...], (Bp, G4))

    h0 = jnp.zeros((Bp, Hp), jnp.float32)
    c0 = jnp.zeros((Bp, Hp), jnp.float32)

    # Warm-up steps 0..T-1: outputs are discarded by the model -> no stores.
    def step_warm(t, carry):
        return _lstm_cell(xw_ref[t], carry[0], carry[1], whh, bias, Hp)

    carry = _unrolled_loop(0, T, step_warm, (h0, c0))

    # Steps T..S-1: store only the T-1 hidden states that feed decoderLinear.
    def step_out(t, carry):
        h, c = _lstm_cell(xw_ref[t], carry[0], carry[1], whh, bias, Hp)
        o_ref[t - T] = h
        return (h, c)

    _unrolled_loop(T, S, step_out, carry)


# ----------------------------------------------------------------------------
# Kernel wrappers
# ----------------------------------------------------------------------------
def pallas_linear(x, w, b, *, tile_m=256, tile_n=256):
    """x @ w.T + b with PyTorch nn.Linear layout w: (N, K), b: (1, N)."""
    M, K = x.shape
    N = w.shape[0]
    tm = M if M <= tile_m else tile_m   # small dims use the full extent
    tn = N if N <= tile_n else tile_n
    grid = (pl.cdiv(M, tm), pl.cdiv(N, tn))
    return pl.pallas_call(
        _linear_kernel,
        out_shape=jax.ShapeDtypeStruct((M, N), jnp.float32),
        grid=grid,
        in_specs=[
            pl.BlockSpec((tm, K), lambda i, j: (i, 0)),
            pl.BlockSpec((tn, K), lambda i, j: (j, 0)),
            pl.BlockSpec((1, tn), lambda i, j: (0, j)),
        ],
        out_specs=pl.BlockSpec((tm, tn), lambda i, j: (i, j)),
        compiler_params=pltpu.CompilerParams(
            dimension_semantics=("parallel", "parallel"),
            vmem_limit_bytes=_VMEM_LIMIT),
    )(x.astype(jnp.float32), w, b)


def pallas_enc_lstm(x_tbh, w_ih, w_hh, b, *, seq_len):
    """Encoder LSTM over seq_len = 2T-1 steps; real input covers only first T."""
    T, Bp, Hp = x_tbh.shape
    G4 = w_ih.shape[0]
    return pl.pallas_call(
        _enc_lstm_kernel,
        out_shape=jax.ShapeDtypeStruct((seq_len, Bp, Hp), jnp.float32),
        in_specs=[_VMEM_SPEC] * 4,
        out_specs=_VMEM_SPEC,
        scratch_shapes=[pltpu.VMEM((T, Bp, G4), jnp.float32)],
        compiler_params=pltpu.CompilerParams(vmem_limit_bytes=_VMEM_LIMIT),
    )(x_tbh, w_ih, w_hh, b)


def pallas_dec_lstm(vid_sbh, cap_tbh, w_ih_cap, w_ih_vid, w_hh, b):
    """Decoder LSTM; returns only the last T-1 hidden states."""
    S, Bp, Hp = vid_sbh.shape
    Tm1 = cap_tbh.shape[0]
    G4 = w_hh.shape[0]
    return pl.pallas_call(
        _dec_lstm_kernel,
        out_shape=jax.ShapeDtypeStruct((Tm1, Bp, Hp), jnp.float32),
        in_specs=[_VMEM_SPEC] * 6,
        out_specs=_VMEM_SPEC,
        scratch_shapes=[pltpu.VMEM((S, Bp, G4), jnp.float32)],
        compiler_params=pltpu.CompilerParams(vmem_limit_bytes=_VMEM_LIMIT),
    )(vid_sbh, cap_tbh, w_ih_cap, w_ih_vid, w_hh, b)


# ----------------------------------------------------------------------------
# One-time parameter re-layout (lane padding, gate-aligned, bias fusion)
# ----------------------------------------------------------------------------
def _pad_gates_mat(w, H, Hp, Din, Dinp):
    # (4H, Din) -> (4Hp, Dinp), keeping gate boundaries on multiples of Hp.
    w4 = w.reshape(4, H, Din).astype(jnp.float32)
    w4 = jnp.pad(w4, ((0, 0), (0, Hp - H), (0, Dinp - Din)))
    return w4.reshape(4 * Hp, Dinp)


def _pad_gates_vec(b, H, Hp):
    b4 = b.reshape(4, H).astype(jnp.float32)
    b4 = jnp.pad(b4, ((0, 0), (0, Hp - H)))
    return b4.reshape(1, 4 * Hp)


def prepare_params(params, hidden):
    """Lane-pad hidden to a multiple of 128, split the decoder input weight
    into caption/video halves, fuse LSTM biases.  Zero padding keeps padded
    lanes exactly zero, so results equal the unpadded computation."""
    H = hidden
    Hp = _round_up(H, 128)
    V = params["dec_lin_w"].shape[0]
    dec_w_ih = params["dec_lstm_w_ih"].astype(jnp.float32)  # (4H, 2H): [cap | vid]
    return {
        "enc_lin_w": jnp.pad(params["enc_lin_w"].astype(jnp.float32),
                             ((0, Hp - H), (0, 0))),                    # (Hp, F)
        "enc_lin_b": jnp.pad(params["enc_lin_b"].astype(jnp.float32),
                             (0, Hp - H)).reshape(1, Hp),
        "enc_w_ih": _pad_gates_mat(params["enc_lstm_w_ih"], H, Hp, H, Hp),
        "enc_w_hh": _pad_gates_mat(params["enc_lstm_w_hh"], H, Hp, H, Hp),
        "enc_b": _pad_gates_vec(
            params["enc_lstm_b_ih"] + params["enc_lstm_b_hh"], H, Hp),
        "dec_w_ih_cap": _pad_gates_mat(dec_w_ih[:, :H], H, Hp, H, Hp),
        "dec_w_ih_vid": _pad_gates_mat(dec_w_ih[:, H:], H, Hp, H, Hp),
        "dec_w_hh": _pad_gates_mat(params["dec_lstm_w_hh"], H, Hp, H, Hp),
        "dec_b": _pad_gates_vec(
            params["dec_lstm_b_ih"] + params["dec_lstm_b_hh"], H, Hp),
        "dec_lin_w": jnp.pad(params["dec_lin_w"].astype(jnp.float32),
                             ((0, 0), (0, Hp - H))),                    # (V, Hp)
        "dec_lin_b": params["dec_lin_b"].astype(jnp.float32).reshape(1, V),
        "embedding": jnp.pad(params["embedding"].astype(jnp.float32),
                             ((0, 0), (0, Hp - H))),                    # (V, Hp)
    }


# ----------------------------------------------------------------------------
# Seq2Seq forward (training branch of the PyTorch module)
# ----------------------------------------------------------------------------
@functools.partial(jax.jit, static_argnames=("batch_size", "featuremaps",
                                             "hidden", "number_of_frames"))
def seq2seq_forward(prep, video_features, caption, *,
                    batch_size, featuremaps, hidden, number_of_frames):
    B, T, H, F = batch_size, number_of_frames, hidden, featuremaps
    Hp = _round_up(H, 128)
    Bp = _round_up(B, 8)
    S = 2 * T - 1

    # encoderLinear (tiled matmul; lane-padded output columns are exactly 0)
    vf = video_features.reshape(B * T, F)
    vf = pallas_linear(vf, prep["enc_lin_w"], prep["enc_lin_b"])      # (B*T, Hp)

    # to time-major, pad batch to a sublane multiple (padded rows are ignored)
    vf = vf.reshape(B, T, Hp).transpose(1, 0, 2)                      # (T, B, Hp)
    vf = jnp.pad(vf, ((0, 0), (0, Bp - B), (0, 0)))                   # (T, Bp, Hp)

    # encoderLSTM over 2T-1 steps; the zero tail is handled in-kernel (no HBM pad)
    video_output = pallas_enc_lstm(
        vf, prep["enc_w_ih"], prep["enc_w_hh"], prep["enc_b"], seq_len=S)

    # caption embedding gather (JAX glue); table already lane-padded to Hp
    cap_emb = prep["embedding"][caption[:, 0:T - 1]]                  # (B, T-1, Hp)
    cap_emb = jnp.pad(cap_emb.transpose(1, 0, 2),
                      ((0, 0), (0, Bp - B), (0, 0)))                  # (T-1, Bp, Hp)

    # decoderLSTM (no feature concat: caption/video halves handled in-kernel);
    # only the last T-1 hidden states are computed into the output.
    dec_out = pallas_dec_lstm(video_output, cap_emb,
                              prep["dec_w_ih_cap"], prep["dec_w_ih_vid"],
                              prep["dec_w_hh"], prep["dec_b"])        # (T-1, Bp, Hp)

    # back to PyTorch (batch, time) row order for the final projection
    dec_out = dec_out.transpose(1, 0, 2)[:B].reshape(B * (T - 1), Hp)

    # decoderLinear (weight K padded to Hp; padded activation lanes are 0)
    logits = pallas_linear(dec_out, prep["dec_lin_w"], prep["dec_lin_b"])
    return logits                                                     # (B*(T-1), V)


# ----------------------------------------------------------------------------
# Deterministic parameter init (PyTorch-default-style uniform bounds)
# ----------------------------------------------------------------------------
def init_params(key, featuremaps, hidden, vocab_size):
    ks = jax.random.split(key, 12)
    H = hidden

    def u(k, shape, bound):
        return jax.random.uniform(k, shape, jnp.float32, -bound, bound)

    lin_b1 = 1.0 / jnp.sqrt(featuremaps)
    lstm_b = 1.0 / jnp.sqrt(H)
    lin_b2 = 1.0 / jnp.sqrt(H)
    return {
        "enc_lin_w": u(ks[0], (H, featuremaps), lin_b1),
        "enc_lin_b": u(ks[1], (H,), lin_b1),
        "enc_lstm_w_ih": u(ks[2], (4 * H, H), lstm_b),
        "enc_lstm_w_hh": u(ks[3], (4 * H, H), lstm_b),
        "enc_lstm_b_ih": u(ks[4], (4 * H,), lstm_b),
        "enc_lstm_b_hh": u(ks[5], (4 * H,), lstm_b),
        "dec_lstm_w_ih": u(ks[6], (4 * H, 2 * H), lstm_b),
        "dec_lstm_w_hh": u(ks[7], (4 * H, H), lstm_b),
        "dec_lstm_b_ih": u(ks[8], (4 * H,), lstm_b),
        "dec_lstm_b_hh": u(ks[9], (4 * H,), lstm_b),
        "dec_lin_w": u(ks[10], (vocab_size, H), lin_b2),
        "dec_lin_b": u(ks[11], (vocab_size,), lin_b2),
        "embedding": jax.random.normal(jax.random.fold_in(key, 99),
                                       (vocab_size, H), jnp.float32),
    }


if __name__ == "__main__":
    # Small shapes consistent with the module's forward.
    batch_size = 2
    featuremaps = 64
    hidden = 32
    number_of_frames = 8

    words = ["<PAD>", "<BOS>", "<EOS>", "<UNK>"] + [f"w{i}" for i in range(12)]
    word2id = {w: i for i, w in enumerate(words)}
    vocab_size = len(word2id)  # 16

    key = jax.random.PRNGKey(0)
    k_p, k_v, k_c = jax.random.split(key, 3)
    params = init_params(k_p, featuremaps, hidden, vocab_size)
    prep = prepare_params(params, hidden)   # one-time weight re-layout / padding

    video_features = jax.random.normal(
        k_v, (batch_size, number_of_frames, featuremaps), jnp.float32)
    caption = jax.random.randint(
        k_c, (batch_size, number_of_frames + 2), 0, vocab_size, jnp.int32)

    logits = seq2seq_forward(prep, video_features, caption,
                             batch_size=batch_size, featuremaps=featuremaps,
                             hidden=hidden, number_of_frames=number_of_frames)
    logits = jax.block_until_ready(logits)

    expected_shape = (batch_size * (number_of_frames - 1), vocab_size)
    assert logits.shape == expected_shape, (logits.shape, expected_shape)
    assert bool(jnp.all(jnp.isfinite(logits)))

    # TODO(synk): inference branch (greedy autoregressive decode) not
    # implemented; it would reuse the same LSTM cell / linear kernels per step.
    print("KERNEL_OK")
</pallas_src>

<mosaic_0001>
module attributes {stable_mosaic.version = 11 : i64} {
  func.func @_linear_kernel(%arg0: i32, %arg1: i32, %arg2: memref<16x64xf32, #tpu.memory_space<vmem>>, %arg3: memref<128x64xf32, #tpu.memory_space<vmem>>, %arg4: memref<1x128xf32, #tpu.memory_space<vmem>>, %arg5: memref<16x128xf32, #tpu.memory_space<vmem>>) attributes {dimension_semantics = [#tpu.dimension_semantics<parallel>, #tpu.dimension_semantics<parallel>], iteration_bounds = array<i64: 1, 1>, scalar_prefetch = 0 : i64, scratch_operands = 0 : i64, tpu.core_type = #tpu.core_type<tc>, window_params = [{transform_indices = @transform_0, window_bounds = array<i64: 16, 64>}, {transform_indices = @transform_1, window_bounds = array<i64: 128, 64>}, {transform_indices = @transform_2, window_bounds = array<i64: 1, 128>}, {transform_indices = @transform_3, window_bounds = array<i64: 16, 128>}]} {
    %c0 = arith.constant 0 : index
    %c0_0 = arith.constant 0 : index
    %0 = vector.load %arg2[%c0, %c0_0] : memref<16x64xf32, #tpu.memory_space<vmem>>, vector<16x64xf32>
    %c0_1 = arith.constant 0 : index
    %c0_2 = arith.constant 0 : index
    %1 = vector.load %arg3[%c0_1, %c0_2] : memref<128x64xf32, #tpu.memory_space<vmem>>, vector<128x64xf32>
    %cst = arith.constant dense<0.000000e+00> : vector<16x128xf32>
    %2 = tpu.matmul %0, %1, %cst {dimension_numbers = #tpu.dot_dimension_numbers<[1], [1], [0], [0], [0, 0, 1, 0], [], []>} : vector<16x64xf32>, vector<128x64xf32>, vector<16x128xf32> -> vector<16x128xf32>
    %c0_3 = arith.constant 0 : index
    %c0_4 = arith.constant 0 : index
    %3 = vector.load %arg4[%c0_3, %c0_4] : memref<1x128xf32, #tpu.memory_space<vmem>>, vector<1x128xf32>
    %4 = vector.broadcast %3 : vector<1x128xf32> to vector<16x128xf32>
    %5 = arith.addf %2, %4 : vector<16x128xf32>
    %c0_5 = arith.constant 0 : index
    %c0_6 = arith.constant 0 : index
    %6 = vector.load %arg5[%c0_5, %c0_6] : memref<16x128xf32, #tpu.memory_space<vmem>>, vector<16x128xf32>
    tpu.vector_store %arg5[%c0_5, %c0_6], %5 {strides = array<i32>} : memref<16x128xf32, #tpu.memory_space<vmem>>, vector<16x128xf32>,
    return
  }
  func.func @transform_0(%arg0: i32, %arg1: i32) -> (i32, i32) {
    %c0_i32 = arith.constant 0 : i32
    %c0_i32_0 = arith.constant 0 : i32
    return %arg0, %c0_i32 : i32, i32
  }
  func.func @transform_1(%arg0: i32, %arg1: i32) -> (i32, i32) {
    %c0_i32 = arith.constant 0 : i32
    %c0_i32_0 = arith.constant 0 : i32
    return %arg1, %c0_i32 : i32, i32
  }
  func.func @transform_2(%arg0: i32, %arg1: i32) -> (i32, i32) {
    %c0_i32 = arith.constant 0 : i32
    %c0_i32_0 = arith.constant 0 : i32
    return %c0_i32, %arg1 : i32, i32
  }
  func.func @transform_3(%arg0: i32, %arg1: i32) -> (i32, i32) {
    %c0_i32 = arith.constant 0 : i32
    return %arg0, %arg1 : i32, i32
  }
}

module attributes {stable_mosaic.version = 11 : i64} {
  func.func @_enc_lstm_kernel(%arg0: memref<8x8x128xf32, #tpu.memory_space<vmem>>, %arg1: memref<512x128xf32, #tpu.memory_space<vmem>>, %arg2: memref<512x128xf32, #tpu.memory_space<vmem>>, %arg3: memref<1x512xf32, #tpu.memory_space<vmem>>, %arg4: memref<15x8x128xf32, #tpu.memory_space<vmem>>, %arg5: memref<8x8x512xf32, #tpu.memory_space<vmem>>) attributes {dimension_semantics = [], scalar_prefetch = 0 : i64, scratch_operands = 1 : i64, tpu.core_type = #tpu.core_type<tc>} {
    %c0 = arith.constant 0 : index
    %c0_0 = arith.constant 0 : index
    %c0_1 = arith.constant 0 : index
    %0 = vector.load %arg0[%c0, %c0_0, %c0_1] : memref<8x8x128xf32, #tpu.memory_space<vmem>>, vector<8x8x128xf32>
    %1 = vector.shape_cast %0 : vector<8x8x128xf32> to vector<64x128xf32>
    %c0_2 = arith.constant 0 : index
    %c0_3 = arith.constant 0 : index
    %2 = vector.load %arg1[%c0_2, %c0_3] : memref<512x128xf32, #tpu.memory_space<vmem>>, vector<512x128xf32>
    %cst = arith.constant dense<0.000000e+00> : vector<64x512xf32>
    %3 = tpu.matmul %1, %2, %cst {dimension_numbers = #tpu.dot_dimension_numbers<[1], [1], [0], [0], [0, 0, 1, 0], [], []>} : vector<64x128xf32>, vector<512x128xf32>, vector<64x512xf32> -> vector<64x512xf32>
    %4 = vector.shape_cast %3 : vector<64x512xf32> to vector<8x8x512xf32>
    %c0_4 = arith.constant 0 : index
    %c0_5 = arith.constant 0 : index
    %c0_6 = arith.constant 0 : index
    %5 = vector.load %arg5[%c0_4, %c0_5, %c0_6] : memref<8x8x512xf32, #tpu.memory_space<vmem>>, vector<8x8x512xf32>
    tpu.vector_store %arg5[%c0_4, %c0_5, %c0_6], %4 {strides = array<i32>} : memref<8x8x512xf32, #tpu.memory_space<vmem>>, vector<8x8x512xf32>,
    %c0_7 = arith.constant 0 : index
    %c0_8 = arith.constant 0 : index
    %6 = vector.load %arg2[%c0_7, %c0_8] : memref<512x128xf32, #tpu.memory_space<vmem>>, vector<512x128xf32>
    %c0_9 = arith.constant 0 : index
    %c0_10 = arith.constant 0 : index
    %7 = vector.load %arg3[%c0_9, %c0_10] : memref<1x512xf32, #tpu.memory_space<vmem>>, vector<1x512xf32>
    %8 = vector.shape_cast %7 : vector<1x512xf32> to vector<1x512xf32>
    %9 = vector.broadcast %8 : vector<1x512xf32> to vector<8x512xf32>
    %cst_11 = arith.constant 0.000000e+00 : f32
    %10 = vector.broadcast %cst_11 : f32 to vector<8x128xf32>
    %cst_12 = arith.constant 0.000000e+00 : f32
    %11 = vector.broadcast %cst_12 : f32 to vector<8x128xf32>
    %c0_13 = arith.constant 0 : index
    %c0_14 = arith.constant 0 : index
    %c0_15 = arith.constant 0 : index
    %12 = vector.load %arg5[%c0_13, %c0_14, %c0_15] : memref<8x8x512xf32, #tpu.memory_space<vmem>>, vector<1x8x512xf32>
    %13 = vector.shape_cast %12 : vector<1x8x512xf32> to vector<8x512xf32>
    %cst_16 = arith.constant dense<0.000000e+00> : vector<8x512xf32>
    %14 = tpu.matmul %10, %6, %cst_16 {dimension_numbers = #tpu.dot_dimension_numbers<[1], [1], [0], [0], [0, 0, 1, 0], [], []>} : vector<8x128xf32>, vector<512x128xf32>, vector<8x512xf32> -> vector<8x512xf32>
    %15 = arith.addf %14, %9 : vector<8x512xf32>
    %16 = arith.addf %15, %13 : vector<8x512xf32>
    %17 = vector.extract_strided_slice %16 {offsets = [0, 0], sizes = [8, 128], strides = [1, 1]} : vector<8x512xf32> to vector<8x128xf32>
    %18 = arith.negf %17 : vector<8x128xf32>
    %19 = math.exp %18 : vector<8x128xf32>
    %cst_17 = arith.constant 1.000000e+00 : f32
    %20 = vector.broadcast %cst_17 : f32 to vector<8x128xf32>
    %21 = arith.addf %20, %19 : vector<8x128xf32>
    %22 = arith.divf %20, %21 : vector<8x128xf32>
    %23 = vector.extract_strided_slice %16 {offsets = [0, 128], sizes = [8, 128], strides = [1, 1]} : vector<8x512xf32> to vector<8x128xf32>
    %24 = arith.negf %23 : vector<8x128xf32>
    %25 = math.exp %24 : vector<8x128xf32>
    %cst_18 = arith.constant 1.000000e+00 : f32
    %26 = vector.broadcast %cst_18 : f32 to vector<8x128xf32>
    %27 = arith.addf %26, %25 : vector<8x128xf32>
    %28 = arith.divf %26, %27 : vector<8x128xf32>
    %29 = vector.extract_strided_slice %16 {offsets = [0, 256], sizes = [8, 128], strides = [1, 1]} : vector<8x512xf32> to vector<8x128xf32>
    %30 = math.tanh %29 : vector<8x128xf32>
    %31 = vector.extract_strided_slice %16 {offsets = [0, 384], sizes = [8, 128], strides = [1, 1]} : vector<8x512xf32> to vector<8x128xf32>
    %32 = arith.negf %31 : vector<8x128xf32>
    %33 = math.exp %32 : vector<8x128xf32>
    %cst_19 = arith.constant 1.000000e+00 : f32
    %34 = vector.broadcast %cst_19 : f32 to vector<8x128xf32>
    %35 = arith.addf %34, %33 : vector<8x128xf32>
    %36 = arith.divf %34, %35 : vector<8x128xf32>
    %37 = arith.mulf %28, %11 : vector<8x128xf32>
    %38 = arith.mulf %22, %30 : vector<8x128xf32>
    %39 = arith.addf %37, %38 : vector<8x128xf32>
    %40 = math.tanh %39 : vector<8x128xf32>
    %41 = arith.mulf %36, %40 : vector<8x128xf32>
    %c0_20 = arith.constant 0 : index
    %c0_21 = arith.constant 0 : index
    %c0_22 = arith.constant 0 : index
    %42 = vector.load %arg4[%c0_20, %c0_21, %c0_22] : memref<15x8x128xf32, #tpu.memory_space<vmem>>, vector<1x8x128xf32>
    %43 = vector.shape_cast %42 : vector<1x8x128xf32> to vector<8x128xf32>
    %44 = vector.shape_cast %41 : vector<8x128xf32> to vector<1x8x128xf32>
    tpu.vector_store %arg4[%c0_20, %c0_21, %c0_22], %44 {strides = array<i32>} : memref<15x8x128xf32, #tpu.memory_space<vmem>>, vector<1x8x128xf32>,
    %c1 = arith.constant 1 : index
    %c0_23 = arith.constant 0 : index
    %c0_24 = arith.constant 0 : index
    %45 = vector.load %arg5[%c1, %c0_23, %c0_24] : memref<8x8x512xf32, #tpu.memory_space<vmem>>, vector<1x8x512xf32>
    %46 = vector.shape_cast %45 : vector<1x8x512xf32> to vector<8x512xf32>
    %cst_25 = arith.constant dense<0.000000e+00> : vector<8x512xf32>
    %47 = tpu.matmul %41, %6, %cst_25 {dimension_numbers = #tpu.dot_dimension_numbers<[1], [1], [0], [0], [0, 0, 1, 0], [], []>} : vector<8x128xf32>, vector<512x128xf32>, vector<8x512xf32> -> vector<8x512xf32>
    %48 = arith.addf %47, %9 : vector<8x512xf32>
    %49 = arith.addf %48, %46 : vector<8x512xf32>
    %50 = vector.extract_strided_slice %49 {offsets = [0, 0], sizes = [8, 128], strides = [1, 1]} : vector<8x512xf32> to vector<8x128xf32>
    %51 = arith.negf %50 : vector<8x128xf32>
    %52 = math.exp %51 : vector<8x128xf32>
    %cst_26 = arith.constant 1.000000e+00 : f32
    %53 = vector.broadcast %cst_26 : f32 to vector<8x128xf32>
    %54 = arith.addf %53, %52 : vector<8x128xf32>
    %55 = arith.divf %53, %54 : vector<8x128xf32>
    %56 = vector.extract_strided_slice %49 {offsets = [0, 128], sizes = [8, 128], strides = [1, 1]} : vector<8x512xf32> to vector<8x128xf32>
    %57 = arith.negf %56 : vector<8x128xf32>
    %58 = math.exp %57 : vector<8x128xf32>
    %cst_27 = arith.constant 1.000000e+00 : f32
    %59 = vector.broadcast %cst_27 : f32 to vector<8x128xf32>
    %60 = arith.addf %59, %58 : vector<8x128xf32>
    %61 = arith.divf %59, %60 : vector<8x128xf32>
    %62 = vector.extract_strided_slice %49 {offsets = [0, 256], sizes = [8, 128], strides = [1, 1]} : vector<8x512xf32> to vector<8x128xf32>
    %63 = math.tanh %62 : vector<8x128xf32>
    %64 = vector.extract_strided_slice %49 {offsets = [0, 384], sizes = [8, 128], strides = [1, 1]} : vector<8x512xf32> to vector<8x128xf32>
    %65 = arith.negf %64 : vector<8x128xf32>
    %66 = math.exp %65 : vector<8x128xf32>
    %cst_28 = arith.constant 1.000000e+00 : f32
    %67 = vector.broadcast %cst_28 : f32 to vector<8x128xf32>
    %68 = arith.addf %67, %66 : vector<8x128xf32>
    %69 = arith.divf %67, %68 : vector<8x128xf32>
    %70 = arith.mulf %61, %39 : vector<8x128xf32>
    %71 = arith.mulf %55, %63 : vector<8x128xf32>
    %72 = arith.addf %70, %71 : vector<8x128xf32>
    %73 = math.tanh %72 : vector<8x128xf32>
    %74 = arith.mulf %69, %73 : vector<8x128xf32>
    %c1_29 = arith.constant 1 : index
    %c0_30 = arith.constant 0 : index
    %c0_31 = arith.constant 0 : index
    %75 = vector.load %arg4[%c1_29, %c0_30, %c0_31] : memref<15x8x128xf32, #tpu.memory_space<vmem>>, vector<1x8x128xf32>
    %76 = vector.shape_cast %75 : vector<1x8x128xf32> to vector<8x128xf32>
    %77 = vector.shape_cast %74 : vector<8x128xf32> to vector<1x8x128xf32>
    tpu.vector_store %arg4[%c1_29, %c0_30, %c0_31], %77 {strides = array<i32>} : memref<15x8x128xf32, #tpu.memory_space<vmem>>, vector<1x8x128xf32>,
    %c2 = arith.constant 2 : index
    %c0_32 = arith.constant 0 : index
    %c0_33 = arith.constant 0 : index
    %78 = vector.load %arg5[%c2, %c0_32, %c0_33] : memref<8x8x512xf32, #tpu.memory_space<vmem>>, vector<1x8x512xf32>
    %79 = vector.shape_cast %78 : vector<1x8x512xf32> to vector<8x512xf32>
    %cst_34 = arith.constant dense<0.000000e+00> : vector<8x512xf32>
    %80 = tpu.matmul %74, %6, %cst_34 {dimension_numbers = #tpu.dot_dimension_numbers<[1], [1], [0], [0], [0, 0, 1, 0], [], []>} : vector<8x128xf32>, vector<512x128xf32>, vector<8x512xf32> -> vector<8x512xf32>
    %81 = arith.addf %80, %9 : vector<8x512xf32>
    %82 = arith.addf %81, %79 : vector<8x512xf32>
    %83 = vector.extract_strided_slice %82 {offsets = [0, 0], sizes = [8, 128], strides = [1, 1]} : vector<8x512xf32> to vector<8x128xf32>
    %84 = arith.negf %83 : vector<8x128xf32>
    %85 = math.exp %84 : vector<8x128xf32>
    %cst_35 = arith.constant 1.000000e+00 : f32
    %86 = vector.broadcast %cst_35 : f32 to vector<8x128xf32>
    %87 = arith.addf %86, %85 : vector<8x128xf32>
    %88 = arith.divf %86, %87 : vector<8x128xf32>
    %89 = vector.extract_strided_slice %82 {offsets = [0, 128], sizes = [8, 128], strides = [1, 1]} : vector<8x512xf32> to vector<8x128xf32>
    %90 = arith.negf %89 : vector<8x128xf32>
    %91 = math.exp %90 : vector<8x128xf32>
    %cst_36 = arith.constant 1.000000e+00 : f32
    %92 = vector.broadcast %cst_36 : f32 to vector<8x128xf32>
    %93 = arith.addf %92, %91 : vector<8x128xf32>
    %94 = arith.divf %92, %93 : vector<8x128xf32>
    %95 = vector.extract_strided_slice %82 {offsets = [0, 256], sizes = [8, 128], strides = [1, 1]} : vector<8x512xf32> to vector<8x128xf32>
    %96 = math.tanh %95 : vector<8x128xf32>
    %97 = vector.extract_strided_slice %82 {offsets = [0, 384], sizes = [8, 128], strides = [1, 1]} : vector<8x512xf32> to vector<8x128xf32>
    %98 = arith.negf %97 : vector<8x128xf32>
    %99 = math.exp %98 : vector<8x128xf32>
    %cst_37 = arith.constant 1.000000e+00 : f32
    %100 = vector.broadcast %cst_37 : f32 to vector<8x128xf32>
    %101 = arith.addf %100, %99 : vector<8x128xf32>
    %102 = arith.divf %100, %101 : vector<8x128xf32>
    %103 = arith.mulf %94, %72 : vector<8x128xf32>
    %104 = arith.mulf %88, %96 : vector<8x128xf32>
    %105 = arith.addf %103, %104 : vector<8x128xf32>
    %106 = math.tanh %105 : vector<8x128xf32>
    %107 = arith.mulf %102, %106 : vector<8x128xf32>
    %c2_38 = arith.constant 2 : index
    %c0_39 = arith.constant 0 : index
    %c0_40 = arith.constant 0 : index
    %108 = vector.load %arg4[%c2_38, %c0_39, %c0_40] : memref<15x8x128xf32, #tpu.memory_space<vmem>>, vector<1x8x128xf32>
    %109 = vector.shape_cast %108 : vector<1x8x128xf32> to vector<8x128xf32>
    %110 = vector.shape_cast %107 : vector<8x128xf32> to vector<1x8x128xf32>
    tpu.vector_store %arg4[%c2_38, %c0_39, %c0_40], %110 {strides = array<i32>} : memref<15x8x128xf32, #tpu.memory_space<vmem>>, vector<1x8x128xf32>,
    %c3 = arith.constant 3 : index
    %c0_41 = arith.constant 0 : index
    %c0_42 = arith.constant 0 : index
    %111 = vector.load %arg5[%c3, %c0_41, %c0_42] : memref<8x8x512xf32, #tpu.memory_space<vmem>>, vector<1x8x512xf32>
    %112 = vector.shape_cast %111 : vector<1x8x512xf32> to vector<8x512xf32>
    %cst_43 = arith.constant dense<0.000000e+00> : vector<8x512xf32>
    %113 = tpu.matmul %107, %6, %cst_43 {dimension_numbers = #tpu.dot_dimension_numbers<[1], [1], [0], [0], [0, 0, 1, 0], [], []>} : vector<8x128xf32>, vector<512x128xf32>, vector<8x512xf32> -> vector<8x512xf32>
    %114 = arith.addf %113, %9 : vector<8x512xf32>
    %115 = arith.addf %114, %112 : vector<8x512xf32>
    %116 = vector.extract_strided_slice %115 {offsets = [0, 0], sizes = [8, 128], strides = [1, 1]} : vector<8x512xf32> to vector<8x128xf32>
    %117 = arith.negf %116 : vector<8x128xf32>
    %118 = math.exp %117 : vector<8x128xf32>
    %cst_44 = arith.constant 1.000000e+00 : f32
    %119 = vector.broadcast %cst_44 : f32 to vector<8x128xf32>
    %120 = arith.addf %119, %118 : vector<8x128xf32>
    %121 = arith.divf %119, %120 : vector<8x128xf32>
    %122 = vector.extract_strided_slice %115 {offsets = [0, 128], sizes = [8, 128], strides = [1, 1]} : vector<8x512xf32> to vector<8x128xf32>
    %123 = arith.negf %122 : vector<8x128xf32>
    %124 = math.exp %123 : vector<8x128xf32>
    %cst_45 = arith.constant 1.000000e+00 : f32
    %125 = vector.broadcast %cst_45 : f32 to vector<8x128xf32>
    %126 = arith.addf %125, %124 : vector<8x128xf32>
    %127 = arith.divf %125, %126 : vector<8x128xf32>
    %128 = vector.extract_strided_slice %115 {offsets = [0, 256], sizes = [8, 128], strides = [1, 1]} : vector<8x512xf32> to vector<8x128xf32>
    %129 = math.tanh %128 : vector<8x128xf32>
    %130 = vector.extract_strided_slice %115 {offsets = [0, 384], sizes = [8, 128], strides = [1, 1]} : vector<8x512xf32> to vector<8x128xf32>
    %131 = arith.negf %130 : vector<8x128xf32>
    %132 = math.exp %131 : vector<8x128xf32>
    %cst_46 = arith.constant 1.000000e+00 : f32
    %133 = vector.broadcast %cst_46 : f32 to vector<8x128xf32>
    %134 = arith.addf %133, %132 : vector<8x128xf32>
    %135 = arith.divf %133, %134 : vector<8x128xf32>
    %136 = arith.mulf %127, %105 : vector<8x128xf32>
    %137 = arith.mulf %121, %129 : vector<8x128xf32>
    %138 = arith.addf %136, %137 : vector<8x128xf32>
    %139 = math.tanh %138 : vector<8x128xf32>
    %140 = arith.mulf %135, %139 : vector<8x128xf32>
    %c3_47 = arith.constant 3 : index
    %c0_48 = arith.constant 0 : index
    %c0_49 = arith.constant 0 : index
    %141 = vector.load %arg4[%c3_47, %c0_48, %c0_49] : memref<15x8x128xf32, #tpu.memory_space<vmem>>, vector<1x8x128xf32>
    %142 = vector.shape_cast %141 : vector<1x8x128xf32> to vector<8x128xf32>
    %143 = vector.shape_cast %140 : vector<8x128xf32> to vector<1x8x128xf32>
    tpu.vector_store %arg4[%c3_47, %c0_48, %c0_49], %143 {strides = array<i32>} : memref<15x8x128xf32, #tpu.memory_space<vmem>>, vector<1x8x128xf32>,
    %c4 = arith.constant 4 : index
    %c0_50 = arith.constant 0 : index
    %c0_51 = arith.constant 0 : index
    %144 = vector.load %arg5[%c4, %c0_50, %c0_51] : memref<8x8x512xf32, #tpu.memory_space<vmem>>, vector<1x8x512xf32>
    %145 = vector.shape_cast %144 : vector<1x8x512xf32> to vector<8x512xf32>
    %cst_52 = arith.constant dense<0.000000e+00> : vector<8x512xf32>
    %146 = tpu.matmul %140, %6, %cst_52 {dimension_numbers = #tpu.dot_dimension_numbers<[1], [1], [0], [0], [0, 0, 1, 0], [], []>} : vector<8x128xf32>, vector<512x128xf32>, vector<8x512xf32> -> vector<8x512xf32>
    %147 = arith.addf %146, %9 : vector<8x512xf32>
    %148 = arith.addf %147, %145 : vector<8x512xf32>
    %149 = vector.extract_strided_slice %148 {offsets = [0, 0], sizes = [8, 128], strides = [1, 1]} : vector<8x512xf32> to vector<8x128xf32>
    %150 = arith.negf %149 : vector<8x128xf32>
    %151 = math.exp %150 : vector<8x128xf32>
    %cst_53 = arith.constant 1.000000e+00 : f32
    %152 = vector.broadcast %cst_53 : f32 to vector<8x128xf32>
    %153 = arith.addf %152, %151 : vector<8x128xf32>
    %154 = arith.divf %152, %153 : vector<8x128xf32>
    %155 = vector.extract_strided_slice %148 {offsets = [0, 128], sizes = [8, 128], strides = [1, 1]} : vector<8x512xf32> to vector<8x128xf32>
    %156 = arith.negf %155 : vector<8x128xf32>
    %157 = math.exp %156 : vector<8x128xf32>
    %cst_54 = arith.constant 1.000000e+00 : f32
    %158 = vector.broadcast %cst_54 : f32 to vector<8x128xf32>
    %159 = arith.addf %158, %157 : vector<8x128xf32>
    %160 = arith.divf %158, %159 : vector<8x128xf32>
    %161 = vector.extract_strided_slice %148 {offsets = [0, 256], sizes = [8, 128], strides = [1, 1]} : vector<8x512xf32> to vector<8x128xf32>
    %162 = math.tanh %161 : vector<8x128xf32>
    %163 = vector.extract_strided_slice %148 {offsets = [0, 384], sizes = [8, 128], strides = [1, 1]} : vector<8x512xf32> to vector<8x128xf32>
    %164 = arith.negf %163 : vector<8x128xf32>
    %165 = math.exp %164 : vector<8x128xf32>
    %cst_55 = arith.constant 1.000000e+00 : f32
    %166 = vector.broadcast %cst_55 : f32 to vector<8x128xf32>
    %167 = arith.addf %166, %165 : vector<8x128xf32>
    %168 = arith.divf %166, %167 : vector<8x128xf32>
    %169 = arith.mulf %160, %138 : vector<8x128xf32>
    %170 = arith.mulf %154, %162 : vector<8x128xf32>
    %171 = arith.addf %169, %170 : vector<8x128xf32>
    %172 = math.tanh %171 : vector<8x128xf32>
    %173 = arith.mulf %168, %172 : vector<8x128xf32>
    %c4_56 = arith.constant 4 : index
    %c0_57 = arith.constant 0 : index
    %c0_58 = arith.constant 0 : index
    %174 = vector.load %arg4[%c4_56, %c0_57, %c0_58] : memref<15x8x128xf32, #tpu.memory_space<vmem>>, vector<1x8x128xf32>
    %175 = vector.shape_cast %174 : vector<1x8x128xf32> to vector<8x128xf32>
    %176 = vector.shape_cast %173 : vector<8x128xf32> to vector<1x8x128xf32>
    tpu.vector_store %arg4[%c4_56, %c0_57, %c0_58], %176 {strides = array<i32>} : memref<15x8x128xf32, #tpu.memory_space<vmem>>, vector<1x8x128xf32>,
    %c5 = arith.constant 5 : index
    %c0_59 = arith.constant 0 : index
    %c0_60 = arith.constant 0 : index
    %177 = vector.load %arg5[%c5, %c0_59, %c0_60] : memref<8x8x512xf32, #tpu.memory_space<vmem>>, vector<1x8x512xf32>
    %178 = vector.shape_cast %177 : vector<1x8x512xf32> to vector<8x512xf32>
    %cst_61 = arith.constant dense<0.000000e+00> : vector<8x512xf32>
    %179 = tpu.matmul %173, %6, %cst_61 {dimension_numbers = #tpu.dot_dimension_numbers<[1], [1], [0], [0], [0, 0, 1, 0], [], []>} : vector<8x128xf32>, vector<512x128xf32>, vector<8x512xf32> -> vector<8x512xf32>
    %180 = arith.addf %179, %9 : vector<8x512xf32>
    %181 = arith.addf %180, %178 : vector<8x512xf32>
    %182 = vector.extract_strided_slice %181 {offsets = [0, 0], sizes = [8, 128], strides = [1, 1]} : vector<8x512xf32> to vector<8x128xf32>
    %183 = arith.negf %182 : vector<8x128xf32>
    %184 = math.exp %183 : vector<8x128xf32>
    %cst_62 = arith.constant 1.000000e+00 : f32
    %185 = vector.broadcast %cst_62 : f32 to vector<8x128xf32>
    %186 = arith.addf %185, %184 : vector<8x128xf32>
    %187 = arith.divf %185, %186 : vector<8x128xf32>
    %188 = vector.extract_strided_slice %181 {offsets = [0, 128], sizes = [8, 128], strides = [1, 1]} : vector<8x512xf32> to vector<8x128xf32>
    %189 = arith.negf %188 : vector<8x128xf32>
    %190 = math.exp %189 : vector<8x128xf32>
    %cst_63 = arith.constant 1.000000e+00 : f32
    %191 = vector.broadcast %cst_63 : f32 to vector<8x128xf32>
    %192 = arith.addf %191, %190 : vector<8x128xf32>
    %193 = arith.divf %191, %192 : vector<8x128xf32>
    %194 = vector.extract_strided_slice %181 {offsets = [0, 256], sizes = [8, 128], strides = [1, 1]} : vector<8x512xf32> to vector<8x128xf32>
    %195 = math.tanh %194 : vector<8x128xf32>
    %196 = vector.extract_strided_slice %181 {offsets = [0, 384], sizes = [8, 128], strides = [1, 1]} : vector<8x512xf32> to vector<8x128xf32>
    %197 = arith.negf %196 : vector<8x128xf32>
    %198 = math.exp %197 : vector<8x128xf32>
    %cst_64 = arith.constant 1.000000e+00 : f32
    %199 = vector.broadcast %cst_64 : f32 to vector<8x128xf32>
    %200 = arith.addf %199, %198 : vector<8x128xf32>
    %201 = arith.divf %199, %200 : vector<8x128xf32>
    %202 = arith.mulf %193, %171 : vector<8x128xf32>
    %203 = arith.mulf %187, %195 : vector<8x128xf32>
    %204 = arith.addf %202, %203 : vector<8x128xf32>
    %205 = math.tanh %204 : vector<8x128xf32>
    %206 = arith.mulf %201, %205 : vector<8x128xf32>
    %c5_65 = arith.constant 5 : index
    %c0_66 = arith.constant 0 : index
    %c0_67 = arith.constant 0 : index
    %207 = vector.load %arg4[%c5_65, %c0_66, %c0_67] : memref<15x8x128xf32, #tpu.memory_space<vmem>>, vector<1x8x128xf32>
    %208 = vector.shape_cast %207 : vector<1x8x128xf32> to vector<8x128xf32>
    %209 = vector.shape_cast %206 : vector<8x128xf32> to vector<1x8x128xf32>
    tpu.vector_store %arg4[%c5_65, %c0_66, %c0_67], %209 {strides = array<i32>} : memref<15x8x128xf32, #tpu.memory_space<vmem>>, vector<1x8x128xf32>,
    %c6 = arith.constant 6 : index
    %c0_68 = arith.constant 0 : index
    %c0_69 = arith.constant 0 : index
    %210 = vector.load %arg5[%c6, %c0_68, %c0_69] : memref<8x8x512xf32, #tpu.memory_space<vmem>>, vector<1x8x512xf32>
    %211 = vector.shape_cast %210 : vector<1x8x512xf32> to vector<8x512xf32>
    %cst_70 = arith.constant dense<0.000000e+00> : vector<8x512xf32>
    %212 = tpu.matmul %206, %6, %cst_70 {dimension_numbers = #tpu.dot_dimension_numbers<[1], [1], [0], [0], [0, 0, 1, 0], [], []>} : vector<8x128xf32>, vector<512x128xf32>, vector<8x512xf32> -> vector<8x512xf32>
    %213 = arith.addf %212, %9 : vector<8x512xf32>
    %214 = arith.addf %213, %211 : vector<8x512xf32>
    %215 = vector.extract_strided_slice %214 {offsets = [0, 0], sizes = [8, 128], strides = [1, 1]} : vector<8x512xf32> to vector<8x128xf32>
    %216 = arith.negf %215 : vector<8x128xf32>
    %217 = math.exp %216 : vector<8x128xf32>
    %cst_71 = arith.constant 1.000000e+00 : f32
    %218 = vector.broadcast %cst_71 : f32 to vector<8x128xf32>
    %219 = arith.addf %218, %217 : vector<8x128xf32>
    %220 = arith.divf %218, %219 : vector<8x128xf32>
    %221 = vector.extract_strided_slice %214 {offsets = [0, 128], sizes = [8, 128], strides = [1, 1]} : vector<8x512xf32> to vector<8x128xf32>
    %222 = arith.negf %221 : vector<8x128xf32>
    %223 = math.exp %222 : vector<8x128xf32>
    %cst_72 = arith.constant 1.000000e+00 : f32
    %224 = vector.broadcast %cst_72 : f32 to vector<8x128xf32>
    %225 = arith.addf %224, %223 : vector<8x128xf32>
    %226 = arith.divf %224, %225 : vector<8x128xf32>
    %227 = vector.extract_strided_slice %214 {offsets = [0, 256], sizes = [8, 128], strides = [1, 1]} : vector<8x512xf32> to vector<8x128xf32>
    %228 = math.tanh %227 : vector<8x128xf32>
    %229 = vector.extract_strided_slice %214 {offsets = [0, 384], sizes = [8, 128], strides = [1, 1]} : vector<8x512xf32> to vector<8x128xf32>
    %230 = arith.negf %229 : vector<8x128xf32>
    %231 = math.exp %230 : vector<8x128xf32>
    %cst_73 = arith.constant 1.000000e+00 : f32
    %232 = vector.broadcast %cst_73 : f32 to vector<8x128xf32>
    %233 = arith.addf %232, %231 : vector<8x128xf32>
    %234 = arith.divf %232, %233 : vector<8x128xf32>
    %235 = arith.mulf %226, %204 : vector<8x128xf32>
    %236 = arith.mulf %220, %228 : vector<8x128xf32>
    %237 = arith.addf %235, %236 : vector<8x128xf32>
    %238 = math.tanh %237 : vector<8x128xf32>
    %239 = arith.mulf %234, %238 : vector<8x128xf32>
    %c6_74 = arith.constant 6 : index
    %c0_75 = arith.constant 0 : index
    %c0_76 = arith.constant 0 : index
    %240 = vector.load %arg4[%c6_74, %c0_75, %c0_76] : memref<15x8x128xf32, #tpu.memory_space<vmem>>, vector<1x8x128xf32>
    %241 = vector.shape_cast %240 : vector<1x8x128xf32> to vector<8x128xf32>
    %242 = vector.shape_cast %239 : vector<8x128xf32> to vector<1x8x128xf32>
    tpu.vector_store %arg4[%c6_74, %c0_75, %c0_76], %242 {strides = array<i32>} : memref<15x8x128xf32, #tpu.memory_space<vmem>>, vector<1x8x128xf32>,
    %c7 = arith.constant 7 : index
    %c0_77 = arith.constant 0 : index
    %c0_78 = arith.constant 0 : index
    %243 = vector.load %arg5[%c7, %c0_77, %c0_78] : memref<8x8x512xf32, #tpu.memory_space<vmem>>, vector<1x8x512xf32>
    %244 = vector.shape_cast %243 : vector<1x8x512xf32> to vector<8x512xf32>
    %cst_79 = arith.constant dense<0.000000e+00> : vector<8x512xf32>
    %245 = tpu.matmul %239, %6, %cst_79 {dimension_numbers = #tpu.dot_dimension_numbers<[1], [1], [0], [0], [0, 0, 1, 0], [], []>} : vector<8x128xf32>, vector<512x128xf32>, vector<8x512xf32> -> vector<8x512xf32>
    %246 = arith.addf %245, %9 : vector<8x512xf32>
    %247 = arith.addf %246, %244 : vector<8x512xf32>
    %248 = vector.extract_strided_slice %247 {offsets = [0, 0], sizes = [8, 128], strides = [1, 1]} : vector<8x512xf32> to vector<8x128xf32>
    %249 = arith.negf %248 : vector<8x128xf32>
    %250 = math.exp %249 : vector<8x128xf32>
    %cst_80 = arith.constant 1.000000e+00 : f32
    %251 = vector.broadcast %cst_80 : f32 to vector<8x128xf32>
    %252 = arith.addf %251, %250 : vector<8x128xf32>
    %253 = arith.divf %251, %252 : vector<8x128xf32>
    %254 = vector.extract_strided_slice %247 {offsets = [0, 128], sizes = [8, 128], strides = [1, 1]} : vector<8x512xf32> to vector<8x128xf32>
    %255 = arith.negf %254 : vector<8x128xf32>
    %256 = math.exp %255 : vector<8x128xf32>
    %cst_81 = arith.constant 1.000000e+00 : f32
    %257 = vector.broadcast %cst_81 : f32 to vector<8x128xf32>
    %258 = arith.addf %257, %256 : vector<8x128xf32>
    %259 = arith.divf %257, %258 : vector<8x128xf32>
    %260 = vector.extract_strided_slice %247 {offsets = [0, 256], sizes = [8, 128], strides = [1, 1]} : vector<8x512xf32> to vector<8x128xf32>
    %261 = math.tanh %260 : vector<8x128xf32>
    %262 = vector.extract_strided_slice %247 {offsets = [0, 384], sizes = [8, 128], strides = [1, 1]} : vector<8x512xf32> to vector<8x128xf32>
    %263 = arith.negf %262 : vector<8x128xf32>
    %264 = math.exp %263 : vector<8x128xf32>
    %cst_82 = arith.constant 1.000000e+00 : f32
    %265 = vector.broadcast %cst_82 : f32 to vector<8x128xf32>
    %266 = arith.addf %265, %264 : vector<8x128xf32>
    %267 = arith.divf %265, %266 : vector<8x128xf32>
    %268 = arith.mulf %259, %237 : vector<8x128xf32>
    %269 = arith.mulf %253, %261 : vector<8x128xf32>
    %270 = arith.addf %268, %269 : vector<8x128xf32>
    %271 = math.tanh %270 : vector<8x128xf32>
    %272 = arith.mulf %267, %271 : vector<8x128xf32>
    %c7_83 = arith.constant 7 : index
    %c0_84 = arith.constant 0 : index
    %c0_85 = arith.constant 0 : index
    %273 = vector.load %arg4[%c7_83, %c0_84, %c0_85] : memref<15x8x128xf32, #tpu.memory_space<vmem>>, vector<1x8x128xf32>
    %274 = vector.shape_cast %273 : vector<1x8x128xf32> to vector<8x128xf32>
    %275 = vector.shape_cast %272 : vector<8x128xf32> to vector<1x8x128xf32>
    tpu.vector_store %arg4[%c7_83, %c0_84, %c0_85], %275 {strides = array<i32>} : memref<15x8x128xf32, #tpu.memory_space<vmem>>, vector<1x8x128xf32>,
    %cst_86 = arith.constant dense<0.000000e+00> : vector<8x512xf32>
    %276 = tpu.matmul %272, %6, %cst_86 {dimension_numbers = #tpu.dot_dimension_numbers<[1], [1], [0], [0], [0, 0, 1, 0], [], []>} : vector<8x128xf32>, vector<512x128xf32>, vector<8x512xf32> -> vector<8x512xf32>
    %277 = arith.addf %276, %9 : vector<8x512xf32>
    %278 = vector.extract_strided_slice %277 {offsets = [0, 0], sizes = [8, 128], strides = [1, 1]} : vector<8x512xf32> to vector<8x128xf32>
    %279 = arith.negf %278 : vector<8x128xf32>
    %280 = math.exp %279 : vector<8x128xf32>
    %cst_87 = arith.constant 1.000000e+00 : f32
    %281 = vector.broadcast %cst_87 : f32 to vector<8x128xf32>
    %282 = arith.addf %281, %280 : vector<8x128xf32>
    %283 = arith.divf %281, %282 : vector<8x128xf32>
    %284 = vector.extract_strided_slice %277 {offsets = [0, 128], sizes = [8, 128], strides = [1, 1]} : vector<8x512xf32> to vector<8x128xf32>
    %285 = arith.negf %284 : vector<8x128xf32>
    %286 = math.exp %285 : vector<8x128xf32>
    %cst_88 = arith.constant 1.000000e+00 : f32
    %287 = vector.broadcast %cst_88 : f32 to vector<8x128xf32>
    %288 = arith.addf %287, %286 : vector<8x128xf32>
    %289 = arith.divf %287, %288 : vector<8x128xf32>
    %290 = vector.extract_strided_slice %277 {offsets = [0, 256], sizes = [8, 128], strides = [1, 1]} : vector<8x512xf32> to vector<8x128xf32>
    %291 = math.tanh %290 : vector<8x128xf32>
    %292 = vector.extract_strided_slice %277 {offsets = [0, 384], sizes = [8, 128], strides = [1, 1]} : vector<8x512xf32> to vector<8x128xf32>
    %293 = arith.negf %292 : vector<8x128xf32>
    %294 = math.exp %293 : vector<8x128xf32>
    %cst_89 = arith.constant 1.000000e+00 : f32
    %295 = vector.broadcast %cst_89 : f32 to vector<8x128xf32>
    %296 = arith.addf %295, %294 : vector<8x128xf32>
    %297 = arith.divf %295, %296 : vector<8x128xf32>
    %298 = arith.mulf %289, %270 : vector<8x128xf32>
    %299 = arith.mulf %283, %291 : vector<8x128xf32>
    %300 = arith.addf %298, %299 : vector<8x128xf32>
    %301 = math.tanh %300 : vector<8x128xf32>
    %302 = arith.mulf %297, %301 : vector<8x128xf32>
    %c8 = arith.constant 8 : index
    %c0_90 = arith.constant 0 : index
    %c0_91 = arith.constant 0 : index
    %303 = vector.load %arg4[%c8, %c0_90, %c0_91] : memref<15x8x128xf32, #tpu.memory_space<vmem>>, vector<1x8x128xf32>
    %304 = vector.shape_cast %303 : vector<1x8x128xf32> to vector<8x128xf32>
    %305 = vector.shape_cast %302 : vector<8x128xf32> to vector<1x8x128xf32>
    tpu.vector_store %arg4[%c8, %c0_90, %c0_91], %305 {strides = array<i32>} : memref<15x8x128xf32, #tpu.memory_space<vmem>>, vector<1x8x128xf32>,
    %cst_92 = arith.constant dense<0.000000e+00> : vector<8x512xf32>
    %306 = tpu.matmul %302, %6, %cst_92 {dimension_numbers = #tpu.dot_dimension_numbers<[1], [1], [0], [0], [0, 0, 1, 0], [], []>} : vector<8x128xf32>, vector<512x128xf32>, vector<8x512xf32> -> vector<8x512xf32>
    %307 = arith.addf %306, %9 : vector<8x512xf32>
    %308 = vector.extract_strided_slice %307 {offsets = [0, 0], sizes = [8, 128], strides = [1, 1]} : vector<8x512xf32> to vector<8x128xf32>
    %309 = arith.negf %308 : vector<8x128xf32>
    %310 = math.exp %309 : vector<8x128xf32>
    %cst_93 = arith.constant 1.000000e+00 : f32
    %311 = vector.broadcast %cst_93 : f32 to vector<8x128xf32>
    %312 = arith.addf %311, %310 : vector<8x128xf32>
    %313 = arith.divf %311, %312 : vector<8x128xf32>
    %314 = vector.extract_strided_slice %307 {offsets = [0, 128], sizes = [8, 128], strides = [1, 1]} : vector<8x512xf32> to vector<8x128xf32>
    %315 = arith.negf %314 : vector<8x128xf32>
    %316 = math.exp %315 : vector<8x128xf32>
    %cst_94 = arith.constant 1.000000e+00 : f32
    %317 = vector.broadcast %cst_94 : f32 to vector<8x128xf32>
    %318 = arith.addf %317, %316 : vector<8x128xf32>
    %319 = arith.divf %317, %318 : vector<8x128xf32>
    %320 = vector.extract_strided_slice %307 {offsets = [0, 256], sizes = [8, 128], strides = [1, 1]} : vector<8x512xf32> to vector<8x128xf32>
    %321 = math.tanh %320 : vector<8x128xf32>
    %322 = vector.extract_strided_slice %307 {offsets = [0, 384], sizes = [8, 128], strides = [1, 1]} : vector<8x512xf32> to vector<8x128xf32>
    %323 = arith.negf %322 : vector<8x128xf32>
    %324 = math.exp %323 : vector<8x128xf32>
    %cst_95 = arith.constant 1.000000e+00 : f32
    %325 = vector.broadcast %cst_95 : f32 to vector<8x128xf32>
    %326 = arith.addf %325, %324 : vector<8x128xf32>
    %327 = arith.divf %325, %326 : vector<8x128xf32>
    %328 = arith.mulf %319, %300 : vector<8x128xf32>
    %329 = arith.mulf %313, %321 : vector<8x128xf32>
    %330 = arith.addf %328, %329 : vector<8x128xf32>
    %331 = math.tanh %330 : vector<8x128xf32>
    %332 = arith.mulf %327, %331 : vector<8x128xf32>
    %c9 = arith.constant 9 : index
    %c0_96 = arith.constant 0 : index
    %c0_97 = arith.constant 0 : index
    %333 = vector.load %arg4[%c9, %c0_96, %c0_97] : memref<15x8x128xf32, #tpu.memory_space<vmem>>, vector<1x8x128xf32>
    %334 = vector.shape_cast %333 : vector<1x8x128xf32> to vector<8x128xf32>
    %335 = vector.shape_cast %332 : vector<8x128xf32> to vector<1x8x128xf32>
    tpu.vector_store %arg4[%c9, %c0_96, %c0_97], %335 {strides = array<i32>} : memref<15x8x128xf32, #tpu.memory_space<vmem>>, vector<1x8x128xf32>,
    %cst_98 = arith.constant dense<0.000000e+00> : vector<8x512xf32>
    %336 = tpu.matmul %332, %6, %cst_98 {dimension_numbers = #tpu.dot_dimension_numbers<[1], [1], [0], [0], [0, 0, 1, 0], [], []>} : vector<8x128xf32>, vector<512x128xf32>, vector<8x512xf32> -> vector<8x512xf32>
    %337 = arith.addf %336, %9 : vector<8x512xf32>
    %338 = vector.extract_strided_slice %337 {offsets = [0, 0], sizes = [8, 128], strides = [1, 1]} : vector<8x512xf32> to vector<8x128xf32>
    %339 = arith.negf %338 : vector<8x128xf32>
    %340 = math.exp %339 : vector<8x128xf32>
    %cst_99 = arith.constant 1.000000e+00 : f32
    %341 = vector.broadcast %cst_99 : f32 to vector<8x128xf32>
    %342 = arith.addf %341, %340 : vector<8x128xf32>
    %343 = arith.divf %341, %342 : vector<8x128xf32>
    %344 = vector.extract_strided_slice %337 {offsets = [0, 128], sizes = [8, 128], strides = [1, 1]} : vector<8x512xf32> to vector<8x128xf32>
    %345 = arith.negf %344 : vector<8x128xf32>
    %346 = math.exp %345 : vector<8x128xf32>
    %cst_100 = arith.constant 1.000000e+00 : f32
    %347 = vector.broadcast %cst_100 : f32 to vector<8x128xf32>
    %348 = arith.addf %347, %346 : vector<8x128xf32>
    %349 = arith.divf %347, %348 : vector<8x128xf32>
    %350 = vector.extract_strided_slice %337 {offsets = [0, 256], sizes = [8, 128], strides = [1, 1]} : vector<8x512xf32> to vector<8x128xf32>
    %351 = math.tanh %350 : vector<8x128xf32>
    %352 = vector.extract_strided_slice %337 {offsets = [0, 384], sizes = [8, 128], strides = [1, 1]} : vector<8x512xf32> to vector<8x128xf32>
    %353 = arith.negf %352 : vector<8x128xf32>
    %354 = math.exp %353 : vector<8x128xf32>
    %cst_101 = arith.constant 1.000000e+00 : f32
    %355 = vector.broadcast %cst_101 : f32 to vector<8x128xf32>
    %356 = arith.addf %355, %354 : vector<8x128xf32>
    %357 = arith.divf %355, %356 : vector<8x128xf32>
    %358 = arith.mulf %349, %330 : vector<8x128xf32>
    %359 = arith.mulf %343, %351 : vector<8x128xf32>
    %360 = arith.addf %358, %359 : vector<8x128xf32>
    %361 = math.tanh %360 : vector<8x128xf32>
    %362 = arith.mulf %357, %361 : vector<8x128xf32>
    %c10 = arith.constant 10 : index
    %c0_102 = arith.constant 0 : index
    %c0_103 = arith.constant 0 : index
    %363 = vector.load %arg4[%c10, %c0_102, %c0_103] : memref<15x8x128xf32, #tpu.memory_space<vmem>>, vector<1x8x128xf32>
    %364 = vector.shape_cast %363 : vector<1x8x128xf32> to vector<8x128xf32>
    %365 = vector.shape_cast %362 : vector<8x128xf32> to vector<1x8x128xf32>
    tpu.vector_store %arg4[%c10, %c0_102, %c0_103], %365 {strides = array<i32>} : memref<15x8x128xf32, #tpu.memory_space<vmem>>, vector<1x8x128xf32>,
    %cst_104 = arith.constant dense<0.000000e+00> : vector<8x512xf32>
    %366 = tpu.matmul %362, %6, %cst_104 {dimension_numbers = #tpu.dot_dimension_numbers<[1], [1], [0], [0], [0, 0, 1, 0], [], []>} : vector<8x128xf32>, vector<512x128xf32>, vector<8x512xf32> -> vector<8x512xf32>
    %367 = arith.addf %366, %9 : vector<8x512xf32>
    %368 = vector.extract_strided_slice %367 {offsets = [0, 0], sizes = [8, 128], strides = [1, 1]} : vector<8x512xf32> to vector<8x128xf32>
    %369 = arith.negf %368 : vector<8x128xf32>
    %370 = math.exp %369 : vector<8x128xf32>
    %cst_105 = arith.constant 1.000000e+00 : f32
    %371 = vector.broadcast %cst_105 : f32 to vector<8x128xf32>
    %372 = arith.addf %371, %370 : vector<8x128xf32>
    %373 = arith.divf %371, %372 : vector<8x128xf32>
    %374 = vector.extract_strided_slice %367 {offsets = [0, 128], sizes = [8, 128], strides = [1, 1]} : vector<8x512xf32> to vector<8x128xf32>
    %375 = arith.negf %374 : vector<8x128xf32>
    %376 = math.exp %375 : vector<8x128xf32>
    %cst_106 = arith.constant 1.000000e+00 : f32
    %377 = vector.broadcast %cst_106 : f32 to vector<8x128xf32>
    %378 = arith.addf %377, %376 : vector<8x128xf32>
    %379 = arith.divf %377, %378 : vector<8x128xf32>
    %380 = vector.extract_strided_slice %367 {offsets = [0, 256], sizes = [8, 128], strides = [1, 1]} : vector<8x512xf32> to vector<8x128xf32>
    %381 = math.tanh %380 : vector<8x128xf32>
    %382 = vector.extract_strided_slice %367 {offsets = [0, 384], sizes = [8, 128], strides = [1, 1]} : vector<8x512xf32> to vector<8x128xf32>
    %383 = arith.negf %382 : vector<8x128xf32>
    %384 = math.exp %383 : vector<8x128xf32>
    %cst_107 = arith.constant 1.000000e+00 : f32
    %385 = vector.broadcast %cst_107 : f32 to vector<8x128xf32>
    %386 = arith.addf %385, %384 : vector<8x128xf32>
    %387 = arith.divf %385, %386 : vector<8x128xf32>
    %388 = arith.mulf %379, %360 : vector<8x128xf32>
    %389 = arith.mulf %373, %381 : vector<8x128xf32>
    %390 = arith.addf %388, %389 : vector<8x128xf32>
    %391 = math.tanh %390 : vector<8x128xf32>
    %392 = arith.mulf %387, %391 : vector<8x128xf32>
    %c11 = arith.constant 11 : index
    %c0_108 = arith.constant 0 : index
    %c0_109 = arith.constant 0 : index
    %393 = vector.load %arg4[%c11, %c0_108, %c0_109] : memref<15x8x128xf32, #tpu.memory_space<vmem>>, vector<1x8x128xf32>
    %394 = vector.shape_cast %393 : vector<1x8x128xf32> to vector<8x128xf32>
    %395 = vector.shape_cast %392 : vector<8x128xf32> to vector<1x8x128xf32>
    tpu.vector_store %arg4[%c11, %c0_108, %c0_109], %395 {strides = array<i32>} : memref<15x8x128xf32, #tpu.memory_space<vmem>>, vector<1x8x128xf32>,
    %cst_110 = arith.constant dense<0.000000e+00> : vector<8x512xf32>
    %396 = tpu.matmul %392, %6, %cst_110 {dimension_numbers = #tpu.dot_dimension_numbers<[1], [1], [0], [0], [0, 0, 1, 0], [], []>} : vector<8x128xf32>, vector<512x128xf32>, vector<8x512xf32> -> vector<8x512xf32>
    %397 = arith.addf %396, %9 : vector<8x512xf32>
    %398 = vector.extract_strided_slice %397 {offsets = [0, 0], sizes = [8, 128], strides = [1, 1]} : vector<8x512xf32> to vector<8x128xf32>
    %399 = arith.negf %398 : vector<8x128xf32>
    %400 = math.exp %399 : vector<8x128xf32>
    %cst_111 = arith.constant 1.000000e+00 : f32
    %401 = vector.broadcast %cst_111 : f32 to vector<8x128xf32>
    %402 = arith.addf %401, %400 : vector<8x128xf32>
    %403 = arith.divf %401, %402 : vector<8x128xf32>
    %404 = vector.extract_strided_slice %397 {offsets = [0, 128], sizes = [8, 128], strides = [1, 1]} : vector<8x512xf32> to vector<8x128xf32>
    %405 = arith.negf %404 : vector<8x128xf32>
    %406 = math.exp %405 : vector<8x128xf32>
    %cst_112 = arith.constant 1.000000e+00 : f32
    %407 = vector.broadcast %cst_112 : f32 to vector<8x128xf32>
    %408 = arith.addf %407, %406 : vector<8x128xf32>
    %409 = arith.divf %407, %408 : vector<8x128xf32>
    %410 = vector.extract_strided_slice %397 {offsets = [0, 256], sizes = [8, 128], strides = [1, 1]} : vector<8x512xf32> to vector<8x128xf32>
    %411 = math.tanh %410 : vector<8x128xf32>
    %412 = vector.extract_strided_slice %397 {offsets = [0, 384], sizes = [8, 128], strides = [1, 1]} : vector<8x512xf32> to vector<8x128xf32>
    %413 = arith.negf %412 : vector<8x128xf32>
    %414 = math.exp %413 : vector<8x128xf32>
    %cst_113 = arith.constant 1.000000e+00 : f32
    %415 = vector.broadcast %cst_113 : f32 to vector<8x128xf32>
    %416 = arith.addf %415, %414 : vector<8x128xf32>
    %417 = arith.divf %415, %416 : vector<8x128xf32>
    %418 = arith.mulf %409, %390 : vector<8x128xf32>
    %419 = arith.mulf %403, %411 : vector<8x128xf32>
    %420 = arith.addf %418, %419 : vector<8x128xf32>
    %421 = math.tanh %420 : vector<8x128xf32>
    %422 = arith.mulf %417, %421 : vector<8x128xf32>
    %c12 = arith.constant 12 : index
    %c0_114 = arith.constant 0 : index
    %c0_115 = arith.constant 0 : index
    %423 = vector.load %arg4[%c12, %c0_114, %c0_115] : memref<15x8x128xf32, #tpu.memory_space<vmem>>, vector<1x8x128xf32>
    %424 = vector.shape_cast %423 : vector<1x8x128xf32> to vector<8x128xf32>
    %425 = vector.shape_cast %422 : vector<8x128xf32> to vector<1x8x128xf32>
    tpu.vector_store %arg4[%c12, %c0_114, %c0_115], %425 {strides = array<i32>} : memref<15x8x128xf32, #tpu.memory_space<vmem>>, vector<1x8x128xf32>,
    %cst_116 = arith.constant dense<0.000000e+00> : vector<8x512xf32>
    %426 = tpu.matmul %422, %6, %cst_116 {dimension_numbers = #tpu.dot_dimension_numbers<[1], [1], [0], [0], [0, 0, 1, 0], [], []>} : vector<8x128xf32>, vector<512x128xf32>, vector<8x512xf32> -> vector<8x512xf32>
    %427 = arith.addf %426, %9 : vector<8x512xf32>
    %428 = vector.extract_strided_slice %427 {offsets = [0, 0], sizes = [8, 128], strides = [1, 1]} : vector<8x512xf32> to vector<8x128xf32>
    %429 = arith.negf %428 : vector<8x128xf32>
    %430 = math.exp %429 : vector<8x128xf32>
    %cst_117 = arith.constant 1.000000e+00 : f32
    %431 = vector.broadcast %cst_117 : f32 to vector<8x128xf32>
    %432 = arith.addf %431, %430 : vector<8x128xf32>
    %433 = arith.divf %431, %432 : vector<8x128xf32>
    %434 = vector.extract_strided_slice %427 {offsets = [0, 128], sizes = [8, 128], strides = [1, 1]} : vector<8x512xf32> to vector<8x128xf32>
    %435 = arith.negf %434 : vector<8x128xf32>
    %436 = math.exp %435 : vector<8x128xf32>
    %cst_118 = arith.constant 1.000000e+00 : f32
    %437 = vector.broadcast %cst_118 : f32 to vector<8x128xf32>
    %438 = arith.addf %437, %436 : vector<8x128xf32>
    %439 = arith.divf %437, %438 : vector<8x128xf32>
    %440 = vector.extract_strided_slice %427 {offsets = [0, 256], sizes = [8, 128], strides = [1, 1]} : vector<8x512xf32> to vector<8x128xf32>
    %441 = math.tanh %440 : vector<8x128xf32>
    %442 = vector.extract_strided_slice %427 {offsets = [0, 384], sizes = [8, 128], strides = [1, 1]} : vector<8x512xf32> to vector<8x128xf32>
    %443 = arith.negf %442 : vector<8x128xf32>
    %444 = math.exp %443 : vector<8x128xf32>
    %cst_119 = arith.constant 1.000000e+00 : f32
    %445 = vector.broadcast %cst_119 : f32 to vector<8x128xf32>
    %446 = arith.addf %445, %444 : vector<8x128xf32>
    %447 = arith.divf %445, %446 : vector<8x128xf32>
    %448 = arith.mulf %439, %420 : vector<8x128xf32>
    %449 = arith.mulf %433, %441 : vector<8x128xf32>
    %450 = arith.addf %448, %449 : vector<8x128xf32>
    %451 = math.tanh %450 : vector<8x128xf32>
    %452 = arith.mulf %447, %451 : vector<8x128xf32>
    %c13 = arith.constant 13 : index
    %c0_120 = arith.constant 0 : index
    %c0_121 = arith.constant 0 : index
    %453 = vector.load %arg4[%c13, %c0_120, %c0_121] : memref<15x8x128xf32, #tpu.memory_space<vmem>>, vector<1x8x128xf32>
    %454 = vector.shape_cast %453 : vector<1x8x128xf32> to vector<8x128xf32>
    %455 = vector.shape_cast %452 : vector<8x128xf32> to vector<1x8x128xf32>
    tpu.vector_store %arg4[%c13, %c0_120, %c0_121], %455 {strides = array<i32>} : memref<15x8x128xf32, #tpu.memory_space<vmem>>, vector<1x8x128xf32>,
    %cst_122 = arith.constant dense<0.000000e+00> : vector<8x512xf32>
    %456 = tpu.matmul %452, %6, %cst_122 {dimension_numbers = #tpu.dot_dimension_numbers<[1], [1], [0], [0], [0, 0, 1, 0], [], []>} : vector<8x128xf32>, vector<512x128xf32>, vector<8x512xf32> -> vector<8x512xf32>
    %457 = arith.addf %456, %9 : vector<8x512xf32>
    %458 = vector.extract_strided_slice %457 {offsets = [0, 0], sizes = [8, 128], strides = [1, 1]} : vector<8x512xf32> to vector<8x128xf32>
    %459 = arith.negf %458 : vector<8x128xf32>
    %460 = math.exp %459 : vector<8x128xf32>
    %cst_123 = arith.constant 1.000000e+00 : f32
    %461 = vector.broadcast %cst_123 : f32 to vector<8x128xf32>
    %462 = arith.addf %461, %460 : vector<8x128xf32>
    %463 = arith.divf %461, %462 : vector<8x128xf32>
    %464 = vector.extract_strided_slice %457 {offsets = [0, 128], sizes = [8, 128], strides = [1, 1]} : vector<8x512xf32> to vector<8x128xf32>
    %465 = arith.negf %464 : vector<8x128xf32>
    %466 = math.exp %465 : vector<8x128xf32>
    %cst_124 = arith.constant 1.000000e+00 : f32
    %467 = vector.broadcast %cst_124 : f32 to vector<8x128xf32>
    %468 = arith.addf %467, %466 : vector<8x128xf32>
    %469 = arith.divf %467, %468 : vector<8x128xf32>
    %470 = vector.extract_strided_slice %457 {offsets = [0, 256], sizes = [8, 128], strides = [1, 1]} : vector<8x512xf32> to vector<8x128xf32>
    %471 = math.tanh %470 : vector<8x128xf32>
    %472 = vector.extract_strided_slice %457 {offsets = [0, 384], sizes = [8, 128], strides = [1, 1]} : vector<8x512xf32> to vector<8x128xf32>
    %473 = arith.negf %472 : vector<8x128xf32>
    %474 = math.exp %473 : vector<8x128xf32>
    %cst_125 = arith.constant 1.000000e+00 : f32
    %475 = vector.broadcast %cst_125 : f32 to vector<8x128xf32>
    %476 = arith.addf %475, %474 : vector<8x128xf32>
    %477 = arith.divf %475, %476 : vector<8x128xf32>
    %478 = arith.mulf %469, %450 : vector<8x128xf32>
    %479 = arith.mulf %463, %471 : vector<8x128xf32>
    %480 = arith.addf %478, %479 : vector<8x128xf32>
    %481 = math.tanh %480 : vector<8x128xf32>
    %482 = arith.mulf %477, %481 : vector<8x128xf32>
    %c14 = arith.constant 14 : index
    %c0_126 = arith.constant 0 : index
    %c0_127 = arith.constant 0 : index
    %483 = vector.load %arg4[%c14, %c0_126, %c0_127] : memref<15x8x128xf32, #tpu.memory_space<vmem>>, vector<1x8x128xf32>
    %484 = vector.shape_cast %483 : vector<1x8x128xf32> to vector<8x128xf32>
    %485 = vector.shape_cast %482 : vector<8x128xf32> to vector<1x8x128xf32>
    tpu.vector_store %arg4[%c14, %c0_126, %c0_127], %485 {strides = array<i32>} : memref<15x8x128xf32, #tpu.memory_space<vmem>>, vector<1x8x128xf32>,
    return
  }
}

module attributes {stable_mosaic.version = 11 : i64} {
  func.func @_dec_lstm_kernel(%arg0: memref<15x8x128xf32, #tpu.memory_space<vmem>>, %arg1: memref<7x8x128xf32, #tpu.memory_space<vmem>>, %arg2: memref<512x128xf32, #tpu.memory_space<vmem>>, %arg3: memref<512x128xf32, #tpu.memory_space<vmem>>, %arg4: memref<512x128xf32, #tpu.memory_space<vmem>>, %arg5: memref<1x512xf32, #tpu.memory_space<vmem>>, %arg6: memref<7x8x128xf32, #tpu.memory_space<vmem>>, %arg7: memref<15x8x512xf32, #tpu.memory_space<vmem>>) attributes {dimension_semantics = [], scalar_prefetch = 0 : i64, scratch_operands = 1 : i64, tpu.core_type = #tpu.core_type<tc>} {
    %c0 = arith.constant 0 : index
    %c0_0 = arith.constant 0 : index
    %c0_1 = arith.constant 0 : index
    %0 = vector.load %arg0[%c0, %c0_0, %c0_1] : memref<15x8x128xf32, #tpu.memory_space<vmem>>, vector<15x8x128xf32>
    %1 = vector.shape_cast %0 : vector<15x8x128xf32> to vector<120x128xf32>
    %c0_2 = arith.constant 0 : index
    %c0_3 = arith.constant 0 : index
    %2 = vector.load %arg3[%c0_2, %c0_3] : memref<512x128xf32, #tpu.memory_space<vmem>>, vector<512x128xf32>
    %cst = arith.constant dense<0.000000e+00> : vector<120x512xf32>
    %3 = tpu.matmul %1, %2, %cst {dimension_numbers = #tpu.dot_dimension_numbers<[1], [1], [0], [0], [0, 0, 1, 0], [], []>} : vector<120x128xf32>, vector<512x128xf32>, vector<120x512xf32> -> vector<120x512xf32>
    %4 = vector.shape_cast %3 : vector<120x512xf32> to vector<15x8x512xf32>
    %c0_4 = arith.constant 0 : index
    %c0_5 = arith.constant 0 : index
    %c0_6 = arith.constant 0 : index
    %5 = vector.load %arg1[%c0_4, %c0_5, %c0_6] : memref<7x8x128xf32, #tpu.memory_space<vmem>>, vector<7x8x128xf32>
    %6 = vector.shape_cast %5 : vector<7x8x128xf32> to vector<56x128xf32>
    %c0_7 = arith.constant 0 : index
    %c0_8 = arith.constant 0 : index
    %7 = vector.load %arg2[%c0_7, %c0_8] : memref<512x128xf32, #tpu.memory_space<vmem>>, vector<512x128xf32>
    %cst_9 = arith.constant dense<0.000000e+00> : vector<56x512xf32>
    %8 = tpu.matmul %6, %7, %cst_9 {dimension_numbers = #tpu.dot_dimension_numbers<[1], [1], [0], [0], [0, 0, 1, 0], [], []>} : vector<56x128xf32>, vector<512x128xf32>, vector<56x512xf32> -> vector<56x512xf32>
    %9 = vector.shape_cast %8 : vector<56x512xf32> to vector<7x8x512xf32>
    %10 = vector.extract_strided_slice %4 {offsets = [0, 0, 0], sizes = [8, 8, 512], strides = [1, 1, 1]} : vector<15x8x512xf32> to vector<8x8x512xf32>
    %c0_10 = arith.constant 0 : index
    %c0_11 = arith.constant 0 : index
    %c0_12 = arith.constant 0 : index
    %11 = vector.load %arg7[%c0_10, %c0_11, %c0_12] : memref<15x8x512xf32, #tpu.memory_space<vmem>>, vector<8x8x512xf32>
    tpu.vector_store %arg7[%c0_10, %c0_11, %c0_12], %10 {strides = array<i32>} : memref<15x8x512xf32, #tpu.memory_space<vmem>>, vector<8x8x512xf32>,
    %12 = vector.extract_strided_slice %4 {offsets = [8, 0, 0], sizes = [7, 8, 512], strides = [1, 1, 1]} : vector<15x8x512xf32> to vector<7x8x512xf32>
    %13 = arith.addf %12, %9 : vector<7x8x512xf32>
    %c8 = arith.constant 8 : index
    %c0_13 = arith.constant 0 : index
    %c0_14 = arith.constant 0 : index
    %14 = vector.load %arg7[%c8, %c0_13, %c0_14] : memref<15x8x512xf32, #tpu.memory_space<vmem>>, vector<7x8x512xf32>
    tpu.vector_store %arg7[%c8, %c0_13, %c0_14], %13 {strides = array<i32>} : memref<15x8x512xf32, #tpu.memory_space<vmem>>, vector<7x8x512xf32>,
    %c0_15 = arith.constant 0 : index
    %c0_16 = arith.constant 0 : index
    %15 = vector.load %arg4[%c0_15, %c0_16] : memref<512x128xf32, #tpu.memory_space<vmem>>, vector<512x128xf32>
    %c0_17 = arith.constant 0 : index
    %c0_18 = arith.constant 0 : index
    %16 = vector.load %arg5[%c0_17, %c0_18] : memref<1x512xf32, #tpu.memory_space<vmem>>, vector<1x512xf32>
    %17 = vector.shape_cast %16 : vector<1x512xf32> to vector<1x512xf32>
    %18 = vector.broadcast %17 : vector<1x512xf32> to vector<8x512xf32>
    %cst_19 = arith.constant 0.000000e+00 : f32
    %19 = vector.broadcast %cst_19 : f32 to vector<8x128xf32>
    %cst_20 = arith.constant 0.000000e+00 : f32
    %20 = vector.broadcast %cst_20 : f32 to vector<8x128xf32>
    %c0_21 = arith.constant 0 : index
    %c0_22 = arith.constant 0 : index
    %c0_23 = arith.constant 0 : index
    %21 = vector.load %arg7[%c0_21, %c0_22, %c0_23] : memref<15x8x512xf32, #tpu.memory_space<vmem>>, vector<1x8x512xf32>
    %22 = vector.shape_cast %21 : vector<1x8x512xf32> to vector<8x512xf32>
    %cst_24 = arith.constant dense<0.000000e+00> : vector<8x512xf32>
    %23 = tpu.matmul %19, %15, %cst_24 {dimension_numbers = #tpu.dot_dimension_numbers<[1], [1], [0], [0], [0, 0, 1, 0], [], []>} : vector<8x128xf32>, vector<512x128xf32>, vector<8x512xf32> -> vector<8x512xf32>
    %24 = arith.addf %23, %18 : vector<8x512xf32>
    %25 = arith.addf %24, %22 : vector<8x512xf32>
    %26 = vector.extract_strided_slice %25 {offsets = [0, 0], sizes = [8, 128], strides = [1, 1]} : vector<8x512xf32> to vector<8x128xf32>
    %27 = arith.negf %26 : vector<8x128xf32>
    %28 = math.exp %27 : vector<8x128xf32>
    %cst_25 = arith.constant 1.000000e+00 : f32
    %29 = vector.broadcast %cst_25 : f32 to vector<8x128xf32>
    %30 = arith.addf %29, %28 : vector<8x128xf32>
    %31 = arith.divf %29, %30 : vector<8x128xf32>
    %32 = vector.extract_strided_slice %25 {offsets = [0, 128], sizes = [8, 128], strides = [1, 1]} : vector<8x512xf32> to vector<8x128xf32>
    %33 = arith.negf %32 : vector<8x128xf32>
    %34 = math.exp %33 : vector<8x128xf32>
    %cst_26 = arith.constant 1.000000e+00 : f32
    %35 = vector.broadcast %cst_26 : f32 to vector<8x128xf32>
    %36 = arith.addf %35, %34 : vector<8x128xf32>
    %37 = arith.divf %35, %36 : vector<8x128xf32>
    %38 = vector.extract_strided_slice %25 {offsets = [0, 256], sizes = [8, 128], strides = [1, 1]} : vector<8x512xf32> to vector<8x128xf32>
    %39 = math.tanh %38 : vector<8x128xf32>
    %40 = vector.extract_strided_slice %25 {offsets = [0, 384], sizes = [8, 128], strides = [1, 1]} : vector<8x512xf32> to vector<8x128xf32>
    %41 = arith.negf %40 : vector<8x128xf32>
    %42 = math.exp %41 : vector<8x128xf32>
    %cst_27 = arith.constant 1.000000e+00 : f32
    %43 = vector.broadcast %cst_27 : f32 to vector<8x128xf32>
    %44 = arith.addf %43, %42 : vector<8x128xf32>
    %45 = arith.divf %43, %44 : vector<8x128xf32>
    %46 = arith.mulf %37, %20 : vector<8x128xf32>
    %47 = arith.mulf %31, %39 : vector<8x128xf32>
    %48 = arith.addf %46, %47 : vector<8x128xf32>
    %49 = math.tanh %48 : vector<8x128xf32>
    %50 = arith.mulf %45, %49 : vector<8x128xf32>
    %c1 = arith.constant 1 : index
    %c0_28 = arith.constant 0 : index
    %c0_29 = arith.constant 0 : index
    %51 = vector.load %arg7[%c1, %c0_28, %c0_29] : memref<15x8x512xf32, #tpu.memory_space<vmem>>, vector<1x8x512xf32>
    %52 = vector.shape_cast %51 : vector<1x8x512xf32> to vector<8x512xf32>
    %cst_30 = arith.constant dense<0.000000e+00> : vector<8x512xf32>
    %53 = tpu.matmul %50, %15, %cst_30 {dimension_numbers = #tpu.dot_dimension_numbers<[1], [1], [0], [0], [0, 0, 1, 0], [], []>} : vector<8x128xf32>, vector<512x128xf32>, vector<8x512xf32> -> vector<8x512xf32>
    %54 = arith.addf %53, %18 : vector<8x512xf32>
    %55 = arith.addf %54, %52 : vector<8x512xf32>
    %56 = vector.extract_strided_slice %55 {offsets = [0, 0], sizes = [8, 128], strides = [1, 1]} : vector<8x512xf32> to vector<8x128xf32>
    %57 = arith.negf %56 : vector<8x128xf32>
    %58 = math.exp %57 : vector<8x128xf32>
    %cst_31 = arith.constant 1.000000e+00 : f32
    %59 = vector.broadcast %cst_31 : f32 to vector<8x128xf32>
    %60 = arith.addf %59, %58 : vector<8x128xf32>
    %61 = arith.divf %59, %60 : vector<8x128xf32>
    %62 = vector.extract_strided_slice %55 {offsets = [0, 128], sizes = [8, 128], strides = [1, 1]} : vector<8x512xf32> to vector<8x128xf32>
    %63 = arith.negf %62 : vector<8x128xf32>
    %64 = math.exp %63 : vector<8x128xf32>
    %cst_32 = arith.constant 1.000000e+00 : f32
    %65 = vector.broadcast %cst_32 : f32 to vector<8x128xf32>
    %66 = arith.addf %65, %64 : vector<8x128xf32>
    %67 = arith.divf %65, %66 : vector<8x128xf32>
    %68 = vector.extract_strided_slice %55 {offsets = [0, 256], sizes = [8, 128], strides = [1, 1]} : vector<8x512xf32> to vector<8x128xf32>
    %69 = math.tanh %68 : vector<8x128xf32>
    %70 = vector.extract_strided_slice %55 {offsets = [0, 384], sizes = [8, 128], strides = [1, 1]} : vector<8x512xf32> to vector<8x128xf32>
    %71 = arith.negf %70 : vector<8x128xf32>
    %72 = math.exp %71 : vector<8x128xf32>
    %cst_33 = arith.constant 1.000000e+00 : f32
    %73 = vector.broadcast %cst_33 : f32 to vector<8x128xf32>
    %74 = arith.addf %73, %72 : vector<8x128xf32>
    %75 = arith.divf %73, %74 : vector<8x128xf32>
    %76 = arith.mulf %67, %48 : vector<8x128xf32>
    %77 = arith.mulf %61, %69 : vector<8x128xf32>
    %78 = arith.addf %76, %77 : vector<8x128xf32>
    %79 = math.tanh %78 : vector<8x128xf32>
    %80 = arith.mulf %75, %79 : vector<8x128xf32>
    %c2 = arith.constant 2 : index
    %c0_34 = arith.constant 0 : index
    %c0_35 = arith.constant 0 : index
    %81 = vector.load %arg7[%c2, %c0_34, %c0_35] : memref<15x8x512xf32, #tpu.memory_space<vmem>>, vector<1x8x512xf32>
    %82 = vector.shape_cast %81 : vector<1x8x512xf32> to vector<8x512xf32>
    %cst_36 = arith.constant dense<0.000000e+00> : vector<8x512xf32>
    %83 = tpu.matmul %80, %15, %cst_36 {dimension_numbers = #tpu.dot_dimension_numbers<[1], [1], [0], [0], [0, 0, 1, 0], [], []>} : vector<8x128xf32>, vector<512x128xf32>, vector<8x512xf32> -> vector<8x512xf32>
    %84 = arith.addf %83, %18 : vector<8x512xf32>
    %85 = arith.addf %84, %82 : vector<8x512xf32>
    %86 = vector.extract_strided_slice %85 {offsets = [0, 0], sizes = [8, 128], strides = [1, 1]} : vector<8x512xf32> to vector<8x128xf32>
    %87 = arith.negf %86 : vector<8x128xf32>
    %88 = math.exp %87 : vector<8x128xf32>
    %cst_37 = arith.constant 1.000000e+00 : f32
    %89 = vector.broadcast %cst_37 : f32 to vector<8x128xf32>
    %90 = arith.addf %89, %88 : vector<8x128xf32>
    %91 = arith.divf %89, %90 : vector<8x128xf32>
    %92 = vector.extract_strided_slice %85 {offsets = [0, 128], sizes = [8, 128], strides = [1, 1]} : vector<8x512xf32> to vector<8x128xf32>
    %93 = arith.negf %92 : vector<8x128xf32>
    %94 = math.exp %93 : vector<8x128xf32>
    %cst_38 = arith.constant 1.000000e+00 : f32
    %95 = vector.broadcast %cst_38 : f32 to vector<8x128xf32>
    %96 = arith.addf %95, %94 : vector<8x128xf32>
    %97 = arith.divf %95, %96 : vector<8x128xf32>
    %98 = vector.extract_strided_slice %85 {offsets = [0, 256], sizes = [8, 128], strides = [1, 1]} : vector<8x512xf32> to vector<8x128xf32>
    %99 = math.tanh %98 : vector<8x128xf32>
    %100 = vector.extract_strided_slice %85 {offsets = [0, 384], sizes = [8, 128], strides = [1, 1]} : vector<8x512xf32> to vector<8x128xf32>
    %101 = arith.negf %100 : vector<8x128xf32>
    %102 = math.exp %101 : vector<8x128xf32>
    %cst_39 = arith.constant 1.000000e+00 : f32
    %103 = vector.broadcast %cst_39 : f32 to vector<8x128xf32>
    %104 = arith.addf %103, %102 : vector<8x128xf32>
    %105 = arith.divf %103, %104 : vector<8x128xf32>
    %106 = arith.mulf %97, %78 : vector<8x128xf32>
    %107 = arith.mulf %91, %99 : vector<8x128xf32>
    %108 = arith.addf %106, %107 : vector<8x128xf32>
    %109 = math.tanh %108 : vector<8x128xf32>
    %110 = arith.mulf %105, %109 : vector<8x128xf32>
    %c3 = arith.constant 3 : index
    %c0_40 = arith.constant 0 : index
    %c0_41 = arith.constant 0 : index
    %111 = vector.load %arg7[%c3, %c0_40, %c0_41] : memref<15x8x512xf32, #tpu.memory_space<vmem>>, vector<1x8x512xf32>
    %112 = vector.shape_cast %111 : vector<1x8x512xf32> to vector<8x512xf32>
    %cst_42 = arith.constant dense<0.000000e+00> : vector<8x512xf32>
    %113 = tpu.matmul %110, %15, %cst_42 {dimension_numbers = #tpu.dot_dimension_numbers<[1], [1], [0], [0], [0, 0, 1, 0], [], []>} : vector<8x128xf32>, vector<512x128xf32>, vector<8x512xf32> -> vector<8x512xf32>
    %114 = arith.addf %113, %18 : vector<8x512xf32>
    %115 = arith.addf %114, %112 : vector<8x512xf32>
    %116 = vector.extract_strided_slice %115 {offsets = [0, 0], sizes = [8, 128], strides = [1, 1]} : vector<8x512xf32> to vector<8x128xf32>
    %117 = arith.negf %116 : vector<8x128xf32>
    %118 = math.exp %117 : vector<8x128xf32>
    %cst_43 = arith.constant 1.000000e+00 : f32
    %119 = vector.broadcast %cst_43 : f32 to vector<8x128xf32>
    %120 = arith.addf %119, %118 : vector<8x128xf32>
    %121 = arith.divf %119, %120 : vector<8x128xf32>
    %122 = vector.extract_strided_slice %115 {offsets = [0, 128], sizes = [8, 128], strides = [1, 1]} : vector<8x512xf32> to vector<8x128xf32>
    %123 = arith.negf %122 : vector<8x128xf32>
    %124 = math.exp %123 : vector<8x128xf32>
    %cst_44 = arith.constant 1.000000e+00 : f32
    %125 = vector.broadcast %cst_44 : f32 to vector<8x128xf32>
    %126 = arith.addf %125, %124 : vector<8x128xf32>
    %127 = arith.divf %125, %126 : vector<8x128xf32>
    %128 = vector.extract_strided_slice %115 {offsets = [0, 256], sizes = [8, 128], strides = [1, 1]} : vector<8x512xf32> to vector<8x128xf32>
    %129 = math.tanh %128 : vector<8x128xf32>
    %130 = vector.extract_strided_slice %115 {offsets = [0, 384], sizes = [8, 128], strides = [1, 1]} : vector<8x512xf32> to vector<8x128xf32>
    %131 = arith.negf %130 : vector<8x128xf32>
    %132 = math.exp %131 : vector<8x128xf32>
    %cst_45 = arith.constant 1.000000e+00 : f32
    %133 = vector.broadcast %cst_45 : f32 to vector<8x128xf32>
    %134 = arith.addf %133, %132 : vector<8x128xf32>
    %135 = arith.divf %133, %134 : vector<8x128xf32>
    %136 = arith.mulf %127, %108 : vector<8x128xf32>
    %137 = arith.mulf %121, %129 : vector<8x128xf32>
    %138 = arith.addf %136, %137 : vector<8x128xf32>
    %139 = math.tanh %138 : vector<8x128xf32>
    %140 = arith.mulf %135, %139 : vector<8x128xf32>
    %c4 = arith.constant 4 : index
    %c0_46 = arith.constant 0 : index
    %c0_47 = arith.constant 0 : index
    %141 = vector.load %arg7[%c4, %c0_46, %c0_47] : memref<15x8x512xf32, #tpu.memory_space<vmem>>, vector<1x8x512xf32>
    %142 = vector.shape_cast %141 : vector<1x8x512xf32> to vector<8x512xf32>
    %cst_48 = arith.constant dense<0.000000e+00> : vector<8x512xf32>
    %143 = tpu.matmul %140, %15, %cst_48 {dimension_numbers = #tpu.dot_dimension_numbers<[1], [1], [0], [0], [0, 0, 1, 0], [], []>} : vector<8x128xf32>, vector<512x128xf32>, vector<8x512xf32> -> vector<8x512xf32>
    %144 = arith.addf %143, %18 : vector<8x512xf32>
    %145 = arith.addf %144, %142 : vector<8x512xf32>
    %146 = vector.extract_strided_slice %145 {offsets = [0, 0], sizes = [8, 128], strides = [1, 1]} : vector<8x512xf32> to vector<8x128xf32>
    %147 = arith.negf %146 : vector<8x128xf32>
    %148 = math.exp %147 : vector<8x128xf32>
    %cst_49 = arith.constant 1.000000e+00 : f32
    %149 = vector.broadcast %cst_49 : f32 to vector<8x128xf32>
    %150 = arith.addf %149, %148 : vector<8x128xf32>
    %151 = arith.divf %149, %150 : vector<8x128xf32>
    %152 = vector.extract_strided_slice %145 {offsets = [0, 128], sizes = [8, 128], strides = [1, 1]} : vector<8x512xf32> to vector<8x128xf32>
    %153 = arith.negf %152 : vector<8x128xf32>
    %154 = math.exp %153 : vector<8x128xf32>
    %cst_50 = arith.constant 1.000000e+00 : f32
    %155 = vector.broadcast %cst_50 : f32 to vector<8x128xf32>
    %156 = arith.addf %155, %154 : vector<8x128xf32>
    %157 = arith.divf %155, %156 : vector<8x128xf32>
    %158 = vector.extract_strided_slice %145 {offsets = [0, 256], sizes = [8, 128], strides = [1, 1]} : vector<8x512xf32> to vector<8x128xf32>
    %159 = math.tanh %158 : vector<8x128xf32>
    %160 = vector.extract_strided_slice %145 {offsets = [0, 384], sizes = [8, 128], strides = [1, 1]} : vector<8x512xf32> to vector<8x128xf32>
    %161 = arith.negf %160 : vector<8x128xf32>
    %162 = math.exp %161 : vector<8x128xf32>
    %cst_51 = arith.constant 1.000000e+00 : f32
    %163 = vector.broadcast %cst_51 : f32 to vector<8x128xf32>
    %164 = arith.addf %163, %162 : vector<8x128xf32>
    %165 = arith.divf %163, %164 : vector<8x128xf32>
    %166 = arith.mulf %157, %138 : vector<8x128xf32>
    %167 = arith.mulf %151, %159 : vector<8x128xf32>
    %168 = arith.addf %166, %167 : vector<8x128xf32>
    %169 = math.tanh %168 : vector<8x128xf32>
    %170 = arith.mulf %165, %169 : vector<8x128xf32>
    %c5 = arith.constant 5 : index
    %c0_52 = arith.constant 0 : index
    %c0_53 = arith.constant 0 : index
    %171 = vector.load %arg7[%c5, %c0_52, %c0_53] : memref<15x8x512xf32, #tpu.memory_space<vmem>>, vector<1x8x512xf32>
    %172 = vector.shape_cast %171 : vector<1x8x512xf32> to vector<8x512xf32>
    %cst_54 = arith.constant dense<0.000000e+00> : vector<8x512xf32>
    %173 = tpu.matmul %170, %15, %cst_54 {dimension_numbers = #tpu.dot_dimension_numbers<[1], [1], [0], [0], [0, 0, 1, 0], [], []>} : vector<8x128xf32>, vector<512x128xf32>, vector<8x512xf32> -> vector<8x512xf32>
    %174 = arith.addf %173, %18 : vector<8x512xf32>
    %175 = arith.addf %174, %172 : vector<8x512xf32>
    %176 = vector.extract_strided_slice %175 {offsets = [0, 0], sizes = [8, 128], strides = [1, 1]} : vector<8x512xf32> to vector<8x128xf32>
    %177 = arith.negf %176 : vector<8x128xf32>
    %178 = math.exp %177 : vector<8x128xf32>
    %cst_55 = arith.constant 1.000000e+00 : f32
    %179 = vector.broadcast %cst_55 : f32 to vector<8x128xf32>
    %180 = arith.addf %179, %178 : vector<8x128xf32>
    %181 = arith.divf %179, %180 : vector<8x128xf32>
    %182 = vector.extract_strided_slice %175 {offsets = [0, 128], sizes = [8, 128], strides = [1, 1]} : vector<8x512xf32> to vector<8x128xf32>
    %183 = arith.negf %182 : vector<8x128xf32>
    %184 = math.exp %183 : vector<8x128xf32>
    %cst_56 = arith.constant 1.000000e+00 : f32
    %185 = vector.broadcast %cst_56 : f32 to vector<8x128xf32>
    %186 = arith.addf %185, %184 : vector<8x128xf32>
    %187 = arith.divf %185, %186 : vector<8x128xf32>
    %188 = vector.extract_strided_slice %175 {offsets = [0, 256], sizes = [8, 128], strides = [1, 1]} : vector<8x512xf32> to vector<8x128xf32>
    %189 = math.tanh %188 : vector<8x128xf32>
    %190 = vector.extract_strided_slice %175 {offsets = [0, 384], sizes = [8, 128], strides = [1, 1]} : vector<8x512xf32> to vector<8x128xf32>
    %191 = arith.negf %190 : vector<8x128xf32>
    %192 = math.exp %191 : vector<8x128xf32>
    %cst_57 = arith.constant 1.000000e+00 : f32
    %193 = vector.broadcast %cst_57 : f32 to vector<8x128xf32>
    %194 = arith.addf %193, %192 : vector<8x128xf32>
    %195 = arith.divf %193, %194 : vector<8x128xf32>
    %196 = arith.mulf %187, %168 : vector<8x128xf32>
    %197 = arith.mulf %181, %189 : vector<8x128xf32>
    %198 = arith.addf %196, %197 : vector<8x128xf32>
    %199 = math.tanh %198 : vector<8x128xf32>
    %200 = arith.mulf %195, %199 : vector<8x128xf32>
    %c6 = arith.constant 6 : index
    %c0_58 = arith.constant 0 : index
    %c0_59 = arith.constant 0 : index
    %201 = vector.load %arg7[%c6, %c0_58, %c0_59] : memref<15x8x512xf32, #tpu.memory_space<vmem>>, vector<1x8x512xf32>
    %202 = vector.shape_cast %201 : vector<1x8x512xf32> to vector<8x512xf32>
    %cst_60 = arith.constant dense<0.000000e+00> : vector<8x512xf32>
    %203 = tpu.matmul %200, %15, %cst_60 {dimension_numbers = #tpu.dot_dimension_numbers<[1], [1], [0], [0], [0, 0, 1, 0], [], []>} : vector<8x128xf32>, vector<512x128xf32>, vector<8x512xf32> -> vector<8x512xf32>
    %204 = arith.addf %203, %18 : vector<8x512xf32>
    %205 = arith.addf %204, %202 : vector<8x512xf32>
    %206 = vector.extract_strided_slice %205 {offsets = [0, 0], sizes = [8, 128], strides = [1, 1]} : vector<8x512xf32> to vector<8x128xf32>
    %207 = arith.negf %206 : vector<8x128xf32>
    %208 = math.exp %207 : vector<8x128xf32>
    %cst_61 = arith.constant 1.000000e+00 : f32
    %209 = vector.broadcast %cst_61 : f32 to vector<8x128xf32>
    %210 = arith.addf %209, %208 : vector<8x128xf32>
    %211 = arith.divf %209, %210 : vector<8x128xf32>
    %212 = vector.extract_strided_slice %205 {offsets = [0, 128], sizes = [8, 128], strides = [1, 1]} : vector<8x512xf32> to vector<8x128xf32>
    %213 = arith.negf %212 : vector<8x128xf32>
    %214 = math.exp %213 : vector<8x128xf32>
    %cst_62 = arith.constant 1.000000e+00 : f32
    %215 = vector.broadcast %cst_62 : f32 to vector<8x128xf32>
    %216 = arith.addf %215, %214 : vector<8x128xf32>
    %217 = arith.divf %215, %216 : vector<8x128xf32>
    %218 = vector.extract_strided_slice %205 {offsets = [0, 256], sizes = [8, 128], strides = [1, 1]} : vector<8x512xf32> to vector<8x128xf32>
    %219 = math.tanh %218 : vector<8x128xf32>
    %220 = vector.extract_strided_slice %205 {offsets = [0, 384], sizes = [8, 128], strides = [1, 1]} : vector<8x512xf32> to vector<8x128xf32>
    %221 = arith.negf %220 : vector<8x128xf32>
    %222 = math.exp %221 : vector<8x128xf32>
    %cst_63 = arith.constant 1.000000e+00 : f32
    %223 = vector.broadcast %cst_63 : f32 to vector<8x128xf32>
    %224 = arith.addf %223, %222 : vector<8x128xf32>
    %225 = arith.divf %223, %224 : vector<8x128xf32>
    %226 = arith.mulf %217, %198 : vector<8x128xf32>
    %227 = arith.mulf %211, %219 : vector<8x128xf32>
    %228 = arith.addf %226, %227 : vector<8x128xf32>
    %229 = math.tanh %228 : vector<8x128xf32>
    %230 = arith.mulf %225, %229 : vector<8x128xf32>
    %c7 = arith.constant 7 : index
    %c0_64 = arith.constant 0 : index
    %c0_65 = arith.constant 0 : index
    %231 = vector.load %arg7[%c7, %c0_64, %c0_65] : memref<15x8x512xf32, #tpu.memory_space<vmem>>, vector<1x8x512xf32>
    %232 = vector.shape_cast %231 : vector<1x8x512xf32> to vector<8x512xf32>
    %cst_66 = arith.constant dense<0.000000e+00> : vector<8x512xf32>
    %233 = tpu.matmul %230, %15, %cst_66 {dimension_numbers = #tpu.dot_dimension_numbers<[1], [1], [0], [0], [0, 0, 1, 0], [], []>} : vector<8x128xf32>, vector<512x128xf32>, vector<8x512xf32> -> vector<8x512xf32>
    %234 = arith.addf %233, %18 : vector<8x512xf32>
    %235 = arith.addf %234, %232 : vector<8x512xf32>
    %236 = vector.extract_strided_slice %235 {offsets = [0, 0], sizes = [8, 128], strides = [1, 1]} : vector<8x512xf32> to vector<8x128xf32>
    %237 = arith.negf %236 : vector<8x128xf32>
    %238 = math.exp %237 : vector<8x128xf32>
    %cst_67 = arith.constant 1.000000e+00 : f32
    %239 = vector.broadcast %cst_67 : f32 to vector<8x128xf32>
    %240 = arith.addf %239, %238 : vector<8x128xf32>
    %241 = arith.divf %239, %240 : vector<8x128xf32>
    %242 = vector.extract_strided_slice %235 {offsets = [0, 128], sizes = [8, 128], strides = [1, 1]} : vector<8x512xf32> to vector<8x128xf32>
    %243 = arith.negf %242 : vector<8x128xf32>
    %244 = math.exp %243 : vector<8x128xf32>
    %cst_68 = arith.constant 1.000000e+00 : f32
    %245 = vector.broadcast %cst_68 : f32 to vector<8x128xf32>
    %246 = arith.addf %245, %244 : vector<8x128xf32>
    %247 = arith.divf %245, %246 : vector<8x128xf32>
    %248 = vector.extract_strided_slice %235 {offsets = [0, 256], sizes = [8, 128], strides = [1, 1]} : vector<8x512xf32> to vector<8x128xf32>
    %249 = math.tanh %248 : vector<8x128xf32>
    %250 = vector.extract_strided_slice %235 {offsets = [0, 384], sizes = [8, 128], strides = [1, 1]} : vector<8x512xf32> to vector<8x128xf32>
    %251 = arith.negf %250 : vector<8x128xf32>
    %252 = math.exp %251 : vector<8x128xf32>
    %cst_69 = arith.constant 1.000000e+00 : f32
    %253 = vector.broadcast %cst_69 : f32 to vector<8x128xf32>
    %254 = arith.addf %253, %252 : vector<8x128xf32>
    %255 = arith.divf %253, %254 : vector<8x128xf32>
    %256 = arith.mulf %247, %228 : vector<8x128xf32>
    %257 = arith.mulf %241, %249 : vector<8x128xf32>
    %258 = arith.addf %256, %257 : vector<8x128xf32>
    %259 = math.tanh %258 : vector<8x128xf32>
    %260 = arith.mulf %255, %259 : vector<8x128xf32>
    %c8_70 = arith.constant 8 : index
    %c0_71 = arith.constant 0 : index
    %c0_72 = arith.constant 0 : index
    %261 = vector.load %arg7[%c8_70, %c0_71, %c0_72] : memref<15x8x512xf32, #tpu.memory_space<vmem>>, vector<1x8x512xf32>
    %262 = vector.shape_cast %261 : vector<1x8x512xf32> to vector<8x512xf32>
    %cst_73 = arith.constant dense<0.000000e+00> : vector<8x512xf32>
    %263 = tpu.matmul %260, %15, %cst_73 {dimension_numbers = #tpu.dot_dimension_numbers<[1], [1], [0], [0], [0, 0, 1, 0], [], []>} : vector<8x128xf32>, vector<512x128xf32>, vector<8x512xf32> -> vector<8x512xf32>
    %264 = arith.addf %263, %18 : vector<8x512xf32>
    %265 = arith.addf %264, %262 : vector<8x512xf32>
    %266 = vector.extract_strided_slice %265 {offsets = [0, 0], sizes = [8, 128], strides = [1, 1]} : vector<8x512xf32> to vector<8x128xf32>
    %267 = arith.negf %266 : vector<8x128xf32>
    %268 = math.exp %267 : vector<8x128xf32>
    %cst_74 = arith.constant 1.000000e+00 : f32
    %269 = vector.broadcast %cst_74 : f32 to vector<8x128xf32>
    %270 = arith.addf %269, %268 : vector<8x128xf32>
    %271 = arith.divf %269, %270 : vector<8x128xf32>
    %272 = vector.extract_strided_slice %265 {offsets = [0, 128], sizes = [8, 128], strides = [1, 1]} : vector<8x512xf32> to vector<8x128xf32>
    %273 = arith.negf %272 : vector<8x128xf32>
    %274 = math.exp %273 : vector<8x128xf32>
    %cst_75 = arith.constant 1.000000e+00 : f32
    %275 = vector.broadcast %cst_75 : f32 to vector<8x128xf32>
    %276 = arith.addf %275, %274 : vector<8x128xf32>
    %277 = arith.divf %275, %276 : vector<8x128xf32>
    %278 = vector.extract_strided_slice %265 {offsets = [0, 256], sizes = [8, 128], strides = [1, 1]} : vector<8x512xf32> to vector<8x128xf32>
    %279 = math.tanh %278 : vector<8x128xf32>
    %280 = vector.extract_strided_slice %265 {offsets = [0, 384], sizes = [8, 128], strides = [1, 1]} : vector<8x512xf32> to vector<8x128xf32>
    %281 = arith.negf %280 : vector<8x128xf32>
    %282 = math.exp %281 : vector<8x128xf32>
    %cst_76 = arith.constant 1.000000e+00 : f32
    %283 = vector.broadcast %cst_76 : f32 to vector<8x128xf32>
    %284 = arith.addf %283, %282 : vector<8x128xf32>
    %285 = arith.divf %283, %284 : vector<8x128xf32>
    %286 = arith.mulf %277, %258 : vector<8x128xf32>
    %287 = arith.mulf %271, %279 : vector<8x128xf32>
    %288 = arith.addf %286, %287 : vector<8x128xf32>
    %289 = math.tanh %288 : vector<8x128xf32>
    %290 = arith.mulf %285, %289 : vector<8x128xf32>
    %c0_77 = arith.constant 0 : index
    %c0_78 = arith.constant 0 : index
    %c0_79 = arith.constant 0 : index
    %291 = vector.load %arg6[%c0_77, %c0_78, %c0_79] : memref<7x8x128xf32, #tpu.memory_space<vmem>>, vector<1x8x128xf32>
    %292 = vector.shape_cast %291 : vector<1x8x128xf32> to vector<8x128xf32>
    %293 = vector.shape_cast %290 : vector<8x128xf32> to vector<1x8x128xf32>
    tpu.vector_store %arg6[%c0_77, %c0_78, %c0_79], %293 {strides = array<i32>} : memref<7x8x128xf32, #tpu.memory_space<vmem>>, vector<1x8x128xf32>,
    %c9 = arith.constant 9 : index
    %c0_80 = arith.constant 0 : index
    %c0_81 = arith.constant 0 : index
    %294 = vector.load %arg7[%c9, %c0_80, %c0_81] : memref<15x8x512xf32, #tpu.memory_space<vmem>>, vector<1x8x512xf32>
    %295 = vector.shape_cast %294 : vector<1x8x512xf32> to vector<8x512xf32>
    %cst_82 = arith.constant dense<0.000000e+00> : vector<8x512xf32>
    %296 = tpu.matmul %290, %15, %cst_82 {dimension_numbers = #tpu.dot_dimension_numbers<[1], [1], [0], [0], [0, 0, 1, 0], [], []>} : vector<8x128xf32>, vector<512x128xf32>, vector<8x512xf32> -> vector<8x512xf32>
    %297 = arith.addf %296, %18 : vector<8x512xf32>
    %298 = arith.addf %297, %295 : vector<8x512xf32>
    %299 = vector.extract_strided_slice %298 {offsets = [0, 0], sizes = [8, 128], strides = [1, 1]} : vector<8x512xf32> to vector<8x128xf32>
    %300 = arith.negf %299 : vector<8x128xf32>
    %301 = math.exp %300 : vector<8x128xf32>
    %cst_83 = arith.constant 1.000000e+00 : f32
    %302 = vector.broadcast %cst_83 : f32 to vector<8x128xf32>
    %303 = arith.addf %302, %301 : vector<8x128xf32>
    %304 = arith.divf %302, %303 : vector<8x128xf32>
    %305 = vector.extract_strided_slice %298 {offsets = [0, 128], sizes = [8, 128], strides = [1, 1]} : vector<8x512xf32> to vector<8x128xf32>
    %306 = arith.negf %305 : vector<8x128xf32>
    %307 = math.exp %306 : vector<8x128xf32>
    %cst_84 = arith.constant 1.000000e+00 : f32
    %308 = vector.broadcast %cst_84 : f32 to vector<8x128xf32>
    %309 = arith.addf %308, %307 : vector<8x128xf32>
    %310 = arith.divf %308, %309 : vector<8x128xf32>
    %311 = vector.extract_strided_slice %298 {offsets = [0, 256], sizes = [8, 128], strides = [1, 1]} : vector<8x512xf32> to vector<8x128xf32>
    %312 = math.tanh %311 : vector<8x128xf32>
    %313 = vector.extract_strided_slice %298 {offsets = [0, 384], sizes = [8, 128], strides = [1, 1]} : vector<8x512xf32> to vector<8x128xf32>
    %314 = arith.negf %313 : vector<8x128xf32>
    %315 = math.exp %314 : vector<8x128xf32>
    %cst_85 = arith.constant 1.000000e+00 : f32
    %316 = vector.broadcast %cst_85 : f32 to vector<8x128xf32>
    %317 = arith.addf %316, %315 : vector<8x128xf32>
    %318 = arith.divf %316, %317 : vector<8x128xf32>
    %319 = arith.mulf %310, %288 : vector<8x128xf32>
    %320 = arith.mulf %304, %312 : vector<8x128xf32>
    %321 = arith.addf %319, %320 : vector<8x128xf32>
    %322 = math.tanh %321 : vector<8x128xf32>
    %323 = arith.mulf %318, %322 : vector<8x128xf32>
    %c1_86 = arith.constant 1 : index
    %c0_87 = arith.constant 0 : index
    %c0_88 = arith.constant 0 : index
    %324 = vector.load %arg6[%c1_86, %c0_87, %c0_88] : memref<7x8x128xf32, #tpu.memory_space<vmem>>, vector<1x8x128xf32>
    %325 = vector.shape_cast %324 : vector<1x8x128xf32> to vector<8x128xf32>
    %326 = vector.shape_cast %323 : vector<8x128xf32> to vector<1x8x128xf32>
    tpu.vector_store %arg6[%c1_86, %c0_87, %c0_88], %326 {strides = array<i32>} : memref<7x8x128xf32, #tpu.memory_space<vmem>>, vector<1x8x128xf32>,
    %c10 = arith.constant 10 : index
    %c0_89 = arith.constant 0 : index
    %c0_90 = arith.constant 0 : index
    %327 = vector.load %arg7[%c10, %c0_89, %c0_90] : memref<15x8x512xf32, #tpu.memory_space<vmem>>, vector<1x8x512xf32>
    %328 = vector.shape_cast %327 : vector<1x8x512xf32> to vector<8x512xf32>
    %cst_91 = arith.constant dense<0.000000e+00> : vector<8x512xf32>
    %329 = tpu.matmul %323, %15, %cst_91 {dimension_numbers = #tpu.dot_dimension_numbers<[1], [1], [0], [0], [0, 0, 1, 0], [], []>} : vector<8x128xf32>, vector<512x128xf32>, vector<8x512xf32> -> vector<8x512xf32>
    %330 = arith.addf %329, %18 : vector<8x512xf32>
    %331 = arith.addf %330, %328 : vector<8x512xf32>
    %332 = vector.extract_strided_slice %331 {offsets = [0, 0], sizes = [8, 128], strides = [1, 1]} : vector<8x512xf32> to vector<8x128xf32>
    %333 = arith.negf %332 : vector<8x128xf32>
    %334 = math.exp %333 : vector<8x128xf32>
    %cst_92 = arith.constant 1.000000e+00 : f32
    %335 = vector.broadcast %cst_92 : f32 to vector<8x128xf32>
    %336 = arith.addf %335, %334 : vector<8x128xf32>
    %337 = arith.divf %335, %336 : vector<8x128xf32>
    %338 = vector.extract_strided_slice %331 {offsets = [0, 128], sizes = [8, 128], strides = [1, 1]} : vector<8x512xf32> to vector<8x128xf32>
    %339 = arith.negf %338 : vector<8x128xf32>
    %340 = math.exp %339 : vector<8x128xf32>
    %cst_93 = arith.constant 1.000000e+00 : f32
    %341 = vector.broadcast %cst_93 : f32 to vector<8x128xf32>
    %342 = arith.addf %341, %340 : vector<8x128xf32>
    %343 = arith.divf %341, %342 : vector<8x128xf32>
    %344 = vector.extract_strided_slice %331 {offsets = [0, 256], sizes = [8, 128], strides = [1, 1]} : vector<8x512xf32> to vector<8x128xf32>
    %345 = math.tanh %344 : vector<8x128xf32>
    %346 = vector.extract_strided_slice %331 {offsets = [0, 384], sizes = [8, 128], strides = [1, 1]} : vector<8x512xf32> to vector<8x128xf32>
    %347 = arith.negf %346 : vector<8x128xf32>
    %348 = math.exp %347 : vector<8x128xf32>
    %cst_94 = arith.constant 1.000000e+00 : f32
    %349 = vector.broadcast %cst_94 : f32 to vector<8x128xf32>
    %350 = arith.addf %349, %348 : vector<8x128xf32>
    %351 = arith.divf %349, %350 : vector<8x128xf32>
    %352 = arith.mulf %343, %321 : vector<8x128xf32>
    %353 = arith.mulf %337, %345 : vector<8x128xf32>
    %354 = arith.addf %352, %353 : vector<8x128xf32>
    %355 = math.tanh %354 : vector<8x128xf32>
    %356 = arith.mulf %351, %355 : vector<8x128xf32>
    %c2_95 = arith.constant 2 : index
    %c0_96 = arith.constant 0 : index
    %c0_97 = arith.constant 0 : index
    %357 = vector.load %arg6[%c2_95, %c0_96, %c0_97] : memref<7x8x128xf32, #tpu.memory_space<vmem>>, vector<1x8x128xf32>
    %358 = vector.shape_cast %357 : vector<1x8x128xf32> to vector<8x128xf32>
    %359 = vector.shape_cast %356 : vector<8x128xf32> to vector<1x8x128xf32>
    tpu.vector_store %arg6[%c2_95, %c0_96, %c0_97], %359 {strides = array<i32>} : memref<7x8x128xf32, #tpu.memory_space<vmem>>, vector<1x8x128xf32>,
    %c11 = arith.constant 11 : index
    %c0_98 = arith.constant 0 : index
    %c0_99 = arith.constant 0 : index
    %360 = vector.load %arg7[%c11, %c0_98, %c0_99] : memref<15x8x512xf32, #tpu.memory_space<vmem>>, vector<1x8x512xf32>
    %361 = vector.shape_cast %360 : vector<1x8x512xf32> to vector<8x512xf32>
    %cst_100 = arith.constant dense<0.000000e+00> : vector<8x512xf32>
    %362 = tpu.matmul %356, %15, %cst_100 {dimension_numbers = #tpu.dot_dimension_numbers<[1], [1], [0], [0], [0, 0, 1, 0], [], []>} : vector<8x128xf32>, vector<512x128xf32>, vector<8x512xf32> -> vector<8x512xf32>
    %363 = arith.addf %362, %18 : vector<8x512xf32>
    %364 = arith.addf %363, %361 : vector<8x512xf32>
    %365 = vector.extract_strided_slice %364 {offsets = [0, 0], sizes = [8, 128], strides = [1, 1]} : vector<8x512xf32> to vector<8x128xf32>
    %366 = arith.negf %365 : vector<8x128xf32>
    %367 = math.exp %366 : vector<8x128xf32>
    %cst_101 = arith.constant 1.000000e+00 : f32
    %368 = vector.broadcast %cst_101 : f32 to vector<8x128xf32>
    %369 = arith.addf %368, %367 : vector<8x128xf32>
    %370 = arith.divf %368, %369 : vector<8x128xf32>
    %371 = vector.extract_strided_slice %364 {offsets = [0, 128], sizes = [8, 128], strides = [1, 1]} : vector<8x512xf32> to vector<8x128xf32>
    %372 = arith.negf %371 : vector<8x128xf32>
    %373 = math.exp %372 : vector<8x128xf32>
    %cst_102 = arith.constant 1.000000e+00 : f32
    %374 = vector.broadcast %cst_102 : f32 to vector<8x128xf32>
    %375 = arith.addf %374, %373 : vector<8x128xf32>
    %376 = arith.divf %374, %375 : vector<8x128xf32>
    %377 = vector.extract_strided_slice %364 {offsets = [0, 256], sizes = [8, 128], strides = [1, 1]} : vector<8x512xf32> to vector<8x128xf32>
    %378 = math.tanh %377 : vector<8x128xf32>
    %379 = vector.extract_strided_slice %364 {offsets = [0, 384], sizes = [8, 128], strides = [1, 1]} : vector<8x512xf32> to vector<8x128xf32>
    %380 = arith.negf %379 : vector<8x128xf32>
    %381 = math.exp %380 : vector<8x128xf32>
    %cst_103 = arith.constant 1.000000e+00 : f32
    %382 = vector.broadcast %cst_103 : f32 to vector<8x128xf32>
    %383 = arith.addf %382, %381 : vector<8x128xf32>
    %384 = arith.divf %382, %383 : vector<8x128xf32>
    %385 = arith.mulf %376, %354 : vector<8x128xf32>
    %386 = arith.mulf %370, %378 : vector<8x128xf32>
    %387 = arith.addf %385, %386 : vector<8x128xf32>
    %388 = math.tanh %387 : vector<8x128xf32>
    %389 = arith.mulf %384, %388 : vector<8x128xf32>
    %c3_104 = arith.constant 3 : index
    %c0_105 = arith.constant 0 : index
    %c0_106 = arith.constant 0 : index
    %390 = vector.load %arg6[%c3_104, %c0_105, %c0_106] : memref<7x8x128xf32, #tpu.memory_space<vmem>>, vector<1x8x128xf32>
    %391 = vector.shape_cast %390 : vector<1x8x128xf32> to vector<8x128xf32>
    %392 = vector.shape_cast %389 : vector<8x128xf32> to vector<1x8x128xf32>
    tpu.vector_store %arg6[%c3_104, %c0_105, %c0_106], %392 {strides = array<i32>} : memref<7x8x128xf32, #tpu.memory_space<vmem>>, vector<1x8x128xf32>,
    %c12 = arith.constant 12 : index
    %c0_107 = arith.constant 0 : index
    %c0_108 = arith.constant 0 : index
    %393 = vector.load %arg7[%c12, %c0_107, %c0_108] : memref<15x8x512xf32, #tpu.memory_space<vmem>>, vector<1x8x512xf32>
    %394 = vector.shape_cast %393 : vector<1x8x512xf32> to vector<8x512xf32>
    %cst_109 = arith.constant dense<0.000000e+00> : vector<8x512xf32>
    %395 = tpu.matmul %389, %15, %cst_109 {dimension_numbers = #tpu.dot_dimension_numbers<[1], [1], [0], [0], [0, 0, 1, 0], [], []>} : vector<8x128xf32>, vector<512x128xf32>, vector<8x512xf32> -> vector<8x512xf32>
    %396 = arith.addf %395, %18 : vector<8x512xf32>
    %397 = arith.addf %396, %394 : vector<8x512xf32>
    %398 = vector.extract_strided_slice %397 {offsets = [0, 0], sizes = [8, 128], strides = [1, 1]} : vector<8x512xf32> to vector<8x128xf32>
    %399 = arith.negf %398 : vector<8x128xf32>
    %400 = math.exp %399 : vector<8x128xf32>
    %cst_110 = arith.constant 1.000000e+00 : f32
    %401 = vector.broadcast %cst_110 : f32 to vector<8x128xf32>
    %402 = arith.addf %401, %400 : vector<8x128xf32>
    %403 = arith.divf %401, %402 : vector<8x128xf32>
    %404 = vector.extract_strided_slice %397 {offsets = [0, 128], sizes = [8, 128], strides = [1, 1]} : vector<8x512xf32> to vector<8x128xf32>
    %405 = arith.negf %404 : vector<8x128xf32>
    %406 = math.exp %405 : vector<8x128xf32>
    %cst_111 = arith.constant 1.000000e+00 : f32
    %407 = vector.broadcast %cst_111 : f32 to vector<8x128xf32>
    %408 = arith.addf %407, %406 : vector<8x128xf32>
    %409 = arith.divf %407, %408 : vector<8x128xf32>
    %410 = vector.extract_strided_slice %397 {offsets = [0, 256], sizes = [8, 128], strides = [1, 1]} : vector<8x512xf32> to vector<8x128xf32>
    %411 = math.tanh %410 : vector<8x128xf32>
    %412 = vector.extract_strided_slice %397 {offsets = [0, 384], sizes = [8, 128], strides = [1, 1]} : vector<8x512xf32> to vector<8x128xf32>
    %413 = arith.negf %412 : vector<8x128xf32>
    %414 = math.exp %413 : vector<8x128xf32>
    %cst_112 = arith.constant 1.000000e+00 : f32
    %415 = vector.broadcast %cst_112 : f32 to vector<8x128xf32>
    %416 = arith.addf %415, %414 : vector<8x128xf32>
    %417 = arith.divf %415, %416 : vector<8x128xf32>
    %418 = arith.mulf %409, %387 : vector<8x128xf32>
    %419 = arith.mulf %403, %411 : vector<8x128xf32>
    %420 = arith.addf %418, %419 : vector<8x128xf32>
    %421 = math.tanh %420 : vector<8x128xf32>
    %422 = arith.mulf %417, %421 : vector<8x128xf32>
    %c4_113 = arith.constant 4 : index
    %c0_114 = arith.constant 0 : index
    %c0_115 = arith.constant 0 : index
    %423 = vector.load %arg6[%c4_113, %c0_114, %c0_115] : memref<7x8x128xf32, #tpu.memory_space<vmem>>, vector<1x8x128xf32>
    %424 = vector.shape_cast %423 : vector<1x8x128xf32> to vector<8x128xf32>
    %425 = vector.shape_cast %422 : vector<8x128xf32> to vector<1x8x128xf32>
    tpu.vector_store %arg6[%c4_113, %c0_114, %c0_115], %425 {strides = array<i32>} : memref<7x8x128xf32, #tpu.memory_space<vmem>>, vector<1x8x128xf32>,
    %c13 = arith.constant 13 : index
    %c0_116 = arith.constant 0 : index
    %c0_117 = arith.constant 0 : index
    %426 = vector.load %arg7[%c13, %c0_116, %c0_117] : memref<15x8x512xf32, #tpu.memory_space<vmem>>, vector<1x8x512xf32>
    %427 = vector.shape_cast %426 : vector<1x8x512xf32> to vector<8x512xf32>
    %cst_118 = arith.constant dense<0.000000e+00> : vector<8x512xf32>
    %428 = tpu.matmul %422, %15, %cst_118 {dimension_numbers = #tpu.dot_dimension_numbers<[1], [1], [0], [0], [0, 0, 1, 0], [], []>} : vector<8x128xf32>, vector<512x128xf32>, vector<8x512xf32> -> vector<8x512xf32>
    %429 = arith.addf %428, %18 : vector<8x512xf32>
    %430 = arith.addf %429, %427 : vector<8x512xf32>
    %431 = vector.extract_strided_slice %430 {offsets = [0, 0], sizes = [8, 128], strides = [1, 1]} : vector<8x512xf32> to vector<8x128xf32>
    %432 = arith.negf %431 : vector<8x128xf32>
    %433 = math.exp %432 : vector<8x128xf32>
    %cst_119 = arith.constant 1.000000e+00 : f32
    %434 = vector.broadcast %cst_119 : f32 to vector<8x128xf32>
    %435 = arith.addf %434, %433 : vector<8x128xf32>
    %436 = arith.divf %434, %435 : vector<8x128xf32>
    %437 = vector.extract_strided_slice %430 {offsets = [0, 128], sizes = [8, 128], strides = [1, 1]} : vector<8x512xf32> to vector<8x128xf32>
    %438 = arith.negf %437 : vector<8x128xf32>
    %439 = math.exp %438 : vector<8x128xf32>
    %cst_120 = arith.constant 1.000000e+00 : f32
    %440 = vector.broadcast %cst_120 : f32 to vector<8x128xf32>
    %441 = arith.addf %440, %439 : vector<8x128xf32>
    %442 = arith.divf %440, %441 : vector<8x128xf32>
    %443 = vector.extract_strided_slice %430 {offsets = [0, 256], sizes = [8, 128], strides = [1, 1]} : vector<8x512xf32> to vector<8x128xf32>
    %444 = math.tanh %443 : vector<8x128xf32>
    %445 = vector.extract_strided_slice %430 {offsets = [0, 384], sizes = [8, 128], strides = [1, 1]} : vector<8x512xf32> to vector<8x128xf32>
    %446 = arith.negf %445 : vector<8x128xf32>
    %447 = math.exp %446 : vector<8x128xf32>
    %cst_121 = arith.constant 1.000000e+00 : f32
    %448 = vector.broadcast %cst_121 : f32 to vector<8x128xf32>
    %449 = arith.addf %448, %447 : vector<8x128xf32>
    %450 = arith.divf %448, %449 : vector<8x128xf32>
    %451 = arith.mulf %442, %420 : vector<8x128xf32>
    %452 = arith.mulf %436, %444 : vector<8x128xf32>
    %453 = arith.addf %451, %452 : vector<8x128xf32>
    %454 = math.tanh %453 : vector<8x128xf32>
    %455 = arith.mulf %450, %454 : vector<8x128xf32>
    %c5_122 = arith.constant 5 : index
    %c0_123 = arith.constant 0 : index
    %c0_124 = arith.constant 0 : index
    %456 = vector.load %arg6[%c5_122, %c0_123, %c0_124] : memref<7x8x128xf32, #tpu.memory_space<vmem>>, vector<1x8x128xf32>
    %457 = vector.shape_cast %456 : vector<1x8x128xf32> to vector<8x128xf32>
    %458 = vector.shape_cast %455 : vector<8x128xf32> to vector<1x8x128xf32>
    tpu.vector_store %arg6[%c5_122, %c0_123, %c0_124], %458 {strides = array<i32>} : memref<7x8x128xf32, #tpu.memory_space<vmem>>, vector<1x8x128xf32>,
    %c14 = arith.constant 14 : index
    %c0_125 = arith.constant 0 : index
    %c0_126 = arith.constant 0 : index
    %459 = vector.load %arg7[%c14, %c0_125, %c0_126] : memref<15x8x512xf32, #tpu.memory_space<vmem>>, vector<1x8x512xf32>
    %460 = vector.shape_cast %459 : vector<1x8x512xf32> to vector<8x512xf32>
    %cst_127 = arith.constant dense<0.000000e+00> : vector<8x512xf32>
    %461 = tpu.matmul %455, %15, %cst_127 {dimension_numbers = #tpu.dot_dimension_numbers<[1], [1], [0], [0], [0, 0, 1, 0], [], []>} : vector<8x128xf32>, vector<512x128xf32>, vector<8x512xf32> -> vector<8x512xf32>
    %462 = arith.addf %461, %18 : vector<8x512xf32>
    %463 = arith.addf %462, %460 : vector<8x512xf32>
    %464 = vector.extract_strided_slice %463 {offsets = [0, 0], sizes = [8, 128], strides = [1, 1]} : vector<8x512xf32> to vector<8x128xf32>
    %465 = arith.negf %464 : vector<8x128xf32>
    %466 = math.exp %465 : vector<8x128xf32>
    %cst_128 = arith.constant 1.000000e+00 : f32
    %467 = vector.broadcast %cst_128 : f32 to vector<8x128xf32>
    %468 = arith.addf %467, %466 : vector<8x128xf32>
    %469 = arith.divf %467, %468 : vector<8x128xf32>
    %470 = vector.extract_strided_slice %463 {offsets = [0, 128], sizes = [8, 128], strides = [1, 1]} : vector<8x512xf32> to vector<8x128xf32>
    %471 = arith.negf %470 : vector<8x128xf32>
    %472 = math.exp %471 : vector<8x128xf32>
    %cst_129 = arith.constant 1.000000e+00 : f32
    %473 = vector.broadcast %cst_129 : f32 to vector<8x128xf32>
    %474 = arith.addf %473, %472 : vector<8x128xf32>
    %475 = arith.divf %473, %474 : vector<8x128xf32>
    %476 = vector.extract_strided_slice %463 {offsets = [0, 256], sizes = [8, 128], strides = [1, 1]} : vector<8x512xf32> to vector<8x128xf32>
    %477 = math.tanh %476 : vector<8x128xf32>
    %478 = vector.extract_strided_slice %463 {offsets = [0, 384], sizes = [8, 128], strides = [1, 1]} : vector<8x512xf32> to vector<8x128xf32>
    %479 = arith.negf %478 : vector<8x128xf32>
    %480 = math.exp %479 : vector<8x128xf32>
    %cst_130 = arith.constant 1.000000e+00 : f32
    %481 = vector.broadcast %cst_130 : f32 to vector<8x128xf32>
    %482 = arith.addf %481, %480 : vector<8x128xf32>
    %483 = arith.divf %481, %482 : vector<8x128xf32>
    %484 = arith.mulf %475, %453 : vector<8x128xf32>
    %485 = arith.mulf %469, %477 : vector<8x128xf32>
    %486 = arith.addf %484, %485 : vector<8x128xf32>
    %487 = math.tanh %486 : vector<8x128xf32>
    %488 = arith.mulf %483, %487 : vector<8x128xf32>
    %c6_131 = arith.constant 6 : index
    %c0_132 = arith.constant 0 : index
    %c0_133 = arith.constant 0 : index
    %489 = vector.load %arg6[%c6_131, %c0_132, %c0_133] : memref<7x8x128xf32, #tpu.memory_space<vmem>>, vector<1x8x128xf32>
    %490 = vector.shape_cast %489 : vector<1x8x128xf32> to vector<8x128xf32>
    %491 = vector.shape_cast %488 : vector<8x128xf32> to vector<1x8x128xf32>
    tpu.vector_store %arg6[%c6_131, %c0_132, %c0_133], %491 {strides = array<i32>} : memref<7x8x128xf32, #tpu.memory_space<vmem>>, vector<1x8x128xf32>,
    return
  }
}

module attributes {stable_mosaic.version = 11 : i64} {
  func.func @_linear_kernel(%arg0: i32, %arg1: i32, %arg2: memref<14x128xf32, #tpu.memory_space<vmem>>, %arg3: memref<16x128xf32, #tpu.memory_space<vmem>>, %arg4: memref<1x16xf32, #tpu.memory_space<vmem>>, %arg5: memref<14x16xf32, #tpu.memory_space<vmem>>) attributes {dimension_semantics = [#tpu.dimension_semantics<parallel>, #tpu.dimension_semantics<parallel>], iteration_bounds = array<i64: 1, 1>, scalar_prefetch = 0 : i64, scratch_operands = 0 : i64, tpu.core_type = #tpu.core_type<tc>, window_params = [{transform_indices = @transform_0, window_bounds = array<i64: 14, 128>}, {transform_indices = @transform_1, window_bounds = array<i64: 16, 128>}, {transform_indices = @transform_2, window_bounds = array<i64: 1, 16>}, {transform_indices = @transform_3, window_bounds = array<i64: 14, 16>}]} {
    %c0 = arith.constant 0 : index
    %c0_0 = arith.constant 0 : index
    %0 = vector.load %arg2[%c0, %c0_0] : memref<14x128xf32, #tpu.memory_space<vmem>>, vector<14x128xf32>
    %c0_1 = arith.constant 0 : index
    %c0_2 = arith.constant 0 : index
    %1 = vector.load %arg3[%c0_1, %c0_2] : memref<16x128xf32, #tpu.memory_space<vmem>>, vector<16x128xf32>
    %cst = arith.constant dense<0.000000e+00> : vector<14x16xf32>
    %2 = tpu.matmul %0, %1, %cst {dimension_numbers = #tpu.dot_dimension_numbers<[1], [1], [0], [0], [0, 0, 1, 0], [], []>} : vector<14x128xf32>, vector<16x128xf32>, vector<14x16xf32> -> vector<14x16xf32>
    %c0_3 = arith.constant 0 : index
    %c0_4 = arith.constant 0 : index
    %3 = vector.load %arg4[%c0_3, %c0_4] : memref<1x16xf32, #tpu.memory_space<vmem>>, vector<1x16xf32>
    %4 = vector.broadcast %3 : vector<1x16xf32> to vector<14x16xf32>
    %5 = arith.addf %2, %4 : vector<14x16xf32>
    %c0_5 = arith.constant 0 : index
    %c0_6 = arith.constant 0 : index
    %6 = vector.load %arg5[%c0_5, %c0_6] : memref<14x16xf32, #tpu.memory_space<vmem>>, vector<14x16xf32>
    tpu.vector_store %arg5[%c0_5, %c0_6], %5 {strides = array<i32>} : memref<14x16xf32, #tpu.memory_space<vmem>>, vector<14x16xf32>,
    return
  }
  func.func @transform_0(%arg0: i32, %arg1: i32) -> (i32, i32) {
    %c0_i32 = arith.constant 0 : i32
    %c0_i32_0 = arith.constant 0 : i32
    return %arg0, %c0_i32 : i32, i32
  }
  func.func @transform_1(%arg0: i32, %arg1: i32) -> (i32, i32) {
    %c0_i32 = arith.constant 0 : i32
    %c0_i32_0 = arith.constant 0 : i32
    return %arg1, %c0_i32 : i32, i32
  }
  func.func @transform_2(%arg0: i32, %arg1: i32) -> (i32, i32) {
    %c0_i32 = arith.constant 0 : i32
    %c0_i32_0 = arith.constant 0 : i32
    return %c0_i32, %arg1 : i32, i32
  }
  func.func @transform_3(%arg0: i32, %arg1: i32) -> (i32, i32) {
    %c0_i32 = arith.constant 0 : i32
    return %arg0, %arg1 : i32, i32
  }
}

</mosaic_0001>

<llo_original>
// kernel: seq2seq_forward.4
$region0: #{seq2seq_forward.4}
  #allocation0 [shape = 'u32[]', space=smem, size = 0x4, offset = 0x4, fixed_abs, tag = 'smem constant byte address 0x4 - core index']
  #allocation1 [shape = 'u32[72,128]{1,0:T(1,128)}', space=vmem, size = 0x9000, scoped, tag = 'internal scratch']
  %s0 = inlined_call_operand.vmem [shape: f32[16,64], index: 0, kind: input, shape index: {}]
  %s1 = inlined_call_operand.vmem [shape: f32[128,64], index: 1, kind: input, shape index: {}]
  %s2 = inlined_call_operand.vmem [shape: f32[1,128], index: 2, kind: input, shape index: {}]
  %s3 = inlined_call_operand.vmem [shape: f32[16,128], index: 3, kind: output, shape index: {}]
  %s4 = sld [smem:[#allocation0]]
  $region22: #{seq2seq_forward.4} parent=0
    _
  %s6 = ssub.s32 1, %s4
  %s7 = scalar_select 0, %s6, %s4
  // Predicated region
  $region2: #{seq2seq_forward.4} parent=0 // pred_check
    _
  $region3: #{seq2seq_forward.4} parent=0 // pred_check_branch
    %9 = sbr.rel (0) target = $region5
  $region4: #{seq2seq_forward.4} parent=0 // pred_region
    _
  $region5: #{seq2seq_forward.4} parent=0 // pred_fallthru
    _
  // Predicated region
  $region6: #{seq2seq_forward.4} parent=0 // pred_check
    _
  $region7: #{seq2seq_forward.4} parent=0 // pred_check_branch
    %11 = sbr.rel (0) target = $region9
  $region8: #{seq2seq_forward.4} parent=0 // pred_region
    _
  $region9: #{seq2seq_forward.4} parent=0 // pred_fallthru
    _
  // Predicated region
  $region10: #{seq2seq_forward.4} parent=0 // pred_check
    _
  $region11: #{seq2seq_forward.4} parent=0 // pred_check_branch
    %13 = sbr.rel (0) target = $region13
  $region12: #{seq2seq_forward.4} parent=0 // pred_region
    _
  $region13: #{seq2seq_forward.4} parent=0 // pred_fallthru
    _
  %v14 = vld [vmem:[%s0] sm:$0xff]
  %v15 = vld [vmem:[%s0 + $0x8] sm:$0xff]
  %v16 = vld [vmem:[%s1] sm:$0xff]
  %v17 = vld [vmem:[%s1 + $0x8] sm:$0xff]
  %v18 = vld [vmem:[%s1 + $0x10] sm:$0xff]
  %v19 = vld [vmem:[%s1 + $0x18] sm:$0xff]
  %v20 = vld [vmem:[%s1 + $0x20] sm:$0xff]
  %v21 = vld [vmem:[%s1 + $0x28] sm:$0xff]
  %v22 = vld [vmem:[%s1 + $0x30] sm:$0xff]
  %v23 = vld [vmem:[%s1 + $0x38] sm:$0xff]
  %v24 = vld [vmem:[%s1 + $0x40] sm:$0xff]
  %v25 = vld [vmem:[%s1 + $0x48] sm:$0xff]
  %v26 = vld [vmem:[%s1 + $0x50] sm:$0xff]
  %v27 = vld [vmem:[%s1 + $0x58] sm:$0xff]
  %v28 = vld [vmem:[%s1 + $0x60] sm:$0xff]
  %v29 = vld [vmem:[%s1 + $0x68] sm:$0xff]
  %v30 = vld [vmem:[%s1 + $0x70] sm:$0xff]
  %v31 = vld [vmem:[%s1 + $0x78] sm:$0xff]
  %v32 = vld [vmem:[%s2] sm:$0x1]
  %v34 = vperm.slane %v32, 0
  %vm36 = vcmask 523264
  %v38 = vsel %vm36, %v14, 0
  %v41 = vsel %vm36, %v15, 0
  %v44 = vsel %vm36, %v16, 0
  %v47 = vsel %vm36, %v17, 0
  %v50 = vsel %vm36, %v18, 0
  %v53 = vsel %vm36, %v19, 0
  %v56 = vsel %vm36, %v20, 0
  %v59 = vsel %vm36, %v21, 0
  %v62 = vsel %vm36, %v22, 0
  %v65 = vsel %vm36, %v23, 0
  %v68 = vsel %vm36, %v24, 0
  %v71 = vsel %vm36, %v25, 0
  %v74 = vsel %vm36, %v26, 0
  %v77 = vsel %vm36, %v27, 0
  %v80 = vsel %vm36, %v28, 0
  %v83 = vsel %vm36, %v29, 0
  %v86 = vsel %vm36, %v30, 0
  %v89 = vsel %vm36, %v31, 0
  %91 = vmatpush.xpose.msra.mxu0 %v89
  %92 = vmatpush.xpose.msra.mxu0 %v86
  %93 = vmatpush.xpose.msra.mxu0 %v83
  %94 = vmatpush.xpose.msra.mxu0 %v80
  %95 = vmatpush.xpose.msra.mxu0 %v77
  %96 = vmatpush.xpose.msra.mxu0 %v74
  %97 = vmatpush.xpose.msra.mxu0 %v71
  %98 = vmatpush.xpose.msra.mxu0 %v68
  %99 = vmatpush.xpose.msra.mxu0 %v65
  %100 = vmatpush.xpose.msra.mxu0 %v62
  %101 = vmatpush.xpose.msra.mxu0 %v59
  %102 = vmatpush.xpose.msra.mxu0 %v56
  %103 = vmatpush.xpose.msra.mxu0 %v53
  %104 = vmatpush.xpose.msra.mxu0 %v50
  %105 = vmatpush.xpose.msra.mxu0 %v47
  %106 = vmatpush.xpose.msra.mxu0 %v44
  %107 = vmatmul.f32.gmra.mxu0 %v38
  %v108 = vpop.f32.mrf.mxu0
  %v109 = vadd.f32 %v34, %v108
  %110 = vmatmul.f32.gmra.mxu0 %v41
  %v111 = vpop.f32.mrf.mxu0
  %v112 = vadd.f32 %v34, %v111
  %113 = vdwg.mxu0
  %114 = vst [vmem:[%s3] sm:$0xff] %v109
  %115 = vst [vmem:[%s3 + $0x8] sm:$0xff] %v112
  // Predicated region
  $region14: #{seq2seq_forward.4} parent=0 // pred_check
    _
  $region15: #{seq2seq_forward.4} parent=0 // pred_check_branch
    %117 = sbr.rel (0) target = $region17
  $region16: #{seq2seq_forward.4} parent=0 // pred_region
    _
  $region17: #{seq2seq_forward.4} parent=0 // pred_fallthru
    _
  // Predicated region
  $region18: #{seq2seq_forward.4} parent=0 // pred_check
    _
  $region19: #{seq2seq_forward.4} parent=0 // pred_check_branch
    %119 = sbr.rel (0) target = $region21
  $region20: #{seq2seq_forward.4} parent=0 // pred_region
    _
  $region21: #{seq2seq_forward.4} parent=0 // pred_fallthru
    _

// kernel: seq2seq_forward.7
$region0: #{seq2seq_forward.7}
  #allocation0 [shape = 'u32[]', space=smem, size = 0x4, offset = 0x4, fixed_abs, tag = 'smem constant byte address 0x4 - core index']
  #allocation1 [shape = 'u32[72,128]{1,0:T(1,128)}', space=vmem, size = 0x9000, scoped, tag = 'internal scratch']
  %s0 = inlined_call_operand.vmem [shape: f32[14,128], index: 0, kind: input, shape index: {}]
  %s1 = inlined_call_operand.vmem [shape: f32[16,128], index: 1, kind: input, shape index: {}]
  %s2 = inlined_call_operand.vmem [shape: f32[1,16], index: 2, kind: input, shape index: {}]
  %s3 = inlined_call_operand.hbm [shape: f32[14,16], index: 3, kind: output, shape index: {}]
  %s4 = sld [smem:[#allocation0]]
  $region22: #{seq2seq_forward.7} parent=0
    _
  %s6 = ssub.s32 1, %s4
  %s7 = scalar_select 0, %s6, %s4
  $region1: #{seq2seq_forward.7} parent=0
    #allocation2 [shape = 'u8[8192]{0}', space=vmem, size = 0x2000, scoped, tag = 'output window, operand 0, single buffered']
    #allocation3 [shape = 's32[1]{0}', space=sflag, size = 0x4, scoped, tag = 'scoped memory for seq2seq_forward.7']
    %8 = vsyncpa [#allocation3], 0
    // Predicated region
    $region2: #{seq2seq_forward.7} parent=1 // pred_check
      _
    $region3: #{seq2seq_forward.7} parent=1 // pred_check_branch
      %10 = sbr.rel (0) target = $region5
    $region4: #{seq2seq_forward.7} parent=1 // pred_region
      _
    $region5: #{seq2seq_forward.7} parent=1 // pred_fallthru
      _
    // Predicated region
    $region6: #{seq2seq_forward.7} parent=1 // pred_check
      _
    $region7: #{seq2seq_forward.7} parent=1 // pred_check_branch
      %12 = sbr.rel (0) target = $region9
    $region8: #{seq2seq_forward.7} parent=1 // pred_region
      _
    $region9: #{seq2seq_forward.7} parent=1 // pred_fallthru
      _
    // Predicated region
    $region10: #{seq2seq_forward.7} parent=1 // pred_check
      _
    $region11: #{seq2seq_forward.7} parent=1 // pred_check_branch
      %14 = sbr.rel (0) target = $region13
    $region12: #{seq2seq_forward.7} parent=1 // pred_region
      _
    $region13: #{seq2seq_forward.7} parent=1 // pred_fallthru
      _
    %v15 = vld [vmem:[%s0] sm:$0xff]
    %v16 = vld [vmem:[%s0 + $0x8] sm:$0x3f]
    %v17 = vld [vmem:[%s1] sm:$0xff]
    %v18 = vld [vmem:[%s1 + $0x8] sm:$0xff]
    %v19 = vld [vmem:[%s2] sm:$0x1]
    %v21 = vperm.slane %v19, 0
    %23 = vmatpush.xpose.msra.mxu0 0.0
    %24 = vmatpush.xpose.msra.mxu0 0.0
    %25 = vmatpush.xpose.msra.mxu0 0.0
    %26 = vmatpush.xpose.msra.mxu0 0.0
    %27 = vmatpush.xpose.msra.mxu0 0.0
    %28 = vmatpush.xpose.msra.mxu0 0.0
    %29 = vmatpush.xpose.msra.mxu0 0.0
    %30 = vmatpush.xpose.msra.mxu0 0.0
    %31 = vmatpush.xpose.msra.mxu0 0.0
    %32 = vmatpush.xpose.msra.mxu0 0.0
    %33 = vmatpush.xpose.msra.mxu0 0.0
    %34 = vmatpush.xpose.msra.mxu0 0.0
    %35 = vmatpush.xpose.msra.mxu0 0.0
    %36 = vmatpush.xpose.msra.mxu0 0.0
    %37 = vmatpush.xpose.msra.mxu0 %v18
    %38 = vmatpush.xpose.msra.mxu0 %v17
    %39 = vmatmul.f32.gmra.mxu0 %v15
    %v40 = vpop.f32.mrf.mxu0
    %v41 = vadd.f32 %v21, %v40
    %42 = vmatmul.f32.gmra.mxu0 %v16
    %v43 = vpop.f32.mrf.mxu0
    %v44 = vadd.f32 %v21, %v43
    %45 = vdwg.mxu0
    %vm46 = vcmask 130048
    %47 = vst.msk [vmem:[#allocation2] sm:$0xff] %vm46, %v41
    %vm48 = vcmask 128000
    %49 = vst.msk [vmem:[#allocation2 + $0x8] sm:$0x3f] %vm48, %v44
    // Predicated region
    $region14: #{seq2seq_forward.7} parent=1 // pred_check
      _
    $region15: #{seq2seq_forward.7} parent=1 // pred_check_branch
      %51 = sbr.rel (0) target = $region17
    $region16: #{seq2seq_forward.7} parent=1 // pred_region
      %53 = vsyncadd [#allocation3], 0
      %s54 = sshll.u32 [#allocation2], 4
      %s55 = int_to_ptr.vmem [resolvable:$true] %s54
      %s56 = sshll.u32 %s3, 4
      %s57 = int_to_ptr.hbm [resolvable:$true] %s56
      %62 = dma.vmem_to_hbm [thread:$0]  %s55, 256, %s57, [#allocation3], 128, 128, 8
    $region17: #{seq2seq_forward.7} parent=1 // pred_fallthru
      _
    // Predicated region
    $region18: #{seq2seq_forward.7} parent=1 // pred_check
      _
    $region19: #{seq2seq_forward.7} parent=1 // pred_check_branch
      %64 = sbr.rel (0) target = $region21
    $region20: #{seq2seq_forward.7} parent=1 // pred_region
      %66 = dma.done [#allocation3], 256
    $region21: #{seq2seq_forward.7} parent=1 // pred_fallthru
      _
    %67 = vsyncpa [#allocation3], 1

// kernel: seq2seq_forward.5
$region0: #{seq2seq_forward.5}
  #allocation0 [shape = 'u32[]', space=smem, size = 0x4, offset = 0x4, fixed_abs, tag = 'smem constant byte address 0x4 - core index']
  #allocation1 [shape = 'u32[72,128]{1,0:T(1,128)}', space=vmem, size = 0x9000, scoped, tag = 'internal scratch']
  #allocation2 [shape = 'f32[8,8,512]{2,1,0:T(8,128)}', space=vmem, size = 0x20000, scoped, tag = 'scratch operand']
  %s0 = inlined_call_operand.vmem [shape: f32[8,8,128], index: 0, kind: input, shape index: {}]
  %s1 = inlined_call_operand.hbm [shape: f32[512,128], index: 1, kind: input, shape index: {}]
  %s2 = inlined_call_operand.hbm [shape: f32[512,128], index: 2, kind: input, shape index: {}]
  %s3 = inlined_call_operand.vmem [shape: f32[1,512], index: 3, kind: input, shape index: {}]
  %s4 = inlined_call_operand.vmem [shape: f32[15,8,128], index: 4, kind: output, shape index: {}]
  %s5 = sld [smem:[#allocation0]]
  $region34: #{seq2seq_forward.5} parent=0
    _
  %s7 = ssub.s32 1, %s5
  %s8 = scalar_select 0, %s7, %s5
  $region1: #{seq2seq_forward.5} parent=0
    #allocation3 [shape = 'u8[262144]{0}', space=vmem, size = 0x40000, scoped, tag = 'input window, operand 1, single buffered']
    #allocation4 [shape = 's32[1]{0}', space=sflag, size = 0x4, scoped, tag = 'scoped memory for seq2seq_forward.5']
    #allocation5 [shape = 'u8[262144]{0}', space=vmem, size = 0x40000, scoped, tag = 'input window, operand 2, single buffered']
    #allocation6 [shape = 's32[1]{0}', space=sflag, size = 0x4, scoped, tag = 'scoped memory for seq2seq_forward.5']
    %9 = vsyncpa [#allocation4], 0
    %10 = vsyncpa [#allocation6], 0
    // Predicated region
    $region2: #{seq2seq_forward.5} parent=1 // pred_check
      _
    $region3: #{seq2seq_forward.5} parent=1 // pred_check_branch
      %12 = sbr.rel (0) target = $region5
    $region4: #{seq2seq_forward.5} parent=1 // pred_region
      _
    $region5: #{seq2seq_forward.5} parent=1 // pred_fallthru
      _
    // Predicated region
    $region6: #{seq2seq_forward.5} parent=1 // pred_check
      _
    $region7: #{seq2seq_forward.5} parent=1 // pred_check_branch
      %14 = sbr.rel (0) target = $region9
    $region8: #{seq2seq_forward.5} parent=1 // pred_region
      %16 = vsyncadd [#allocation4], 0
      %s17 = sshll.u32 %s1, 4
      %s18 = int_to_ptr.hbm [resolvable:$true] %s17
      %s19 = sshll.u32 [#allocation3], 4
      %s20 = int_to_ptr.vmem [resolvable:$true] %s19
      %25 = dma.hbm_to_vmem [thread:$0]  %s18, 8192, %s20, [#allocation4], 128, 128, 8
    $region9: #{seq2seq_forward.5} parent=1 // pred_fallthru
      _
    // Predicated region
    $region10: #{seq2seq_forward.5} parent=1 // pred_check
      _
    $region11: #{seq2seq_forward.5} parent=1 // pred_check_branch
      %27 = sbr.rel (0) target = $region13
    $region12: #{seq2seq_forward.5} parent=1 // pred_region
      %29 = vsyncadd [#allocation6], 0
      %s30 = sshll.u32 %s2, 4
      %s31 = int_to_ptr.hbm [resolvable:$true] %s30
      %s32 = sshll.u32 [#allocation5], 4
      %s33 = int_to_ptr.vmem [resolvable:$true] %s32
      %38 = dma.hbm_to_vmem [thread:$0]  %s31, 8192, %s33, [#allocation6], 128, 128, 8
    $region13: #{seq2seq_forward.5} parent=1 // pred_fallthru
      _
    // Predicated region
    $region14: #{seq2seq_forward.5} parent=1 // pred_check
      _
    $region15: #{seq2seq_forward.5} parent=1 // pred_check_branch
      %40 = sbr.rel (0) target = $region17
    $region16: #{seq2seq_forward.5} parent=1 // pred_region
      _
    $region17: #{seq2seq_forward.5} parent=1 // pred_fallthru
      _
    // Predicated region
    $region18: #{seq2seq_forward.5} parent=1 // pred_check
      _
    $region19: #{seq2seq_forward.5} parent=1 // pred_check_branch
      %42 = sbr.rel (0) target = $region21
    $region20: #{seq2seq_forward.5} parent=1 // pred_region
      %44 = dma.done [#allocation4], 8192
    $region21: #{seq2seq_forward.5} parent=1 // pred_fallthru
      _
    // Predicated region
    $region22: #{seq2seq_forward.5} parent=1 // pred_check
      _
    $region23: #{seq2seq_forward.5} parent=1 // pred_check_branch
      %46 = sbr.rel (0) target = $region25
    $region24: #{seq2seq_forward.5} parent=1 // pred_region
      %48 = dma.done [#allocation6], 8192
    $region25: #{seq2seq_forward.5} parent=1 // pred_fallthru
      _
    %v49 = vld [vmem:[%s0] sm:$0xff]
    %v50 = vld [vmem:[%s0 + $0x8] sm:$0xff]
    %v51 = vld [vmem:[%s0 + $0x10] sm:$0xff]
    %v52 = vld [vmem:[%s0 + $0x18] sm:$0xff]
    %v53 = vld [vmem:[%s0 + $0x20] sm:$0xff]
    %v54 = vld [vmem:[%s0 + $0x28] sm:$0xff]
    %v55 = vld [vmem:[%s0 + $0x30] sm:$0xff]
    %v56 = vld [vmem:[%s0 + $0x38] sm:$0xff]
    %v57 = vld [vmem:[#allocation3] sm:$0xff]
    %v58 = vld [vmem:[#allocation3 + $0x8] sm:$0xff]
    %v59 = vld [vmem:[#allocation3 + $0x10] sm:$0xff]
    %v60 = vld [vmem:[#allocation3 + $0x18] sm:$0xff]
    %v61 = vld [vmem:[#allocation3 + $0x20] sm:$0xff]
    %v62 = vld [vmem:[#allocation3 + $0x28] sm:$0xff]
    %v63 = vld [vmem:[#allocation3 + $0x30] sm:$0xff]
    %v64 = vld [vmem:[#allocation3 + $0x38] sm:$0xff]
    %v65 = vld [vmem:[#allocation3 + $0x40] sm:$0xff]
    %v66 = vld [vmem:[#allocation3 + $0x48] sm:$0xff]
    %v67 = vld [vmem:[#allocation3 + $0x50] sm:$0xff]
    %v68 = vld [vmem:[#allocation3 + $0x58] sm:$0xff]
    %v69 = vld [vmem:[#allocation3 + $0x60] sm:$0xff]
    %v70 = vld [vmem:[#allocation3 + $0x68] sm:$0xff]
    %v71 = vld [vmem:[#allocation3 + $0x70] sm:$0xff]
    %v72 = vld [vmem:[#allocation3 + $0x78] sm:$0xff]
    %v73 = vld [vmem:[#allocation3 + $0x80] sm:$0xff]
    %v74 = vld [vmem:[#allocation3 + $0x88] sm:$0xff]
    %v75 = vld [vmem:[#allocation3 + $0x90] sm:$0xff]
    %v76 = vld [vmem:[#allocation3 + $0x98] sm:$0xff]
    %v77 = vld [vmem:[#allocation3 + $0xa0] sm:$0xff]
    %v78 = vld [vmem:[#allocation3 + $0xa8] sm:$0xff]
    %v79 = vld [vmem:[#allocation3 + $0xb0] sm:$0xff]
    %v80 = vld [vmem:[#allocation3 + $0xb8] sm:$0xff]
    %v81 = vld [vmem:[#allocation3 + $0xc0] sm:$0xff]
    %v82 = vld [vmem:[#allocation3 + $0xc8] sm:$0xff]
    %v83 = vld [vmem:[#allocation3 + $0xd0] sm:$0xff]
    %v84 = vld [vmem:[#allocation3 + $0xd8] sm:$0xff]
    %v85 = vld [vmem:[#allocation3 + $0xe0] sm:$0xff]
    %v86 = vld [vmem:[#allocation3 + $0xe8] sm:$0xff]
    %v87 = vld [vmem:[#allocation3 + $0xf0] sm:$0xff]
    %v88 = vld [vmem:[#allocation3 + $0xf8] sm:$0xff]
    %v89 = vld [vmem:[#allocation3 + $0x100] sm:$0xff]
    %v90 = vld [vmem:[#allocation3 + $0x108] sm:$0xff]
    %v91 = vld [vmem:[#allocation3 + $0x110] sm:$0xff]
    %v92 = vld [vmem:[#allocation3 + $0x118] sm:$0xff]
    %v93 = vld [vmem:[#allocation3 + $0x120] sm:$0xff]
    %v94 = vld [vmem:[#allocation3 + $0x128] sm:$0xff]
    %v95 = vld [vmem:[#allocation3 + $0x130] sm:$0xff]
    %v96 = vld [vmem:[#allocation3 + $0x138] sm:$0xff]
    %v97 = vld [vmem:[#allocation3 + $0x140] sm:$0xff]
    %v98 = vld [vmem:[#allocation3 + $0x148] sm:$0xff]
    %v99 = vld [vmem:[#allocation3 + $0x150] sm:$0xff]
    %v100 = vld [vmem:[#allocation3 + $0x158] sm:$0xff]
    %v101 = vld [vmem:[#allocation3 + $0x160] sm:$0xff]
    %v102 = vld [vmem:[#allocation3 + $0x168] sm:$0xff]
    %v103 = vld [vmem:[#allocation3 + $0x170] sm:$0xff]
    %v104 = vld [vmem:[#allocation3 + $0x178] sm:$0xff]
    %v105 = vld [vmem:[#allocation3 + $0x180] sm:$0xff]
    %v106 = vld [vmem:[#allocation3 + $0x188] sm:$0xff]
    %v107 = vld [vmem:[#allocation3 + $0x190] sm:$0xff]
    %v108 = vld [vmem:[#allocation3 + $0x198] sm:$0xff]
    %v109 = vld [vmem:[#allocation3 + $0x1a0] sm:$0xff]
    %v110 = vld [vmem:[#allocation3 + $0x1a8] sm:$0xff]
    %v111 = vld [vmem:[#allocation3 + $0x1b0] sm:$0xff]
    %v112 = vld [vmem:[#allocation3 + $0x1b8] sm:$0xff]
    %v113 = vld [vmem:[#allocation3 + $0x1c0] sm:$0xff]
    %v114 = vld [vmem:[#allocation3 + $0x1c8] sm:$0xff]
    %v115 = vld [vmem:[#allocation3 + $0x1d0] sm:$0xff]
    %v116 = vld [vmem:[#allocation3 + $0x1d8] sm:$0xff]
    %v117 = vld [vmem:[#allocation3 + $0x1e0] sm:$0xff]
    %v118 = vld [vmem:[#allocation3 + $0x1e8] sm:$0xff]
    %v119 = vld [vmem:[#allocation3 + $0x1f0] sm:$0xff]
    %v120 = vld [vmem:[#allocation3 + $0x1f8] sm:$0xff]
    %121 = vmatpush.xpose.msra.mxu0 %v72
    %122 = vmatpush.xpose.msra.mxu0 %v71
    %123 = vmatpush.xpose.msra.mxu0 %v70
    %124 = vmatpush.xpose.msra.mxu0 %v69
    %125 = vmatpush.xpose.msra.mxu0 %v68
    %126 = vmatpush.xpose.msra.mxu0 %v67
    %127 = vmatpush.xpose.msra.mxu0 %v66
    %128 = vmatpush.xpose.msra.mxu0 %v65
    %129 = vmatpush.xpose.msra.mxu0 %v64
    %130 = vmatpush.xpose.msra.mxu0 %v63
    %131 = vmatpush.xpose.msra.mxu0 %v62
    %132 = vmatpush.xpose.msra.mxu0 %v61
    %133 = vmatpush.xpose.msra.mxu0 %v60
    %134 = vmatpush.xpose.msra.mxu0 %v59
    %135 = vmatpush.xpose.msra.mxu0 %v58
    %136 = vmatpush.xpose.msra.mxu0 %v57
    %137 = vmatmul.f32.gmra.mxu0 %v49
    %v138 = vpop.f32.mrf.mxu0
    %v139 = vadd.f32 0.0, %v138
    %140 = vmatmul.f32.gmra.mxu0 %v50
    %v141 = vpop.f32.mrf.mxu0
    %v142 = vadd.f32 0.0, %v141
    %143 = vmatmul.f32.gmra.mxu0 %v51
    %v144 = vpop.f32.mrf.mxu0
    %v145 = vadd.f32 0.0, %v144
    %146 = vmatmul.f32.gmra.mxu0 %v52
    %v147 = vpop.f32.mrf.mxu0
    %v148 = vadd.f32 0.0, %v147
    %149 = vmatmul.f32.gmra.mxu0 %v53
    %v150 = vpop.f32.mrf.mxu0
    %v151 = vadd.f32 0.0, %v150
    %152 = vmatmul.f32.gmra.mxu0 %v54
    %v153 = vpop.f32.mrf.mxu0
    %v154 = vadd.f32 0.0, %v153
    %155 = vmatmul.f32.gmra.mxu0 %v55
    %v156 = vpop.f32.mrf.mxu0
    %v157 = vadd.f32 0.0, %v156
    %158 = vmatmul.f32.gmra.mxu0 %v56
    %v159 = vpop.f32.mrf.mxu0
    %v160 = vadd.f32 0.0, %v159
    %161 = vdwg.mxu0
    %162 = vmatpush.xpose.msra.mxu0 %v88
    %163 = vmatpush.xpose.msra.mxu0 %v87
    %164 = vmatpush.xpose.msra.mxu0 %v86
    %165 = vmatpush.xpose.msra.mxu0 %v85
    %166 = vmatpush.xpose.msra.mxu0 %v84
    %167 = vmatpush.xpose.msra.mxu0 %v83
    %168 = vmatpush.xpose.msra.mxu0 %v82
    %169 = vmatpush.xpose.msra.mxu0 %v81
    %170 = vmatpush.xpose.msra.mxu0 %v80
    %171 = vmatpush.xpose.msra.mxu0 %v79
    %172 = vmatpush.xpose.msra.mxu0 %v78
    %173 = vmatpush.xpose.msra.mxu0 %v77
    %174 = vmatpush.xpose.msra.mxu0 %v76
    %175 = vmatpush.xpose.msra.mxu0 %v75
    %176 = vmatpush.xpose.msra.mxu0 %v74
    %177 = vmatpush.xpose.msra.mxu0 %v73
    %178 = vmatmul.f32.gmra.mxu0 %v49
    %v179 = vpop.f32.mrf.mxu0
    %v180 = vadd.f32 0.0, %v179
    %181 = vmatmul.f32.gmra.mxu0 %v50
    %v182 = vpop.f32.mrf.mxu0
    %v183 = vadd.f32 0.0, %v182
    %184 = vmatmul.f32.gmra.mxu0 %v51
    %v185 = vpop.f32.mrf.mxu0
    %v186 = vadd.f32 0.0, %v185
    %187 = vmatmul.f32.gmra.mxu0 %v52
    %v188 = vpop.f32.mrf.mxu0
    %v189 = vadd.f32 0.0, %v188
    %190 = vmatmul.f32.gmra.mxu0 %v53
    %v191 = vpop.f32.mrf.mxu0
    %v192 = vadd.f32 0.0, %v191
    %193 = vmatmul.f32.gmra.mxu0 %v54
    %v194 = vpop.f32.mrf.mxu0
    %v195 = vadd.f32 0.0, %v194
    %196 = vmatmul.f32.gmra.mxu0 %v55
    %v197 = vpop.f32.mrf.mxu0
    %v198 = vadd.f32 0.0, %v197
    %199 = vmatmul.f32.gmra.mxu0 %v56
    %v200 = vpop.f32.mrf.mxu0
    %v201 = vadd.f32 0.0, %v200
    %202 = vdwg.mxu0
    %203 = vmatpush.xpose.msra.mxu0 %v104
    %204 = vmatpush.xpose.msra.mxu0 %v103
    %205 = vmatpush.xpose.msra.mxu0 %v102
    %206 = vmatpush.xpose.msra.mxu0 %v101
    %207 = vmatpush.xpose.msra.mxu0 %v100
    %208 = vmatpush.xpose.msra.mxu0 %v99
    %209 = vmatpush.xpose.msra.mxu0 %v98
    %210 = vmatpush.xpose.msra.mxu0 %v97
    %211 = vmatpush.xpose.msra.mxu0 %v96
    %212 = vmatpush.xpose.msra.mxu0 %v95
    %213 = vmatpush.xpose.msra.mxu0 %v94
    %214 = vmatpush.xpose.msra.mxu0 %v93
    %215 = vmatpush.xpose.msra.mxu0 %v92
    %216 = vmatpush.xpose.msra.mxu0 %v91
    %217 = vmatpush.xpose.msra.mxu0 %v90
    %218 = vmatpush.xpose.msra.mxu0 %v89
    %219 = vmatmul.f32.gmra.mxu0 %v49
    %v220 = vpop.f32.mrf.mxu0
    %v221 = vadd.f32 0.0, %v220
    %222 = vmatmul.f32.gmra.mxu0 %v50
    %v223 = vpop.f32.mrf.mxu0
    %v224 = vadd.f32 0.0, %v223
    %225 = vmatmul.f32.gmra.mxu0 %v51
    %v226 = vpop.f32.mrf.mxu0
    %v227 = vadd.f32 0.0, %v226
    %228 = vmatmul.f32.gmra.mxu0 %v52
    %v229 = vpop.f32.mrf.mxu0
    %v230 = vadd.f32 0.0, %v229
    %231 = vmatmul.f32.gmra.mxu0 %v53
    %v232 = vpop.f32.mrf.mxu0
    %v233 = vadd.f32 0.0, %v232
    %234 = vmatmul.f32.gmra.mxu0 %v54
    %v235 = vpop.f32.mrf.mxu0
    %v236 = vadd.f32 0.0, %v235
    %237 = vmatmul.f32.gmra.mxu0 %v55
    %v238 = vpop.f32.mrf.mxu0
    %v239 = vadd.f32 0.0, %v238
    %240 = vmatmul.f32.gmra.mxu0 %v56
    %v241 = vpop.f32.mrf.mxu0
    %v242 = vadd.f32 0.0, %v241
    %243 = vdwg.mxu0
    %244 = vmatpush.xpose.msra.mxu0 %v120
    %245 = vmatpush.xpose.msra.mxu0 %v119
    %246 = vmatpush.xpose.msra.mxu0 %v118
    %247 = vmatpush.xpose.msra.mxu0 %v117
    %248 = vmatpush.xpose.msra.mxu0 %v116
    %249 = vmatpush.xpose.msra.mxu0 %v115
    %250 = vmatpush.xpose.msra.mxu0 %v114
    %251 = vmatpush.xpose.msra.mxu0 %v113
    %252 = vmatpush.xpose.msra.mxu0 %v112
    %253 = vmatpush.xpose.msra.mxu0 %v111
    %254 = vmatpush.xpose.msra.mxu0 %v110
    %255 = vmatpush.xpose.msra.mxu0 %v109
    %256 = vmatpush.xpose.msra.mxu0 %v108
    %257 = vmatpush.xpose.msra.mxu0 %v107
    %258 = vmatpush.xpose.msra.mxu0 %v106
    %259 = vmatpush.xpose.msra.mxu0 %v105
    %260 = vmatmul.f32.gmra.mxu0 %v49
    %v261 = vpop.f32.mrf.mxu0
    %v262 = vadd.f32 0.0, %v261
    %263 = vmatmul.f32.gmra.mxu0 %v50
    %v264 = vpop.f32.mrf.mxu0
    %v265 = vadd.f32 0.0, %v264
    %266 = vmatmul.f32.gmra.mxu0 %v51
    %v267 = vpop.f32.mrf.mxu0
    %v268 = vadd.f32 0.0, %v267
    %269 = vmatmul.f32.gmra.mxu0 %v52
    %v270 = vpop.f32.mrf.mxu0
    %v271 = vadd.f32 0.0, %v270
    %272 = vmatmul.f32.gmra.mxu0 %v53
    %v273 = vpop.f32.mrf.mxu0
    %v274 = vadd.f32 0.0, %v273
    %275 = vmatmul.f32.gmra.mxu0 %v54
    %v276 = vpop.f32.mrf.mxu0
    %v277 = vadd.f32 0.0, %v276
    %278 = vmatmul.f32.gmra.mxu0 %v55
    %v279 = vpop.f32.mrf.mxu0
    %v280 = vadd.f32 0.0, %v279
    %281 = vmatmul.f32.gmra.mxu0 %v56
    %v282 = vpop.f32.mrf.mxu0
    %v283 = vadd.f32 0.0, %v282
    %284 = vdwg.mxu0
    %285 = vst [vmem:[#allocation2] sm:$0xff] %v139
    %286 = vst [vmem:[#allocation2 + $0x8] sm:$0xff] %v180
    %287 = vst [vmem:[#allocation2 + $0x10] sm:$0xff] %v221
    %288 = vst [vmem:[#allocation2 + $0x18] sm:$0xff] %v262
    %289 = vst [vmem:[#allocation2 + $0x20] sm:$0xff] %v142
    %290 = vst [vmem:[#allocation2 + $0x28] sm:$0xff] %v183
    %291 = vst [vmem:[#allocation2 + $0x30] sm:$0xff] %v224
    %292 = vst [vmem:[#allocation2 + $0x38] sm:$0xff] %v265
    %293 = vst [vmem:[#allocation2 + $0x40] sm:$0xff] %v145
    %294 = vst [vmem:[#allocation2 + $0x48] sm:$0xff] %v186
    %295 = vst [vmem:[#allocation2 + $0x50] sm:$0xff] %v227
    %296 = vst [vmem:[#allocation2 + $0x58] sm:$0xff] %v268
    %297 = vst [vmem:[#allocation2 + $0x60] sm:$0xff] %v148
    %298 = vst [vmem:[#allocation2 + $0x68] sm:$0xff] %v189
    %299 = vst [vmem:[#allocation2 + $0x70] sm:$0xff] %v230
    %300 = vst [vmem:[#allocation2 + $0x78] sm:$0xff] %v271
    %301 = vst [vmem:[#allocation2 + $0x80] sm:$0xff] %v151
    %302 = vst [vmem:[#allocation2 + $0x88] sm:$0xff] %v192
    %303 = vst [vmem:[#allocation2 + $0x90] sm:$0xff] %v233
    %304 = vst [vmem:[#allocation2 + $0x98] sm:$0xff] %v274
    %305 = vst [vmem:[#allocation2 + $0xa0] sm:$0xff] %v154
    %306 = vst [vmem:[#allocation2 + $0xa8] sm:$0xff] %v195
    %307 = vst [vmem:[#allocation2 + $0xb0] sm:$0xff] %v236
    %308 = vst [vmem:[#allocation2 + $0xb8] sm:$0xff] %v277
    %309 = vst [vmem:[#allocation2 + $0xc0] sm:$0xff] %v157
    %310 = vst [vmem:[#allocation2 + $0xc8] sm:$0xff] %v198
    %311 = vst [vmem:[#allocation2 + $0xd0] sm:$0xff] %v239
    %312 = vst [vmem:[#allocation2 + $0xd8] sm:$0xff] %v280
    %313 = vst [vmem:[#allocation2 + $0xe0] sm:$0xff] %v160
    %314 = vst [vmem:[#allocation2 + $0xe8] sm:$0xff] %v201
    %315 = vst [vmem:[#allocation2 + $0xf0] sm:$0xff] %v242
    %316 = vst [vmem:[#allocation2 + $0xf8] sm:$0xff] %v283
    %v317 = vld [vmem:[#allocation5] sm:$0xff]
    %v318 = vld [vmem:[#allocation5 + $0x8] sm:$0xff]
    %v319 = vld [vmem:[#allocation5 + $0x10] sm:$0xff]
    %v320 = vld [vmem:[#allocation5 + $0x18] sm:$0xff]
    %v321 = vld [vmem:[#allocation5 + $0x20] sm:$0xff]
    %v322 = vld [vmem:[#allocation5 + $0x28] sm:$0xff]
    %v323 = vld [vmem:[#allocation5 + $0x30] sm:$0xff]
    %v324 = vld [vmem:[#allocation5 + $0x38] sm:$0xff]
    %v325 = vld [vmem:[#allocation5 + $0x40] sm:$0xff]
    %v326 = vld [vmem:[#allocation5 + $0x48] sm:$0xff]
    %v327 = vld [vmem:[#allocation5 + $0x50] sm:$0xff]
    %v328 = vld [vmem:[#allocation5 + $0x58] sm:$0xff]
    %v329 = vld [vmem:[#allocation5 + $0x60] sm:$0xff]
    %v330 = vld [vmem:[#allocation5 + $0x68] sm:$0xff]
    %v331 = vld [vmem:[#allocation5 + $0x70] sm:$0xff]
    %v332 = vld [vmem:[#allocation5 + $0x78] sm:$0xff]
    %v333 = vld [vmem:[#allocation5 + $0x80] sm:$0xff]
    %v334 = vld [vmem:[#allocation5 + $0x88] sm:$0xff]
    %v335 = vld [vmem:[#allocation5 + $0x90] sm:$0xff]
    %v336 = vld [vmem:[#allocation5 + $0x98] sm:$0xff]
    %v337 = vld [vmem:[#allocation5 + $0xa0] sm:$0xff]
    %v338 = vld [vmem:[#allocation5 + $0xa8] sm:$0xff]
    %v339 = vld [vmem:[#allocation5 + $0xb0] sm:$0xff]
    %v340 = vld [vmem:[#allocation5 + $0xb8] sm:$0xff]
    %v341 = vld [vmem:[#allocation5 + $0xc0] sm:$0xff]
    %v342 = vld [vmem:[#allocation5 + $0xc8] sm:$0xff]
    %v343 = vld [vmem:[#allocation5 + $0xd0] sm:$0xff]
    %v344 = vld [vmem:[#allocation5 + $0xd8] sm:$0xff]
    %v345 = vld [vmem:[#allocation5 + $0xe0] sm:$0xff]
    %v346 = vld [vmem:[#allocation5 + $0xe8] sm:$0xff]
    %v347 = vld [vmem:[#allocation5 + $0xf0] sm:$0xff]
    %v348 = vld [vmem:[#allocation5 + $0xf8] sm:$0xff]
    %v349 = vld [vmem:[#allocation5 + $0x100] sm:$0xff]
    %v350 = vld [vmem:[#allocation5 + $0x108] sm:$0xff]
    %v351 = vld [vmem:[#allocation5 + $0x110] sm:$0xff]
    %v352 = vld [vmem:[#allocation5 + $0x118] sm:$0xff]
    %v353 = vld [vmem:[#allocation5 + $0x120] sm:$0xff]
    %v354 = vld [vmem:[#allocation5 + $0x128] sm:$0xff]
    %v355 = vld [vmem:[#allocation5 + $0x130] sm:$0xff]
    %v356 = vld [vmem:[#allocation5 + $0x138] sm:$0xff]
    %v357 = vld [vmem:[#allocation5 + $0x140] sm:$0xff]
    %v358 = vld [vmem:[#allocation5 + $0x148] sm:$0xff]
    %v359 = vld [vmem:[#allocation5 + $0x150] sm:$0xff]
    %v360 = vld [vmem:[#allocation5 + $0x158] sm:$0xff]
    %v361 = vld [vmem:[#allocation5 + $0x160] sm:$0xff]
    %v362 = vld [vmem:[#allocation5 + $0x168] sm:$0xff]
    %v363 = vld [vmem:[#allocation5 + $0x170] sm:$0xff]
    %v364 = vld [vmem:[#allocation5 + $0x178] sm:$0xff]
    %v365 = vld [vmem:[#allocation5 + $0x180] sm:$0xff]
    %v366 = vld [vmem:[#allocation5 + $0x188] sm:$0xff]
    %v367 = vld [vmem:[#allocation5 + $0x190] sm:$0xff]
    %v368 = vld [vmem:[#allocation5 + $0x198] sm:$0xff]
    %v369 = vld [vmem:[#allocation5 + $0x1a0] sm:$0xff]
    %v370 = vld [vmem:[#allocation5 + $0x1a8] sm:$0xff]
    %v371 = vld [vmem:[#allocation5 + $0x1b0] sm:$0xff]
    %v372 = vld [vmem:[#allocation5 + $0x1b8] sm:$0xff]
    %v373 = vld [vmem:[#allocation5 + $0x1c0] sm:$0xff]
    %v374 = vld [vmem:[#allocation5 + $0x1c8] sm:$0xff]
    %v375 = vld [vmem:[#allocation5 + $0x1d0] sm:$0xff]
    %v376 = vld [vmem:[#allocation5 + $0x1d8] sm:$0xff]
    %v377 = vld [vmem:[#allocation5 + $0x1e0] sm:$0xff]
    %v378 = vld [vmem:[#allocation5 + $0x1e8] sm:$0xff]
    %v379 = vld [vmem:[#allocation5 + $0x1f0] sm:$0xff]
    %v380 = vld [vmem:[#allocation5 + $0x1f8] sm:$0xff]
    %v381 = vld [vmem:[%s3] sm:$0xf]
    %v383 = vperm.slane %v381, 0
    %v384 = vperm.slane %v381, 1
    %v385 = vperm.slane %v381, 2
    %v386 = vperm.slane %v381, 3
    %v391 = vld [vmem:[#allocation2] sm:$0xff]
    %v392 = vld [vmem:[#allocation2 + $0x8] sm:$0xff]
    %v393 = vld [vmem:[#allocation2 + $0x10] sm:$0xff]
    %v394 = vld [vmem:[#allocation2 + $0x18] sm:$0xff]
    %395 = vmatpush.xpose.msra.mxu0 %v332
    %396 = vmatpush.xpose.msra.mxu0 %v331
    %397 = vmatpush.xpose.msra.mxu0 %v330
    %398 = vmatpush.xpose.msra.mxu0 %v329
    %399 = vmatpush.xpose.msra.mxu0 %v328
    %400 = vmatpush.xpose.msra.mxu0 %v327
    %401 = vmatpush.xpose.msra.mxu0 %v326
    %402 = vmatpush.xpose.msra.mxu0 %v325
    %403 = vmatpush.xpose.msra.mxu0 %v324
    %404 = vmatpush.xpose.msra.mxu0 %v323
    %405 = vmatpush.xpose.msra.mxu0 %v322
    %406 = vmatpush.xpose.msra.mxu0 %v321
    %407 = vmatpush.xpose.msra.mxu0 %v320
    %408 = vmatpush.xpose.msra.mxu0 %v319
    %409 = vmatpush.xpose.msra.mxu0 %v318
    %410 = vmatpush.xpose.msra.mxu0 %v317
    %411 = vmatmul.f32.gmra.mxu0 0.0
    %v412 = vpop.f32.mrf.mxu0
    %v413 = vadd.f32 %v383, %v412
    %414 = vdwg.mxu0
    %415 = vmatpush.xpose.msra.mxu0 %v348
    %416 = vmatpush.xpose.msra.mxu0 %v347
    %417 = vmatpush.xpose.msra.mxu0 %v346
    %418 = vmatpush.xpose.msra.mxu0 %v345
    %419 = vmatpush.xpose.msra.mxu0 %v344
    %420 = vmatpush.xpose.msra.mxu0 %v343
    %421 = vmatpush.xpose.msra.mxu0 %v342
    %422 = vmatpush.xpose.msra.mxu0 %v341
    %423 = vmatpush.xpose.msra.mxu0 %v340
    %424 = vmatpush.xpose.msra.mxu0 %v339
    %425 = vmatpush.xpose.msra.mxu0 %v338
    %426 = vmatpush.xpose.msra.mxu0 %v337
    %427 = vmatpush.xpose.msra.mxu0 %v336
    %428 = vmatpush.xpose.msra.mxu0 %v335
    %429 = vmatpush.xpose.msra.mxu0 %v334
    %430 = vmatpush.xpose.msra.mxu0 %v333
    %431 = vmatmul.f32.gmra.mxu0 0.0
    %v432 = vpop.f32.mrf.mxu0
    %v433 = vadd.f32 %v384, %v432
    %434 = vdwg.mxu0
    %435 = vmatpush.xpose.msra.mxu0 %v364
    %436 = vmatpush.xpose.msra.mxu0 %v363
    %437 = vmatpush.xpose.msra.mxu0 %v362
    %438 = vmatpush.xpose.msra.mxu0 %v361
    %439 = vmatpush.xpose.msra.mxu0 %v360
    %440 = vmatpush.xpose.msra.mxu0 %v359
    %441 = vmatpush.xpose.msra.mxu0 %v358
    %442 = vmatpush.xpose.msra.mxu0 %v357
    %443 = vmatpush.xpose.msra.mxu0 %v356
    %444 = vmatpush.xpose.msra.mxu0 %v355
    %445 = vmatpush.xpose.msra.mxu0 %v354
    %446 = vmatpush.xpose.msra.mxu0 %v353
    %447 = vmatpush.xpose.msra.mxu0 %v352
    %448 = vmatpush.xpose.msra.mxu0 %v351
    %449 = vmatpush.xpose.msra.mxu0 %v350
    %450 = vmatpush.xpose.msra.mxu0 %v349
    %451 = vmatmul.f32.gmra.mxu0 0.0
    %v452 = vpop.f32.mrf.mxu0
    %v453 = vadd.f32 %v385, %v452
    %454 = vdwg.mxu0
    %455 = vmatpush.xpose.msra.mxu0 %v380
    %456 = vmatpush.xpose.msra.mxu0 %v379
    %457 = vmatpush.xpose.msra.mxu0 %v378
    %458 = vmatpush.xpose.msra.mxu0 %v377
    %459 = vmatpush.xpose.msra.mxu0 %v376
    %460 = vmatpush.xpose.msra.mxu0 %v375
    %461 = vmatpush.xpose.msra.mxu0 %v374
    %462 = vmatpush.xpose.msra.mxu0 %v373
    %463 = vmatpush.xpose.msra.mxu0 %v372
    %464 = vmatpush.xpose.msra.mxu0 %v371
    %465 = vmatpush.xpose.msra.mxu0 %v370
    %466 = vmatpush.xpose.msra.mxu0 %v369
    %467 = vmatpush.xpose.msra.mxu0 %v368
    %468 = vmatpush.xpose.msra.mxu0 %v367
    %469 = vmatpush.xpose.msra.mxu0 %v366
    %470 = vmatpush.xpose.msra.mxu0 %v365
    %471 = vmatmul.f32.gmra.mxu0 0.0
    %v472 = vpop.f32.mrf.mxu0
    %v473 = vadd.f32 %v386, %v472
    %474 = vdwg.mxu0
    %v475 = vadd.f32 %v413, %v391
    %v476 = vadd.f32 %v433, %v392
    %v477 = vadd.f32 %v453, %v393
    %v478 = vadd.f32 %v473, %v394
    %v479 = vxor.u32 %v475, 2147483648
    %v480 = vmul.f32 %v479, 1.442695
    %v481 = vpow.pop %v480
    %v482 = vadd.f32 %v481, 1.0
    %v483 = vrcp.pop %v482
    %v484 = vmul.f32 %v482, %v483
    %v485 = vsub.f32 1.0, %v484
    %v486 = vmul.f32 %v483, %v485
    %v487 = vadd.f32 %v483, %v486
    %vm488 = vweird.f32 %v482
    %vm489 = vweird.f32 %v483
    %vm490 = vmor %vm488, %vm489
    %v491 = vsel %vm490, %v483, %v487
    %v492 = vand.u32 2147483647, %v482
    %vm493 = vcmp.eq.f32.partialorder %v492, 8.507059e+37
    %v494 = vand.u32 %v482, 2147483648
    %v495 = vor.u32 1.1754944e-38, %v494
    %v496 = vsel %vm493, %v495, %v491
    %v497 = vmul.f32 1.0, %v496
    %v498 = vxor.u32 %v476, 2147483648
    %v499 = vmul.f32 %v498, 1.442695
    %v500 = vpow.pop %v499
    %v501 = vadd.f32 %v500, 1.0
    %v502 = vrcp.pop %v501
    %v503 = vmul.f32 %v501, %v502
    %v504 = vsub.f32 1.0, %v503
    %v505 = vmul.f32 %v502, %v504
    %v506 = vadd.f32 %v502, %v505
    %vm507 = vweird.f32 %v501
    %vm508 = vweird.f32 %v502
    %vm509 = vmor %vm507, %vm508
    %v510 = vsel %vm509, %v502, %v506
    %v511 = vand.u32 2147483647, %v501
    %vm512 = vcmp.eq.f32.partialorder %v511, 8.507059e+37
    %v513 = vand.u32 %v501, 2147483648
    %v514 = vor.u32 1.1754944e-38, %v513
    %v515 = vsel %vm512, %v514, %v510
    %v516 = vmul.f32 1.0, %v515
    %v517 = vtanh.pop %v477
    %v518 = vxor.u32 %v478, 2147483648
    %v519 = vmul.f32 %v518, 1.442695
    %v520 = vpow.pop %v519
    %v521 = vadd.f32 %v520, 1.0
    %v522 = vrcp.pop %v521
    %v523 = vmul.f32 %v521, %v522
    %v524 = vsub.f32 1.0, %v523
    %v525 = vmul.f32 %v522, %v524
    %v526 = vadd.f32 %v522, %v525
    %vm527 = vweird.f32 %v521
    %vm528 = vweird.f32 %v522
    %vm529 = vmor %vm527, %vm528
    %v530 = vsel %vm529, %v522, %v526
    %v531 = vand.u32 2147483647, %v521
    %vm532 = vcmp.eq.f32.partialorder %v531, 8.507059e+37
    %v533 = vand.u32 %v521, 2147483648
    %v534 = vor.u32 1.1754944e-38, %v533
    %v535 = vsel %vm532, %v534, %v530
    %v536 = vmul.f32 1.0, %v535
    %v537 = vmul.f32 %v516, 0.0
    %v538 = vmul.f32 %v497, %v517
    %v539 = vadd.f32 %v537, %v538
    %v540 = vtanh.pop %v539
    %v541 = vmul.f32 %v536, %v540
    %542 = vst [vmem:[%s4] sm:$0xff] %v541
    %s543 = scalar_lea.vmem [#allocation2], 32
    %v544 = vld [vmem:[%s543] sm:$0xff]
    %v545 = vld [vmem:[%s543 + $0x8] sm:$0xff]
    %v546 = vld [vmem:[%s543 + $0x10] sm:$0xff]
    %v547 = vld [vmem:[%s543 + $0x18] sm:$0xff]
    %548 = vmatpush.xpose.msra.mxu0 %v332
    %549 = vmatpush.xpose.msra.mxu0 %v331
    %550 = vmatpush.xpose.msra.mxu0 %v330
    %551 = vmatpush.xpose.msra.mxu0 %v329
    %552 = vmatpush.xpose.msra.mxu0 %v328
    %553 = vmatpush.xpose.msra.mxu0 %v327
    %554 = vmatpush.xpose.msra.mxu0 %v326
    %555 = vmatpush.xpose.msra.mxu0 %v325
    %556 = vmatpush.xpose.msra.mxu0 %v324
    %557 = vmatpush.xpose.msra.mxu0 %v323
    %558 = vmatpush.xpose.msra.mxu0 %v322
    %559 = vmatpush.xpose.msra.mxu0 %v321
    %560 = vmatpush.xpose.msra.mxu0 %v320
    %561 = vmatpush.xpose.msra.mxu0 %v319
    %562 = vmatpush.xpose.msra.mxu0 %v318
    %563 = vmatpush.xpose.msra.mxu0 %v317
    %564 = vmatmul.f32.gmra.mxu0 %v541
    %v565 = vpop.f32.mrf.mxu0
    %v566 = vadd.f32 %v383, %v565
    %567 = vdwg.mxu0
    %568 = vmatpush.xpose.msra.mxu0 %v348
    %569 = vmatpush.xpose.msra.mxu0 %v347
    %570 = vmatpush.xpose.msra.mxu0 %v346
    %571 = vmatpush.xpose.msra.mxu0 %v345
    %572 = vmatpush.xpose.msra.mxu0 %v344
    %573 = vmatpush.xpose.msra.mxu0 %v343
    %574 = vmatpush.xpose.msra.mxu0 %v342
    %575 = vmatpush.xpose.msra.mxu0 %v341
    %576 = vmatpush.xpose.msra.mxu0 %v340
    %577 = vmatpush.xpose.msra.mxu0 %v339
    %578 = vmatpush.xpose.msra.mxu0 %v338
    %579 = vmatpush.xpose.msra.mxu0 %v337
    %580 = vmatpush.xpose.msra.mxu0 %v336
    %581 = vmatpush.xpose.msra.mxu0 %v335
    %582 = vmatpush.xpose.msra.mxu0 %v334
    %583 = vmatpush.xpose.msra.mxu0 %v333
    %584 = vmatmul.f32.gmra.mxu0 %v541
    %v585 = vpop.f32.mrf.mxu0
    %v586 = vadd.f32 %v384, %v585
    %587 = vdwg.mxu0
    %588 = vmatpush.xpose.msra.mxu0 %v364
    %589 = vmatpush.xpose.msra.mxu0 %v363
    %590 = vmatpush.xpose.msra.mxu0 %v362
    %591 = vmatpush.xpose.msra.mxu0 %v361
    %592 = vmatpush.xpose.msra.mxu0 %v360
    %593 = vmatpush.xpose.msra.mxu0 %v359
    %594 = vmatpush.xpose.msra.mxu0 %v358
    %595 = vmatpush.xpose.msra.mxu0 %v357
    %596 = vmatpush.xpose.msra.mxu0 %v356
    %597 = vmatpush.xpose.msra.mxu0 %v355
    %598 = vmatpush.xpose.msra.mxu0 %v354
    %599 = vmatpush.xpose.msra.mxu0 %v353
    %600 = vmatpush.xpose.msra.mxu0 %v352
    %601 = vmatpush.xpose.msra.mxu0 %v351
    %602 = vmatpush.xpose.msra.mxu0 %v350
    %603 = vmatpush.xpose.msra.mxu0 %v349
    %604 = vmatmul.f32.gmra.mxu0 %v541
    %v605 = vpop.f32.mrf.mxu0
    %v606 = vadd.f32 %v385, %v605
    %607 = vdwg.mxu0
    %608 = vmatpush.xpose.msra.mxu0 %v380
    %609 = vmatpush.xpose.msra.mxu0 %v379
    %610 = vmatpush.xpose.msra.mxu0 %v378
    %611 = vmatpush.xpose.msra.mxu0 %v377
    %612 = vmatpush.xpose.msra.mxu0 %v376
    %613 = vmatpush.xpose.msra.mxu0 %v375
    %614 = vmatpush.xpose.msra.mxu0 %v374
    %615 = vmatpush.xpose.msra.mxu0 %v373
    %616 = vmatpush.xpose.msra.mxu0 %v372
    %617 = vmatpush.xpose.msra.mxu0 %v371
    %618 = vmatpush.xpose.msra.mxu0 %v370
    %619 = vmatpush.xpose.msra.mxu0 %v369
    %620 = vmatpush.xpose.msra.mxu0 %v368
    %621 = vmatpush.xpose.msra.mxu0 %v367
    %622 = vmatpush.xpose.msra.mxu0 %v366
    %623 = vmatpush.xpose.msra.mxu0 %v365
    %624 = vmatmul.f32.gmra.mxu0 %v541
    %v625 = vpop.f32.mrf.mxu0
    %v626 = vadd.f32 %v386, %v625
    %627 = vdwg.mxu0
    %v628 = vadd.f32 %v566, %v544
    %v629 = vadd.f32 %v586, %v545
    %v630 = vadd.f32 %v606, %v546
    %v631 = vadd.f32 %v626, %v547
    %v632 = vxor.u32 %v628, 2147483648
    %v633 = vmul.f32 %v632, 1.442695
    %v634 = vpow.pop %v633
    %v635 = vadd.f32 %v634, 1.0
    %v636 = vrcp.pop %v635
    %v637 = vmul.f32 %v635, %v636
    %v638 = vsub.f32 1.0, %v637
    %v639 = vmul.f32 %v636, %v638
    %v640 = vadd.f32 %v636, %v639
    %vm641 = vweird.f32 %v635
    %vm642 = vweird.f32 %v636
    %vm643 = vmor %vm641, %vm642
    %v644 = vsel %vm643, %v636, %v640
    %v645 = vand.u32 2147483647, %v635
    %vm646 = vcmp.eq.f32.partialorder %v645, 8.507059e+37
    %v647 = vand.u32 %v635, 2147483648
    %v648 = vor.u32 1.1754944e-38, %v647
    %v649 = vsel %vm646, %v648, %v644
    %v650 = vmul.f32 1.0, %v649
    %v651 = vxor.u32 %v629, 2147483648
    %v652 = vmul.f32 %v651, 1.442695
    %v653 = vpow.pop %v652
    %v654 = vadd.f32 %v653, 1.0
    %v655 = vrcp.pop %v654
    %v656 = vmul.f32 %v654, %v655
    %v657 = vsub.f32 1.0, %v656
    %v658 = vmul.f32 %v655, %v657
    %v659 = vadd.f32 %v655, %v658
    %vm660 = vweird.f32 %v654
    %vm661 = vweird.f32 %v655
    %vm662 = vmor %vm660, %vm661
    %v663 = vsel %vm662, %v655, %v659
    %v664 = vand.u32 2147483647, %v654
    %vm665 = vcmp.eq.f32.partialorder %v664, 8.507059e+37
    %v666 = vand.u32 %v654, 2147483648
    %v667 = vor.u32 1.1754944e-38, %v666
    %v668 = vsel %vm665, %v667, %v663
    %v669 = vmul.f32 1.0, %v668
    %v670 = vtanh.pop %v630
    %v671 = vxor.u32 %v631, 2147483648
    %v672 = vmul.f32 %v671, 1.442695
    %v673 = vpow.pop %v672
    %v674 = vadd.f32 %v673, 1.0
    %v675 = vrcp.pop %v674
    %v676 = vmul.f32 %v674, %v675
    %v677 = vsub.f32 1.0, %v676
    %v678 = vmul.f32 %v675, %v677
    %v679 = vadd.f32 %v675, %v678
    %vm680 = vweird.f32 %v674
    %vm681 = vweird.f32 %v675
    %vm682 = vmor %vm680, %vm681
    %v683 = vsel %vm682, %v675, %v679
    %v684 = vand.u32 2147483647, %v674
    %vm685 = vcmp.eq.f32.partialorder %v684, 8.507059e+37
    %v686 = vand.u32 %v674, 2147483648
    %v687 = vor.u32 1.1754944e-38, %v686
    %v688 = vsel %vm685, %v687, %v683
    %v689 = vmul.f32 1.0, %v688
    %v690 = vmul.f32 %v669, %v539
    %v691 = vmul.f32 %v650, %v670
    %v692 = vadd.f32 %v690, %v691
    %v693 = vtanh.pop %v692
    %v694 = vmul.f32 %v689, %v693
    %s695 = scalar_lea.vmem %s4, 8
    %696 = vst [vmem:[%s695] sm:$0xff] %v694
    %s697 = scalar_lea.vmem [#allocation2], 64
    %v698 = vld [vmem:[%s697] sm:$0xff]
    %v699 = vld [vmem:[%s697 + $0x8] sm:$0xff]
    %v700 = vld [vmem:[%s697 + $0x10] sm:$0xff]
    %v701 = vld [vmem:[%s697 + $0x18] sm:$0xff]
    %702 = vmatpush.xpose.msra.mxu0 %v332
    %703 = vmatpush.xpose.msra.mxu0 %v331
    %704 = vmatpush.xpose.msra.mxu0 %v330
    %705 = vmatpush.xpose.msra.mxu0 %v329
    %706 = vmatpush.xpose.msra.mxu0 %v328
    %707 = vmatpush.xpose.msra.mxu0 %v327
    %708 = vmatpush.xpose.msra.mxu0 %v326
    %709 = vmatpush.xpose.msra.mxu0 %v325
    %710 = vmatpush.xpose.msra.mxu0 %v324
    %711 = vmatpush.xpose.msra.mxu0 %v323
    %712 = vmatpush.xpose.msra.mxu0 %v322
    %713 = vmatpush.xpose.msra.mxu0 %v321
    %714 = vmatpush.xpose.msra.mxu0 %v320
    %715 = vmatpush.xpose.msra.mxu0 %v319
    %716 = vmatpush.xpose.msra.mxu0 %v318
    %717 = vmatpush.xpose.msra.mxu0 %v317
    %718 = vmatmul.f32.gmra.mxu0 %v694
    %v719 = vpop.f32.mrf.mxu0
    %v720 = vadd.f32 %v383, %v719
    %721 = vdwg.mxu0
    %722 = vmatpush.xpose.msra.mxu0 %v348
    %723 = vmatpush.xpose.msra.mxu0 %v347
    %724 = vmatpush.xpose.msra.mxu0 %v346
    %725 = vmatpush.xpose.msra.mxu0 %v345
    %726 = vmatpush.xpose.msra.mxu0 %v344
    %727 = vmatpush.xpose.msra.mxu0 %v343
    %728 = vmatpush.xpose.msra.mxu0 %v342
    %729 = vmatpush.xpose.msra.mxu0 %v341
    %730 = vmatpush.xpose.msra.mxu0 %v340
    %731 = vmatpush.xpose.msra.mxu0 %v339
    %732 = vmatpush.xpose.msra.mxu0 %v338
    %733 = vmatpush.xpose.msra.mxu0 %v337
    %734 = vmatpush.xpose.msra.mxu0 %v336
    %735 = vmatpush.xpose.msra.mxu0 %v335
    %736 = vmatpush.xpose.msra.mxu0 %v334
    %737 = vmatpush.xpose.msra.mxu0 %v333
    %738 = vmatmul.f32.gmra.mxu0 %v694
    %v739 = vpop.f32.mrf.mxu0
    %v740 = vadd.f32 %v384, %v739
    %741 = vdwg.mxu0
    %742 = vmatpush.xpose.msra.mxu0 %v364
    %743 = vmatpush.xpose.msra.mxu0 %v363
    %744 = vmatpush.xpose.msra.mxu0 %v362
    %745 = vmatpush.xpose.msra.mxu0 %v361
    %746 = vmatpush.xpose.msra.mxu0 %v360
    %747 = vmatpush.xpose.msra.mxu0 %v359
    %748 = vmatpush.xpose.msra.mxu0 %v358
    %749 = vmatpush.xpose.msra.mxu0 %v357
    %750 = vmatpush.xpose.msra.mxu0 %v356
    %751 = vmatpush.xpose.msra.mxu0 %v355
    %752 = vmatpush.xpose.msra.mxu0 %v354
    %753 = vmatpush.xpose.msra.mxu0 %v353
    %754 = vmatpush.xpose.msra.mxu0 %v352
    %755 = vmatpush.xpose.msra.mxu0 %v351
    %756 = vmatpush.xpose.msra.mxu0 %v350
    %757 = vmatpush.xpose.msra.mxu0 %v349
    %758 = vmatmul.f32.gmra.mxu0 %v694
    %v759 = vpop.f32.mrf.mxu0
    %v760 = vadd.f32 %v385, %v759
    %761 = vdwg.mxu0
    %762 = vmatpush.xpose.msra.mxu0 %v380
    %763 = vmatpush.xpose.msra.mxu0 %v379
    %764 = vmatpush.xpose.msra.mxu0 %v378
    %765 = vmatpush.xpose.msra.mxu0 %v377
    %766 = vmatpush.xpose.msra.mxu0 %v376
    %767 = vmatpush.xpose.msra.mxu0 %v375
    %768 = vmatpush.xpose.msra.mxu0 %v374
    %769 = vmatpush.xpose.msra.mxu0 %v373
    %770 = vmatpush.xpose.msra.mxu0 %v372
    %771 = vmatpush.xpose.msra.mxu0 %v371
    %772 = vmatpush.xpose.msra.mxu0 %v370
    %773 = vmatpush.xpose.msra.mxu0 %v369
    %774 = vmatpush.xpose.msra.mxu0 %v368
    %775 = vmatpush.xpose.msra.mxu0 %v367
    %776 = vmatpush.xpose.msra.mxu0 %v366
    %777 = vmatpush.xpose.msra.mxu0 %v365
    %778 = vmatmul.f32.gmra.mxu0 %v694
    %v779 = vpop.f32.mrf.mxu0
    %v780 = vadd.f32 %v386, %v779
    %781 = vdwg.mxu0
    %v782 = vadd.f32 %v720, %v698
    %v783 = vadd.f32 %v740, %v699
    %v784 = vadd.f32 %v760, %v700
    %v785 = vadd.f32 %v780, %v701
    %v786 = vxor.u32 %v782, 2147483648
    %v787 = vmul.f32 %v786, 1.442695
    %v788 = vpow.pop %v787
    %v789 = vadd.f32 %v788, 1.0
    %v790 = vrcp.pop %v789
    %v791 = vmul.f32 %v789, %v790
    %v792 = vsub.f32 1.0, %v791
    %v793 = vmul.f32 %v790, %v792
    %v794 = vadd.f32 %v790, %v793
    %vm795 = vweird.f32 %v789
    %vm796 = vweird.f32 %v790
    %vm797 = vmor %vm795, %vm796
    %v798 = vsel %vm797, %v790, %v794
    %v799 = vand.u32 2147483647, %v789
    %vm800 = vcmp.eq.f32.partialorder %v799, 8.507059e+37
    %v801 = vand.u32 %v789, 2147483648
    %v802 = vor.u32 1.1754944e-38, %v801
    %v803 = vsel %vm800, %v802, %v798
    %v804 = vmul.f32 1.0, %v803
    %v805 = vxor.u32 %v783, 2147483648
    %v806 = vmul.f32 %v805, 1.442695
    %v807 = vpow.pop %v806
    %v808 = vadd.f32 %v807, 1.0
    %v809 = vrcp.pop %v808
    %v810 = vmul.f32 %v808, %v809
    %v811 = vsub.f32 1.0, %v810
    %v812 = vmul.f32 %v809, %v811
    %v813 = vadd.f32 %v809, %v812
    %vm814 = vweird.f32 %v808
    %vm815 = vweird.f32 %v809
    %vm816 = vmor %vm814, %vm815
    %v817 = vsel %vm816, %v809, %v813
    %v818 = vand.u32 2147483647, %v808
    %vm819 = vcmp.eq.f32.partialorder %v818, 8.507059e+37
    %v820 = vand.u32 %v808, 2147483648
    %v821 = vor.u32 1.1754944e-38, %v820
    %v822 = vsel %vm819, %v821, %v817
    %v823 = vmul.f32 1.0, %v822
    %v824 = vtanh.pop %v784
    %v825 = vxor.u32 %v785, 2147483648
    %v826 = vmul.f32 %v825, 1.442695
    %v827 = vpow.pop %v826
    %v828 = vadd.f32 %v827, 1.0
    %v829 = vrcp.pop %v828
    %v830 = vmul.f32 %v828, %v829
    %v831 = vsub.f32 1.0, %v830
    %v832 = vmul.f32 %v829, %v831
    %v833 = vadd.f32 %v829, %v832
    %vm834 = vweird.f32 %v828
    %vm835 = vweird.f32 %v829
    %vm836 = vmor %vm834, %vm835
    %v837 = vsel %vm836, %v829, %v833
    %v838 = vand.u32 2147483647, %v828
    %vm839 = vcmp.eq.f32.partialorder %v838, 8.507059e+37
    %v840 = vand.u32 %v828, 2147483648
    %v841 = vor.u32 1.1754944e-38, %v840
    %v842 = vsel %vm839, %v841, %v837
    %v843 = vmul.f32 1.0, %v842
    %v844 = vmul.f32 %v823, %v692
    %v845 = vmul.f32 %v804, %v824
    %v846 = vadd.f32 %v844, %v845
    %v847 = vtanh.pop %v846
    %v848 = vmul.f32 %v843, %v847
    %s849 = scalar_lea.vmem %s4, 16
    %850 = vst [vmem:[%s849] sm:$0xff] %v848
    %s851 = scalar_lea.vmem [#allocation2], 96
    %v852 = vld [vmem:[%s851] sm:$0xff]
    %v853 = vld [vmem:[%s851 + $0x8] sm:$0xff]
    %v854 = vld [vmem:[%s851 + $0x10] sm:$0xff]
    %v855 = vld [vmem:[%s851 + $0x18] sm:$0xff]
    %856 = vmatpush.xpose.msra.mxu0 %v332
    %857 = vmatpush.xpose.msra.mxu0 %v331
    %858 = vmatpush.xpose.msra.mxu0 %v330
    %859 = vmatpush.xpose.msra.mxu0 %v329
    %860 = vmatpush.xpose.msra.mxu0 %v328
    %861 = vmatpush.xpose.msra.mxu0 %v327
    %862 = vmatpush.xpose.msra.mxu0 %v326
    %863 = vmatpush.xpose.msra.mxu0 %v325
    %864 = vmatpush.xpose.msra.mxu0 %v324
    %865 = vmatpush.xpose.msra.mxu0 %v323
    %866 = vmatpush.xpose.msra.mxu0 %v322
    %867 = vmatpush.xpose.msra.mxu0 %v321
    %868 = vmatpush.xpose.msra.mxu0 %v320
    %869 = vmatpush.xpose.msra.mxu0 %v319
    %870 = vmatpush.xpose.msra.mxu0 %v318
    %871 = vmatpush.xpose.msra.mxu0 %v317
    %872 = vmatmul.f32.gmra.mxu0 %v848
    %v873 = vpop.f32.mrf.mxu0
    %v874 = vadd.f32 %v383, %v873
    %875 = vdwg.mxu0
    %876 = vmatpush.xpose.msra.mxu0 %v348
    %877 = vmatpush.xpose.msra.mxu0 %v347
    %878 = vmatpush.xpose.msra.mxu0 %v346
    %879 = vmatpush.xpose.msra.mxu0 %v345
    %880 = vmatpush.xpose.msra.mxu0 %v344
    %881 = vmatpush.xpose.msra.mxu0 %v343
    %882 = vmatpush.xpose.msra.mxu0 %v342
    %883 = vmatpush.xpose.msra.mxu0 %v341
    %884 = vmatpush.xpose.msra.mxu0 %v340
    %885 = vmatpush.xpose.msra.mxu0 %v339
    %886 = vmatpush.xpose.msra.mxu0 %v338
    %887 = vmatpush.xpose.msra.mxu0 %v337
    %888 = vmatpush.xpose.msra.mxu0 %v336
    %889 = vmatpush.xpose.msra.mxu0 %v335
    %890 = vmatpush.xpose.msra.mxu0 %v334
    %891 = vmatpush.xpose.msra.mxu0 %v333
    %892 = vmatmul.f32.gmra.mxu0 %v848
    %v893 = vpop.f32.mrf.mxu0
    %v894 = vadd.f32 %v384, %v893
    %895 = vdwg.mxu0
    %896 = vmatpush.xpose.msra.mxu0 %v364
    %897 = vmatpush.xpose.msra.mxu0 %v363
    %898 = vmatpush.xpose.msra.mxu0 %v362
    %899 = vmatpush.xpose.msra.mxu0 %v361
    %900 = vmatpush.xpose.msra.mxu0 %v360
    %901 = vmatpush.xpose.msra.mxu0 %v359
    %902 = vmatpush.xpose.msra.mxu0 %v358
    %903 = vmatpush.xpose.msra.mxu0 %v357
    %904 = vmatpush.xpose.msra.mxu0 %v356
    %905 = vmatpush.xpose.msra.mxu0 %v355
    %906 = vmatpush.xpose.msra.mxu0 %v354
    %907 = vmatpush.xpose.msra.mxu0 %v353
    %908 = vmatpush.xpose.msra.mxu0 %v352
    %909 = vmatpush.xpose.msra.mxu0 %v351
    %910 = vmatpush.xpose.msra.mxu0 %v350
    %911 = vmatpush.xpose.msra.mxu0 %v349
    %912 = vmatmul.f32.gmra.mxu0 %v848
    %v913 = vpop.f32.mrf.mxu0
    %v914 = vadd.f32 %v385, %v913
    %915 = vdwg.mxu0
    %916 = vmatpush.xpose.msra.mxu0 %v380
    %917 = vmatpush.xpose.msra.mxu0 %v379
    %918 = vmatpush.xpose.msra.mxu0 %v378
    %919 = vmatpush.xpose.msra.mxu0 %v377
    %920 = vmatpush.xpose.msra.mxu0 %v376
    %921 = vmatpush.xpose.msra.mxu0 %v375
    %922 = vmatpush.xpose.msra.mxu0 %v374
    %923 = vmatpush.xpose.msra.mxu0 %v373
    %924 = vmatpush.xpose.msra.mxu0 %v372
    %925 = vmatpush.xpose.msra.mxu0 %v371
    %926 = vmatpush.xpose.msra.mxu0 %v370
    %927 = vmatpush.xpose.msra.mxu0 %v369
    %928 = vmatpush.xpose.msra.mxu0 %v368
    %929 = vmatpush.xpose.msra.mxu0 %v367
    %930 = vmatpush.xpose.msra.mxu0 %v366
    %931 = vmatpush.xpose.msra.mxu0 %v365
    %932 = vmatmul.f32.gmra.mxu0 %v848
    %v933 = vpop.f32.mrf.mxu0
    %v934 = vadd.f32 %v386, %v933
    %935 = vdwg.mxu0
    %v936 = vadd.f32 %v874, %v852
    %v937 = vadd.f32 %v894, %v853
    %v938 = vadd.f32 %v914, %v854
    %v939 = vadd.f32 %v934, %v855
    %v940 = vxor.u32 %v936, 2147483648
    %v941 = vmul.f32 %v940, 1.442695
    %v942 = vpow.pop %v941
    %v943 = vadd.f32 %v942, 1.0
    %v944 = vrcp.pop %v943
    %v945 = vmul.f32 %v943, %v944
    %v946 = vsub.f32 1.0, %v945
    %v947 = vmul.f32 %v944, %v946
    %v948 = vadd.f32 %v944, %v947
    %vm949 = vweird.f32 %v943
    %vm950 = vweird.f32 %v944
    %vm951 = vmor %vm949, %vm950
    %v952 = vsel %vm951, %v944, %v948
    %v953 = vand.u32 2147483647, %v943
    %vm954 = vcmp.eq.f32.partialorder %v953, 8.507059e+37
    %v955 = vand.u32 %v943, 2147483648
    %v956 = vor.u32 1.1754944e-38, %v955
    %v957 = vsel %vm954, %v956, %v952
    %v958 = vmul.f32 1.0, %v957
    %v959 = vxor.u32 %v937, 2147483648
    %v960 = vmul.f32 %v959, 1.442695
    %v961 = vpow.pop %v960
    %v962 = vadd.f32 %v961, 1.0
    %v963 = vrcp.pop %v962
    %v964 = vmul.f32 %v962, %v963
    %v965 = vsub.f32 1.0, %v964
    %v966 = vmul.f32 %v963, %v965
    %v967 = vadd.f32 %v963, %v966
    %vm968 = vweird.f32 %v962
    %vm969 = vweird.f32 %v963
    %vm970 = vmor %vm968, %vm969
    %v971 = vsel %vm970, %v963, %v967
    %v972 = vand.u32 2147483647, %v962
    %vm973 = vcmp.eq.f32.partialorder %v972, 8.507059e+37
    %v974 = vand.u32 %v962, 2147483648
    %v975 = vor.u32 1.1754944e-38, %v974
    %v976 = vsel %vm973, %v975, %v971
    %v977 = vmul.f32 1.0, %v976
    %v978 = vtanh.pop %v938
    %v979 = vxor.u32 %v939, 2147483648
    %v980 = vmul.f32 %v979, 1.442695
    %v981 = vpow.pop %v980
    %v982 = vadd.f32 %v981, 1.0
    %v983 = vrcp.pop %v982
    %v984 = vmul.f32 %v982, %v983
    %v985 = vsub.f32 1.0, %v984
    %v986 = vmul.f32 %v983, %v985
    %v987 = vadd.f32 %v983, %v986
    %vm988 = vweird.f32 %v982
    %vm989 = vweird.f32 %v983
    %vm990 = vmor %vm988, %vm989
    %v991 = vsel %vm990, %v983, %v987
    %v992 = vand.u32 2147483647, %v982
    %vm993 = vcmp.eq.f32.partialorder %v992, 8.507059e+37
    %v994 = vand.u32 %v982, 2147483648
    %v995 = vor.u32 1.1754944e-38, %v994
    %v996 = vsel %vm993, %v995, %v991
    %v997 = vmul.f32 1.0, %v996
    %v998 = vmul.f32 %v977, %v846
    %v999 = vmul.f32 %v958, %v978
    %v1000 = vadd.f32 %v998, %v999
    %v1001 = vtanh.pop %v1000
    %v1002 = vmul.f32 %v997, %v1001
    %s1003 = scalar_lea.vmem %s4, 24
    %1004 = vst [vmem:[%s1003] sm:$0xff] %v1002
    %s1005 = scalar_lea.vmem [#allocation2], 128
    %v1006 = vld [vmem:[%s1005] sm:$0xff]
    %v1007 = vld [vmem:[%s1005 + $0x8] sm:$0xff]
    %v1008 = vld [vmem:[%s1005 + $0x10] sm:$0xff]
    %v1009 = vld [vmem:[%s1005 + $0x18] sm:$0xff]
    %1010 = vmatpush.xpose.msra.mxu0 %v332
    %1011 = vmatpush.xpose.msra.mxu0 %v331
    %1012 = vmatpush.xpose.msra.mxu0 %v330
    %1013 = vmatpush.xpose.msra.mxu0 %v329
    %1014 = vmatpush.xpose.msra.mxu0 %v328
    %1015 = vmatpush.xpose.msra.mxu0 %v327
    %1016 = vmatpush.xpose.msra.mxu0 %v326
    %1017 = vmatpush.xpose.msra.mxu0 %v325
    %1018 = vmatpush.xpose.msra.mxu0 %v324
    %1019 = vmatpush.xpose.msra.mxu0 %v323
    %1020 = vmatpush.xpose.msra.mxu0 %v322
    %1021 = vmatpush.xpose.msra.mxu0 %v321
    %1022 = vmatpush.xpose.msra.mxu0 %v320
    %1023 = vmatpush.xpose.msra.mxu0 %v319
    %1024 = vmatpush.xpose.msra.mxu0 %v318
    %1025 = vmatpush.xpose.msra.mxu0 %v317
    %1026 = vmatmul.f32.gmra.mxu0 %v1002
    %v1027 = vpop.f32.mrf.mxu0
    %v1028 = vadd.f32 %v383, %v1027
    %1029 = vdwg.mxu0
    %1030 = vmatpush.xpose.msra.mxu0 %v348
    %1031 = vmatpush.xpose.msra.mxu0 %v347
    %1032 = vmatpush.xpose.msra.mxu0 %v346
    %1033 = vmatpush.xpose.msra.mxu0 %v345
    %1034 = vmatpush.xpose.msra.mxu0 %v344
    %1035 = vmatpush.xpose.msra.mxu0 %v343
    %1036 = vmatpush.xpose.msra.mxu0 %v342
    %1037 = vmatpush.xpose.msra.mxu0 %v341
    %1038 = vmatpush.xpose.msra.mxu0 %v340
    %1039 = vmatpush.xpose.msra.mxu0 %v339
    %1040 = vmatpush.xpose.msra.mxu0 %v338
    %1041 = vmatpush.xpose.msra.mxu0 %v337
    %1042 = vmatpush.xpose.msra.mxu0 %v336
    %1043 = vmatpush.xpose.msra.mxu0 %v335
    %1044 = vmatpush.xpose.msra.mxu0 %v334
    %1045 = vmatpush.xpose.msra.mxu0 %v333
    %1046 = vmatmul.f32.gmra.mxu0 %v1002
    %v1047 = vpop.f32.mrf.mxu0
    %v1048 = vadd.f32 %v384, %v1047
    %1049 = vdwg.mxu0
    %1050 = vmatpush.xpose.msra.mxu0 %v364
    %1051 = vmatpush.xpose.msra.mxu0 %v363
    %1052 = vmatpush.xpose.msra.mxu0 %v362
    %1053 = vmatpush.xpose.msra.mxu0 %v361
    %1054 = vmatpush.xpose.msra.mxu0 %v360
    %1055 = vmatpush.xpose.msra.mxu0 %v359
    %1056 = vmatpush.xpose.msra.mxu0 %v358
    %1057 = vmatpush.xpose.msra.mxu0 %v357
    %1058 = vmatpush.xpose.msra.mxu0 %v356
    %1059 = vmatpush.xpose.msra.mxu0 %v355
    %1060 = vmatpush.xpose.msra.mxu0 %v354
    %1061 = vmatpush.xpose.msra.mxu0 %v353
    %1062 = vmatpush.xpose.msra.mxu0 %v352
    %1063 = vmatpush.xpose.msra.mxu0 %v351
    %1064 = vmatpush.xpose.msra.mxu0 %v350
    %1065 = vmatpush.xpose.msra.mxu0 %v349
    %1066 = vmatmul.f32.gmra.mxu0 %v1002
    %v1067 = vpop.f32.mrf.mxu0
    %v1068 = vadd.f32 %v385, %v1067
    %1069 = vdwg.mxu0
    %1070 = vmatpush.xpose.msra.mxu0 %v380
    %1071 = vmatpush.xpose.msra.mxu0 %v379
    %1072 = vmatpush.xpose.msra.mxu0 %v378
    %1073 = vmatpush.xpose.msra.mxu0 %v377
    %1074 = vmatpush.xpose.msra.mxu0 %v376
    %1075 = vmatpush.xpose.msra.mxu0 %v375
    %1076 = vmatpush.xpose.msra.mxu0 %v374
    %1077 = vmatpush.xpose.msra.mxu0 %v373
    %1078 = vmatpush.xpose.msra.mxu0 %v372
    %1079 = vmatpush.xpose.msra.mxu0 %v371
    %1080 = vmatpush.xpose.msra.mxu0 %v370
    %1081 = vmatpush.xpose.msra.mxu0 %v369
    %1082 = vmatpush.xpose.msra.mxu0 %v368
    %1083 = vmatpush.xpose.msra.mxu0 %v367
    %1084 = vmatpush.xpose.msra.mxu0 %v366
    %1085 = vmatpush.xpose.msra.mxu0 %v365
    %1086 = vmatmul.f32.gmra.mxu0 %v1002
    %v1087 = vpop.f32.mrf.mxu0
    %v1088 = vadd.f32 %v386, %v1087
    %1089 = vdwg.mxu0
    %v1090 = vadd.f32 %v1028, %v1006
    %v1091 = vadd.f32 %v1048, %v1007
    %v1092 = vadd.f32 %v1068, %v1008
    %v1093 = vadd.f32 %v1088, %v1009
    %v1094 = vxor.u32 %v1090, 2147483648
    %v1095 = vmul.f32 %v1094, 1.442695
    %v1096 = vpow.pop %v1095
    %v1097 = vadd.f32 %v1096, 1.0
    %v1098 = vrcp.pop %v1097
    %v1099 = vmul.f32 %v1097, %v1098
    %v1100 = vsub.f32 1.0, %v1099
    %v1101 = vmul.f32 %v1098, %v1100
    %v1102 = vadd.f32 %v1098, %v1101
    %vm1103 = vweird.f32 %v1097
    %vm1104 = vweird.f32 %v1098
    %vm1105 = vmor %vm1103, %vm1104
    %v1106 = vsel %vm1105, %v1098, %v1102
    %v1107 = vand.u32 2147483647, %v1097
    %vm1108 = vcmp.eq.f32.partialorder %v1107, 8.507059e+37
    %v1109 = vand.u32 %v1097, 2147483648
    %v1110 = vor.u32 1.1754944e-38, %v1109
    %v1111 = vsel %vm1108, %v1110, %v1106
    %v1112 = vmul.f32 1.0, %v1111
    %v1113 = vxor.u32 %v1091, 2147483648
    %v1114 = vmul.f32 %v1113, 1.442695
    %v1115 = vpow.pop %v1114
    %v1116 = vadd.f32 %v1115, 1.0
    %v1117 = vrcp.pop %v1116
    %v1118 = vmul.f32 %v1116, %v1117
    %v1119 = vsub.f32 1.0, %v1118
    %v1120 = vmul.f32 %v1117, %v1119
    %v1121 = vadd.f32 %v1117, %v1120
    %vm1122 = vweird.f32 %v1116
    %vm1123 = vweird.f32 %v1117
    %vm1124 = vmor %vm1122, %vm1123
    %v1125 = vsel %vm1124, %v1117, %v1121
    %v1126 = vand.u32 2147483647, %v1116
    %vm1127 = vcmp.eq.f32.partialorder %v1126, 8.507059e+37
    %v1128 = vand.u32 %v1116, 2147483648
    %v1129 = vor.u32 1.1754944e-38, %v1128
    %v1130 = vsel %vm1127, %v1129, %v1125
    %v1131 = vmul.f32 1.0, %v1130
    %v1132 = vtanh.pop %v1092
    %v1133 = vxor.u32 %v1093, 2147483648
    %v1134 = vmul.f32 %v1133, 1.442695
    %v1135 = vpow.pop %v1134
    %v1136 = vadd.f32 %v1135, 1.0
    %v1137 = vrcp.pop %v1136
    %v1138 = vmul.f32 %v1136, %v1137
    %v1139 = vsub.f32 1.0, %v1138
    %v1140 = vmul.f32 %v1137, %v1139
    %v1141 = vadd.f32 %v1137, %v1140
    %vm1142 = vweird.f32 %v1136
    %vm1143 = vweird.f32 %v1137
    %vm1144 = vmor %vm1142, %vm1143
    %v1145 = vsel %vm1144, %v1137, %v1141
    %v1146 = vand.u32 2147483647, %v1136
    %vm1147 = vcmp.eq.f32.partialorder %v1146, 8.507059e+37
    %v1148 = vand.u32 %v1136, 2147483648
    %v1149 = vor.u32 1.1754944e-38, %v1148
    %v1150 = vsel %vm1147, %v1149, %v1145
    %v1151 = vmul.f32 1.0, %v1150
    %v1152 = vmul.f32 %v1131, %v1000
    %v1153 = vmul.f32 %v1112, %v1132
    %v1154 = vadd.f32 %v1152, %v1153
    %v1155 = vtanh.pop %v1154
    %v1156 = vmul.f32 %v1151, %v1155
    %s1157 = scalar_lea.vmem %s4, 32
    %1158 = vst [vmem:[%s1157] sm:$0xff] %v1156
    %s1159 = scalar_lea.vmem [#allocation2], 160
    %v1160 = vld [vmem:[%s1159] sm:$0xff]
    %v1161 = vld [vmem:[%s1159 + $0x8] sm:$0xff]
    %v1162 = vld [vmem:[%s1159 + $0x10] sm:$0xff]
    %v1163 = vld [vmem:[%s1159 + $0x18] sm:$0xff]
    %1164 = vmatpush.xpose.msra.mxu0 %v332
    %1165 = vmatpush.xpose.msra.mxu0 %v331
    %1166 = vmatpush.xpose.msra.mxu0 %v330
    %1167 = vmatpush.xpose.msra.mxu0 %v329
    %1168 = vmatpush.xpose.msra.mxu0 %v328
    %1169 = vmatpush.xpose.msra.mxu0 %v327
    %1170 = vmatpush.xpose.msra.mxu0 %v326
    %1171 = vmatpush.xpose.msra.mxu0 %v325
    %1172 = vmatpush.xpose.msra.mxu0 %v324
    %1173 = vmatpush.xpose.msra.mxu0 %v323
    %1174 = vmatpush.xpose.msra.mxu0 %v322
    %1175 = vmatpush.xpose.msra.mxu0 %v321
    %1176 = vmatpush.xpose.msra.mxu0 %v320
    %1177 = vmatpush.xpose.msra.mxu0 %v319
    %1178 = vmatpush.xpose.msra.mxu0 %v318
    %1179 = vmatpush.xpose.msra.mxu0 %v317
    %1180 = vmatmul.f32.gmra.mxu0 %v1156
    %v1181 = vpop.f32.mrf.mxu0
    %v1182 = vadd.f32 %v383, %v1181
    %1183 = vdwg.mxu0
    %1184 = vmatpush.xpose.msra.mxu0 %v348
    %1185 = vmatpush.xpose.msra.mxu0 %v347
    %1186 = vmatpush.xpose.msra.mxu0 %v346
    %1187 = vmatpush.xpose.msra.mxu0 %v345
    %1188 = vmatpush.xpose.msra.mxu0 %v344
    %1189 = vmatpush.xpose.msra.mxu0 %v343
    %1190 = vmatpush.xpose.msra.mxu0 %v342
    %1191 = vmatpush.xpose.msra.mxu0 %v341
    %1192 = vmatpush.xpose.msra.mxu0 %v340
    %1193 = vmatpush.xpose.msra.mxu0 %v339
    %1194 = vmatpush.xpose.msra.mxu0 %v338
    %1195 = vmatpush.xpose.msra.mxu0 %v337
    %1196 = vmatpush.xpose.msra.mxu0 %v336
    %1197 = vmatpush.xpose.msra.mxu0 %v335
    %1198 = vmatpush.xpose.msra.mxu0 %v334
    %1199 = vmatpush.xpose.msra.mxu0 %v333
    %1200 = vmatmul.f32.gmra.mxu0 %v1156
    %v1201 = vpop.f32.mrf.mxu0
    %v1202 = vadd.f32 %v384, %v1201
    %1203 = vdwg.mxu0
    %1204 = vmatpush.xpose.msra.mxu0 %v364
    %1205 = vmatpush.xpose.msra.mxu0 %v363
    %1206 = vmatpush.xpose.msra.mxu0 %v362
    %1207 = vmatpush.xpose.msra.mxu0 %v361
    %1208 = vmatpush.xpose.msra.mxu0 %v360
    %1209 = vmatpush.xpose.msra.mxu0 %v359
    %1210 = vmatpush.xpose.msra.mxu0 %v358
    %1211 = vmatpush.xpose.msra.mxu0 %v357
    %1212 = vmatpush.xpose.msra.mxu0 %v356
    %1213 = vmatpush.xpose.msra.mxu0 %v355
    %1214 = vmatpush.xpose.msra.mxu0 %v354
    %1215 = vmatpush.xpose.msra.mxu0 %v353
    %1216 = vmatpush.xpose.msra.mxu0 %v352
    %1217 = vmatpush.xpose.msra.mxu0 %v351
    %1218 = vmatpush.xpose.msra.mxu0 %v350
    %1219 = vmatpush.xpose.msra.mxu0 %v349
    %1220 = vmatmul.f32.gmra.mxu0 %v1156
    %v1221 = vpop.f32.mrf.mxu0
    %v1222 = vadd.f32 %v385, %v1221
    %1223 = vdwg.mxu0
    %1224 = vmatpush.xpose.msra.mxu0 %v380
    %1225 = vmatpush.xpose.msra.mxu0 %v379
    %1226 = vmatpush.xpose.msra.mxu0 %v378
    %1227 = vmatpush.xpose.msra.mxu0 %v377
    %1228 = vmatpush.xpose.msra.mxu0 %v376
    %1229 = vmatpush.xpose.msra.mxu0 %v375
    %1230 = vmatpush.xpose.msra.mxu0 %v374
    %1231 = vmatpush.xpose.msra.mxu0 %v373
    %1232 = vmatpush.xpose.msra.mxu0 %v372
    %1233 = vmatpush.xpose.msra.mxu0 %v371
    %1234 = vmatpush.xpose.msra.mxu0 %v370
    %1235 = vmatpush.xpose.msra.mxu0 %v369
    %1236 = vmatpush.xpose.msra.mxu0 %v368
    %1237 = vmatpush.xpose.msra.mxu0 %v367
    %1238 = vmatpush.xpose.msra.mxu0 %v366
    %1239 = vmatpush.xpose.msra.mxu0 %v365
    %1240 = vmatmul.f32.gmra.mxu0 %v1156
    %v1241 = vpop.f32.mrf.mxu0
    %v1242 = vadd.f32 %v386, %v1241
    %1243 = vdwg.mxu0
    %v1244 = vadd.f32 %v1182, %v1160
    %v1245 = vadd.f32 %v1202, %v1161
    %v1246 = vadd.f32 %v1222, %v1162
    %v1247 = vadd.f32 %v1242, %v1163
    %v1248 = vxor.u32 %v1244, 2147483648
    %v1249 = vmul.f32 %v1248, 1.442695
    %v1250 = vpow.pop %v1249
    %v1251 = vadd.f32 %v1250, 1.0
    %v1252 = vrcp.pop %v1251
    %v1253 = vmul.f32 %v1251, %v1252
    %v1254 = vsub.f32 1.0, %v1253
    %v1255 = vmul.f32 %v1252, %v1254
    %v1256 = vadd.f32 %v1252, %v1255
    %vm1257 = vweird.f32 %v1251
    %vm1258 = vweird.f32 %v1252
    %vm1259 = vmor %vm1257, %vm1258
    %v1260 = vsel %vm1259, %v1252, %v1256
    %v1261 = vand.u32 2147483647, %v1251
    %vm1262 = vcmp.eq.f32.partialorder %v1261, 8.507059e+37
    %v1263 = vand.u32 %v1251, 2147483648
    %v1264 = vor.u32 1.1754944e-38, %v1263
    %v1265 = vsel %vm1262, %v1264, %v1260
    %v1266 = vmul.f32 1.0, %v1265
    %v1267 = vxor.u32 %v1245, 2147483648
    %v1268 = vmul.f32 %v1267, 1.442695
    %v1269 = vpow.pop %v1268
    %v1270 = vadd.f32 %v1269, 1.0
    %v1271 = vrcp.pop %v1270
    %v1272 = vmul.f32 %v1270, %v1271
    %v1273 = vsub.f32 1.0, %v1272
    %v1274 = vmul.f32 %v1271, %v1273
    %v1275 = vadd.f32 %v1271, %v1274
    %vm1276 = vweird.f32 %v1270
    %vm1277 = vweird.f32 %v1271
    %vm1278 = vmor %vm1276, %vm1277
    %v1279 = vsel %vm1278, %v1271, %v1275
    %v1280 = vand.u32 2147483647, %v1270
    %vm1281 = vcmp.eq.f32.partialorder %v1280, 8.507059e+37
    %v1282 = vand.u32 %v1270, 2147483648
    %v1283 = vor.u32 1.1754944e-38, %v1282
    %v1284 = vsel %vm1281, %v1283, %v1279
    %v1285 = vmul.f32 1.0, %v1284
    %v1286 = vtanh.pop %v1246
    %v1287 = vxor.u32 %v1247, 2147483648
    %v1288 = vmul.f32 %v1287, 1.442695
    %v1289 = vpow.pop %v1288
    %v1290 = vadd.f32 %v1289, 1.0
    %v1291 = vrcp.pop %v1290
    %v1292 = vmul.f32 %v1290, %v1291
    %v1293 = vsub.f32 1.0, %v1292
    %v1294 = vmul.f32 %v1291, %v1293
    %v1295 = vadd.f32 %v1291, %v1294
    %vm1296 = vweird.f32 %v1290
    %vm1297 = vweird.f32 %v1291
    %vm1298 = vmor %vm1296, %vm1297
    %v1299 = vsel %vm1298, %v1291, %v1295
    %v1300 = vand.u32 2147483647, %v1290
    %vm1301 = vcmp.eq.f32.partialorder %v1300, 8.507059e+37
    %v1302 = vand.u32 %v1290, 2147483648
    %v1303 = vor.u32 1.1754944e-38, %v1302
    %v1304 = vsel %vm1301, %v1303, %v1299
    %v1305 = vmul.f32 1.0, %v1304
    %v1306 = vmul.f32 %v1285, %v1154
    %v1307 = vmul.f32 %v1266, %v1286
    %v1308 = vadd.f32 %v1306, %v1307
    %v1309 = vtanh.pop %v1308
    %v1310 = vmul.f32 %v1305, %v1309
    %s1311 = scalar_lea.vmem %s4, 40
    %1312 = vst [vmem:[%s1311] sm:$0xff] %v1310
    %s1313 = scalar_lea.vmem [#allocation2], 192
    %v1314 = vld [vmem:[%s1313] sm:$0xff]
    %v1315 = vld [vmem:[%s1313 + $0x8] sm:$0xff]
    %v1316 = vld [vmem:[%s1313 + $0x10] sm:$0xff]
    %v1317 = vld [vmem:[%s1313 + $0x18] sm:$0xff]
    %1318 = vmatpush.xpose.msra.mxu0 %v332
    %1319 = vmatpush.xpose.msra.mxu0 %v331
    %1320 = vmatpush.xpose.msra.mxu0 %v330
    %1321 = vmatpush.xpose.msra.mxu0 %v329
    %1322 = vmatpush.xpose.msra.mxu0 %v328
    %1323 = vmatpush.xpose.msra.mxu0 %v327
    %1324 = vmatpush.xpose.msra.mxu0 %v326
    %1325 = vmatpush.xpose.msra.mxu0 %v325
    %1326 = vmatpush.xpose.msra.mxu0 %v324
    %1327 = vmatpush.xpose.msra.mxu0 %v323
    %1328 = vmatpush.xpose.msra.mxu0 %v322
    %1329 = vmatpush.xpose.msra.mxu0 %v321
    %1330 = vmatpush.xpose.msra.mxu0 %v320
    %1331 = vmatpush.xpose.msra.mxu0 %v319
    %1332 = vmatpush.xpose.msra.mxu0 %v318
    %1333 = vmatpush.xpose.msra.mxu0 %v317
    %1334 = vmatmul.f32.gmra.mxu0 %v1310
    %v1335 = vpop.f32.mrf.mxu0
    %v1336 = vadd.f32 %v383, %v1335
    %1337 = vdwg.mxu0
    %1338 = vmatpush.xpose.msra.mxu0 %v348
    %1339 = vmatpush.xpose.msra.mxu0 %v347
    %1340 = vmatpush.xpose.msra.mxu0 %v346
    %1341 = vmatpush.xpose.msra.mxu0 %v345
    %1342 = vmatpush.xpose.msra.mxu0 %v344
    %1343 = vmatpush.xpose.msra.mxu0 %v343
    %1344 = vmatpush.xpose.msra.mxu0 %v342
    %1345 = vmatpush.xpose.msra.mxu0 %v341
    %1346 = vmatpush.xpose.msra.mxu0 %v340
    %1347 = vmatpush.xpose.msra.mxu0 %v339
    %1348 = vmatpush.xpose.msra.mxu0 %v338
    %1349 = vmatpush.xpose.msra.mxu0 %v337
    %1350 = vmatpush.xpose.msra.mxu0 %v336
    %1351 = vmatpush.xpose.msra.mxu0 %v335
    %1352 = vmatpush.xpose.msra.mxu0 %v334
    %1353 = vmatpush.xpose.msra.mxu0 %v333
    %1354 = vmatmul.f32.gmra.mxu0 %v1310
    %v1355 = vpop.f32.mrf.mxu0
    %v1356 = vadd.f32 %v384, %v1355
    %1357 = vdwg.mxu0
    %1358 = vmatpush.xpose.msra.mxu0 %v364
    %1359 = vmatpush.xpose.msra.mxu0 %v363
    %1360 = vmatpush.xpose.msra.mxu0 %v362
    %1361 = vmatpush.xpose.msra.mxu0 %v361
    %1362 = vmatpush.xpose.msra.mxu0 %v360
    %1363 = vmatpush.xpose.msra.mxu0 %v359
    %1364 = vmatpush.xpose.msra.mxu0 %v358
    %1365 = vmatpush.xpose.msra.mxu0 %v357
    %1366 = vmatpush.xpose.msra.mxu0 %v356
    %1367 = vmatpush.xpose.msra.mxu0 %v355
    %1368 = vmatpush.xpose.msra.mxu0 %v354
    %1369 = vmatpush.xpose.msra.mxu0 %v353
    %1370 = vmatpush.xpose.msra.mxu0 %v352
    %1371 = vmatpush.xpose.msra.mxu0 %v351
    %1372 = vmatpush.xpose.msra.mxu0 %v350
    %1373 = vmatpush.xpose.msra.mxu0 %v349
    %1374 = vmatmul.f32.gmra.mxu0 %v1310
    %v1375 = vpop.f32.mrf.mxu0
    %v1376 = vadd.f32 %v385, %v1375
    %1377 = vdwg.mxu0
    %1378 = vmatpush.xpose.msra.mxu0 %v380
    %1379 = vmatpush.xpose.msra.mxu0 %v379
    %1380 = vmatpush.xpose.msra.mxu0 %v378
    %1381 = vmatpush.xpose.msra.mxu0 %v377
    %1382 = vmatpush.xpose.msra.mxu0 %v376
    %1383 = vmatpush.xpose.msra.mxu0 %v375
    %1384 = vmatpush.xpose.msra.mxu0 %v374
    %1385 = vmatpush.xpose.msra.mxu0 %v373
    %1386 = vmatpush.xpose.msra.mxu0 %v372
    %1387 = vmatpush.xpose.msra.mxu0 %v371
    %1388 = vmatpush.xpose.msra.mxu0 %v370
    %1389 = vmatpush.xpose.msra.mxu0 %v369
    %1390 = vmatpush.xpose.msra.mxu0 %v368
    %1391 = vmatpush.xpose.msra.mxu0 %v367
    %1392 = vmatpush.xpose.msra.mxu0 %v366
    %1393 = vmatpush.xpose.msra.mxu0 %v365
    %1394 = vmatmul.f32.gmra.mxu0 %v1310
    %v1395 = vpop.f32.mrf.mxu0
    %v1396 = vadd.f32 %v386, %v1395
    %1397 = vdwg.mxu0
    %v1398 = vadd.f32 %v1336, %v1314
    %v1399 = vadd.f32 %v1356, %v1315
    %v1400 = vadd.f32 %v1376, %v1316
    %v1401 = vadd.f32 %v1396, %v1317
    %v1402 = vxor.u32 %v1398, 2147483648
    %v1403 = vmul.f32 %v1402, 1.442695
    %v1404 = vpow.pop %v1403
    %v1405 = vadd.f32 %v1404, 1.0
    %v1406 = vrcp.pop %v1405
    %v1407 = vmul.f32 %v1405, %v1406
    %v1408 = vsub.f32 1.0, %v1407
    %v1409 = vmul.f32 %v1406, %v1408
    %v1410 = vadd.f32 %v1406, %v1409
    %vm1411 = vweird.f32 %v1405
    %vm1412 = vweird.f32 %v1406
    %vm1413 = vmor %vm1411, %vm1412
    %v1414 = vsel %vm1413, %v1406, %v1410
    %v1415 = vand.u32 2147483647, %v1405
    %vm1416 = vcmp.eq.f32.partialorder %v1415, 8.507059e+37
    %v1417 = vand.u32 %v1405, 2147483648
    %v1418 = vor.u32 1.1754944e-38, %v1417
    %v1419 = vsel %vm1416, %v1418, %v1414
    %v1420 = vmul.f32 1.0, %v1419
    %v1421 = vxor.u32 %v1399, 2147483648
    %v1422 = vmul.f32 %v1421, 1.442695
    %v1423 = vpow.pop %v1422
    %v1424 = vadd.f32 %v1423, 1.0
    %v1425 = vrcp.pop %v1424
    %v1426 = vmul.f32 %v1424, %v1425
    %v1427 = vsub.f32 1.0, %v1426
    %v1428 = vmul.f32 %v1425, %v1427
    %v1429 = vadd.f32 %v1425, %v1428
    %vm1430 = vweird.f32 %v1424
    %vm1431 = vweird.f32 %v1425
    %vm1432 = vmor %vm1430, %vm1431
    %v1433 = vsel %vm1432, %v1425, %v1429
    %v1434 = vand.u32 2147483647, %v1424
    %vm1435 = vcmp.eq.f32.partialorder %v1434, 8.507059e+37
    %v1436 = vand.u32 %v1424, 2147483648
    %v1437 = vor.u32 1.1754944e-38, %v1436
    %v1438 = vsel %vm1435, %v1437, %v1433
    %v1439 = vmul.f32 1.0, %v1438
    %v1440 = vtanh.pop %v1400
    %v1441 = vxor.u32 %v1401, 2147483648
    %v1442 = vmul.f32 %v1441, 1.442695
    %v1443 = vpow.pop %v1442
    %v1444 = vadd.f32 %v1443, 1.0
    %v1445 = vrcp.pop %v1444
    %v1446 = vmul.f32 %v1444, %v1445
    %v1447 = vsub.f32 1.0, %v1446
    %v1448 = vmul.f32 %v1445, %v1447
    %v1449 = vadd.f32 %v1445, %v1448
    %vm1450 = vweird.f32 %v1444
    %vm1451 = vweird.f32 %v1445
    %vm1452 = vmor %vm1450, %vm1451
    %v1453 = vsel %vm1452, %v1445, %v1449
    %v1454 = vand.u32 2147483647, %v1444
    %vm1455 = vcmp.eq.f32.partialorder %v1454, 8.507059e+37
    %v1456 = vand.u32 %v1444, 2147483648
    %v1457 = vor.u32 1.1754944e-38, %v1456
    %v1458 = vsel %vm1455, %v1457, %v1453
    %v1459 = vmul.f32 1.0, %v1458
    %v1460 = vmul.f32 %v1439, %v1308
    %v1461 = vmul.f32 %v1420, %v1440
    %v1462 = vadd.f32 %v1460, %v1461
    %v1463 = vtanh.pop %v1462
    %v1464 = vmul.f32 %v1459, %v1463
    %s1465 = scalar_lea.vmem %s4, 48
    %1466 = vst [vmem:[%s1465] sm:$0xff] %v1464
    %s1467 = scalar_lea.vmem [#allocation2], 224
    %v1468 = vld [vmem:[%s1467] sm:$0xff]
    %v1469 = vld [vmem:[%s1467 + $0x8] sm:$0xff]
    %v1470 = vld [vmem:[%s1467 + $0x10] sm:$0xff]
    %v1471 = vld [vmem:[%s1467 + $0x18] sm:$0xff]
    %1472 = vmatpush.xpose.msra.mxu0 %v332
    %1473 = vmatpush.xpose.msra.mxu0 %v331
    %1474 = vmatpush.xpose.msra.mxu0 %v330
    %1475 = vmatpush.xpose.msra.mxu0 %v329
    %1476 = vmatpush.xpose.msra.mxu0 %v328
    %1477 = vmatpush.xpose.msra.mxu0 %v327
    %1478 = vmatpush.xpose.msra.mxu0 %v326
    %1479 = vmatpush.xpose.msra.mxu0 %v325
    %1480 = vmatpush.xpose.msra.mxu0 %v324
    %1481 = vmatpush.xpose.msra.mxu0 %v323
    %1482 = vmatpush.xpose.msra.mxu0 %v322
    %1483 = vmatpush.xpose.msra.mxu0 %v321
    %1484 = vmatpush.xpose.msra.mxu0 %v320
    %1485 = vmatpush.xpose.msra.mxu0 %v319
    %1486 = vmatpush.xpose.msra.mxu0 %v318
    %1487 = vmatpush.xpose.msra.mxu0 %v317
    %1488 = vmatmul.f32.gmra.mxu0 %v1464
    %v1489 = vpop.f32.mrf.mxu0
    %v1490 = vadd.f32 %v383, %v1489
    %1491 = vdwg.mxu0
    %1492 = vmatpush.xpose.msra.mxu0 %v348
    %1493 = vmatpush.xpose.msra.mxu0 %v347
    %1494 = vmatpush.xpose.msra.mxu0 %v346
    %1495 = vmatpush.xpose.msra.mxu0 %v345
    %1496 = vmatpush.xpose.msra.mxu0 %v344
    %1497 = vmatpush.xpose.msra.mxu0 %v343
    %1498 = vmatpush.xpose.msra.mxu0 %v342
    %1499 = vmatpush.xpose.msra.mxu0 %v341
    %1500 = vmatpush.xpose.msra.mxu0 %v340
    %1501 = vmatpush.xpose.msra.mxu0 %v339
    %1502 = vmatpush.xpose.msra.mxu0 %v338
    %1503 = vmatpush.xpose.msra.mxu0 %v337
    %1504 = vmatpush.xpose.msra.mxu0 %v336
    %1505 = vmatpush.xpose.msra.mxu0 %v335
    %1506 = vmatpush.xpose.msra.mxu0 %v334
    %1507 = vmatpush.xpose.msra.mxu0 %v333
    %1508 = vmatmul.f32.gmra.mxu0 %v1464
    %v1509 = vpop.f32.mrf.mxu0
    %v1510 = vadd.f32 %v384, %v1509
    %1511 = vdwg.mxu0
    %1512 = vmatpush.xpose.msra.mxu0 %v364
    %1513 = vmatpush.xpose.msra.mxu0 %v363
    %1514 = vmatpush.xpose.msra.mxu0 %v362
    %1515 = vmatpush.xpose.msra.mxu0 %v361
    %1516 = vmatpush.xpose.msra.mxu0 %v360
    %1517 = vmatpush.xpose.msra.mxu0 %v359
    %1518 = vmatpush.xpose.msra.mxu0 %v358
    %1519 = vmatpush.xpose.msra.mxu0 %v357
    %1520 = vmatpush.xpose.msra.mxu0 %v356
    %1521 = vmatpush.xpose.msra.mxu0 %v355
    %1522 = vmatpush.xpose.msra.mxu0 %v354
    %1523 = vmatpush.xpose.msra.mxu0 %v353
    %1524 = vmatpush.xpose.msra.mxu0 %v352
    %1525 = vmatpush.xpose.msra.mxu0 %v351
    %1526 = vmatpush.xpose.msra.mxu0 %v350
    %1527 = vmatpush.xpose.msra.mxu0 %v349
    %1528 = vmatmul.f32.gmra.mxu0 %v1464
    %v1529 = vpop.f32.mrf.mxu0
    %v1530 = vadd.f32 %v385, %v1529
    %1531 = vdwg.mxu0
    %1532 = vmatpush.xpose.msra.mxu0 %v380
    %1533 = vmatpush.xpose.msra.mxu0 %v379
    %1534 = vmatpush.xpose.msra.mxu0 %v378
    %1535 = vmatpush.xpose.msra.mxu0 %v377
    %1536 = vmatpush.xpose.msra.mxu0 %v376
    %1537 = vmatpush.xpose.msra.mxu0 %v375
    %1538 = vmatpush.xpose.msra.mxu0 %v374
    %1539 = vmatpush.xpose.msra.mxu0 %v373
    %1540 = vmatpush.xpose.msra.mxu0 %v372
    %1541 = vmatpush.xpose.msra.mxu0 %v371
    %1542 = vmatpush.xpose.msra.mxu0 %v370
    %1543 = vmatpush.xpose.msra.mxu0 %v369
    %1544 = vmatpush.xpose.msra.mxu0 %v368
    %1545 = vmatpush.xpose.msra.mxu0 %v367
    %1546 = vmatpush.xpose.msra.mxu0 %v366
    %1547 = vmatpush.xpose.msra.mxu0 %v365
    %1548 = vmatmul.f32.gmra.mxu0 %v1464
    %v1549 = vpop.f32.mrf.mxu0
    %v1550 = vadd.f32 %v386, %v1549
    %1551 = vdwg.mxu0
    %v1552 = vadd.f32 %v1490, %v1468
    %v1553 = vadd.f32 %v1510, %v1469
    %v1554 = vadd.f32 %v1530, %v1470
    %v1555 = vadd.f32 %v1550, %v1471
    %v1556 = vxor.u32 %v1552, 2147483648
    %v1557 = vmul.f32 %v1556, 1.442695
    %v1558 = vpow.pop %v1557
    %v1559 = vadd.f32 %v1558, 1.0
    %v1560 = vrcp.pop %v1559
    %v1561 = vmul.f32 %v1559, %v1560
    %v1562 = vsub.f32 1.0, %v1561
    %v1563 = vmul.f32 %v1560, %v1562
    %v1564 = vadd.f32 %v1560, %v1563
    %vm1565 = vweird.f32 %v1559
    %vm1566 = vweird.f32 %v1560
    %vm1567 = vmor %vm1565, %vm1566
    %v1568 = vsel %vm1567, %v1560, %v1564
    %v1569 = vand.u32 2147483647, %v1559
    %vm1570 = vcmp.eq.f32.partialorder %v1569, 8.507059e+37
    %v1571 = vand.u32 %v1559, 2147483648
    %v1572 = vor.u32 1.1754944e-38, %v1571
    %v1573 = vsel %vm1570, %v1572, %v1568
    %v1574 = vmul.f32 1.0, %v1573
    %v1575 = vxor.u32 %v1553, 2147483648
    %v1576 = vmul.f32 %v1575, 1.442695
    %v1577 = vpow.pop %v1576
    %v1578 = vadd.f32 %v1577, 1.0
    %v1579 = vrcp.pop %v1578
    %v1580 = vmul.f32 %v1578, %v1579
    %v1581 = vsub.f32 1.0, %v1580
    %v1582 = vmul.f32 %v1579, %v1581
    %v1583 = vadd.f32 %v1579, %v1582
    %vm1584 = vweird.f32 %v1578
    %vm1585 = vweird.f32 %v1579
    %vm1586 = vmor %vm1584, %vm1585
    %v1587 = vsel %vm1586, %v1579, %v1583
    %v1588 = vand.u32 2147483647, %v1578
    %vm1589 = vcmp.eq.f32.partialorder %v1588, 8.507059e+37
    %v1590 = vand.u32 %v1578, 2147483648
    %v1591 = vor.u32 1.1754944e-38, %v1590
    %v1592 = vsel %vm1589, %v1591, %v1587
    %v1593 = vmul.f32 1.0, %v1592
    %v1594 = vtanh.pop %v1554
    %v1595 = vxor.u32 %v1555, 2147483648
    %v1596 = vmul.f32 %v1595, 1.442695
    %v1597 = vpow.pop %v1596
    %v1598 = vadd.f32 %v1597, 1.0
    %v1599 = vrcp.pop %v1598
    %v1600 = vmul.f32 %v1598, %v1599
    %v1601 = vsub.f32 1.0, %v1600
    %v1602 = vmul.f32 %v1599, %v1601
    %v1603 = vadd.f32 %v1599, %v1602
    %vm1604 = vweird.f32 %v1598
    %vm1605 = vweird.f32 %v1599
    %vm1606 = vmor %vm1604, %vm1605
    %v1607 = vsel %vm1606, %v1599, %v1603
    %v1608 = vand.u32 2147483647, %v1598
    %vm1609 = vcmp.eq.f32.partialorder %v1608, 8.507059e+37
    %v1610 = vand.u32 %v1598, 2147483648
    %v1611 = vor.u32 1.1754944e-38, %v1610
    %v1612 = vsel %vm1609, %v1611, %v1607
    %v1613 = vmul.f32 1.0, %v1612
    %v1614 = vmul.f32 %v1593, %v1462
    %v1615 = vmul.f32 %v1574, %v1594
    %v1616 = vadd.f32 %v1614, %v1615
    %v1617 = vtanh.pop %v1616
    %v1618 = vmul.f32 %v1613, %v1617
    %s1619 = scalar_lea.vmem %s4, 56
    %1620 = vst [vmem:[%s1619] sm:$0xff] %v1618
    %1621 = vmatpush.xpose.msra.mxu0 %v332
    %1622 = vmatpush.xpose.msra.mxu0 %v331
    %1623 = vmatpush.xpose.msra.mxu0 %v330
    %1624 = vmatpush.xpose.msra.mxu0 %v329
    %1625 = vmatpush.xpose.msra.mxu0 %v328
    %1626 = vmatpush.xpose.msra.mxu0 %v327
    %1627 = vmatpush.xpose.msra.mxu0 %v326
    %1628 = vmatpush.xpose.msra.mxu0 %v325
    %1629 = vmatpush.xpose.msra.mxu0 %v324
    %1630 = vmatpush.xpose.msra.mxu0 %v323
    %1631 = vmatpush.xpose.msra.mxu0 %v322
    %1632 = vmatpush.xpose.msra.mxu0 %v321
    %1633 = vmatpush.xpose.msra.mxu0 %v320
    %1634 = vmatpush.xpose.msra.mxu0 %v319
    %1635 = vmatpush.xpose.msra.mxu0 %v318
    %1636 = vmatpush.xpose.msra.mxu0 %v317
    %1637 = vmatmul.f32.gmra.mxu0 %v1618
    %v1638 = vpop.f32.mrf.mxu0
    %v1639 = vadd.f32 %v383, %v1638
    %1640 = vdwg.mxu0
    %1641 = vmatpush.xpose.msra.mxu0 %v348
    %1642 = vmatpush.xpose.msra.mxu0 %v347
    %1643 = vmatpush.xpose.msra.mxu0 %v346
    %1644 = vmatpush.xpose.msra.mxu0 %v345
    %1645 = vmatpush.xpose.msra.mxu0 %v344
    %1646 = vmatpush.xpose.msra.mxu0 %v343
    %1647 = vmatpush.xpose.msra.mxu0 %v342
    %1648 = vmatpush.xpose.msra.mxu0 %v341
    %1649 = vmatpush.xpose.msra.mxu0 %v340
    %1650 = vmatpush.xpose.msra.mxu0 %v339
    %1651 = vmatpush.xpose.msra.mxu0 %v338
    %1652 = vmatpush.xpose.msra.mxu0 %v337
    %1653 = vmatpush.xpose.msra.mxu0 %v336
    %1654 = vmatpush.xpose.msra.mxu0 %v335
    %1655 = vmatpush.xpose.msra.mxu0 %v334
    %1656 = vmatpush.xpose.msra.mxu0 %v333
    %1657 = vmatmul.f32.gmra.mxu0 %v1618
    %v1658 = vpop.f32.mrf.mxu0
    %v1659 = vadd.f32 %v384, %v1658
    %1660 = vdwg.mxu0
    %1661 = vmatpush.xpose.msra.mxu0 %v364
    %1662 = vmatpush.xpose.msra.mxu0 %v363
    %1663 = vmatpush.xpose.msra.mxu0 %v362
    %1664 = vmatpush.xpose.msra.mxu0 %v361
    %1665 = vmatpush.xpose.msra.mxu0 %v360
    %1666 = vmatpush.xpose.msra.mxu0 %v359
    %1667 = vmatpush.xpose.msra.mxu0 %v358
    %1668 = vmatpush.xpose.msra.mxu0 %v357
    %1669 = vmatpush.xpose.msra.mxu0 %v356
    %1670 = vmatpush.xpose.msra.mxu0 %v355
    %1671 = vmatpush.xpose.msra.mxu0 %v354
    %1672 = vmatpush.xpose.msra.mxu0 %v353
    %1673 = vmatpush.xpose.msra.mxu0 %v352
    %1674 = vmatpush.xpose.msra.mxu0 %v351
    %1675 = vmatpush.xpose.msra.mxu0 %v350
    %1676 = vmatpush.xpose.msra.mxu0 %v349
    %1677 = vmatmul.f32.gmra.mxu0 %v1618
    %v1678 = vpop.f32.mrf.mxu0
    %v1679 = vadd.f32 %v385, %v1678
    %1680 = vdwg.mxu0
    %1681 = vmatpush.xpose.msra.mxu0 %v380
    %1682 = vmatpush.xpose.msra.mxu0 %v379
    %1683 = vmatpush.xpose.msra.mxu0 %v378
    %1684 = vmatpush.xpose.msra.mxu0 %v377
    %1685 = vmatpush.xpose.msra.mxu0 %v376
    %1686 = vmatpush.xpose.msra.mxu0 %v375
    %1687 = vmatpush.xpose.msra.mxu0 %v374
    %1688 = vmatpush.xpose.msra.mxu0 %v373
    %1689 = vmatpush.xpose.msra.mxu0 %v372
    %1690 = vmatpush.xpose.msra.mxu0 %v371
    %1691 = vmatpush.xpose.msra.mxu0 %v370
    %1692 = vmatpush.xpose.msra.mxu0 %v369
    %1693 = vmatpush.xpose.msra.mxu0 %v368
    %1694 = vmatpush.xpose.msra.mxu0 %v367
    %1695 = vmatpush.xpose.msra.mxu0 %v366
    %1696 = vmatpush.xpose.msra.mxu0 %v365
    %1697 = vmatmul.f32.gmra.mxu0 %v1618
    %v1698 = vpop.f32.mrf.mxu0
    %v1699 = vadd.f32 %v386, %v1698
    %1700 = vdwg.mxu0
    %v1701 = vxor.u32 %v1639, 2147483648
    %v1702 = vmul.f32 %v1701, 1.442695
    %v1703 = vpow.pop %v1702
    %v1704 = vadd.f32 %v1703, 1.0
    %v1705 = vrcp.pop %v1704
    %v1706 = vmul.f32 %v1704, %v1705
    %v1707 = vsub.f32 1.0, %v1706
    %v1708 = vmul.f32 %v1705, %v1707
    %v1709 = vadd.f32 %v1705, %v1708
    %vm1710 = vweird.f32 %v1704
    %vm1711 = vweird.f32 %v1705
    %vm1712 = vmor %vm1710, %vm1711
    %v1713 = vsel %vm1712, %v1705, %v1709
    %v1714 = vand.u32 2147483647, %v1704
    %vm1715 = vcmp.eq.f32.partialorder %v1714, 8.507059e+37
    %v1716 = vand.u32 %v1704, 2147483648
    %v1717 = vor.u32 1.1754944e-38, %v1716
    %v1718 = vsel %vm1715, %v1717, %v1713
    %v1719 = vmul.f32 1.0, %v1718
    %v1720 = vxor.u32 %v1659, 2147483648
    %v1721 = vmul.f32 %v1720, 1.442695
    %v1722 = vpow.pop %v1721
    %v1723 = vadd.f32 %v1722, 1.0
    %v1724 = vrcp.pop %v1723
    %v1725 = vmul.f32 %v1723, %v1724
    %v1726 = vsub.f32 1.0, %v1725
    %v1727 = vmul.f32 %v1724, %v1726
    %v1728 = vadd.f32 %v1724, %v1727
    %vm1729 = vweird.f32 %v1723
    %vm1730 = vweird.f32 %v1724
    %vm1731 = vmor %vm1729, %vm1730
    %v1732 = vsel %vm1731, %v1724, %v1728
    %v1733 = vand.u32 2147483647, %v1723
    %vm1734 = vcmp.eq.f32.partialorder %v1733, 8.507059e+37
    %v1735 = vand.u32 %v1723, 2147483648
    %v1736 = vor.u32 1.1754944e-38, %v1735
    %v1737 = vsel %vm1734, %v1736, %v1732
    %v1738 = vmul.f32 1.0, %v1737
    %v1739 = vtanh.pop %v1679
    %v1740 = vxor.u32 %v1699, 2147483648
    %v1741 = vmul.f32 %v1740, 1.442695
    %v1742 = vpow.pop %v1741
    %v1743 = vadd.f32 %v1742, 1.0
    %v1744 = vrcp.pop %v1743
    %v1745 = vmul.f32 %v1743, %v1744
    %v1746 = vsub.f32 1.0, %v1745
    %v1747 = vmul.f32 %v1744, %v1746
    %v1748 = vadd.f32 %v1744, %v1747
    %vm1749 = vweird.f32 %v1743
    %vm1750 = vweird.f32 %v1744
    %vm1751 = vmor %vm1749, %vm1750
    %v1752 = vsel %vm1751, %v1744, %v1748
    %v1753 = vand.u32 2147483647, %v1743
    %vm1754 = vcmp.eq.f32.partialorder %v1753, 8.507059e+37
    %v1755 = vand.u32 %v1743, 2147483648
    %v1756 = vor.u32 1.1754944e-38, %v1755
    %v1757 = vsel %vm1754, %v1756, %v1752
    %v1758 = vmul.f32 1.0, %v1757
    %v1759 = vmul.f32 %v1738, %v1616
    %v1760 = vmul.f32 %v1719, %v1739
    %v1761 = vadd.f32 %v1759, %v1760
    %v1762 = vtanh.pop %v1761
    %v1763 = vmul.f32 %v1758, %v1762
    %s1764 = scalar_lea.vmem %s4, 64
    %1765 = vst [vmem:[%s1764] sm:$0xff] %v1763
    %1766 = vmatpush.xpose.msra.mxu0 %v332
    %1767 = vmatpush.xpose.msra.mxu0 %v331
    %1768 = vmatpush.xpose.msra.mxu0 %v330
    %1769 = vmatpush.xpose.msra.mxu0 %v329
    %1770 = vmatpush.xpose.msra.mxu0 %v328
    %1771 = vmatpush.xpose.msra.mxu0 %v327
    %1772 = vmatpush.xpose.msra.mxu0 %v326
    %1773 = vmatpush.xpose.msra.mxu0 %v325
    %1774 = vmatpush.xpose.msra.mxu0 %v324
    %1775 = vmatpush.xpose.msra.mxu0 %v323
    %1776 = vmatpush.xpose.msra.mxu0 %v322
    %1777 = vmatpush.xpose.msra.mxu0 %v321
    %1778 = vmatpush.xpose.msra.mxu0 %v320
    %1779 = vmatpush.xpose.msra.mxu0 %v319
    %1780 = vmatpush.xpose.msra.mxu0 %v318
    %1781 = vmatpush.xpose.msra.mxu0 %v317
    %1782 = vmatmul.f32.gmra.mxu0 %v1763
    %v1783 = vpop.f32.mrf.mxu0
    %v1784 = vadd.f32 %v383, %v1783
    %1785 = vdwg.mxu0
    %1786 = vmatpush.xpose.msra.mxu0 %v348
    %1787 = vmatpush.xpose.msra.mxu0 %v347
    %1788 = vmatpush.xpose.msra.mxu0 %v346
    %1789 = vmatpush.xpose.msra.mxu0 %v345
    %1790 = vmatpush.xpose.msra.mxu0 %v344
    %1791 = vmatpush.xpose.msra.mxu0 %v343
    %1792 = vmatpush.xpose.msra.mxu0 %v342
    %1793 = vmatpush.xpose.msra.mxu0 %v341
    %1794 = vmatpush.xpose.msra.mxu0 %v340
    %1795 = vmatpush.xpose.msra.mxu0 %v339
    %1796 = vmatpush.xpose.msra.mxu0 %v338
    %1797 = vmatpush.xpose.msra.mxu0 %v337
    %1798 = vmatpush.xpose.msra.mxu0 %v336
    %1799 = vmatpush.xpose.msra.mxu0 %v335
    %1800 = vmatpush.xpose.msra.mxu0 %v334
    %1801 = vmatpush.xpose.msra.mxu0 %v333
    %1802 = vmatmul.f32.gmra.mxu0 %v1763
    %v1803 = vpop.f32.mrf.mxu0
    %v1804 = vadd.f32 %v384, %v1803
    %1805 = vdwg.mxu0
    %1806 = vmatpush.xpose.msra.mxu0 %v364
    %1807 = vmatpush.xpose.msra.mxu0 %v363
    %1808 = vmatpush.xpose.msra.mxu0 %v362
    %1809 = vmatpush.xpose.msra.mxu0 %v361
    %1810 = vmatpush.xpose.msra.mxu0 %v360
    %1811 = vmatpush.xpose.msra.mxu0 %v359
    %1812 = vmatpush.xpose.msra.mxu0 %v358
    %1813 = vmatpush.xpose.msra.mxu0 %v357
    %1814 = vmatpush.xpose.msra.mxu0 %v356
    %1815 = vmatpush.xpose.msra.mxu0 %v355
    %1816 = vmatpush.xpose.msra.mxu0 %v354
    %1817 = vmatpush.xpose.msra.mxu0 %v353
    %1818 = vmatpush.xpose.msra.mxu0 %v352
    %1819 = vmatpush.xpose.msra.mxu0 %v351
    %1820 = vmatpush.xpose.msra.mxu0 %v350
    %1821 = vmatpush.xpose.msra.mxu0 %v349
    %1822 = vmatmul.f32.gmra.mxu0 %v1763
    %v1823 = vpop.f32.mrf.mxu0
    %v1824 = vadd.f32 %v385, %v1823
    %1825 = vdwg.mxu0
    %1826 = vmatpush.xpose.msra.mxu0 %v380
    %1827 = vmatpush.xpose.msra.mxu0 %v379
    %1828 = vmatpush.xpose.msra.mxu0 %v378
    %1829 = vmatpush.xpose.msra.mxu0 %v377
    %1830 = vmatpush.xpose.msra.mxu0 %v376
    %1831 = vmatpush.xpose.msra.mxu0 %v375
    %1832 = vmatpush.xpose.msra.mxu0 %v374
    %1833 = vmatpush.xpose.msra.mxu0 %v373
    %1834 = vmatpush.xpose.msra.mxu0 %v372
    %1835 = vmatpush.xpose.msra.mxu0 %v371
    %1836 = vmatpush.xpose.msra.mxu0 %v370
    %1837 = vmatpush.xpose.msra.mxu0 %v369
    %1838 = vmatpush.xpose.msra.mxu0 %v368
    %1839 = vmatpush.xpose.msra.mxu0 %v367
    %1840 = vmatpush.xpose.msra.mxu0 %v366
    %1841 = vmatpush.xpose.msra.mxu0 %v365
    %1842 = vmatmul.f32.gmra.mxu0 %v1763
    %v1843 = vpop.f32.mrf.mxu0
    %v1844 = vadd.f32 %v386, %v1843
    %1845 = vdwg.mxu0
    %v1846 = vxor.u32 %v1784, 2147483648
    %v1847 = vmul.f32 %v1846, 1.442695
    %v1848 = vpow.pop %v1847
    %v1849 = vadd.f32 %v1848, 1.0
    %v1850 = vrcp.pop %v1849
    %v1851 = vmul.f32 %v1849, %v1850
    %v1852 = vsub.f32 1.0, %v1851
    %v1853 = vmul.f32 %v1850, %v1852
    %v1854 = vadd.f32 %v1850, %v1853
    %vm1855 = vweird.f32 %v1849
    %vm1856 = vweird.f32 %v1850
    %vm1857 = vmor %vm1855, %vm1856
    %v1858 = vsel %vm1857, %v1850, %v1854
    %v1859 = vand.u32 2147483647, %v1849
    %vm1860 = vcmp.eq.f32.partialorder %v1859, 8.507059e+37
    %v1861 = vand.u32 %v1849, 2147483648
    %v1862 = vor.u32 1.1754944e-38, %v1861
    %v1863 = vsel %vm1860, %v1862, %v1858
    %v1864 = vmul.f32 1.0, %v1863
    %v1865 = vxor.u32 %v1804, 2147483648
    %v1866 = vmul.f32 %v1865, 1.442695
    %v1867 = vpow.pop %v1866
    %v1868 = vadd.f32 %v1867, 1.0
    %v1869 = vrcp.pop %v1868
    %v1870 = vmul.f32 %v1868, %v1869
    %v1871 = vsub.f32 1.0, %v1870
    %v1872 = vmul.f32 %v1869, %v1871
    %v1873 = vadd.f32 %v1869, %v1872
    %vm1874 = vweird.f32 %v1868
    %vm1875 = vweird.f32 %v1869
    %vm1876 = vmor %vm1874, %vm1875
    %v1877 = vsel %vm1876, %v1869, %v1873
    %v1878 = vand.u32 2147483647, %v1868
    %vm1879 = vcmp.eq.f32.partialorder %v1878, 8.507059e+37
    %v1880 = vand.u32 %v1868, 2147483648
    %v1881 = vor.u32 1.1754944e-38, %v1880
    %v1882 = vsel %vm1879, %v1881, %v1877
    %v1883 = vmul.f32 1.0, %v1882
    %v1884 = vtanh.pop %v1824
    %v1885 = vxor.u32 %v1844, 2147483648
    %v1886 = vmul.f32 %v1885, 1.442695
    %v1887 = vpow.pop %v1886
    %v1888 = vadd.f32 %v1887, 1.0
    %v1889 = vrcp.pop %v1888
    %v1890 = vmul.f32 %v1888, %v1889
    %v1891 = vsub.f32 1.0, %v1890
    %v1892 = vmul.f32 %v1889, %v1891
    %v1893 = vadd.f32 %v1889, %v1892
    %vm1894 = vweird.f32 %v1888
    %vm1895 = vweird.f32 %v1889
    %vm1896 = vmor %vm1894, %vm1895
    %v1897 = vsel %vm1896, %v1889, %v1893
    %v1898 = vand.u32 2147483647, %v1888
    %vm1899 = vcmp.eq.f32.partialorder %v1898, 8.507059e+37
    %v1900 = vand.u32 %v1888, 2147483648
    %v1901 = vor.u32 1.1754944e-38, %v1900
    %v1902 = vsel %vm1899, %v1901, %v1897
    %v1903 = vmul.f32 1.0, %v1902
    %v1904 = vmul.f32 %v1883, %v1761
    %v1905 = vmul.f32 %v1864, %v1884
    %v1906 = vadd.f32 %v1904, %v1905
    %v1907 = vtanh.pop %v1906
    %v1908 = vmul.f32 %v1903, %v1907
    %s1909 = scalar_lea.vmem %s4, 72
    %1910 = vst [vmem:[%s1909] sm:$0xff] %v1908
    %1911 = vmatpush.xpose.msra.mxu0 %v332
    %1912 = vmatpush.xpose.msra.mxu0 %v331
    %1913 = vmatpush.xpose.msra.mxu0 %v330
    %1914 = vmatpush.xpose.msra.mxu0 %v329
    %1915 = vmatpush.xpose.msra.mxu0 %v328
    %1916 = vmatpush.xpose.msra.mxu0 %v327
    %1917 = vmatpush.xpose.msra.mxu0 %v326
    %1918 = vmatpush.xpose.msra.mxu0 %v325
    %1919 = vmatpush.xpose.msra.mxu0 %v324
    %1920 = vmatpush.xpose.msra.mxu0 %v323
    %1921 = vmatpush.xpose.msra.mxu0 %v322
    %1922 = vmatpush.xpose.msra.mxu0 %v321
    %1923 = vmatpush.xpose.msra.mxu0 %v320
    %1924 = vmatpush.xpose.msra.mxu0 %v319
    %1925 = vmatpush.xpose.msra.mxu0 %v318
    %1926 = vmatpush.xpose.msra.mxu0 %v317
    %1927 = vmatmul.f32.gmra.mxu0 %v1908
    %v1928 = vpop.f32.mrf.mxu0
    %v1929 = vadd.f32 %v383, %v1928
    %1930 = vdwg.mxu0
    %1931 = vmatpush.xpose.msra.mxu0 %v348
    %1932 = vmatpush.xpose.msra.mxu0 %v347
    %1933 = vmatpush.xpose.msra.mxu0 %v346
    %1934 = vmatpush.xpose.msra.mxu0 %v345
    %1935 = vmatpush.xpose.msra.mxu0 %v344
    %1936 = vmatpush.xpose.msra.mxu0 %v343
    %1937 = vmatpush.xpose.msra.mxu0 %v342
    %1938 = vmatpush.xpose.msra.mxu0 %v341
    %1939 = vmatpush.xpose.msra.mxu0 %v340
    %1940 = vmatpush.xpose.msra.mxu0 %v339
    %1941 = vmatpush.xpose.msra.mxu0 %v338
    %1942 = vmatpush.xpose.msra.mxu0 %v337
    %1943 = vmatpush.xpose.msra.mxu0 %v336
    %1944 = vmatpush.xpose.msra.mxu0 %v335
    %1945 = vmatpush.xpose.msra.mxu0 %v334
    %1946 = vmatpush.xpose.msra.mxu0 %v333
    %1947 = vmatmul.f32.gmra.mxu0 %v1908
    %v1948 = vpop.f32.mrf.mxu0
    %v1949 = vadd.f32 %v384, %v1948
    %1950 = vdwg.mxu0
    %1951 = vmatpush.xpose.msra.mxu0 %v364
    %1952 = vmatpush.xpose.msra.mxu0 %v363
    %1953 = vmatpush.xpose.msra.mxu0 %v362
    %1954 = vmatpush.xpose.msra.mxu0 %v361
    %1955 = vmatpush.xpose.msra.mxu0 %v360
    %1956 = vmatpush.xpose.msra.mxu0 %v359
    %1957 = vmatpush.xpose.msra.mxu0 %v358
    %1958 = vmatpush.xpose.msra.mxu0 %v357
    %1959 = vmatpush.xpose.msra.mxu0 %v356
    %1960 = vmatpush.xpose.msra.mxu0 %v355
    %1961 = vmatpush.xpose.msra.mxu0 %v354
    %1962 = vmatpush.xpose.msra.mxu0 %v353
    %1963 = vmatpush.xpose.msra.mxu0 %v352
    %1964 = vmatpush.xpose.msra.mxu0 %v351
    %1965 = vmatpush.xpose.msra.mxu0 %v350
    %1966 = vmatpush.xpose.msra.mxu0 %v349
    %1967 = vmatmul.f32.gmra.mxu0 %v1908
    %v1968 = vpop.f32.mrf.mxu0
    %v1969 = vadd.f32 %v385, %v1968
    %1970 = vdwg.mxu0
    %1971 = vmatpush.xpose.msra.mxu0 %v380
    %1972 = vmatpush.xpose.msra.mxu0 %v379
    %1973 = vmatpush.xpose.msra.mxu0 %v378
    %1974 = vmatpush.xpose.msra.mxu0 %v377
    %1975 = vmatpush.xpose.msra.mxu0 %v376
    %1976 = vmatpush.xpose.msra.mxu0 %v375
    %1977 = vmatpush.xpose.msra.mxu0 %v374
    %1978 = vmatpush.xpose.msra.mxu0 %v373
    %1979 = vmatpush.xpose.msra.mxu0 %v372
    %1980 = vmatpush.xpose.msra.mxu0 %v371
    %1981 = vmatpush.xpose.msra.mxu0 %v370
    %1982 = vmatpush.xpose.msra.mxu0 %v369
    %1983 = vmatpush.xpose.msra.mxu0 %v368
    %1984 = vmatpush.xpose.msra.mxu0 %v367
    %1985 = vmatpush.xpose.msra.mxu0 %v366
    %1986 = vmatpush.xpose.msra.mxu0 %v365
    %1987 = vmatmul.f32.gmra.mxu0 %v1908
    %v1988 = vpop.f32.mrf.mxu0
    %v1989 = vadd.f32 %v386, %v1988
    %1990 = vdwg.mxu0
    %v1991 = vxor.u32 %v1929, 2147483648
    %v1992 = vmul.f32 %v1991, 1.442695
    %v1993 = vpow.pop %v1992
    %v1994 = vadd.f32 %v1993, 1.0
    %v1995 = vrcp.pop %v1994
    %v1996 = vmul.f32 %v1994, %v1995
    %v1997 = vsub.f32 1.0, %v1996
    %v1998 = vmul.f32 %v1995, %v1997
    %v1999 = vadd.f32 %v1995, %v1998
    %vm2000 = vweird.f32 %v1994
    %vm2001 = vweird.f32 %v1995
    %vm2002 = vmor %vm2000, %vm2001
    %v2003 = vsel %vm2002, %v1995, %v1999
    %v2004 = vand.u32 2147483647, %v1994
    %vm2005 = vcmp.eq.f32.partialorder %v2004, 8.507059e+37
    %v2006 = vand.u32 %v1994, 2147483648
    %v2007 = vor.u32 1.1754944e-38, %v2006
    %v2008 = vsel %vm2005, %v2007, %v2003
    %v2009 = vmul.f32 1.0, %v2008
    %v2010 = vxor.u32 %v1949, 2147483648
    %v2011 = vmul.f32 %v2010, 1.442695
    %v2012 = vpow.pop %v2011
    %v2013 = vadd.f32 %v2012, 1.0
    %v2014 = vrcp.pop %v2013
    %v2015 = vmul.f32 %v2013, %v2014
    %v2016 = vsub.f32 1.0, %v2015
    %v2017 = vmul.f32 %v2014, %v2016
    %v2018 = vadd.f32 %v2014, %v2017
    %vm2019 = vweird.f32 %v2013
    %vm2020 = vweird.f32 %v2014
    %vm2021 = vmor %vm2019, %vm2020
    %v2022 = vsel %vm2021, %v2014, %v2018
    %v2023 = vand.u32 2147483647, %v2013
    %vm2024 = vcmp.eq.f32.partialorder %v2023, 8.507059e+37
    %v2025 = vand.u32 %v2013, 2147483648
    %v2026 = vor.u32 1.1754944e-38, %v2025
    %v2027 = vsel %vm2024, %v2026, %v2022
    %v2028 = vmul.f32 1.0, %v2027
    %v2029 = vtanh.pop %v1969
    %v2030 = vxor.u32 %v1989, 2147483648
    %v2031 = vmul.f32 %v2030, 1.442695
    %v2032 = vpow.pop %v2031
    %v2033 = vadd.f32 %v2032, 1.0
    %v2034 = vrcp.pop %v2033
    %v2035 = vmul.f32 %v2033, %v2034
    %v2036 = vsub.f32 1.0, %v2035
    %v2037 = vmul.f32 %v2034, %v2036
    %v2038 = vadd.f32 %v2034, %v2037
    %vm2039 = vweird.f32 %v2033
    %vm2040 = vweird.f32 %v2034
    %vm2041 = vmor %vm2039, %vm2040
    %v2042 = vsel %vm2041, %v2034, %v2038
    %v2043 = vand.u32 2147483647, %v2033
    %vm2044 = vcmp.eq.f32.partialorder %v2043, 8.507059e+37
    %v2045 = vand.u32 %v2033, 2147483648
    %v2046 = vor.u32 1.1754944e-38, %v2045
    %v2047 = vsel %vm2044, %v2046, %v2042
    %v2048 = vmul.f32 1.0, %v2047
    %v2049 = vmul.f32 %v2028, %v1906
    %v2050 = vmul.f32 %v2009, %v2029
    %v2051 = vadd.f32 %v2049, %v2050
    %v2052 = vtanh.pop %v2051
    %v2053 = vmul.f32 %v2048, %v2052
    %s2054 = scalar_lea.vmem %s4, 80
    %2055 = vst [vmem:[%s2054] sm:$0xff] %v2053
    %2056 = vmatpush.xpose.msra.mxu0 %v332
    %2057 = vmatpush.xpose.msra.mxu0 %v331
    %2058 = vmatpush.xpose.msra.mxu0 %v330
    %2059 = vmatpush.xpose.msra.mxu0 %v329
    %2060 = vmatpush.xpose.msra.mxu0 %v328
    %2061 = vmatpush.xpose.msra.mxu0 %v327
    %2062 = vmatpush.xpose.msra.mxu0 %v326
    %2063 = vmatpush.xpose.msra.mxu0 %v325
    %2064 = vmatpush.xpose.msra.mxu0 %v324
    %2065 = vmatpush.xpose.msra.mxu0 %v323
    %2066 = vmatpush.xpose.msra.mxu0 %v322
    %2067 = vmatpush.xpose.msra.mxu0 %v321
    %2068 = vmatpush.xpose.msra.mxu0 %v320
    %2069 = vmatpush.xpose.msra.mxu0 %v319
    %2070 = vmatpush.xpose.msra.mxu0 %v318
    %2071 = vmatpush.xpose.msra.mxu0 %v317
    %2072 = vmatmul.f32.gmra.mxu0 %v2053
    %v2073 = vpop.f32.mrf.mxu0
    %v2074 = vadd.f32 %v383, %v2073
    %2075 = vdwg.mxu0
    %2076 = vmatpush.xpose.msra.mxu0 %v348
    %2077 = vmatpush.xpose.msra.mxu0 %v347
    %2078 = vmatpush.xpose.msra.mxu0 %v346
    %2079 = vmatpush.xpose.msra.mxu0 %v345
    %2080 = vmatpush.xpose.msra.mxu0 %v344
    %2081 = vmatpush.xpose.msra.mxu0 %v343
    %2082 = vmatpush.xpose.msra.mxu0 %v342
    %2083 = vmatpush.xpose.msra.mxu0 %v341
    %2084 = vmatpush.xpose.msra.mxu0 %v340
    %2085 = vmatpush.xpose.msra.mxu0 %v339
    %2086 = vmatpush.xpose.msra.mxu0 %v338
    %2087 = vmatpush.xpose.msra.mxu0 %v337
    %2088 = vmatpush.xpose.msra.mxu0 %v336
    %2089 = vmatpush.xpose.msra.mxu0 %v335
    %2090 = vmatpush.xpose.msra.mxu0 %v334
    %2091 = vmatpush.xpose.msra.mxu0 %v333
    %2092 = vmatmul.f32.gmra.mxu0 %v2053
    %v2093 = vpop.f32.mrf.mxu0
    %v2094 = vadd.f32 %v384, %v2093
    %2095 = vdwg.mxu0
    %2096 = vmatpush.xpose.msra.mxu0 %v364
    %2097 = vmatpush.xpose.msra.mxu0 %v363
    %2098 = vmatpush.xpose.msra.mxu0 %v362
    %2099 = vmatpush.xpose.msra.mxu0 %v361
    %2100 = vmatpush.xpose.msra.mxu0 %v360
    %2101 = vmatpush.xpose.msra.mxu0 %v359
    %2102 = vmatpush.xpose.msra.mxu0 %v358
    %2103 = vmatpush.xpose.msra.mxu0 %v357
    %2104 = vmatpush.xpose.msra.mxu0 %v356
    %2105 = vmatpush.xpose.msra.mxu0 %v355
    %2106 = vmatpush.xpose.msra.mxu0 %v354
    %2107 = vmatpush.xpose.msra.mxu0 %v353
    %2108 = vmatpush.xpose.msra.mxu0 %v352
    %2109 = vmatpush.xpose.msra.mxu0 %v351
    %2110 = vmatpush.xpose.msra.mxu0 %v350
    %2111 = vmatpush.xpose.msra.mxu0 %v349
    %2112 = vmatmul.f32.gmra.mxu0 %v2053
    %v2113 = vpop.f32.mrf.mxu0
    %v2114 = vadd.f32 %v385, %v2113
    %2115 = vdwg.mxu0
    %2116 = vmatpush.xpose.msra.mxu0 %v380
    %2117 = vmatpush.xpose.msra.mxu0 %v379
    %2118 = vmatpush.xpose.msra.mxu0 %v378
    %2119 = vmatpush.xpose.msra.mxu0 %v377
    %2120 = vmatpush.xpose.msra.mxu0 %v376
    %2121 = vmatpush.xpose.msra.mxu0 %v375
    %2122 = vmatpush.xpose.msra.mxu0 %v374
    %2123 = vmatpush.xpose.msra.mxu0 %v373
    %2124 = vmatpush.xpose.msra.mxu0 %v372
    %2125 = vmatpush.xpose.msra.mxu0 %v371
    %2126 = vmatpush.xpose.msra.mxu0 %v370
    %2127 = vmatpush.xpose.msra.mxu0 %v369
    %2128 = vmatpush.xpose.msra.mxu0 %v368
    %2129 = vmatpush.xpose.msra.mxu0 %v367
    %2130 = vmatpush.xpose.msra.mxu0 %v366
    %2131 = vmatpush.xpose.msra.mxu0 %v365
    %2132 = vmatmul.f32.gmra.mxu0 %v2053
    %v2133 = vpop.f32.mrf.mxu0
    %v2134 = vadd.f32 %v386, %v2133
    %2135 = vdwg.mxu0
    %v2136 = vxor.u32 %v2074, 2147483648
    %v2137 = vmul.f32 %v2136, 1.442695
    %v2138 = vpow.pop %v2137
    %v2139 = vadd.f32 %v2138, 1.0
    %v2140 = vrcp.pop %v2139
    %v2141 = vmul.f32 %v2139, %v2140
    %v2142 = vsub.f32 1.0, %v2141
    %v2143 = vmul.f32 %v2140, %v2142
    %v2144 = vadd.f32 %v2140, %v2143
    %vm2145 = vweird.f32 %v2139
    %vm2146 = vweird.f32 %v2140
    %vm2147 = vmor %vm2145, %vm2146
    %v2148 = vsel %vm2147, %v2140, %v2144
    %v2149 = vand.u32 2147483647, %v2139
    %vm2150 = vcmp.eq.f32.partialorder %v2149, 8.507059e+37
    %v2151 = vand.u32 %v2139, 2147483648
    %v2152 = vor.u32 1.1754944e-38, %v2151
    %v2153 = vsel %vm2150, %v2152, %v2148
    %v2154 = vmul.f32 1.0, %v2153
    %v2155 = vxor.u32 %v2094, 2147483648
    %v2156 = vmul.f32 %v2155, 1.442695
    %v2157 = vpow.pop %v2156
    %v2158 = vadd.f32 %v2157, 1.0
    %v2159 = vrcp.pop %v2158
    %v2160 = vmul.f32 %v2158, %v2159
    %v2161 = vsub.f32 1.0, %v2160
    %v2162 = vmul.f32 %v2159, %v2161
    %v2163 = vadd.f32 %v2159, %v2162
    %vm2164 = vweird.f32 %v2158
    %vm2165 = vweird.f32 %v2159
    %vm2166 = vmor %vm2164, %vm2165
    %v2167 = vsel %vm2166, %v2159, %v2163
    %v2168 = vand.u32 2147483647, %v2158
    %vm2169 = vcmp.eq.f32.partialorder %v2168, 8.507059e+37
    %v2170 = vand.u32 %v2158, 2147483648
    %v2171 = vor.u32 1.1754944e-38, %v2170
    %v2172 = vsel %vm2169, %v2171, %v2167
    %v2173 = vmul.f32 1.0, %v2172
    %v2174 = vtanh.pop %v2114
    %v2175 = vxor.u32 %v2134, 2147483648
    %v2176 = vmul.f32 %v2175, 1.442695
    %v2177 = vpow.pop %v2176
    %v2178 = vadd.f32 %v2177, 1.0
    %v2179 = vrcp.pop %v2178
    %v2180 = vmul.f32 %v2178, %v2179
    %v2181 = vsub.f32 1.0, %v2180
    %v2182 = vmul.f32 %v2179, %v2181
    %v2183 = vadd.f32 %v2179, %v2182
    %vm2184 = vweird.f32 %v2178
    %vm2185 = vweird.f32 %v2179
    %vm2186 = vmor %vm2184, %vm2185
    %v2187 = vsel %vm2186, %v2179, %v2183
    %v2188 = vand.u32 2147483647, %v2178
    %vm2189 = vcmp.eq.f32.partialorder %v2188, 8.507059e+37
    %v2190 = vand.u32 %v2178, 2147483648
    %v2191 = vor.u32 1.1754944e-38, %v2190
    %v2192 = vsel %vm2189, %v2191, %v2187
    %v2193 = vmul.f32 1.0, %v2192
    %v2194 = vmul.f32 %v2173, %v2051
    %v2195 = vmul.f32 %v2154, %v2174
    %v2196 = vadd.f32 %v2194, %v2195
    %v2197 = vtanh.pop %v2196
    %v2198 = vmul.f32 %v2193, %v2197
    %s2199 = scalar_lea.vmem %s4, 88
    %2200 = vst [vmem:[%s2199] sm:$0xff] %v2198
    %2201 = vmatpush.xpose.msra.mxu0 %v332
    %2202 = vmatpush.xpose.msra.mxu0 %v331
    %2203 = vmatpush.xpose.msra.mxu0 %v330
    %2204 = vmatpush.xpose.msra.mxu0 %v329
    %2205 = vmatpush.xpose.msra.mxu0 %v328
    %2206 = vmatpush.xpose.msra.mxu0 %v327
    %2207 = vmatpush.xpose.msra.mxu0 %v326
    %2208 = vmatpush.xpose.msra.mxu0 %v325
    %2209 = vmatpush.xpose.msra.mxu0 %v324
    %2210 = vmatpush.xpose.msra.mxu0 %v323
    %2211 = vmatpush.xpose.msra.mxu0 %v322
    %2212 = vmatpush.xpose.msra.mxu0 %v321
    %2213 = vmatpush.xpose.msra.mxu0 %v320
    %2214 = vmatpush.xpose.msra.mxu0 %v319
    %2215 = vmatpush.xpose.msra.mxu0 %v318
    %2216 = vmatpush.xpose.msra.mxu0 %v317
    %2217 = vmatmul.f32.gmra.mxu0 %v2198
    %v2218 = vpop.f32.mrf.mxu0
    %v2219 = vadd.f32 %v383, %v2218
    %2220 = vdwg.mxu0
    %2221 = vmatpush.xpose.msra.mxu0 %v348
    %2222 = vmatpush.xpose.msra.mxu0 %v347
    %2223 = vmatpush.xpose.msra.mxu0 %v346
    %2224 = vmatpush.xpose.msra.mxu0 %v345
    %2225 = vmatpush.xpose.msra.mxu0 %v344
    %2226 = vmatpush.xpose.msra.mxu0 %v343
    %2227 = vmatpush.xpose.msra.mxu0 %v342
    %2228 = vmatpush.xpose.msra.mxu0 %v341
    %2229 = vmatpush.xpose.msra.mxu0 %v340
    %2230 = vmatpush.xpose.msra.mxu0 %v339
    %2231 = vmatpush.xpose.msra.mxu0 %v338
    %2232 = vmatpush.xpose.msra.mxu0 %v337
    %2233 = vmatpush.xpose.msra.mxu0 %v336
    %2234 = vmatpush.xpose.msra.mxu0 %v335
    %2235 = vmatpush.xpose.msra.mxu0 %v334
    %2236 = vmatpush.xpose.msra.mxu0 %v333
    %2237 = vmatmul.f32.gmra.mxu0 %v2198
    %v2238 = vpop.f32.mrf.mxu0
    %v2239 = vadd.f32 %v384, %v2238
    %2240 = vdwg.mxu0
    %2241 = vmatpush.xpose.msra.mxu0 %v364
    %2242 = vmatpush.xpose.msra.mxu0 %v363
    %2243 = vmatpush.xpose.msra.mxu0 %v362
    %2244 = vmatpush.xpose.msra.mxu0 %v361
    %2245 = vmatpush.xpose.msra.mxu0 %v360
    %2246 = vmatpush.xpose.msra.mxu0 %v359
    %2247 = vmatpush.xpose.msra.mxu0 %v358
    %2248 = vmatpush.xpose.msra.mxu0 %v357
    %2249 = vmatpush.xpose.msra.mxu0 %v356
    %2250 = vmatpush.xpose.msra.mxu0 %v355
    %2251 = vmatpush.xpose.msra.mxu0 %v354
    %2252 = vmatpush.xpose.msra.mxu0 %v353
    %2253 = vmatpush.xpose.msra.mxu0 %v352
    %2254 = vmatpush.xpose.msra.mxu0 %v351
    %2255 = vmatpush.xpose.msra.mxu0 %v350
    %2256 = vmatpush.xpose.msra.mxu0 %v349
    %2257 = vmatmul.f32.gmra.mxu0 %v2198
    %v2258 = vpop.f32.mrf.mxu0
    %v2259 = vadd.f32 %v385, %v2258
    %2260 = vdwg.mxu0
    %2261 = vmatpush.xpose.msra.mxu0 %v380
    %2262 = vmatpush.xpose.msra.mxu0 %v379
    %2263 = vmatpush.xpose.msra.mxu0 %v378
    %2264 = vmatpush.xpose.msra.mxu0 %v377
    %2265 = vmatpush.xpose.msra.mxu0 %v376
    %2266 = vmatpush.xpose.msra.mxu0 %v375
    %2267 = vmatpush.xpose.msra.mxu0 %v374
    %2268 = vmatpush.xpose.msra.mxu0 %v373
    %2269 = vmatpush.xpose.msra.mxu0 %v372
    %2270 = vmatpush.xpose.msra.mxu0 %v371
    %2271 = vmatpush.xpose.msra.mxu0 %v370
    %2272 = vmatpush.xpose.msra.mxu0 %v369
    %2273 = vmatpush.xpose.msra.mxu0 %v368
    %2274 = vmatpush.xpose.msra.mxu0 %v367
    %2275 = vmatpush.xpose.msra.mxu0 %v366
    %2276 = vmatpush.xpose.msra.mxu0 %v365
    %2277 = vmatmul.f32.gmra.mxu0 %v2198
    %v2278 = vpop.f32.mrf.mxu0
    %v2279 = vadd.f32 %v386, %v2278
    %2280 = vdwg.mxu0
    %v2281 = vxor.u32 %v2219, 2147483648
    %v2282 = vmul.f32 %v2281, 1.442695
    %v2283 = vpow.pop %v2282
    %v2284 = vadd.f32 %v2283, 1.0
    %v2285 = vrcp.pop %v2284
    %v2286 = vmul.f32 %v2284, %v2285
    %v2287 = vsub.f32 1.0, %v2286
    %v2288 = vmul.f32 %v2285, %v2287
    %v2289 = vadd.f32 %v2285, %v2288
    %vm2290 = vweird.f32 %v2284
    %vm2291 = vweird.f32 %v2285
    %vm2292 = vmor %vm2290, %vm2291
    %v2293 = vsel %vm2292, %v2285, %v2289
    %v2294 = vand.u32 2147483647, %v2284
    %vm2295 = vcmp.eq.f32.partialorder %v2294, 8.507059e+37
    %v2296 = vand.u32 %v2284, 2147483648
    %v2297 = vor.u32 1.1754944e-38, %v2296
    %v2298 = vsel %vm2295, %v2297, %v2293
    %v2299 = vmul.f32 1.0, %v2298
    %v2300 = vxor.u32 %v2239, 2147483648
    %v2301 = vmul.f32 %v2300, 1.442695
    %v2302 = vpow.pop %v2301
    %v2303 = vadd.f32 %v2302, 1.0
    %v2304 = vrcp.pop %v2303
    %v2305 = vmul.f32 %v2303, %v2304
    %v2306 = vsub.f32 1.0, %v2305
    %v2307 = vmul.f32 %v2304, %v2306
    %v2308 = vadd.f32 %v2304, %v2307
    %vm2309 = vweird.f32 %v2303
    %vm2310 = vweird.f32 %v2304
    %vm2311 = vmor %vm2309, %vm2310
    %v2312 = vsel %vm2311, %v2304, %v2308
    %v2313 = vand.u32 2147483647, %v2303
    %vm2314 = vcmp.eq.f32.partialorder %v2313, 8.507059e+37
    %v2315 = vand.u32 %v2303, 2147483648
    %v2316 = vor.u32 1.1754944e-38, %v2315
    %v2317 = vsel %vm2314, %v2316, %v2312
    %v2318 = vmul.f32 1.0, %v2317
    %v2319 = vtanh.pop %v2259
    %v2320 = vxor.u32 %v2279, 2147483648
    %v2321 = vmul.f32 %v2320, 1.442695
    %v2322 = vpow.pop %v2321
    %v2323 = vadd.f32 %v2322, 1.0
    %v2324 = vrcp.pop %v2323
    %v2325 = vmul.f32 %v2323, %v2324
    %v2326 = vsub.f32 1.0, %v2325
    %v2327 = vmul.f32 %v2324, %v2326
    %v2328 = vadd.f32 %v2324, %v2327
    %vm2329 = vweird.f32 %v2323
    %vm2330 = vweird.f32 %v2324
    %vm2331 = vmor %vm2329, %vm2330
    %v2332 = vsel %vm2331, %v2324, %v2328
    %v2333 = vand.u32 2147483647, %v2323
    %vm2334 = vcmp.eq.f32.partialorder %v2333, 8.507059e+37
    %v2335 = vand.u32 %v2323, 2147483648
    %v2336 = vor.u32 1.1754944e-38, %v2335
    %v2337 = vsel %vm2334, %v2336, %v2332
    %v2338 = vmul.f32 1.0, %v2337
    %v2339 = vmul.f32 %v2318, %v2196
    %v2340 = vmul.f32 %v2299, %v2319
    %v2341 = vadd.f32 %v2339, %v2340
    %v2342 = vtanh.pop %v2341
    %v2343 = vmul.f32 %v2338, %v2342
    %s2344 = scalar_lea.vmem %s4, 96
    %2345 = vst [vmem:[%s2344] sm:$0xff] %v2343
    %2346 = vmatpush.xpose.msra.mxu0 %v332
    %2347 = vmatpush.xpose.msra.mxu0 %v331
    %2348 = vmatpush.xpose.msra.mxu0 %v330
    %2349 = vmatpush.xpose.msra.mxu0 %v329
    %2350 = vmatpush.xpose.msra.mxu0 %v328
    %2351 = vmatpush.xpose.msra.mxu0 %v327
    %2352 = vmatpush.xpose.msra.mxu0 %v326
    %2353 = vmatpush.xpose.msra.mxu0 %v325
    %2354 = vmatpush.xpose.msra.mxu0 %v324
    %2355 = vmatpush.xpose.msra.mxu0 %v323
    %2356 = vmatpush.xpose.msra.mxu0 %v322
    %2357 = vmatpush.xpose.msra.mxu0 %v321
    %2358 = vmatpush.xpose.msra.mxu0 %v320
    %2359 = vmatpush.xpose.msra.mxu0 %v319
    %2360 = vmatpush.xpose.msra.mxu0 %v318
    %2361 = vmatpush.xpose.msra.mxu0 %v317
    %2362 = vmatmul.f32.gmra.mxu0 %v2343
    %v2363 = vpop.f32.mrf.mxu0
    %v2364 = vadd.f32 %v383, %v2363
    %2365 = vdwg.mxu0
    %2366 = vmatpush.xpose.msra.mxu0 %v348
    %2367 = vmatpush.xpose.msra.mxu0 %v347
    %2368 = vmatpush.xpose.msra.mxu0 %v346
    %2369 = vmatpush.xpose.msra.mxu0 %v345
    %2370 = vmatpush.xpose.msra.mxu0 %v344
    %2371 = vmatpush.xpose.msra.mxu0 %v343
    %2372 = vmatpush.xpose.msra.mxu0 %v342
    %2373 = vmatpush.xpose.msra.mxu0 %v341
    %2374 = vmatpush.xpose.msra.mxu0 %v340
    %2375 = vmatpush.xpose.msra.mxu0 %v339
    %2376 = vmatpush.xpose.msra.mxu0 %v338
    %2377 = vmatpush.xpose.msra.mxu0 %v337
    %2378 = vmatpush.xpose.msra.mxu0 %v336
    %2379 = vmatpush.xpose.msra.mxu0 %v335
    %2380 = vmatpush.xpose.msra.mxu0 %v334
    %2381 = vmatpush.xpose.msra.mxu0 %v333
    %2382 = vmatmul.f32.gmra.mxu0 %v2343
    %v2383 = vpop.f32.mrf.mxu0
    %v2384 = vadd.f32 %v384, %v2383
    %2385 = vdwg.mxu0
    %2386 = vmatpush.xpose.msra.mxu0 %v364
    %2387 = vmatpush.xpose.msra.mxu0 %v363
    %2388 = vmatpush.xpose.msra.mxu0 %v362
    %2389 = vmatpush.xpose.msra.mxu0 %v361
    %2390 = vmatpush.xpose.msra.mxu0 %v360
    %2391 = vmatpush.xpose.msra.mxu0 %v359
    %2392 = vmatpush.xpose.msra.mxu0 %v358
    %2393 = vmatpush.xpose.msra.mxu0 %v357
    %2394 = vmatpush.xpose.msra.mxu0 %v356
    %2395 = vmatpush.xpose.msra.mxu0 %v355
    %2396 = vmatpush.xpose.msra.mxu0 %v354
    %2397 = vmatpush.xpose.msra.mxu0 %v353
    %2398 = vmatpush.xpose.msra.mxu0 %v352
    %2399 = vmatpush.xpose.msra.mxu0 %v351
    %2400 = vmatpush.xpose.msra.mxu0 %v350
    %2401 = vmatpush.xpose.msra.mxu0 %v349
    %2402 = vmatmul.f32.gmra.mxu0 %v2343
    %v2403 = vpop.f32.mrf.mxu0
    %v2404 = vadd.f32 %v385, %v2403
    %2405 = vdwg.mxu0
    %2406 = vmatpush.xpose.msra.mxu0 %v380
    %2407 = vmatpush.xpose.msra.mxu0 %v379
    %2408 = vmatpush.xpose.msra.mxu0 %v378
    %2409 = vmatpush.xpose.msra.mxu0 %v377
    %2410 = vmatpush.xpose.msra.mxu0 %v376
    %2411 = vmatpush.xpose.msra.mxu0 %v375
    %2412 = vmatpush.xpose.msra.mxu0 %v374
    %2413 = vmatpush.xpose.msra.mxu0 %v373
    %2414 = vmatpush.xpose.msra.mxu0 %v372
    %2415 = vmatpush.xpose.msra.mxu0 %v371
    %2416 = vmatpush.xpose.msra.mxu0 %v370
    %2417 = vmatpush.xpose.msra.mxu0 %v369
    %2418 = vmatpush.xpose.msra.mxu0 %v368
    %2419 = vmatpush.xpose.msra.mxu0 %v367
    %2420 = vmatpush.xpose.msra.mxu0 %v366
    %2421 = vmatpush.xpose.msra.mxu0 %v365
    %2422 = vmatmul.f32.gmra.mxu0 %v2343
    %v2423 = vpop.f32.mrf.mxu0
    %v2424 = vadd.f32 %v386, %v2423
    %2425 = vdwg.mxu0
    %v2426 = vxor.u32 %v2364, 2147483648
    %v2427 = vmul.f32 %v2426, 1.442695
    %v2428 = vpow.pop %v2427
    %v2429 = vadd.f32 %v2428, 1.0
    %v2430 = vrcp.pop %v2429
    %v2431 = vmul.f32 %v2429, %v2430
    %v2432 = vsub.f32 1.0, %v2431
    %v2433 = vmul.f32 %v2430, %v2432
    %v2434 = vadd.f32 %v2430, %v2433
    %vm2435 = vweird.f32 %v2429
    %vm2436 = vweird.f32 %v2430
    %vm2437 = vmor %vm2435, %vm2436
    %v2438 = vsel %vm2437, %v2430, %v2434
    %v2439 = vand.u32 2147483647, %v2429
    %vm2440 = vcmp.eq.f32.partialorder %v2439, 8.507059e+37
    %v2441 = vand.u32 %v2429, 2147483648
    %v2442 = vor.u32 1.1754944e-38, %v2441
    %v2443 = vsel %vm2440, %v2442, %v2438
    %v2444 = vmul.f32 1.0, %v2443
    %v2445 = vxor.u32 %v2384, 2147483648
    %v2446 = vmul.f32 %v2445, 1.442695
    %v2447 = vpow.pop %v2446
    %v2448 = vadd.f32 %v2447, 1.0
    %v2449 = vrcp.pop %v2448
    %v2450 = vmul.f32 %v2448, %v2449
    %v2451 = vsub.f32 1.0, %v2450
    %v2452 = vmul.f32 %v2449, %v2451
    %v2453 = vadd.f32 %v2449, %v2452
    %vm2454 = vweird.f32 %v2448
    %vm2455 = vweird.f32 %v2449
    %vm2456 = vmor %vm2454, %vm2455
    %v2457 = vsel %vm2456, %v2449, %v2453
    %v2458 = vand.u32 2147483647, %v2448
    %vm2459 = vcmp.eq.f32.partialorder %v2458, 8.507059e+37
    %v2460 = vand.u32 %v2448, 2147483648
    %v2461 = vor.u32 1.1754944e-38, %v2460
    %v2462 = vsel %vm2459, %v2461, %v2457
    %v2463 = vmul.f32 1.0, %v2462
    %v2464 = vtanh.pop %v2404
    %v2465 = vxor.u32 %v2424, 2147483648
    %v2466 = vmul.f32 %v2465, 1.442695
    %v2467 = vpow.pop %v2466
    %v2468 = vadd.f32 %v2467, 1.0
    %v2469 = vrcp.pop %v2468
    %v2470 = vmul.f32 %v2468, %v2469
    %v2471 = vsub.f32 1.0, %v2470
    %v2472 = vmul.f32 %v2469, %v2471
    %v2473 = vadd.f32 %v2469, %v2472
    %vm2474 = vweird.f32 %v2468
    %vm2475 = vweird.f32 %v2469
    %vm2476 = vmor %vm2474, %vm2475
    %v2477 = vsel %vm2476, %v2469, %v2473
    %v2478 = vand.u32 2147483647, %v2468
    %vm2479 = vcmp.eq.f32.partialorder %v2478, 8.507059e+37
    %v2480 = vand.u32 %v2468, 2147483648
    %v2481 = vor.u32 1.1754944e-38, %v2480
    %v2482 = vsel %vm2479, %v2481, %v2477
    %v2483 = vmul.f32 1.0, %v2482
    %v2484 = vmul.f32 %v2463, %v2341
    %v2485 = vmul.f32 %v2444, %v2464
    %v2486 = vadd.f32 %v2484, %v2485
    %v2487 = vtanh.pop %v2486
    %v2488 = vmul.f32 %v2483, %v2487
    %s2489 = scalar_lea.vmem %s4, 104
    %2490 = vst [vmem:[%s2489] sm:$0xff] %v2488
    %2491 = vmatpush.xpose.msra.mxu0 %v332
    %2492 = vmatpush.xpose.msra.mxu0 %v331
    %2493 = vmatpush.xpose.msra.mxu0 %v330
    %2494 = vmatpush.xpose.msra.mxu0 %v329
    %2495 = vmatpush.xpose.msra.mxu0 %v328
    %2496 = vmatpush.xpose.msra.mxu0 %v327
    %2497 = vmatpush.xpose.msra.mxu0 %v326
    %2498 = vmatpush.xpose.msra.mxu0 %v325
    %2499 = vmatpush.xpose.msra.mxu0 %v324
    %2500 = vmatpush.xpose.msra.mxu0 %v323
    %2501 = vmatpush.xpose.msra.mxu0 %v322
    %2502 = vmatpush.xpose.msra.mxu0 %v321
    %2503 = vmatpush.xpose.msra.mxu0 %v320
    %2504 = vmatpush.xpose.msra.mxu0 %v319
    %2505 = vmatpush.xpose.msra.mxu0 %v318
    %2506 = vmatpush.xpose.msra.mxu0 %v317
    %2507 = vmatmul.f32.gmra.mxu0 %v2488
    %v2508 = vpop.f32.mrf.mxu0
    %v2509 = vadd.f32 %v383, %v2508
    %2510 = vdwg.mxu0
    %2511 = vmatpush.xpose.msra.mxu0 %v348
    %2512 = vmatpush.xpose.msra.mxu0 %v347
    %2513 = vmatpush.xpose.msra.mxu0 %v346
    %2514 = vmatpush.xpose.msra.mxu0 %v345
    %2515 = vmatpush.xpose.msra.mxu0 %v344
    %2516 = vmatpush.xpose.msra.mxu0 %v343
    %2517 = vmatpush.xpose.msra.mxu0 %v342
    %2518 = vmatpush.xpose.msra.mxu0 %v341
    %2519 = vmatpush.xpose.msra.mxu0 %v340
    %2520 = vmatpush.xpose.msra.mxu0 %v339
    %2521 = vmatpush.xpose.msra.mxu0 %v338
    %2522 = vmatpush.xpose.msra.mxu0 %v337
    %2523 = vmatpush.xpose.msra.mxu0 %v336
    %2524 = vmatpush.xpose.msra.mxu0 %v335
    %2525 = vmatpush.xpose.msra.mxu0 %v334
    %2526 = vmatpush.xpose.msra.mxu0 %v333
    %2527 = vmatmul.f32.gmra.mxu0 %v2488
    %v2528 = vpop.f32.mrf.mxu0
    %v2529 = vadd.f32 %v384, %v2528
    %2530 = vdwg.mxu0
    %2531 = vmatpush.xpose.msra.mxu0 %v364
    %2532 = vmatpush.xpose.msra.mxu0 %v363
    %2533 = vmatpush.xpose.msra.mxu0 %v362
    %2534 = vmatpush.xpose.msra.mxu0 %v361
    %2535 = vmatpush.xpose.msra.mxu0 %v360
    %2536 = vmatpush.xpose.msra.mxu0 %v359
    %2537 = vmatpush.xpose.msra.mxu0 %v358
    %2538 = vmatpush.xpose.msra.mxu0 %v357
    %2539 = vmatpush.xpose.msra.mxu0 %v356
    %2540 = vmatpush.xpose.msra.mxu0 %v355
    %2541 = vmatpush.xpose.msra.mxu0 %v354
    %2542 = vmatpush.xpose.msra.mxu0 %v353
    %2543 = vmatpush.xpose.msra.mxu0 %v352
    %2544 = vmatpush.xpose.msra.mxu0 %v351
    %2545 = vmatpush.xpose.msra.mxu0 %v350
    %2546 = vmatpush.xpose.msra.mxu0 %v349
    %2547 = vmatmul.f32.gmra.mxu0 %v2488
    %v2548 = vpop.f32.mrf.mxu0
    %v2549 = vadd.f32 %v385, %v2548
    %2550 = vdwg.mxu0
    %2551 = vmatpush.xpose.msra.mxu0 %v380
    %2552 = vmatpush.xpose.msra.mxu0 %v379
    %2553 = vmatpush.xpose.msra.mxu0 %v378
    %2554 = vmatpush.xpose.msra.mxu0 %v377
    %2555 = vmatpush.xpose.msra.mxu0 %v376
    %2556 = vmatpush.xpose.msra.mxu0 %v375
    %2557 = vmatpush.xpose.msra.mxu0 %v374
    %2558 = vmatpush.xpose.msra.mxu0 %v373
    %2559 = vmatpush.xpose.msra.mxu0 %v372
    %2560 = vmatpush.xpose.msra.mxu0 %v371
    %2561 = vmatpush.xpose.msra.mxu0 %v370
    %2562 = vmatpush.xpose.msra.mxu0 %v369
    %2563 = vmatpush.xpose.msra.mxu0 %v368
    %2564 = vmatpush.xpose.msra.mxu0 %v367
    %2565 = vmatpush.xpose.msra.mxu0 %v366
    %2566 = vmatpush.xpose.msra.mxu0 %v365
    %2567 = vmatmul.f32.gmra.mxu0 %v2488
    %v2568 = vpop.f32.mrf.mxu0
    %v2569 = vadd.f32 %v386, %v2568
    %2570 = vdwg.mxu0
    %v2571 = vxor.u32 %v2509, 2147483648
    %v2572 = vmul.f32 %v2571, 1.442695
    %v2573 = vpow.pop %v2572
    %v2574 = vadd.f32 %v2573, 1.0
    %v2575 = vrcp.pop %v2574
    %v2576 = vmul.f32 %v2574, %v2575
    %v2577 = vsub.f32 1.0, %v2576
    %v2578 = vmul.f32 %v2575, %v2577
    %v2579 = vadd.f32 %v2575, %v2578
    %vm2580 = vweird.f32 %v2574
    %vm2581 = vweird.f32 %v2575
    %vm2582 = vmor %vm2580, %vm2581
    %v2583 = vsel %vm2582, %v2575, %v2579
    %v2584 = vand.u32 2147483647, %v2574
    %vm2585 = vcmp.eq.f32.partialorder %v2584, 8.507059e+37
    %v2586 = vand.u32 %v2574, 2147483648
    %v2587 = vor.u32 1.1754944e-38, %v2586
    %v2588 = vsel %vm2585, %v2587, %v2583
    %v2589 = vmul.f32 1.0, %v2588
    %v2590 = vxor.u32 %v2529, 2147483648
    %v2591 = vmul.f32 %v2590, 1.442695
    %v2592 = vpow.pop %v2591
    %v2593 = vadd.f32 %v2592, 1.0
    %v2594 = vrcp.pop %v2593
    %v2595 = vmul.f32 %v2593, %v2594
    %v2596 = vsub.f32 1.0, %v2595
    %v2597 = vmul.f32 %v2594, %v2596
    %v2598 = vadd.f32 %v2594, %v2597
    %vm2599 = vweird.f32 %v2593
    %vm2600 = vweird.f32 %v2594
    %vm2601 = vmor %vm2599, %vm2600
    %v2602 = vsel %vm2601, %v2594, %v2598
    %v2603 = vand.u32 2147483647, %v2593
    %vm2604 = vcmp.eq.f32.partialorder %v2603, 8.507059e+37
    %v2605 = vand.u32 %v2593, 2147483648
    %v2606 = vor.u32 1.1754944e-38, %v2605
    %v2607 = vsel %vm2604, %v2606, %v2602
    %v2608 = vmul.f32 1.0, %v2607
    %v2609 = vtanh.pop %v2549
    %v2610 = vxor.u32 %v2569, 2147483648
    %v2611 = vmul.f32 %v2610, 1.442695
    %v2612 = vpow.pop %v2611
    %v2613 = vadd.f32 %v2612, 1.0
    %v2614 = vrcp.pop %v2613
    %v2615 = vmul.f32 %v2613, %v2614
    %v2616 = vsub.f32 1.0, %v2615
    %v2617 = vmul.f32 %v2614, %v2616
    %v2618 = vadd.f32 %v2614, %v2617
    %vm2619 = vweird.f32 %v2613
    %vm2620 = vweird.f32 %v2614
    %vm2621 = vmor %vm2619, %vm2620
    %v2622 = vsel %vm2621, %v2614, %v2618
    %v2623 = vand.u32 2147483647, %v2613
    %vm2624 = vcmp.eq.f32.partialorder %v2623, 8.507059e+37
    %v2625 = vand.u32 %v2613, 2147483648
    %v2626 = vor.u32 1.1754944e-38, %v2625
    %v2627 = vsel %vm2624, %v2626, %v2622
    %v2628 = vmul.f32 1.0, %v2627
    %v2629 = vmul.f32 %v2608, %v2486
    %v2630 = vmul.f32 %v2589, %v2609
    %v2631 = vadd.f32 %v2629, %v2630
    %v2632 = vtanh.pop %v2631
    %v2633 = vmul.f32 %v2628, %v2632
    %s2634 = scalar_lea.vmem %s4, 112
    %2635 = vst [vmem:[%s2634] sm:$0xff] %v2633
    // Predicated region
    $region26: #{seq2seq_forward.5} parent=1 // pred_check
      _
    $region27: #{seq2seq_forward.5} parent=1 // pred_check_branch
      %2637 = sbr.rel (0) target = $region29
    $region28: #{seq2seq_forward.5} parent=1 // pred_region
      _
    $region29: #{seq2seq_forward.5} parent=1 // pred_fallthru
      _
    // Predicated region
    $region30: #{seq2seq_forward.5} parent=1 // pred_check
      _
    $region31: #{seq2seq_forward.5} parent=1 // pred_check_branch
      %2639 = sbr.rel (0) target = $region33
    $region32: #{seq2seq_forward.5} parent=1 // pred_region
      _
    $region33: #{seq2seq_forward.5} parent=1 // pred_fallthru
      _
    %2640 = vsyncpa [#allocation4], 1
    %2641 = vsyncpa [#allocation6], 1

// kernel: seq2seq_forward.6
$region0: #{seq2seq_forward.6}
  #allocation0 [shape = 'u32[]', space=smem, size = 0x4, offset = 0x4, fixed_abs, tag = 'smem constant byte address 0x4 - core index']
  #allocation1 [shape = 'u32[72,128]{1,0:T(1,128)}', space=vmem, size = 0x9000, scoped, tag = 'internal scratch']
  #allocation2 [shape = 'f32[15,8,512]{2,1,0:T(8,128)}', space=vmem, size = 0x3c000, scoped, tag = 'scratch operand']
  %s0 = inlined_call_operand.vmem [shape: f32[15,8,128], index: 0, kind: input, shape index: {}]
  %s1 = inlined_call_operand.vmem [shape: f32[7,8,128], index: 1, kind: input, shape index: {}]
  %s2 = inlined_call_operand.hbm [shape: f32[512,128], index: 2, kind: input, shape index: {}]
  %s3 = inlined_call_operand.hbm [shape: f32[512,128], index: 3, kind: input, shape index: {}]
  %s4 = inlined_call_operand.hbm [shape: f32[512,128], index: 4, kind: input, shape index: {}]
  %s5 = inlined_call_operand.vmem [shape: f32[1,512], index: 5, kind: input, shape index: {}]
  %s6 = inlined_call_operand.vmem [shape: f32[7,8,128], index: 6, kind: output, shape index: {}]
  %s7 = sld [smem:[#allocation0]]
  $region46: #{seq2seq_forward.6} parent=0
    _
  %s9 = ssub.s32 1, %s7
  %s10 = scalar_select 0, %s9, %s7
  $region1: #{seq2seq_forward.6} parent=0
    #allocation3 [shape = 'u8[262144]{0}', space=vmem, size = 0x40000, scoped, tag = 'input window, operand 2, single buffered']
    #allocation4 [shape = 's32[1]{0}', space=sflag, size = 0x4, scoped, tag = 'scoped memory for seq2seq_forward.6']
    #allocation5 [shape = 'u8[262144]{0}', space=vmem, size = 0x40000, scoped, tag = 'input window, operand 3, single buffered']
    #allocation6 [shape = 's32[1]{0}', space=sflag, size = 0x4, scoped, tag = 'scoped memory for seq2seq_forward.6']
    #allocation7 [shape = 'u8[262144]{0}', space=vmem, size = 0x40000, scoped, tag = 'input window, operand 4, single buffered']
    %11 = vsyncpa [#allocation4], 0
    %12 = vsyncpa [#allocation6], 0
    // Predicated region
    $region2: #{seq2seq_forward.6} parent=1 // pred_check
      _
    $region3: #{seq2seq_forward.6} parent=1 // pred_check_branch
      %14 = sbr.rel (0) target = $region5
    $region4: #{seq2seq_forward.6} parent=1 // pred_region
      _
    $region5: #{seq2seq_forward.6} parent=1 // pred_fallthru
      _
    // Predicated region
    $region6: #{seq2seq_forward.6} parent=1 // pred_check
      _
    $region7: #{seq2seq_forward.6} parent=1 // pred_check_branch
      %16 = sbr.rel (0) target = $region9
    $region8: #{seq2seq_forward.6} parent=1 // pred_region
      _
    $region9: #{seq2seq_forward.6} parent=1 // pred_fallthru
      _
    // Predicated region
    $region10: #{seq2seq_forward.6} parent=1 // pred_check
      _
    $region11: #{seq2seq_forward.6} parent=1 // pred_check_branch
      %18 = sbr.rel (0) target = $region13
    $region12: #{seq2seq_forward.6} parent=1 // pred_region
      %20 = vsyncadd [#allocation4], 0
      %s21 = sshll.u32 %s2, 4
      %s22 = int_to_ptr.hbm [resolvable:$true] %s21
      %s23 = sshll.u32 [#allocation3], 4
      %s24 = int_to_ptr.vmem [resolvable:$true] %s23
      %29 = dma.hbm_to_vmem [thread:$0]  %s22, 8192, %s24, [#allocation4], 128, 128, 8
    $region13: #{seq2seq_forward.6} parent=1 // pred_fallthru
      _
    // Predicated region
    $region14: #{seq2seq_forward.6} parent=1 // pred_check
      _
    $region15: #{seq2seq_forward.6} parent=1 // pred_check_branch
      %31 = sbr.rel (0) target = $region17
    $region16: #{seq2seq_forward.6} parent=1 // pred_region
      %33 = vsyncadd [#allocation6], 0
      %s34 = sshll.u32 %s3, 4
      %s35 = int_to_ptr.hbm [resolvable:$true] %s34
      %s36 = sshll.u32 [#allocation5], 4
      %s37 = int_to_ptr.vmem [resolvable:$true] %s36
      %42 = dma.hbm_to_vmem [thread:$0]  %s35, 8192, %s37, [#allocation6], 128, 128, 8
    $region17: #{seq2seq_forward.6} parent=1 // pred_fallthru
      _
    // Predicated region
    $region18: #{seq2seq_forward.6} parent=1 // pred_check
      _
    $region19: #{seq2seq_forward.6} parent=1 // pred_check_branch
      %44 = sbr.rel (0) target = $region21
    $region20: #{seq2seq_forward.6} parent=1 // pred_region
      %46 = vsyncadd [#allocation6], 0
      %s47 = sshll.u32 %s4, 4
      %s48 = int_to_ptr.hbm [resolvable:$true] %s47
      %s49 = sshll.u32 [#allocation7], 4
      %s50 = int_to_ptr.vmem [resolvable:$true] %s49
      %55 = dma.hbm_to_vmem [thread:$0]  %s48, 8192, %s50, [#allocation6], 128, 128, 8
    $region21: #{seq2seq_forward.6} parent=1 // pred_fallthru
      _
    // Predicated region
    $region22: #{seq2seq_forward.6} parent=1 // pred_check
      _
    $region23: #{seq2seq_forward.6} parent=1 // pred_check_branch
      %57 = sbr.rel (0) target = $region25
    $region24: #{seq2seq_forward.6} parent=1 // pred_region
      _
    $region25: #{seq2seq_forward.6} parent=1 // pred_fallthru
      _
    // Predicated region
    $region26: #{seq2seq_forward.6} parent=1 // pred_check
      _
    $region27: #{seq2seq_forward.6} parent=1 // pred_check_branch
      %59 = sbr.rel (0) target = $region29
    $region28: #{seq2seq_forward.6} parent=1 // pred_region
      %61 = dma.done [#allocation4], 8192
    $region29: #{seq2seq_forward.6} parent=1 // pred_fallthru
      _
    // Predicated region
    $region30: #{seq2seq_forward.6} parent=1 // pred_check
      _
    $region31: #{seq2seq_forward.6} parent=1 // pred_check_branch
      %63 = sbr.rel (0) target = $region33
    $region32: #{seq2seq_forward.6} parent=1 // pred_region
      %65 = dma.done [#allocation6], 8192
    $region33: #{seq2seq_forward.6} parent=1 // pred_fallthru
      _
    // Predicated region
    $region34: #{seq2seq_forward.6} parent=1 // pred_check
      _
    $region35: #{seq2seq_forward.6} parent=1 // pred_check_branch
      %67 = sbr.rel (0) target = $region37
    $region36: #{seq2seq_forward.6} parent=1 // pred_region
      %69 = dma.done [#allocation6], 8192
    $region37: #{seq2seq_forward.6} parent=1 // pred_fallthru
      _
    %v70 = vld [vmem:[%s0] sm:$0xff]
    %v71 = vld [vmem:[%s0 + $0x8] sm:$0xff]
    %v72 = vld [vmem:[%s0 + $0x10] sm:$0xff]
    %v73 = vld [vmem:[%s0 + $0x18] sm:$0xff]
    %v74 = vld [vmem:[%s0 + $0x20] sm:$0xff]
    %v75 = vld [vmem:[%s0 + $0x28] sm:$0xff]
    %v76 = vld [vmem:[%s0 + $0x30] sm:$0xff]
    %v77 = vld [vmem:[%s0 + $0x38] sm:$0xff]
    %v78 = vld [vmem:[%s0 + $0x40] sm:$0xff]
    %v79 = vld [vmem:[%s0 + $0x48] sm:$0xff]
    %v80 = vld [vmem:[%s0 + $0x50] sm:$0xff]
    %v81 = vld [vmem:[%s0 + $0x58] sm:$0xff]
    %v82 = vld [vmem:[%s0 + $0x60] sm:$0xff]
    %v83 = vld [vmem:[%s0 + $0x68] sm:$0xff]
    %v84 = vld [vmem:[%s0 + $0x70] sm:$0xff]
    %v85 = vld [vmem:[#allocation5] sm:$0xff]
    %v86 = vld [vmem:[#allocation5 + $0x8] sm:$0xff]
    %v87 = vld [vmem:[#allocation5 + $0x10] sm:$0xff]
    %v88 = vld [vmem:[#allocation5 + $0x18] sm:$0xff]
    %v89 = vld [vmem:[#allocation5 + $0x20] sm:$0xff]
    %v90 = vld [vmem:[#allocation5 + $0x28] sm:$0xff]
    %v91 = vld [vmem:[#allocation5 + $0x30] sm:$0xff]
    %v92 = vld [vmem:[#allocation5 + $0x38] sm:$0xff]
    %v93 = vld [vmem:[#allocation5 + $0x40] sm:$0xff]
    %v94 = vld [vmem:[#allocation5 + $0x48] sm:$0xff]
    %v95 = vld [vmem:[#allocation5 + $0x50] sm:$0xff]
    %v96 = vld [vmem:[#allocation5 + $0x58] sm:$0xff]
    %v97 = vld [vmem:[#allocation5 + $0x60] sm:$0xff]
    %v98 = vld [vmem:[#allocation5 + $0x68] sm:$0xff]
    %v99 = vld [vmem:[#allocation5 + $0x70] sm:$0xff]
    %v100 = vld [vmem:[#allocation5 + $0x78] sm:$0xff]
    %v101 = vld [vmem:[#allocation5 + $0x80] sm:$0xff]
    %v102 = vld [vmem:[#allocation5 + $0x88] sm:$0xff]
    %v103 = vld [vmem:[#allocation5 + $0x90] sm:$0xff]
    %v104 = vld [vmem:[#allocation5 + $0x98] sm:$0xff]
    %v105 = vld [vmem:[#allocation5 + $0xa0] sm:$0xff]
    %v106 = vld [vmem:[#allocation5 + $0xa8] sm:$0xff]
    %v107 = vld [vmem:[#allocation5 + $0xb0] sm:$0xff]
    %v108 = vld [vmem:[#allocation5 + $0xb8] sm:$0xff]
    %v109 = vld [vmem:[#allocation5 + $0xc0] sm:$0xff]
    %v110 = vld [vmem:[#allocation5 + $0xc8] sm:$0xff]
    %v111 = vld [vmem:[#allocation5 + $0xd0] sm:$0xff]
    %v112 = vld [vmem:[#allocation5 + $0xd8] sm:$0xff]
    %v113 = vld [vmem:[#allocation5 + $0xe0] sm:$0xff]
    %v114 = vld [vmem:[#allocation5 + $0xe8] sm:$0xff]
    %v115 = vld [vmem:[#allocation5 + $0xf0] sm:$0xff]
    %v116 = vld [vmem:[#allocation5 + $0xf8] sm:$0xff]
    %v117 = vld [vmem:[#allocation5 + $0x100] sm:$0xff]
    %v118 = vld [vmem:[#allocation5 + $0x108] sm:$0xff]
    %v119 = vld [vmem:[#allocation5 + $0x110] sm:$0xff]
    %v120 = vld [vmem:[#allocation5 + $0x118] sm:$0xff]
    %v121 = vld [vmem:[#allocation5 + $0x120] sm:$0xff]
    %v122 = vld [vmem:[#allocation5 + $0x128] sm:$0xff]
    %v123 = vld [vmem:[#allocation5 + $0x130] sm:$0xff]
    %v124 = vld [vmem:[#allocation5 + $0x138] sm:$0xff]
    %v125 = vld [vmem:[#allocation5 + $0x140] sm:$0xff]
    %v126 = vld [vmem:[#allocation5 + $0x148] sm:$0xff]
    %v127 = vld [vmem:[#allocation5 + $0x150] sm:$0xff]
    %v128 = vld [vmem:[#allocation5 + $0x158] sm:$0xff]
    %v129 = vld [vmem:[#allocation5 + $0x160] sm:$0xff]
    %v130 = vld [vmem:[#allocation5 + $0x168] sm:$0xff]
    %v131 = vld [vmem:[#allocation5 + $0x170] sm:$0xff]
    %v132 = vld [vmem:[#allocation5 + $0x178] sm:$0xff]
    %v133 = vld [vmem:[#allocation5 + $0x180] sm:$0xff]
    %v134 = vld [vmem:[#allocation5 + $0x188] sm:$0xff]
    %v135 = vld [vmem:[#allocation5 + $0x190] sm:$0xff]
    %v136 = vld [vmem:[#allocation5 + $0x198] sm:$0xff]
    %v137 = vld [vmem:[#allocation5 + $0x1a0] sm:$0xff]
    %v138 = vld [vmem:[#allocation5 + $0x1a8] sm:$0xff]
    %v139 = vld [vmem:[#allocation5 + $0x1b0] sm:$0xff]
    %v140 = vld [vmem:[#allocation5 + $0x1b8] sm:$0xff]
    %v141 = vld [vmem:[#allocation5 + $0x1c0] sm:$0xff]
    %v142 = vld [vmem:[#allocation5 + $0x1c8] sm:$0xff]
    %v143 = vld [vmem:[#allocation5 + $0x1d0] sm:$0xff]
    %v144 = vld [vmem:[#allocation5 + $0x1d8] sm:$0xff]
    %v145 = vld [vmem:[#allocation5 + $0x1e0] sm:$0xff]
    %v146 = vld [vmem:[#allocation5 + $0x1e8] sm:$0xff]
    %v147 = vld [vmem:[#allocation5 + $0x1f0] sm:$0xff]
    %v148 = vld [vmem:[#allocation5 + $0x1f8] sm:$0xff]
    %149 = vmatpush.xpose.msra.mxu0 %v100
    %150 = vmatpush.xpose.msra.mxu0 %v99
    %151 = vmatpush.xpose.msra.mxu0 %v98
    %152 = vmatpush.xpose.msra.mxu0 %v97
    %153 = vmatpush.xpose.msra.mxu0 %v96
    %154 = vmatpush.xpose.msra.mxu0 %v95
    %155 = vmatpush.xpose.msra.mxu0 %v94
    %156 = vmatpush.xpose.msra.mxu0 %v93
    %157 = vmatpush.xpose.msra.mxu0 %v92
    %158 = vmatpush.xpose.msra.mxu0 %v91
    %159 = vmatpush.xpose.msra.mxu0 %v90
    %160 = vmatpush.xpose.msra.mxu0 %v89
    %161 = vmatpush.xpose.msra.mxu0 %v88
    %162 = vmatpush.xpose.msra.mxu0 %v87
    %163 = vmatpush.xpose.msra.mxu0 %v86
    %164 = vmatpush.xpose.msra.mxu0 %v85
    %165 = vmatmul.f32.gmra.mxu0 %v70
    %v166 = vpop.f32.mrf.mxu0
    %v167 = vadd.f32 0.0, %v166
    %168 = vmatmul.f32.gmra.mxu0 %v71
    %v169 = vpop.f32.mrf.mxu0
    %v170 = vadd.f32 0.0, %v169
    %171 = vmatmul.f32.gmra.mxu0 %v72
    %v172 = vpop.f32.mrf.mxu0
    %v173 = vadd.f32 0.0, %v172
    %174 = vmatmul.f32.gmra.mxu0 %v73
    %v175 = vpop.f32.mrf.mxu0
    %v176 = vadd.f32 0.0, %v175
    %177 = vmatmul.f32.gmra.mxu0 %v74
    %v178 = vpop.f32.mrf.mxu0
    %v179 = vadd.f32 0.0, %v178
    %180 = vmatmul.f32.gmra.mxu0 %v75
    %v181 = vpop.f32.mrf.mxu0
    %v182 = vadd.f32 0.0, %v181
    %183 = vmatmul.f32.gmra.mxu0 %v76
    %v184 = vpop.f32.mrf.mxu0
    %v185 = vadd.f32 0.0, %v184
    %186 = vmatmul.f32.gmra.mxu0 %v77
    %v187 = vpop.f32.mrf.mxu0
    %v188 = vadd.f32 0.0, %v187
    %189 = vmatmul.f32.gmra.mxu0 %v78
    %v190 = vpop.f32.mrf.mxu0
    %v191 = vadd.f32 0.0, %v190
    %192 = vmatmul.f32.gmra.mxu0 %v79
    %v193 = vpop.f32.mrf.mxu0
    %v194 = vadd.f32 0.0, %v193
    %195 = vmatmul.f32.gmra.mxu0 %v80
    %v196 = vpop.f32.mrf.mxu0
    %v197 = vadd.f32 0.0, %v196
    %198 = vmatmul.f32.gmra.mxu0 %v81
    %v199 = vpop.f32.mrf.mxu0
    %v200 = vadd.f32 0.0, %v199
    %201 = vmatmul.f32.gmra.mxu0 %v82
    %v202 = vpop.f32.mrf.mxu0
    %v203 = vadd.f32 0.0, %v202
    %204 = vmatmul.f32.gmra.mxu0 %v83
    %v205 = vpop.f32.mrf.mxu0
    %v206 = vadd.f32 0.0, %v205
    %207 = vmatmul.f32.gmra.mxu0 %v84
    %v208 = vpop.f32.mrf.mxu0
    %v209 = vadd.f32 0.0, %v208
    %210 = vdwg.mxu0
    %211 = vmatpush.xpose.msra.mxu0 %v116
    %212 = vmatpush.xpose.msra.mxu0 %v115
    %213 = vmatpush.xpose.msra.mxu0 %v114
    %214 = vmatpush.xpose.msra.mxu0 %v113
    %215 = vmatpush.xpose.msra.mxu0 %v112
    %216 = vmatpush.xpose.msra.mxu0 %v111
    %217 = vmatpush.xpose.msra.mxu0 %v110
    %218 = vmatpush.xpose.msra.mxu0 %v109
    %219 = vmatpush.xpose.msra.mxu0 %v108
    %220 = vmatpush.xpose.msra.mxu0 %v107
    %221 = vmatpush.xpose.msra.mxu0 %v106
    %222 = vmatpush.xpose.msra.mxu0 %v105
    %223 = vmatpush.xpose.msra.mxu0 %v104
    %224 = vmatpush.xpose.msra.mxu0 %v103
    %225 = vmatpush.xpose.msra.mxu0 %v102
    %226 = vmatpush.xpose.msra.mxu0 %v101
    %227 = vmatmul.f32.gmra.mxu0 %v70
    %v228 = vpop.f32.mrf.mxu0
    %v229 = vadd.f32 0.0, %v228
    %230 = vmatmul.f32.gmra.mxu0 %v71
    %v231 = vpop.f32.mrf.mxu0
    %v232 = vadd.f32 0.0, %v231
    %233 = vmatmul.f32.gmra.mxu0 %v72
    %v234 = vpop.f32.mrf.mxu0
    %v235 = vadd.f32 0.0, %v234
    %236 = vmatmul.f32.gmra.mxu0 %v73
    %v237 = vpop.f32.mrf.mxu0
    %v238 = vadd.f32 0.0, %v237
    %239 = vmatmul.f32.gmra.mxu0 %v74
    %v240 = vpop.f32.mrf.mxu0
    %v241 = vadd.f32 0.0, %v240
    %242 = vmatmul.f32.gmra.mxu0 %v75
    %v243 = vpop.f32.mrf.mxu0
    %v244 = vadd.f32 0.0, %v243
    %245 = vmatmul.f32.gmra.mxu0 %v76
    %v246 = vpop.f32.mrf.mxu0
    %v247 = vadd.f32 0.0, %v246
    %248 = vmatmul.f32.gmra.mxu0 %v77
    %v249 = vpop.f32.mrf.mxu0
    %v250 = vadd.f32 0.0, %v249
    %251 = vmatmul.f32.gmra.mxu0 %v78
    %v252 = vpop.f32.mrf.mxu0
    %v253 = vadd.f32 0.0, %v252
    %254 = vmatmul.f32.gmra.mxu0 %v79
    %v255 = vpop.f32.mrf.mxu0
    %v256 = vadd.f32 0.0, %v255
    %257 = vmatmul.f32.gmra.mxu0 %v80
    %v258 = vpop.f32.mrf.mxu0
    %v259 = vadd.f32 0.0, %v258
    %260 = vmatmul.f32.gmra.mxu0 %v81
    %v261 = vpop.f32.mrf.mxu0
    %v262 = vadd.f32 0.0, %v261
    %263 = vmatmul.f32.gmra.mxu0 %v82
    %v264 = vpop.f32.mrf.mxu0
    %v265 = vadd.f32 0.0, %v264
    %266 = vmatmul.f32.gmra.mxu0 %v83
    %v267 = vpop.f32.mrf.mxu0
    %v268 = vadd.f32 0.0, %v267
    %269 = vmatmul.f32.gmra.mxu0 %v84
    %v270 = vpop.f32.mrf.mxu0
    %v271 = vadd.f32 0.0, %v270
    %272 = vdwg.mxu0
    %273 = vmatpush.xpose.msra.mxu0 %v132
    %274 = vmatpush.xpose.msra.mxu0 %v131
    %275 = vmatpush.xpose.msra.mxu0 %v130
    %276 = vmatpush.xpose.msra.mxu0 %v129
    %277 = vmatpush.xpose.msra.mxu0 %v128
    %278 = vmatpush.xpose.msra.mxu0 %v127
    %279 = vmatpush.xpose.msra.mxu0 %v126
    %280 = vmatpush.xpose.msra.mxu0 %v125
    %281 = vmatpush.xpose.msra.mxu0 %v124
    %282 = vmatpush.xpose.msra.mxu0 %v123
    %283 = vmatpush.xpose.msra.mxu0 %v122
    %284 = vmatpush.xpose.msra.mxu0 %v121
    %285 = vmatpush.xpose.msra.mxu0 %v120
    %286 = vmatpush.xpose.msra.mxu0 %v119
    %287 = vmatpush.xpose.msra.mxu0 %v118
    %288 = vmatpush.xpose.msra.mxu0 %v117
    %289 = vmatmul.f32.gmra.mxu0 %v70
    %v290 = vpop.f32.mrf.mxu0
    %v291 = vadd.f32 0.0, %v290
    %292 = vmatmul.f32.gmra.mxu0 %v71
    %v293 = vpop.f32.mrf.mxu0
    %v294 = vadd.f32 0.0, %v293
    %295 = vmatmul.f32.gmra.mxu0 %v72
    %v296 = vpop.f32.mrf.mxu0
    %v297 = vadd.f32 0.0, %v296
    %298 = vmatmul.f32.gmra.mxu0 %v73
    %v299 = vpop.f32.mrf.mxu0
    %v300 = vadd.f32 0.0, %v299
    %301 = vmatmul.f32.gmra.mxu0 %v74
    %v302 = vpop.f32.mrf.mxu0
    %v303 = vadd.f32 0.0, %v302
    %304 = vmatmul.f32.gmra.mxu0 %v75
    %v305 = vpop.f32.mrf.mxu0
    %v306 = vadd.f32 0.0, %v305
    %307 = vmatmul.f32.gmra.mxu0 %v76
    %v308 = vpop.f32.mrf.mxu0
    %v309 = vadd.f32 0.0, %v308
    %310 = vmatmul.f32.gmra.mxu0 %v77
    %v311 = vpop.f32.mrf.mxu0
    %v312 = vadd.f32 0.0, %v311
    %313 = vmatmul.f32.gmra.mxu0 %v78
    %v314 = vpop.f32.mrf.mxu0
    %v315 = vadd.f32 0.0, %v314
    %316 = vmatmul.f32.gmra.mxu0 %v79
    %v317 = vpop.f32.mrf.mxu0
    %v318 = vadd.f32 0.0, %v317
    %319 = vmatmul.f32.gmra.mxu0 %v80
    %v320 = vpop.f32.mrf.mxu0
    %v321 = vadd.f32 0.0, %v320
    %322 = vmatmul.f32.gmra.mxu0 %v81
    %v323 = vpop.f32.mrf.mxu0
    %v324 = vadd.f32 0.0, %v323
    %325 = vmatmul.f32.gmra.mxu0 %v82
    %v326 = vpop.f32.mrf.mxu0
    %v327 = vadd.f32 0.0, %v326
    %328 = vmatmul.f32.gmra.mxu0 %v83
    %v329 = vpop.f32.mrf.mxu0
    %v330 = vadd.f32 0.0, %v329
    %331 = vmatmul.f32.gmra.mxu0 %v84
    %v332 = vpop.f32.mrf.mxu0
    %v333 = vadd.f32 0.0, %v332
    %334 = vdwg.mxu0
    %335 = vmatpush.xpose.msra.mxu0 %v148
    %336 = vmatpush.xpose.msra.mxu0 %v147
    %337 = vmatpush.xpose.msra.mxu0 %v146
    %338 = vmatpush.xpose.msra.mxu0 %v145
    %339 = vmatpush.xpose.msra.mxu0 %v144
    %340 = vmatpush.xpose.msra.mxu0 %v143
    %341 = vmatpush.xpose.msra.mxu0 %v142
    %342 = vmatpush.xpose.msra.mxu0 %v141
    %343 = vmatpush.xpose.msra.mxu0 %v140
    %344 = vmatpush.xpose.msra.mxu0 %v139
    %345 = vmatpush.xpose.msra.mxu0 %v138
    %346 = vmatpush.xpose.msra.mxu0 %v137
    %347 = vmatpush.xpose.msra.mxu0 %v136
    %348 = vmatpush.xpose.msra.mxu0 %v135
    %349 = vmatpush.xpose.msra.mxu0 %v134
    %350 = vmatpush.xpose.msra.mxu0 %v133
    %351 = vmatmul.f32.gmra.mxu0 %v70
    %v352 = vpop.f32.mrf.mxu0
    %v353 = vadd.f32 0.0, %v352
    %354 = vmatmul.f32.gmra.mxu0 %v71
    %v355 = vpop.f32.mrf.mxu0
    %v356 = vadd.f32 0.0, %v355
    %357 = vmatmul.f32.gmra.mxu0 %v72
    %v358 = vpop.f32.mrf.mxu0
    %v359 = vadd.f32 0.0, %v358
    %360 = vmatmul.f32.gmra.mxu0 %v73
    %v361 = vpop.f32.mrf.mxu0
    %v362 = vadd.f32 0.0, %v361
    %363 = vmatmul.f32.gmra.mxu0 %v74
    %v364 = vpop.f32.mrf.mxu0
    %v365 = vadd.f32 0.0, %v364
    %366 = vmatmul.f32.gmra.mxu0 %v75
    %v367 = vpop.f32.mrf.mxu0
    %v368 = vadd.f32 0.0, %v367
    %369 = vmatmul.f32.gmra.mxu0 %v76
    %v370 = vpop.f32.mrf.mxu0
    %v371 = vadd.f32 0.0, %v370
    %372 = vmatmul.f32.gmra.mxu0 %v77
    %v373 = vpop.f32.mrf.mxu0
    %v374 = vadd.f32 0.0, %v373
    %375 = vmatmul.f32.gmra.mxu0 %v78
    %v376 = vpop.f32.mrf.mxu0
    %v377 = vadd.f32 0.0, %v376
    %378 = vmatmul.f32.gmra.mxu0 %v79
    %v379 = vpop.f32.mrf.mxu0
    %v380 = vadd.f32 0.0, %v379
    %381 = vmatmul.f32.gmra.mxu0 %v80
    %v382 = vpop.f32.mrf.mxu0
    %v383 = vadd.f32 0.0, %v382
    %384 = vmatmul.f32.gmra.mxu0 %v81
    %v385 = vpop.f32.mrf.mxu0
    %v386 = vadd.f32 0.0, %v385
    %387 = vmatmul.f32.gmra.mxu0 %v82
    %v388 = vpop.f32.mrf.mxu0
    %v389 = vadd.f32 0.0, %v388
    %390 = vmatmul.f32.gmra.mxu0 %v83
    %v391 = vpop.f32.mrf.mxu0
    %v392 = vadd.f32 0.0, %v391
    %393 = vmatmul.f32.gmra.mxu0 %v84
    %v394 = vpop.f32.mrf.mxu0
    %v395 = vadd.f32 0.0, %v394
    %396 = vdwg.mxu0
    %v397 = vld [vmem:[%s1] sm:$0xff]
    %v398 = vld [vmem:[%s1 + $0x8] sm:$0xff]
    %v399 = vld [vmem:[%s1 + $0x10] sm:$0xff]
    %v400 = vld [vmem:[%s1 + $0x18] sm:$0xff]
    %v401 = vld [vmem:[%s1 + $0x20] sm:$0xff]
    %v402 = vld [vmem:[%s1 + $0x28] sm:$0xff]
    %v403 = vld [vmem:[%s1 + $0x30] sm:$0xff]
    %v404 = vld [vmem:[#allocation3] sm:$0xff]
    %v405 = vld [vmem:[#allocation3 + $0x8] sm:$0xff]
    %v406 = vld [vmem:[#allocation3 + $0x10] sm:$0xff]
    %v407 = vld [vmem:[#allocation3 + $0x18] sm:$0xff]
    %v408 = vld [vmem:[#allocation3 + $0x20] sm:$0xff]
    %v409 = vld [vmem:[#allocation3 + $0x28] sm:$0xff]
    %v410 = vld [vmem:[#allocation3 + $0x30] sm:$0xff]
    %v411 = vld [vmem:[#allocation3 + $0x38] sm:$0xff]
    %v412 = vld [vmem:[#allocation3 + $0x40] sm:$0xff]
    %v413 = vld [vmem:[#allocation3 + $0x48] sm:$0xff]
    %v414 = vld [vmem:[#allocation3 + $0x50] sm:$0xff]
    %v415 = vld [vmem:[#allocation3 + $0x58] sm:$0xff]
    %v416 = vld [vmem:[#allocation3 + $0x60] sm:$0xff]
    %v417 = vld [vmem:[#allocation3 + $0x68] sm:$0xff]
    %v418 = vld [vmem:[#allocation3 + $0x70] sm:$0xff]
    %v419 = vld [vmem:[#allocation3 + $0x78] sm:$0xff]
    %v420 = vld [vmem:[#allocation3 + $0x80] sm:$0xff]
    %v421 = vld [vmem:[#allocation3 + $0x88] sm:$0xff]
    %v422 = vld [vmem:[#allocation3 + $0x90] sm:$0xff]
    %v423 = vld [vmem:[#allocation3 + $0x98] sm:$0xff]
    %v424 = vld [vmem:[#allocation3 + $0xa0] sm:$0xff]
    %v425 = vld [vmem:[#allocation3 + $0xa8] sm:$0xff]
    %v426 = vld [vmem:[#allocation3 + $0xb0] sm:$0xff]
    %v427 = vld [vmem:[#allocation3 + $0xb8] sm:$0xff]
    %v428 = vld [vmem:[#allocation3 + $0xc0] sm:$0xff]
    %v429 = vld [vmem:[#allocation3 + $0xc8] sm:$0xff]
    %v430 = vld [vmem:[#allocation3 + $0xd0] sm:$0xff]
    %v431 = vld [vmem:[#allocation3 + $0xd8] sm:$0xff]
    %v432 = vld [vmem:[#allocation3 + $0xe0] sm:$0xff]
    %v433 = vld [vmem:[#allocation3 + $0xe8] sm:$0xff]
    %v434 = vld [vmem:[#allocation3 + $0xf0] sm:$0xff]
    %v435 = vld [vmem:[#allocation3 + $0xf8] sm:$0xff]
    %v436 = vld [vmem:[#allocation3 + $0x100] sm:$0xff]
    %v437 = vld [vmem:[#allocation3 + $0x108] sm:$0xff]
    %v438 = vld [vmem:[#allocation3 + $0x110] sm:$0xff]
    %v439 = vld [vmem:[#allocation3 + $0x118] sm:$0xff]
    %v440 = vld [vmem:[#allocation3 + $0x120] sm:$0xff]
    %v441 = vld [vmem:[#allocation3 + $0x128] sm:$0xff]
    %v442 = vld [vmem:[#allocation3 + $0x130] sm:$0xff]
    %v443 = vld [vmem:[#allocation3 + $0x138] sm:$0xff]
    %v444 = vld [vmem:[#allocation3 + $0x140] sm:$0xff]
    %v445 = vld [vmem:[#allocation3 + $0x148] sm:$0xff]
    %v446 = vld [vmem:[#allocation3 + $0x150] sm:$0xff]
    %v447 = vld [vmem:[#allocation3 + $0x158] sm:$0xff]
    %v448 = vld [vmem:[#allocation3 + $0x160] sm:$0xff]
    %v449 = vld [vmem:[#allocation3 + $0x168] sm:$0xff]
    %v450 = vld [vmem:[#allocation3 + $0x170] sm:$0xff]
    %v451 = vld [vmem:[#allocation3 + $0x178] sm:$0xff]
    %v452 = vld [vmem:[#allocation3 + $0x180] sm:$0xff]
    %v453 = vld [vmem:[#allocation3 + $0x188] sm:$0xff]
    %v454 = vld [vmem:[#allocation3 + $0x190] sm:$0xff]
    %v455 = vld [vmem:[#allocation3 + $0x198] sm:$0xff]
    %v456 = vld [vmem:[#allocation3 + $0x1a0] sm:$0xff]
    %v457 = vld [vmem:[#allocation3 + $0x1a8] sm:$0xff]
    %v458 = vld [vmem:[#allocation3 + $0x1b0] sm:$0xff]
    %v459 = vld [vmem:[#allocation3 + $0x1b8] sm:$0xff]
    %v460 = vld [vmem:[#allocation3 + $0x1c0] sm:$0xff]
    %v461 = vld [vmem:[#allocation3 + $0x1c8] sm:$0xff]
    %v462 = vld [vmem:[#allocation3 + $0x1d0] sm:$0xff]
    %v463 = vld [vmem:[#allocation3 + $0x1d8] sm:$0xff]
    %v464 = vld [vmem:[#allocation3 + $0x1e0] sm:$0xff]
    %v465 = vld [vmem:[#allocation3 + $0x1e8] sm:$0xff]
    %v466 = vld [vmem:[#allocation3 + $0x1f0] sm:$0xff]
    %v467 = vld [vmem:[#allocation3 + $0x1f8] sm:$0xff]
    %468 = vmatpush.xpose.msra.mxu0 %v419
    %469 = vmatpush.xpose.msra.mxu0 %v418
    %470 = vmatpush.xpose.msra.mxu0 %v417
    %471 = vmatpush.xpose.msra.mxu0 %v416
    %472 = vmatpush.xpose.msra.mxu0 %v415
    %473 = vmatpush.xpose.msra.mxu0 %v414
    %474 = vmatpush.xpose.msra.mxu0 %v413
    %475 = vmatpush.xpose.msra.mxu0 %v412
    %476 = vmatpush.xpose.msra.mxu0 %v411
    %477 = vmatpush.xpose.msra.mxu0 %v410
    %478 = vmatpush.xpose.msra.mxu0 %v409
    %479 = vmatpush.xpose.msra.mxu0 %v408
    %480 = vmatpush.xpose.msra.mxu0 %v407
    %481 = vmatpush.xpose.msra.mxu0 %v406
    %482 = vmatpush.xpose.msra.mxu0 %v405
    %483 = vmatpush.xpose.msra.mxu0 %v404
    %484 = vmatmul.f32.gmra.mxu0 %v397
    %v485 = vpop.f32.mrf.mxu0
    %v486 = vadd.f32 0.0, %v485
    %487 = vmatmul.f32.gmra.mxu0 %v398
    %v488 = vpop.f32.mrf.mxu0
    %v489 = vadd.f32 0.0, %v488
    %490 = vmatmul.f32.gmra.mxu0 %v399
    %v491 = vpop.f32.mrf.mxu0
    %v492 = vadd.f32 0.0, %v491
    %493 = vmatmul.f32.gmra.mxu0 %v400
    %v494 = vpop.f32.mrf.mxu0
    %v495 = vadd.f32 0.0, %v494
    %496 = vmatmul.f32.gmra.mxu0 %v401
    %v497 = vpop.f32.mrf.mxu0
    %v498 = vadd.f32 0.0, %v497
    %499 = vmatmul.f32.gmra.mxu0 %v402
    %v500 = vpop.f32.mrf.mxu0
    %v501 = vadd.f32 0.0, %v500
    %502 = vmatmul.f32.gmra.mxu0 %v403
    %v503 = vpop.f32.mrf.mxu0
    %v504 = vadd.f32 0.0, %v503
    %505 = vdwg.mxu0
    %506 = vmatpush.xpose.msra.mxu0 %v435
    %507 = vmatpush.xpose.msra.mxu0 %v434
    %508 = vmatpush.xpose.msra.mxu0 %v433
    %509 = vmatpush.xpose.msra.mxu0 %v432
    %510 = vmatpush.xpose.msra.mxu0 %v431
    %511 = vmatpush.xpose.msra.mxu0 %v430
    %512 = vmatpush.xpose.msra.mxu0 %v429
    %513 = vmatpush.xpose.msra.mxu0 %v428
    %514 = vmatpush.xpose.msra.mxu0 %v427
    %515 = vmatpush.xpose.msra.mxu0 %v426
    %516 = vmatpush.xpose.msra.mxu0 %v425
    %517 = vmatpush.xpose.msra.mxu0 %v424
    %518 = vmatpush.xpose.msra.mxu0 %v423
    %519 = vmatpush.xpose.msra.mxu0 %v422
    %520 = vmatpush.xpose.msra.mxu0 %v421
    %521 = vmatpush.xpose.msra.mxu0 %v420
    %522 = vmatmul.f32.gmra.mxu0 %v397
    %v523 = vpop.f32.mrf.mxu0
    %v524 = vadd.f32 0.0, %v523
    %525 = vmatmul.f32.gmra.mxu0 %v398
    %v526 = vpop.f32.mrf.mxu0
    %v527 = vadd.f32 0.0, %v526
    %528 = vmatmul.f32.gmra.mxu0 %v399
    %v529 = vpop.f32.mrf.mxu0
    %v530 = vadd.f32 0.0, %v529
    %531 = vmatmul.f32.gmra.mxu0 %v400
    %v532 = vpop.f32.mrf.mxu0
    %v533 = vadd.f32 0.0, %v532
    %534 = vmatmul.f32.gmra.mxu0 %v401
    %v535 = vpop.f32.mrf.mxu0
    %v536 = vadd.f32 0.0, %v535
    %537 = vmatmul.f32.gmra.mxu0 %v402
    %v538 = vpop.f32.mrf.mxu0
    %v539 = vadd.f32 0.0, %v538
    %540 = vmatmul.f32.gmra.mxu0 %v403
    %v541 = vpop.f32.mrf.mxu0
    %v542 = vadd.f32 0.0, %v541
    %543 = vdwg.mxu0
    %544 = vmatpush.xpose.msra.mxu0 %v451
    %545 = vmatpush.xpose.msra.mxu0 %v450
    %546 = vmatpush.xpose.msra.mxu0 %v449
    %547 = vmatpush.xpose.msra.mxu0 %v448
    %548 = vmatpush.xpose.msra.mxu0 %v447
    %549 = vmatpush.xpose.msra.mxu0 %v446
    %550 = vmatpush.xpose.msra.mxu0 %v445
    %551 = vmatpush.xpose.msra.mxu0 %v444
    %552 = vmatpush.xpose.msra.mxu0 %v443
    %553 = vmatpush.xpose.msra.mxu0 %v442
    %554 = vmatpush.xpose.msra.mxu0 %v441
    %555 = vmatpush.xpose.msra.mxu0 %v440
    %556 = vmatpush.xpose.msra.mxu0 %v439
    %557 = vmatpush.xpose.msra.mxu0 %v438
    %558 = vmatpush.xpose.msra.mxu0 %v437
    %559 = vmatpush.xpose.msra.mxu0 %v436
    %560 = vmatmul.f32.gmra.mxu0 %v397
    %v561 = vpop.f32.mrf.mxu0
    %v562 = vadd.f32 0.0, %v561
    %563 = vmatmul.f32.gmra.mxu0 %v398
    %v564 = vpop.f32.mrf.mxu0
    %v565 = vadd.f32 0.0, %v564
    %566 = vmatmul.f32.gmra.mxu0 %v399
    %v567 = vpop.f32.mrf.mxu0
    %v568 = vadd.f32 0.0, %v567
    %569 = vmatmul.f32.gmra.mxu0 %v400
    %v570 = vpop.f32.mrf.mxu0
    %v571 = vadd.f32 0.0, %v570
    %572 = vmatmul.f32.gmra.mxu0 %v401
    %v573 = vpop.f32.mrf.mxu0
    %v574 = vadd.f32 0.0, %v573
    %575 = vmatmul.f32.gmra.mxu0 %v402
    %v576 = vpop.f32.mrf.mxu0
    %v577 = vadd.f32 0.0, %v576
    %578 = vmatmul.f32.gmra.mxu0 %v403
    %v579 = vpop.f32.mrf.mxu0
    %v580 = vadd.f32 0.0, %v579
    %581 = vdwg.mxu0
    %582 = vmatpush.xpose.msra.mxu0 %v467
    %583 = vmatpush.xpose.msra.mxu0 %v466
    %584 = vmatpush.xpose.msra.mxu0 %v465
    %585 = vmatpush.xpose.msra.mxu0 %v464
    %586 = vmatpush.xpose.msra.mxu0 %v463
    %587 = vmatpush.xpose.msra.mxu0 %v462
    %588 = vmatpush.xpose.msra.mxu0 %v461
    %589 = vmatpush.xpose.msra.mxu0 %v460
    %590 = vmatpush.xpose.msra.mxu0 %v459
    %591 = vmatpush.xpose.msra.mxu0 %v458
    %592 = vmatpush.xpose.msra.mxu0 %v457
    %593 = vmatpush.xpose.msra.mxu0 %v456
    %594 = vmatpush.xpose.msra.mxu0 %v455
    %595 = vmatpush.xpose.msra.mxu0 %v454
    %596 = vmatpush.xpose.msra.mxu0 %v453
    %597 = vmatpush.xpose.msra.mxu0 %v452
    %598 = vmatmul.f32.gmra.mxu0 %v397
    %v599 = vpop.f32.mrf.mxu0
    %v600 = vadd.f32 0.0, %v599
    %601 = vmatmul.f32.gmra.mxu0 %v398
    %v602 = vpop.f32.mrf.mxu0
    %v603 = vadd.f32 0.0, %v602
    %604 = vmatmul.f32.gmra.mxu0 %v399
    %v605 = vpop.f32.mrf.mxu0
    %v606 = vadd.f32 0.0, %v605
    %607 = vmatmul.f32.gmra.mxu0 %v400
    %v608 = vpop.f32.mrf.mxu0
    %v609 = vadd.f32 0.0, %v608
    %610 = vmatmul.f32.gmra.mxu0 %v401
    %v611 = vpop.f32.mrf.mxu0
    %v612 = vadd.f32 0.0, %v611
    %613 = vmatmul.f32.gmra.mxu0 %v402
    %v614 = vpop.f32.mrf.mxu0
    %v615 = vadd.f32 0.0, %v614
    %616 = vmatmul.f32.gmra.mxu0 %v403
    %v617 = vpop.f32.mrf.mxu0
    %v618 = vadd.f32 0.0, %v617
    %619 = vdwg.mxu0
    %620 = vst [vmem:[#allocation2] sm:$0xff] %v167
    %621 = vst [vmem:[#allocation2 + $0x8] sm:$0xff] %v229
    %622 = vst [vmem:[#allocation2 + $0x10] sm:$0xff] %v291
    %623 = vst [vmem:[#allocation2 + $0x18] sm:$0xff] %v353
    %624 = vst [vmem:[#allocation2 + $0x20] sm:$0xff] %v170
    %625 = vst [vmem:[#allocation2 + $0x28] sm:$0xff] %v232
    %626 = vst [vmem:[#allocation2 + $0x30] sm:$0xff] %v294
    %627 = vst [vmem:[#allocation2 + $0x38] sm:$0xff] %v356
    %628 = vst [vmem:[#allocation2 + $0x40] sm:$0xff] %v173
    %629 = vst [vmem:[#allocation2 + $0x48] sm:$0xff] %v235
    %630 = vst [vmem:[#allocation2 + $0x50] sm:$0xff] %v297
    %631 = vst [vmem:[#allocation2 + $0x58] sm:$0xff] %v359
    %632 = vst [vmem:[#allocation2 + $0x60] sm:$0xff] %v176
    %633 = vst [vmem:[#allocation2 + $0x68] sm:$0xff] %v238
    %634 = vst [vmem:[#allocation2 + $0x70] sm:$0xff] %v300
    %635 = vst [vmem:[#allocation2 + $0x78] sm:$0xff] %v362
    %636 = vst [vmem:[#allocation2 + $0x80] sm:$0xff] %v179
    %637 = vst [vmem:[#allocation2 + $0x88] sm:$0xff] %v241
    %638 = vst [vmem:[#allocation2 + $0x90] sm:$0xff] %v303
    %639 = vst [vmem:[#allocation2 + $0x98] sm:$0xff] %v365
    %640 = vst [vmem:[#allocation2 + $0xa0] sm:$0xff] %v182
    %641 = vst [vmem:[#allocation2 + $0xa8] sm:$0xff] %v244
    %642 = vst [vmem:[#allocation2 + $0xb0] sm:$0xff] %v306
    %643 = vst [vmem:[#allocation2 + $0xb8] sm:$0xff] %v368
    %644 = vst [vmem:[#allocation2 + $0xc0] sm:$0xff] %v185
    %645 = vst [vmem:[#allocation2 + $0xc8] sm:$0xff] %v247
    %646 = vst [vmem:[#allocation2 + $0xd0] sm:$0xff] %v309
    %647 = vst [vmem:[#allocation2 + $0xd8] sm:$0xff] %v371
    %648 = vst [vmem:[#allocation2 + $0xe0] sm:$0xff] %v188
    %649 = vst [vmem:[#allocation2 + $0xe8] sm:$0xff] %v250
    %650 = vst [vmem:[#allocation2 + $0xf0] sm:$0xff] %v312
    %651 = vst [vmem:[#allocation2 + $0xf8] sm:$0xff] %v374
    %v652 = vadd.f32 %v191, %v486
    %v653 = vadd.f32 %v253, %v524
    %v654 = vadd.f32 %v315, %v562
    %v655 = vadd.f32 %v377, %v600
    %v656 = vadd.f32 %v194, %v489
    %v657 = vadd.f32 %v256, %v527
    %v658 = vadd.f32 %v318, %v565
    %v659 = vadd.f32 %v380, %v603
    %v660 = vadd.f32 %v197, %v492
    %v661 = vadd.f32 %v259, %v530
    %v662 = vadd.f32 %v321, %v568
    %v663 = vadd.f32 %v383, %v606
    %v664 = vadd.f32 %v200, %v495
    %v665 = vadd.f32 %v262, %v533
    %v666 = vadd.f32 %v324, %v571
    %v667 = vadd.f32 %v386, %v609
    %v668 = vadd.f32 %v203, %v498
    %v669 = vadd.f32 %v265, %v536
    %v670 = vadd.f32 %v327, %v574
    %v671 = vadd.f32 %v389, %v612
    %v672 = vadd.f32 %v206, %v501
    %v673 = vadd.f32 %v268, %v539
    %v674 = vadd.f32 %v330, %v577
    %v675 = vadd.f32 %v392, %v615
    %v676 = vadd.f32 %v209, %v504
    %v677 = vadd.f32 %v271, %v542
    %v678 = vadd.f32 %v333, %v580
    %v679 = vadd.f32 %v395, %v618
    %s680 = scalar_lea.vmem [#allocation2], 256
    %681 = vst [vmem:[%s680] sm:$0xff] %v652
    %682 = vst [vmem:[%s680 + $0x8] sm:$0xff] %v653
    %683 = vst [vmem:[%s680 + $0x10] sm:$0xff] %v654
    %684 = vst [vmem:[%s680 + $0x18] sm:$0xff] %v655
    %685 = vst [vmem:[%s680 + $0x20] sm:$0xff] %v656
    %686 = vst [vmem:[%s680 + $0x28] sm:$0xff] %v657
    %687 = vst [vmem:[%s680 + $0x30] sm:$0xff] %v658
    %688 = vst [vmem:[%s680 + $0x38] sm:$0xff] %v659
    %689 = vst [vmem:[%s680 + $0x40] sm:$0xff] %v660
    %690 = vst [vmem:[%s680 + $0x48] sm:$0xff] %v661
    %691 = vst [vmem:[%s680 + $0x50] sm:$0xff] %v662
    %692 = vst [vmem:[%s680 + $0x58] sm:$0xff] %v663
    %693 = vst [vmem:[%s680 + $0x60] sm:$0xff] %v664
    %694 = vst [vmem:[%s680 + $0x68] sm:$0xff] %v665
    %695 = vst [vmem:[%s680 + $0x70] sm:$0xff] %v666
    %696 = vst [vmem:[%s680 + $0x78] sm:$0xff] %v667
    %697 = vst [vmem:[%s680 + $0x80] sm:$0xff] %v668
    %698 = vst [vmem:[%s680 + $0x88] sm:$0xff] %v669
    %699 = vst [vmem:[%s680 + $0x90] sm:$0xff] %v670
    %700 = vst [vmem:[%s680 + $0x98] sm:$0xff] %v671
    %701 = vst [vmem:[%s680 + $0xa0] sm:$0xff] %v672
    %702 = vst [vmem:[%s680 + $0xa8] sm:$0xff] %v673
    %703 = vst [vmem:[%s680 + $0xb0] sm:$0xff] %v674
    %704 = vst [vmem:[%s680 + $0xb8] sm:$0xff] %v675
    %705 = vst [vmem:[%s680 + $0xc0] sm:$0xff] %v676
    %706 = vst [vmem:[%s680 + $0xc8] sm:$0xff] %v677
    %707 = vst [vmem:[%s680 + $0xd0] sm:$0xff] %v678
    %708 = vst [vmem:[%s680 + $0xd8] sm:$0xff] %v679
    %v709 = vld [vmem:[#allocation7] sm:$0xff]
    %v710 = vld [vmem:[#allocation7 + $0x8] sm:$0xff]
    %v711 = vld [vmem:[#allocation7 + $0x10] sm:$0xff]
    %v712 = vld [vmem:[#allocation7 + $0x18] sm:$0xff]
    %v713 = vld [vmem:[#allocation7 + $0x20] sm:$0xff]
    %v714 = vld [vmem:[#allocation7 + $0x28] sm:$0xff]
    %v715 = vld [vmem:[#allocation7 + $0x30] sm:$0xff]
    %v716 = vld [vmem:[#allocation7 + $0x38] sm:$0xff]
    %v717 = vld [vmem:[#allocation7 + $0x40] sm:$0xff]
    %v718 = vld [vmem:[#allocation7 + $0x48] sm:$0xff]
    %v719 = vld [vmem:[#allocation7 + $0x50] sm:$0xff]
    %v720 = vld [vmem:[#allocation7 + $0x58] sm:$0xff]
    %v721 = vld [vmem:[#allocation7 + $0x60] sm:$0xff]
    %v722 = vld [vmem:[#allocation7 + $0x68] sm:$0xff]
    %v723 = vld [vmem:[#allocation7 + $0x70] sm:$0xff]
    %v724 = vld [vmem:[#allocation7 + $0x78] sm:$0xff]
    %v725 = vld [vmem:[#allocation7 + $0x80] sm:$0xff]
    %v726 = vld [vmem:[#allocation7 + $0x88] sm:$0xff]
    %v727 = vld [vmem:[#allocation7 + $0x90] sm:$0xff]
    %v728 = vld [vmem:[#allocation7 + $0x98] sm:$0xff]
    %v729 = vld [vmem:[#allocation7 + $0xa0] sm:$0xff]
    %v730 = vld [vmem:[#allocation7 + $0xa8] sm:$0xff]
    %v731 = vld [vmem:[#allocation7 + $0xb0] sm:$0xff]
    %v732 = vld [vmem:[#allocation7 + $0xb8] sm:$0xff]
    %v733 = vld [vmem:[#allocation7 + $0xc0] sm:$0xff]
    %v734 = vld [vmem:[#allocation7 + $0xc8] sm:$0xff]
    %v735 = vld [vmem:[#allocation7 + $0xd0] sm:$0xff]
    %v736 = vld [vmem:[#allocation7 + $0xd8] sm:$0xff]
    %v737 = vld [vmem:[#allocation7 + $0xe0] sm:$0xff]
    %v738 = vld [vmem:[#allocation7 + $0xe8] sm:$0xff]
    %v739 = vld [vmem:[#allocation7 + $0xf0] sm:$0xff]
    %v740 = vld [vmem:[#allocation7 + $0xf8] sm:$0xff]
    %v741 = vld [vmem:[#allocation7 + $0x100] sm:$0xff]
    %v742 = vld [vmem:[#allocation7 + $0x108] sm:$0xff]
    %v743 = vld [vmem:[#allocation7 + $0x110] sm:$0xff]
    %v744 = vld [vmem:[#allocation7 + $0x118] sm:$0xff]
    %v745 = vld [vmem:[#allocation7 + $0x120] sm:$0xff]
    %v746 = vld [vmem:[#allocation7 + $0x128] sm:$0xff]
    %v747 = vld [vmem:[#allocation7 + $0x130] sm:$0xff]
    %v748 = vld [vmem:[#allocation7 + $0x138] sm:$0xff]
    %v749 = vld [vmem:[#allocation7 + $0x140] sm:$0xff]
    %v750 = vld [vmem:[#allocation7 + $0x148] sm:$0xff]
    %v751 = vld [vmem:[#allocation7 + $0x150] sm:$0xff]
    %v752 = vld [vmem:[#allocation7 + $0x158] sm:$0xff]
    %v753 = vld [vmem:[#allocation7 + $0x160] sm:$0xff]
    %v754 = vld [vmem:[#allocation7 + $0x168] sm:$0xff]
    %v755 = vld [vmem:[#allocation7 + $0x170] sm:$0xff]
    %v756 = vld [vmem:[#allocation7 + $0x178] sm:$0xff]
    %v757 = vld [vmem:[#allocation7 + $0x180] sm:$0xff]
    %v758 = vld [vmem:[#allocation7 + $0x188] sm:$0xff]
    %v759 = vld [vmem:[#allocation7 + $0x190] sm:$0xff]
    %v760 = vld [vmem:[#allocation7 + $0x198] sm:$0xff]
    %v761 = vld [vmem:[#allocation7 + $0x1a0] sm:$0xff]
    %v762 = vld [vmem:[#allocation7 + $0x1a8] sm:$0xff]
    %v763 = vld [vmem:[#allocation7 + $0x1b0] sm:$0xff]
    %v764 = vld [vmem:[#allocation7 + $0x1b8] sm:$0xff]
    %v765 = vld [vmem:[#allocation7 + $0x1c0] sm:$0xff]
    %v766 = vld [vmem:[#allocation7 + $0x1c8] sm:$0xff]
    %v767 = vld [vmem:[#allocation7 + $0x1d0] sm:$0xff]
    %v768 = vld [vmem:[#allocation7 + $0x1d8] sm:$0xff]
    %v769 = vld [vmem:[#allocation7 + $0x1e0] sm:$0xff]
    %v770 = vld [vmem:[#allocation7 + $0x1e8] sm:$0xff]
    %v771 = vld [vmem:[#allocation7 + $0x1f0] sm:$0xff]
    %v772 = vld [vmem:[#allocation7 + $0x1f8] sm:$0xff]
    %v773 = vld [vmem:[%s5] sm:$0xf]
    %v775 = vperm.slane %v773, 0
    %v776 = vperm.slane %v773, 1
    %v777 = vperm.slane %v773, 2
    %v778 = vperm.slane %v773, 3
    %v783 = vld [vmem:[#allocation2] sm:$0xff]
    %v784 = vld [vmem:[#allocation2 + $0x8] sm:$0xff]
    %v785 = vld [vmem:[#allocation2 + $0x10] sm:$0xff]
    %v786 = vld [vmem:[#allocation2 + $0x18] sm:$0xff]
    %787 = vmatpush.xpose.msra.mxu0 %v724
    %788 = vmatpush.xpose.msra.mxu0 %v723
    %789 = vmatpush.xpose.msra.mxu0 %v722
    %790 = vmatpush.xpose.msra.mxu0 %v721
    %791 = vmatpush.xpose.msra.mxu0 %v720
    %792 = vmatpush.xpose.msra.mxu0 %v719
    %793 = vmatpush.xpose.msra.mxu0 %v718
    %794 = vmatpush.xpose.msra.mxu0 %v717
    %795 = vmatpush.xpose.msra.mxu0 %v716
    %796 = vmatpush.xpose.msra.mxu0 %v715
    %797 = vmatpush.xpose.msra.mxu0 %v714
    %798 = vmatpush.xpose.msra.mxu0 %v713
    %799 = vmatpush.xpose.msra.mxu0 %v712
    %800 = vmatpush.xpose.msra.mxu0 %v711
    %801 = vmatpush.xpose.msra.mxu0 %v710
    %802 = vmatpush.xpose.msra.mxu0 %v709
    %803 = vmatmul.f32.gmra.mxu0 0.0
    %v804 = vpop.f32.mrf.mxu0
    %v805 = vadd.f32 %v775, %v804
    %806 = vdwg.mxu0
    %807 = vmatpush.xpose.msra.mxu0 %v740
    %808 = vmatpush.xpose.msra.mxu0 %v739
    %809 = vmatpush.xpose.msra.mxu0 %v738
    %810 = vmatpush.xpose.msra.mxu0 %v737
    %811 = vmatpush.xpose.msra.mxu0 %v736
    %812 = vmatpush.xpose.msra.mxu0 %v735
    %813 = vmatpush.xpose.msra.mxu0 %v734
    %814 = vmatpush.xpose.msra.mxu0 %v733
    %815 = vmatpush.xpose.msra.mxu0 %v732
    %816 = vmatpush.xpose.msra.mxu0 %v731
    %817 = vmatpush.xpose.msra.mxu0 %v730
    %818 = vmatpush.xpose.msra.mxu0 %v729
    %819 = vmatpush.xpose.msra.mxu0 %v728
    %820 = vmatpush.xpose.msra.mxu0 %v727
    %821 = vmatpush.xpose.msra.mxu0 %v726
    %822 = vmatpush.xpose.msra.mxu0 %v725
    %823 = vmatmul.f32.gmra.mxu0 0.0
    %v824 = vpop.f32.mrf.mxu0
    %v825 = vadd.f32 %v776, %v824
    %826 = vdwg.mxu0
    %827 = vmatpush.xpose.msra.mxu0 %v756
    %828 = vmatpush.xpose.msra.mxu0 %v755
    %829 = vmatpush.xpose.msra.mxu0 %v754
    %830 = vmatpush.xpose.msra.mxu0 %v753
    %831 = vmatpush.xpose.msra.mxu0 %v752
    %832 = vmatpush.xpose.msra.mxu0 %v751
    %833 = vmatpush.xpose.msra.mxu0 %v750
    %834 = vmatpush.xpose.msra.mxu0 %v749
    %835 = vmatpush.xpose.msra.mxu0 %v748
    %836 = vmatpush.xpose.msra.mxu0 %v747
    %837 = vmatpush.xpose.msra.mxu0 %v746
    %838 = vmatpush.xpose.msra.mxu0 %v745
    %839 = vmatpush.xpose.msra.mxu0 %v744
    %840 = vmatpush.xpose.msra.mxu0 %v743
    %841 = vmatpush.xpose.msra.mxu0 %v742
    %842 = vmatpush.xpose.msra.mxu0 %v741
    %843 = vmatmul.f32.gmra.mxu0 0.0
    %v844 = vpop.f32.mrf.mxu0
    %v845 = vadd.f32 %v777, %v844
    %846 = vdwg.mxu0
    %847 = vmatpush.xpose.msra.mxu0 %v772
    %848 = vmatpush.xpose.msra.mxu0 %v771
    %849 = vmatpush.xpose.msra.mxu0 %v770
    %850 = vmatpush.xpose.msra.mxu0 %v769
    %851 = vmatpush.xpose.msra.mxu0 %v768
    %852 = vmatpush.xpose.msra.mxu0 %v767
    %853 = vmatpush.xpose.msra.mxu0 %v766
    %854 = vmatpush.xpose.msra.mxu0 %v765
    %855 = vmatpush.xpose.msra.mxu0 %v764
    %856 = vmatpush.xpose.msra.mxu0 %v763
    %857 = vmatpush.xpose.msra.mxu0 %v762
    %858 = vmatpush.xpose.msra.mxu0 %v761
    %859 = vmatpush.xpose.msra.mxu0 %v760
    %860 = vmatpush.xpose.msra.mxu0 %v759
    %861 = vmatpush.xpose.msra.mxu0 %v758
    %862 = vmatpush.xpose.msra.mxu0 %v757
    %863 = vmatmul.f32.gmra.mxu0 0.0
    %v864 = vpop.f32.mrf.mxu0
    %v865 = vadd.f32 %v778, %v864
    %866 = vdwg.mxu0
    %v867 = vadd.f32 %v805, %v783
    %v868 = vadd.f32 %v825, %v784
    %v869 = vadd.f32 %v845, %v785
    %v870 = vadd.f32 %v865, %v786
    %v871 = vxor.u32 %v867, 2147483648
    %v872 = vmul.f32 %v871, 1.442695
    %v873 = vpow.pop %v872
    %v874 = vadd.f32 %v873, 1.0
    %v875 = vrcp.pop %v874
    %v876 = vmul.f32 %v874, %v875
    %v877 = vsub.f32 1.0, %v876
    %v878 = vmul.f32 %v875, %v877
    %v879 = vadd.f32 %v875, %v878
    %vm880 = vweird.f32 %v874
    %vm881 = vweird.f32 %v875
    %vm882 = vmor %vm880, %vm881
    %v883 = vsel %vm882, %v875, %v879
    %v884 = vand.u32 2147483647, %v874
    %vm885 = vcmp.eq.f32.partialorder %v884, 8.507059e+37
    %v886 = vand.u32 %v874, 2147483648
    %v887 = vor.u32 1.1754944e-38, %v886
    %v888 = vsel %vm885, %v887, %v883
    %v889 = vmul.f32 1.0, %v888
    %v890 = vxor.u32 %v868, 2147483648
    %v891 = vmul.f32 %v890, 1.442695
    %v892 = vpow.pop %v891
    %v893 = vadd.f32 %v892, 1.0
    %v894 = vrcp.pop %v893
    %v895 = vmul.f32 %v893, %v894
    %v896 = vsub.f32 1.0, %v895
    %v897 = vmul.f32 %v894, %v896
    %v898 = vadd.f32 %v894, %v897
    %vm899 = vweird.f32 %v893
    %vm900 = vweird.f32 %v894
    %vm901 = vmor %vm899, %vm900
    %v902 = vsel %vm901, %v894, %v898
    %v903 = vand.u32 2147483647, %v893
    %vm904 = vcmp.eq.f32.partialorder %v903, 8.507059e+37
    %v905 = vand.u32 %v893, 2147483648
    %v906 = vor.u32 1.1754944e-38, %v905
    %v907 = vsel %vm904, %v906, %v902
    %v908 = vmul.f32 1.0, %v907
    %v909 = vtanh.pop %v869
    %v910 = vxor.u32 %v870, 2147483648
    %v911 = vmul.f32 %v910, 1.442695
    %v912 = vpow.pop %v911
    %v913 = vadd.f32 %v912, 1.0
    %v914 = vrcp.pop %v913
    %v915 = vmul.f32 %v913, %v914
    %v916 = vsub.f32 1.0, %v915
    %v917 = vmul.f32 %v914, %v916
    %v918 = vadd.f32 %v914, %v917
    %vm919 = vweird.f32 %v913
    %vm920 = vweird.f32 %v914
    %vm921 = vmor %vm919, %vm920
    %v922 = vsel %vm921, %v914, %v918
    %v923 = vand.u32 2147483647, %v913
    %vm924 = vcmp.eq.f32.partialorder %v923, 8.507059e+37
    %v925 = vand.u32 %v913, 2147483648
    %v926 = vor.u32 1.1754944e-38, %v925
    %v927 = vsel %vm924, %v926, %v922
    %v928 = vmul.f32 1.0, %v927
    %v929 = vmul.f32 %v908, 0.0
    %v930 = vmul.f32 %v889, %v909
    %v931 = vadd.f32 %v929, %v930
    %v932 = vtanh.pop %v931
    %v933 = vmul.f32 %v928, %v932
    %s934 = scalar_lea.vmem [#allocation2], 32
    %v935 = vld [vmem:[%s934] sm:$0xff]
    %v936 = vld [vmem:[%s934 + $0x8] sm:$0xff]
    %v937 = vld [vmem:[%s934 + $0x10] sm:$0xff]
    %v938 = vld [vmem:[%s934 + $0x18] sm:$0xff]
    %939 = vmatpush.xpose.msra.mxu0 %v724
    %940 = vmatpush.xpose.msra.mxu0 %v723
    %941 = vmatpush.xpose.msra.mxu0 %v722
    %942 = vmatpush.xpose.msra.mxu0 %v721
    %943 = vmatpush.xpose.msra.mxu0 %v720
    %944 = vmatpush.xpose.msra.mxu0 %v719
    %945 = vmatpush.xpose.msra.mxu0 %v718
    %946 = vmatpush.xpose.msra.mxu0 %v717
    %947 = vmatpush.xpose.msra.mxu0 %v716
    %948 = vmatpush.xpose.msra.mxu0 %v715
    %949 = vmatpush.xpose.msra.mxu0 %v714
    %950 = vmatpush.xpose.msra.mxu0 %v713
    %951 = vmatpush.xpose.msra.mxu0 %v712
    %952 = vmatpush.xpose.msra.mxu0 %v711
    %953 = vmatpush.xpose.msra.mxu0 %v710
    %954 = vmatpush.xpose.msra.mxu0 %v709
    %955 = vmatmul.f32.gmra.mxu0 %v933
    %v956 = vpop.f32.mrf.mxu0
    %v957 = vadd.f32 %v775, %v956
    %958 = vdwg.mxu0
    %959 = vmatpush.xpose.msra.mxu0 %v740
    %960 = vmatpush.xpose.msra.mxu0 %v739
    %961 = vmatpush.xpose.msra.mxu0 %v738
    %962 = vmatpush.xpose.msra.mxu0 %v737
    %963 = vmatpush.xpose.msra.mxu0 %v736
    %964 = vmatpush.xpose.msra.mxu0 %v735
    %965 = vmatpush.xpose.msra.mxu0 %v734
    %966 = vmatpush.xpose.msra.mxu0 %v733
    %967 = vmatpush.xpose.msra.mxu0 %v732
    %968 = vmatpush.xpose.msra.mxu0 %v731
    %969 = vmatpush.xpose.msra.mxu0 %v730
    %970 = vmatpush.xpose.msra.mxu0 %v729
    %971 = vmatpush.xpose.msra.mxu0 %v728
    %972 = vmatpush.xpose.msra.mxu0 %v727
    %973 = vmatpush.xpose.msra.mxu0 %v726
    %974 = vmatpush.xpose.msra.mxu0 %v725
    %975 = vmatmul.f32.gmra.mxu0 %v933
    %v976 = vpop.f32.mrf.mxu0
    %v977 = vadd.f32 %v776, %v976
    %978 = vdwg.mxu0
    %979 = vmatpush.xpose.msra.mxu0 %v756
    %980 = vmatpush.xpose.msra.mxu0 %v755
    %981 = vmatpush.xpose.msra.mxu0 %v754
    %982 = vmatpush.xpose.msra.mxu0 %v753
    %983 = vmatpush.xpose.msra.mxu0 %v752
    %984 = vmatpush.xpose.msra.mxu0 %v751
    %985 = vmatpush.xpose.msra.mxu0 %v750
    %986 = vmatpush.xpose.msra.mxu0 %v749
    %987 = vmatpush.xpose.msra.mxu0 %v748
    %988 = vmatpush.xpose.msra.mxu0 %v747
    %989 = vmatpush.xpose.msra.mxu0 %v746
    %990 = vmatpush.xpose.msra.mxu0 %v745
    %991 = vmatpush.xpose.msra.mxu0 %v744
    %992 = vmatpush.xpose.msra.mxu0 %v743
    %993 = vmatpush.xpose.msra.mxu0 %v742
    %994 = vmatpush.xpose.msra.mxu0 %v741
    %995 = vmatmul.f32.gmra.mxu0 %v933
    %v996 = vpop.f32.mrf.mxu0
    %v997 = vadd.f32 %v777, %v996
    %998 = vdwg.mxu0
    %999 = vmatpush.xpose.msra.mxu0 %v772
    %1000 = vmatpush.xpose.msra.mxu0 %v771
    %1001 = vmatpush.xpose.msra.mxu0 %v770
    %1002 = vmatpush.xpose.msra.mxu0 %v769
    %1003 = vmatpush.xpose.msra.mxu0 %v768
    %1004 = vmatpush.xpose.msra.mxu0 %v767
    %1005 = vmatpush.xpose.msra.mxu0 %v766
    %1006 = vmatpush.xpose.msra.mxu0 %v765
    %1007 = vmatpush.xpose.msra.mxu0 %v764
    %1008 = vmatpush.xpose.msra.mxu0 %v763
    %1009 = vmatpush.xpose.msra.mxu0 %v762
    %1010 = vmatpush.xpose.msra.mxu0 %v761
    %1011 = vmatpush.xpose.msra.mxu0 %v760
    %1012 = vmatpush.xpose.msra.mxu0 %v759
    %1013 = vmatpush.xpose.msra.mxu0 %v758
    %1014 = vmatpush.xpose.msra.mxu0 %v757
    %1015 = vmatmul.f32.gmra.mxu0 %v933
    %v1016 = vpop.f32.mrf.mxu0
    %v1017 = vadd.f32 %v778, %v1016
    %1018 = vdwg.mxu0
    %v1019 = vadd.f32 %v957, %v935
    %v1020 = vadd.f32 %v977, %v936
    %v1021 = vadd.f32 %v997, %v937
    %v1022 = vadd.f32 %v1017, %v938
    %v1023 = vxor.u32 %v1019, 2147483648
    %v1024 = vmul.f32 %v1023, 1.442695
    %v1025 = vpow.pop %v1024
    %v1026 = vadd.f32 %v1025, 1.0
    %v1027 = vrcp.pop %v1026
    %v1028 = vmul.f32 %v1026, %v1027
    %v1029 = vsub.f32 1.0, %v1028
    %v1030 = vmul.f32 %v1027, %v1029
    %v1031 = vadd.f32 %v1027, %v1030
    %vm1032 = vweird.f32 %v1026
    %vm1033 = vweird.f32 %v1027
    %vm1034 = vmor %vm1032, %vm1033
    %v1035 = vsel %vm1034, %v1027, %v1031
    %v1036 = vand.u32 2147483647, %v1026
    %vm1037 = vcmp.eq.f32.partialorder %v1036, 8.507059e+37
    %v1038 = vand.u32 %v1026, 2147483648
    %v1039 = vor.u32 1.1754944e-38, %v1038
    %v1040 = vsel %vm1037, %v1039, %v1035
    %v1041 = vmul.f32 1.0, %v1040
    %v1042 = vxor.u32 %v1020, 2147483648
    %v1043 = vmul.f32 %v1042, 1.442695
    %v1044 = vpow.pop %v1043
    %v1045 = vadd.f32 %v1044, 1.0
    %v1046 = vrcp.pop %v1045
    %v1047 = vmul.f32 %v1045, %v1046
    %v1048 = vsub.f32 1.0, %v1047
    %v1049 = vmul.f32 %v1046, %v1048
    %v1050 = vadd.f32 %v1046, %v1049
    %vm1051 = vweird.f32 %v1045
    %vm1052 = vweird.f32 %v1046
    %vm1053 = vmor %vm1051, %vm1052
    %v1054 = vsel %vm1053, %v1046, %v1050
    %v1055 = vand.u32 2147483647, %v1045
    %vm1056 = vcmp.eq.f32.partialorder %v1055, 8.507059e+37
    %v1057 = vand.u32 %v1045, 2147483648
    %v1058 = vor.u32 1.1754944e-38, %v1057
    %v1059 = vsel %vm1056, %v1058, %v1054
    %v1060 = vmul.f32 1.0, %v1059
    %v1061 = vtanh.pop %v1021
    %v1062 = vxor.u32 %v1022, 2147483648
    %v1063 = vmul.f32 %v1062, 1.442695
    %v1064 = vpow.pop %v1063
    %v1065 = vadd.f32 %v1064, 1.0
    %v1066 = vrcp.pop %v1065
    %v1067 = vmul.f32 %v1065, %v1066
    %v1068 = vsub.f32 1.0, %v1067
    %v1069 = vmul.f32 %v1066, %v1068
    %v1070 = vadd.f32 %v1066, %v1069
    %vm1071 = vweird.f32 %v1065
    %vm1072 = vweird.f32 %v1066
    %vm1073 = vmor %vm1071, %vm1072
    %v1074 = vsel %vm1073, %v1066, %v1070
    %v1075 = vand.u32 2147483647, %v1065
    %vm1076 = vcmp.eq.f32.partialorder %v1075, 8.507059e+37
    %v1077 = vand.u32 %v1065, 2147483648
    %v1078 = vor.u32 1.1754944e-38, %v1077
    %v1079 = vsel %vm1076, %v1078, %v1074
    %v1080 = vmul.f32 1.0, %v1079
    %v1081 = vmul.f32 %v1060, %v931
    %v1082 = vmul.f32 %v1041, %v1061
    %v1083 = vadd.f32 %v1081, %v1082
    %v1084 = vtanh.pop %v1083
    %v1085 = vmul.f32 %v1080, %v1084
    %s1086 = scalar_lea.vmem [#allocation2], 64
    %v1087 = vld [vmem:[%s1086] sm:$0xff]
    %v1088 = vld [vmem:[%s1086 + $0x8] sm:$0xff]
    %v1089 = vld [vmem:[%s1086 + $0x10] sm:$0xff]
    %v1090 = vld [vmem:[%s1086 + $0x18] sm:$0xff]
    %1091 = vmatpush.xpose.msra.mxu0 %v724
    %1092 = vmatpush.xpose.msra.mxu0 %v723
    %1093 = vmatpush.xpose.msra.mxu0 %v722
    %1094 = vmatpush.xpose.msra.mxu0 %v721
    %1095 = vmatpush.xpose.msra.mxu0 %v720
    %1096 = vmatpush.xpose.msra.mxu0 %v719
    %1097 = vmatpush.xpose.msra.mxu0 %v718
    %1098 = vmatpush.xpose.msra.mxu0 %v717
    %1099 = vmatpush.xpose.msra.mxu0 %v716
    %1100 = vmatpush.xpose.msra.mxu0 %v715
    %1101 = vmatpush.xpose.msra.mxu0 %v714
    %1102 = vmatpush.xpose.msra.mxu0 %v713
    %1103 = vmatpush.xpose.msra.mxu0 %v712
    %1104 = vmatpush.xpose.msra.mxu0 %v711
    %1105 = vmatpush.xpose.msra.mxu0 %v710
    %1106 = vmatpush.xpose.msra.mxu0 %v709
    %1107 = vmatmul.f32.gmra.mxu0 %v1085
    %v1108 = vpop.f32.mrf.mxu0
    %v1109 = vadd.f32 %v775, %v1108
    %1110 = vdwg.mxu0
    %1111 = vmatpush.xpose.msra.mxu0 %v740
    %1112 = vmatpush.xpose.msra.mxu0 %v739
    %1113 = vmatpush.xpose.msra.mxu0 %v738
    %1114 = vmatpush.xpose.msra.mxu0 %v737
    %1115 = vmatpush.xpose.msra.mxu0 %v736
    %1116 = vmatpush.xpose.msra.mxu0 %v735
    %1117 = vmatpush.xpose.msra.mxu0 %v734
    %1118 = vmatpush.xpose.msra.mxu0 %v733
    %1119 = vmatpush.xpose.msra.mxu0 %v732
    %1120 = vmatpush.xpose.msra.mxu0 %v731
    %1121 = vmatpush.xpose.msra.mxu0 %v730
    %1122 = vmatpush.xpose.msra.mxu0 %v729
    %1123 = vmatpush.xpose.msra.mxu0 %v728
    %1124 = vmatpush.xpose.msra.mxu0 %v727
    %1125 = vmatpush.xpose.msra.mxu0 %v726
    %1126 = vmatpush.xpose.msra.mxu0 %v725
    %1127 = vmatmul.f32.gmra.mxu0 %v1085
    %v1128 = vpop.f32.mrf.mxu0
    %v1129 = vadd.f32 %v776, %v1128
    %1130 = vdwg.mxu0
    %1131 = vmatpush.xpose.msra.mxu0 %v756
    %1132 = vmatpush.xpose.msra.mxu0 %v755
    %1133 = vmatpush.xpose.msra.mxu0 %v754
    %1134 = vmatpush.xpose.msra.mxu0 %v753
    %1135 = vmatpush.xpose.msra.mxu0 %v752
    %1136 = vmatpush.xpose.msra.mxu0 %v751
    %1137 = vmatpush.xpose.msra.mxu0 %v750
    %1138 = vmatpush.xpose.msra.mxu0 %v749
    %1139 = vmatpush.xpose.msra.mxu0 %v748
    %1140 = vmatpush.xpose.msra.mxu0 %v747
    %1141 = vmatpush.xpose.msra.mxu0 %v746
    %1142 = vmatpush.xpose.msra.mxu0 %v745
    %1143 = vmatpush.xpose.msra.mxu0 %v744
    %1144 = vmatpush.xpose.msra.mxu0 %v743
    %1145 = vmatpush.xpose.msra.mxu0 %v742
    %1146 = vmatpush.xpose.msra.mxu0 %v741
    %1147 = vmatmul.f32.gmra.mxu0 %v1085
    %v1148 = vpop.f32.mrf.mxu0
    %v1149 = vadd.f32 %v777, %v1148
    %1150 = vdwg.mxu0
    %1151 = vmatpush.xpose.msra.mxu0 %v772
    %1152 = vmatpush.xpose.msra.mxu0 %v771
    %1153 = vmatpush.xpose.msra.mxu0 %v770
    %1154 = vmatpush.xpose.msra.mxu0 %v769
    %1155 = vmatpush.xpose.msra.mxu0 %v768
    %1156 = vmatpush.xpose.msra.mxu0 %v767
    %1157 = vmatpush.xpose.msra.mxu0 %v766
    %1158 = vmatpush.xpose.msra.mxu0 %v765
    %1159 = vmatpush.xpose.msra.mxu0 %v764
    %1160 = vmatpush.xpose.msra.mxu0 %v763
    %1161 = vmatpush.xpose.msra.mxu0 %v762
    %1162 = vmatpush.xpose.msra.mxu0 %v761
    %1163 = vmatpush.xpose.msra.mxu0 %v760
    %1164 = vmatpush.xpose.msra.mxu0 %v759
    %1165 = vmatpush.xpose.msra.mxu0 %v758
    %1166 = vmatpush.xpose.msra.mxu0 %v757
    %1167 = vmatmul.f32.gmra.mxu0 %v1085
    %v1168 = vpop.f32.mrf.mxu0
    %v1169 = vadd.f32 %v778, %v1168
    %1170 = vdwg.mxu0
    %v1171 = vadd.f32 %v1109, %v1087
    %v1172 = vadd.f32 %v1129, %v1088
    %v1173 = vadd.f32 %v1149, %v1089
    %v1174 = vadd.f32 %v1169, %v1090
    %v1175 = vxor.u32 %v1171, 2147483648
    %v1176 = vmul.f32 %v1175, 1.442695
    %v1177 = vpow.pop %v1176
    %v1178 = vadd.f32 %v1177, 1.0
    %v1179 = vrcp.pop %v1178
    %v1180 = vmul.f32 %v1178, %v1179
    %v1181 = vsub.f32 1.0, %v1180
    %v1182 = vmul.f32 %v1179, %v1181
    %v1183 = vadd.f32 %v1179, %v1182
    %vm1184 = vweird.f32 %v1178
    %vm1185 = vweird.f32 %v1179
    %vm1186 = vmor %vm1184, %vm1185
    %v1187 = vsel %vm1186, %v1179, %v1183
    %v1188 = vand.u32 2147483647, %v1178
    %vm1189 = vcmp.eq.f32.partialorder %v1188, 8.507059e+37
    %v1190 = vand.u32 %v1178, 2147483648
    %v1191 = vor.u32 1.1754944e-38, %v1190
    %v1192 = vsel %vm1189, %v1191, %v1187
    %v1193 = vmul.f32 1.0, %v1192
    %v1194 = vxor.u32 %v1172, 2147483648
    %v1195 = vmul.f32 %v1194, 1.442695
    %v1196 = vpow.pop %v1195
    %v1197 = vadd.f32 %v1196, 1.0
    %v1198 = vrcp.pop %v1197
    %v1199 = vmul.f32 %v1197, %v1198
    %v1200 = vsub.f32 1.0, %v1199
    %v1201 = vmul.f32 %v1198, %v1200
    %v1202 = vadd.f32 %v1198, %v1201
    %vm1203 = vweird.f32 %v1197
    %vm1204 = vweird.f32 %v1198
    %vm1205 = vmor %vm1203, %vm1204
    %v1206 = vsel %vm1205, %v1198, %v1202
    %v1207 = vand.u32 2147483647, %v1197
    %vm1208 = vcmp.eq.f32.partialorder %v1207, 8.507059e+37
    %v1209 = vand.u32 %v1197, 2147483648
    %v1210 = vor.u32 1.1754944e-38, %v1209
    %v1211 = vsel %vm1208, %v1210, %v1206
    %v1212 = vmul.f32 1.0, %v1211
    %v1213 = vtanh.pop %v1173
    %v1214 = vxor.u32 %v1174, 2147483648
    %v1215 = vmul.f32 %v1214, 1.442695
    %v1216 = vpow.pop %v1215
    %v1217 = vadd.f32 %v1216, 1.0
    %v1218 = vrcp.pop %v1217
    %v1219 = vmul.f32 %v1217, %v1218
    %v1220 = vsub.f32 1.0, %v1219
    %v1221 = vmul.f32 %v1218, %v1220
    %v1222 = vadd.f32 %v1218, %v1221
    %vm1223 = vweird.f32 %v1217
    %vm1224 = vweird.f32 %v1218
    %vm1225 = vmor %vm1223, %vm1224
    %v1226 = vsel %vm1225, %v1218, %v1222
    %v1227 = vand.u32 2147483647, %v1217
    %vm1228 = vcmp.eq.f32.partialorder %v1227, 8.507059e+37
    %v1229 = vand.u32 %v1217, 2147483648
    %v1230 = vor.u32 1.1754944e-38, %v1229
    %v1231 = vsel %vm1228, %v1230, %v1226
    %v1232 = vmul.f32 1.0, %v1231
    %v1233 = vmul.f32 %v1212, %v1083
    %v1234 = vmul.f32 %v1193, %v1213
    %v1235 = vadd.f32 %v1233, %v1234
    %v1236 = vtanh.pop %v1235
    %v1237 = vmul.f32 %v1232, %v1236
    %s1238 = scalar_lea.vmem [#allocation2], 96
    %v1239 = vld [vmem:[%s1238] sm:$0xff]
    %v1240 = vld [vmem:[%s1238 + $0x8] sm:$0xff]
    %v1241 = vld [vmem:[%s1238 + $0x10] sm:$0xff]
    %v1242 = vld [vmem:[%s1238 + $0x18] sm:$0xff]
    %1243 = vmatpush.xpose.msra.mxu0 %v724
    %1244 = vmatpush.xpose.msra.mxu0 %v723
    %1245 = vmatpush.xpose.msra.mxu0 %v722
    %1246 = vmatpush.xpose.msra.mxu0 %v721
    %1247 = vmatpush.xpose.msra.mxu0 %v720
    %1248 = vmatpush.xpose.msra.mxu0 %v719
    %1249 = vmatpush.xpose.msra.mxu0 %v718
    %1250 = vmatpush.xpose.msra.mxu0 %v717
    %1251 = vmatpush.xpose.msra.mxu0 %v716
    %1252 = vmatpush.xpose.msra.mxu0 %v715
    %1253 = vmatpush.xpose.msra.mxu0 %v714
    %1254 = vmatpush.xpose.msra.mxu0 %v713
    %1255 = vmatpush.xpose.msra.mxu0 %v712
    %1256 = vmatpush.xpose.msra.mxu0 %v711
    %1257 = vmatpush.xpose.msra.mxu0 %v710
    %1258 = vmatpush.xpose.msra.mxu0 %v709
    %1259 = vmatmul.f32.gmra.mxu0 %v1237
    %v1260 = vpop.f32.mrf.mxu0
    %v1261 = vadd.f32 %v775, %v1260
    %1262 = vdwg.mxu0
    %1263 = vmatpush.xpose.msra.mxu0 %v740
    %1264 = vmatpush.xpose.msra.mxu0 %v739
    %1265 = vmatpush.xpose.msra.mxu0 %v738
    %1266 = vmatpush.xpose.msra.mxu0 %v737
    %1267 = vmatpush.xpose.msra.mxu0 %v736
    %1268 = vmatpush.xpose.msra.mxu0 %v735
    %1269 = vmatpush.xpose.msra.mxu0 %v734
    %1270 = vmatpush.xpose.msra.mxu0 %v733
    %1271 = vmatpush.xpose.msra.mxu0 %v732
    %1272 = vmatpush.xpose.msra.mxu0 %v731
    %1273 = vmatpush.xpose.msra.mxu0 %v730
    %1274 = vmatpush.xpose.msra.mxu0 %v729
    %1275 = vmatpush.xpose.msra.mxu0 %v728
    %1276 = vmatpush.xpose.msra.mxu0 %v727
    %1277 = vmatpush.xpose.msra.mxu0 %v726
    %1278 = vmatpush.xpose.msra.mxu0 %v725
    %1279 = vmatmul.f32.gmra.mxu0 %v1237
    %v1280 = vpop.f32.mrf.mxu0
    %v1281 = vadd.f32 %v776, %v1280
    %1282 = vdwg.mxu0
    %1283 = vmatpush.xpose.msra.mxu0 %v756
    %1284 = vmatpush.xpose.msra.mxu0 %v755
    %1285 = vmatpush.xpose.msra.mxu0 %v754
    %1286 = vmatpush.xpose.msra.mxu0 %v753
    %1287 = vmatpush.xpose.msra.mxu0 %v752
    %1288 = vmatpush.xpose.msra.mxu0 %v751
    %1289 = vmatpush.xpose.msra.mxu0 %v750
    %1290 = vmatpush.xpose.msra.mxu0 %v749
    %1291 = vmatpush.xpose.msra.mxu0 %v748
    %1292 = vmatpush.xpose.msra.mxu0 %v747
    %1293 = vmatpush.xpose.msra.mxu0 %v746
    %1294 = vmatpush.xpose.msra.mxu0 %v745
    %1295 = vmatpush.xpose.msra.mxu0 %v744
    %1296 = vmatpush.xpose.msra.mxu0 %v743
    %1297 = vmatpush.xpose.msra.mxu0 %v742
    %1298 = vmatpush.xpose.msra.mxu0 %v741
    %1299 = vmatmul.f32.gmra.mxu0 %v1237
    %v1300 = vpop.f32.mrf.mxu0
    %v1301 = vadd.f32 %v777, %v1300
    %1302 = vdwg.mxu0
    %1303 = vmatpush.xpose.msra.mxu0 %v772
    %1304 = vmatpush.xpose.msra.mxu0 %v771
    %1305 = vmatpush.xpose.msra.mxu0 %v770
    %1306 = vmatpush.xpose.msra.mxu0 %v769
    %1307 = vmatpush.xpose.msra.mxu0 %v768
    %1308 = vmatpush.xpose.msra.mxu0 %v767
    %1309 = vmatpush.xpose.msra.mxu0 %v766
    %1310 = vmatpush.xpose.msra.mxu0 %v765
    %1311 = vmatpush.xpose.msra.mxu0 %v764
    %1312 = vmatpush.xpose.msra.mxu0 %v763
    %1313 = vmatpush.xpose.msra.mxu0 %v762
    %1314 = vmatpush.xpose.msra.mxu0 %v761
    %1315 = vmatpush.xpose.msra.mxu0 %v760
    %1316 = vmatpush.xpose.msra.mxu0 %v759
    %1317 = vmatpush.xpose.msra.mxu0 %v758
    %1318 = vmatpush.xpose.msra.mxu0 %v757
    %1319 = vmatmul.f32.gmra.mxu0 %v1237
    %v1320 = vpop.f32.mrf.mxu0
    %v1321 = vadd.f32 %v778, %v1320
    %1322 = vdwg.mxu0
    %v1323 = vadd.f32 %v1261, %v1239
    %v1324 = vadd.f32 %v1281, %v1240
    %v1325 = vadd.f32 %v1301, %v1241
    %v1326 = vadd.f32 %v1321, %v1242
    %v1327 = vxor.u32 %v1323, 2147483648
    %v1328 = vmul.f32 %v1327, 1.442695
    %v1329 = vpow.pop %v1328
    %v1330 = vadd.f32 %v1329, 1.0
    %v1331 = vrcp.pop %v1330
    %v1332 = vmul.f32 %v1330, %v1331
    %v1333 = vsub.f32 1.0, %v1332
    %v1334 = vmul.f32 %v1331, %v1333
    %v1335 = vadd.f32 %v1331, %v1334
    %vm1336 = vweird.f32 %v1330
    %vm1337 = vweird.f32 %v1331
    %vm1338 = vmor %vm1336, %vm1337
    %v1339 = vsel %vm1338, %v1331, %v1335
    %v1340 = vand.u32 2147483647, %v1330
    %vm1341 = vcmp.eq.f32.partialorder %v1340, 8.507059e+37
    %v1342 = vand.u32 %v1330, 2147483648
    %v1343 = vor.u32 1.1754944e-38, %v1342
    %v1344 = vsel %vm1341, %v1343, %v1339
    %v1345 = vmul.f32 1.0, %v1344
    %v1346 = vxor.u32 %v1324, 2147483648
    %v1347 = vmul.f32 %v1346, 1.442695
    %v1348 = vpow.pop %v1347
    %v1349 = vadd.f32 %v1348, 1.0
    %v1350 = vrcp.pop %v1349
    %v1351 = vmul.f32 %v1349, %v1350
    %v1352 = vsub.f32 1.0, %v1351
    %v1353 = vmul.f32 %v1350, %v1352
    %v1354 = vadd.f32 %v1350, %v1353
    %vm1355 = vweird.f32 %v1349
    %vm1356 = vweird.f32 %v1350
    %vm1357 = vmor %vm1355, %vm1356
    %v1358 = vsel %vm1357, %v1350, %v1354
    %v1359 = vand.u32 2147483647, %v1349
    %vm1360 = vcmp.eq.f32.partialorder %v1359, 8.507059e+37
    %v1361 = vand.u32 %v1349, 2147483648
    %v1362 = vor.u32 1.1754944e-38, %v1361
    %v1363 = vsel %vm1360, %v1362, %v1358
    %v1364 = vmul.f32 1.0, %v1363
    %v1365 = vtanh.pop %v1325
    %v1366 = vxor.u32 %v1326, 2147483648
    %v1367 = vmul.f32 %v1366, 1.442695
    %v1368 = vpow.pop %v1367
    %v1369 = vadd.f32 %v1368, 1.0
    %v1370 = vrcp.pop %v1369
    %v1371 = vmul.f32 %v1369, %v1370
    %v1372 = vsub.f32 1.0, %v1371
    %v1373 = vmul.f32 %v1370, %v1372
    %v1374 = vadd.f32 %v1370, %v1373
    %vm1375 = vweird.f32 %v1369
    %vm1376 = vweird.f32 %v1370
    %vm1377 = vmor %vm1375, %vm1376
    %v1378 = vsel %vm1377, %v1370, %v1374
    %v1379 = vand.u32 2147483647, %v1369
    %vm1380 = vcmp.eq.f32.partialorder %v1379, 8.507059e+37
    %v1381 = vand.u32 %v1369, 2147483648
    %v1382 = vor.u32 1.1754944e-38, %v1381
    %v1383 = vsel %vm1380, %v1382, %v1378
    %v1384 = vmul.f32 1.0, %v1383
    %v1385 = vmul.f32 %v1364, %v1235
    %v1386 = vmul.f32 %v1345, %v1365
    %v1387 = vadd.f32 %v1385, %v1386
    %v1388 = vtanh.pop %v1387
    %v1389 = vmul.f32 %v1384, %v1388
    %s1390 = scalar_lea.vmem [#allocation2], 128
    %v1391 = vld [vmem:[%s1390] sm:$0xff]
    %v1392 = vld [vmem:[%s1390 + $0x8] sm:$0xff]
    %v1393 = vld [vmem:[%s1390 + $0x10] sm:$0xff]
    %v1394 = vld [vmem:[%s1390 + $0x18] sm:$0xff]
    %1395 = vmatpush.xpose.msra.mxu0 %v724
    %1396 = vmatpush.xpose.msra.mxu0 %v723
    %1397 = vmatpush.xpose.msra.mxu0 %v722
    %1398 = vmatpush.xpose.msra.mxu0 %v721
    %1399 = vmatpush.xpose.msra.mxu0 %v720
    %1400 = vmatpush.xpose.msra.mxu0 %v719
    %1401 = vmatpush.xpose.msra.mxu0 %v718
    %1402 = vmatpush.xpose.msra.mxu0 %v717
    %1403 = vmatpush.xpose.msra.mxu0 %v716
    %1404 = vmatpush.xpose.msra.mxu0 %v715
    %1405 = vmatpush.xpose.msra.mxu0 %v714
    %1406 = vmatpush.xpose.msra.mxu0 %v713
    %1407 = vmatpush.xpose.msra.mxu0 %v712
    %1408 = vmatpush.xpose.msra.mxu0 %v711
    %1409 = vmatpush.xpose.msra.mxu0 %v710
    %1410 = vmatpush.xpose.msra.mxu0 %v709
    %1411 = vmatmul.f32.gmra.mxu0 %v1389
    %v1412 = vpop.f32.mrf.mxu0
    %v1413 = vadd.f32 %v775, %v1412
    %1414 = vdwg.mxu0
    %1415 = vmatpush.xpose.msra.mxu0 %v740
    %1416 = vmatpush.xpose.msra.mxu0 %v739
    %1417 = vmatpush.xpose.msra.mxu0 %v738
    %1418 = vmatpush.xpose.msra.mxu0 %v737
    %1419 = vmatpush.xpose.msra.mxu0 %v736
    %1420 = vmatpush.xpose.msra.mxu0 %v735
    %1421 = vmatpush.xpose.msra.mxu0 %v734
    %1422 = vmatpush.xpose.msra.mxu0 %v733
    %1423 = vmatpush.xpose.msra.mxu0 %v732
    %1424 = vmatpush.xpose.msra.mxu0 %v731
    %1425 = vmatpush.xpose.msra.mxu0 %v730
    %1426 = vmatpush.xpose.msra.mxu0 %v729
    %1427 = vmatpush.xpose.msra.mxu0 %v728
    %1428 = vmatpush.xpose.msra.mxu0 %v727
    %1429 = vmatpush.xpose.msra.mxu0 %v726
    %1430 = vmatpush.xpose.msra.mxu0 %v725
    %1431 = vmatmul.f32.gmra.mxu0 %v1389
    %v1432 = vpop.f32.mrf.mxu0
    %v1433 = vadd.f32 %v776, %v1432
    %1434 = vdwg.mxu0
    %1435 = vmatpush.xpose.msra.mxu0 %v756
    %1436 = vmatpush.xpose.msra.mxu0 %v755
    %1437 = vmatpush.xpose.msra.mxu0 %v754
    %1438 = vmatpush.xpose.msra.mxu0 %v753
    %1439 = vmatpush.xpose.msra.mxu0 %v752
    %1440 = vmatpush.xpose.msra.mxu0 %v751
    %1441 = vmatpush.xpose.msra.mxu0 %v750
    %1442 = vmatpush.xpose.msra.mxu0 %v749
    %1443 = vmatpush.xpose.msra.mxu0 %v748
    %1444 = vmatpush.xpose.msra.mxu0 %v747
    %1445 = vmatpush.xpose.msra.mxu0 %v746
    %1446 = vmatpush.xpose.msra.mxu0 %v745
    %1447 = vmatpush.xpose.msra.mxu0 %v744
    %1448 = vmatpush.xpose.msra.mxu0 %v743
    %1449 = vmatpush.xpose.msra.mxu0 %v742
    %1450 = vmatpush.xpose.msra.mxu0 %v741
    %1451 = vmatmul.f32.gmra.mxu0 %v1389
    %v1452 = vpop.f32.mrf.mxu0
    %v1453 = vadd.f32 %v777, %v1452
    %1454 = vdwg.mxu0
    %1455 = vmatpush.xpose.msra.mxu0 %v772
    %1456 = vmatpush.xpose.msra.mxu0 %v771
    %1457 = vmatpush.xpose.msra.mxu0 %v770
    %1458 = vmatpush.xpose.msra.mxu0 %v769
    %1459 = vmatpush.xpose.msra.mxu0 %v768
    %1460 = vmatpush.xpose.msra.mxu0 %v767
    %1461 = vmatpush.xpose.msra.mxu0 %v766
    %1462 = vmatpush.xpose.msra.mxu0 %v765
    %1463 = vmatpush.xpose.msra.mxu0 %v764
    %1464 = vmatpush.xpose.msra.mxu0 %v763
    %1465 = vmatpush.xpose.msra.mxu0 %v762
    %1466 = vmatpush.xpose.msra.mxu0 %v761
    %1467 = vmatpush.xpose.msra.mxu0 %v760
    %1468 = vmatpush.xpose.msra.mxu0 %v759
    %1469 = vmatpush.xpose.msra.mxu0 %v758
    %1470 = vmatpush.xpose.msra.mxu0 %v757
    %1471 = vmatmul.f32.gmra.mxu0 %v1389
    %v1472 = vpop.f32.mrf.mxu0
    %v1473 = vadd.f32 %v778, %v1472
    %1474 = vdwg.mxu0
    %v1475 = vadd.f32 %v1413, %v1391
    %v1476 = vadd.f32 %v1433, %v1392
    %v1477 = vadd.f32 %v1453, %v1393
    %v1478 = vadd.f32 %v1473, %v1394
    %v1479 = vxor.u32 %v1475, 2147483648
    %v1480 = vmul.f32 %v1479, 1.442695
    %v1481 = vpow.pop %v1480
    %v1482 = vadd.f32 %v1481, 1.0
    %v1483 = vrcp.pop %v1482
    %v1484 = vmul.f32 %v1482, %v1483
    %v1485 = vsub.f32 1.0, %v1484
    %v1486 = vmul.f32 %v1483, %v1485
    %v1487 = vadd.f32 %v1483, %v1486
    %vm1488 = vweird.f32 %v1482
    %vm1489 = vweird.f32 %v1483
    %vm1490 = vmor %vm1488, %vm1489
    %v1491 = vsel %vm1490, %v1483, %v1487
    %v1492 = vand.u32 2147483647, %v1482
    %vm1493 = vcmp.eq.f32.partialorder %v1492, 8.507059e+37
    %v1494 = vand.u32 %v1482, 2147483648
    %v1495 = vor.u32 1.1754944e-38, %v1494
    %v1496 = vsel %vm1493, %v1495, %v1491
    %v1497 = vmul.f32 1.0, %v1496
    %v1498 = vxor.u32 %v1476, 2147483648
    %v1499 = vmul.f32 %v1498, 1.442695
    %v1500 = vpow.pop %v1499
    %v1501 = vadd.f32 %v1500, 1.0
    %v1502 = vrcp.pop %v1501
    %v1503 = vmul.f32 %v1501, %v1502
    %v1504 = vsub.f32 1.0, %v1503
    %v1505 = vmul.f32 %v1502, %v1504
    %v1506 = vadd.f32 %v1502, %v1505
    %vm1507 = vweird.f32 %v1501
    %vm1508 = vweird.f32 %v1502
    %vm1509 = vmor %vm1507, %vm1508
    %v1510 = vsel %vm1509, %v1502, %v1506
    %v1511 = vand.u32 2147483647, %v1501
    %vm1512 = vcmp.eq.f32.partialorder %v1511, 8.507059e+37
    %v1513 = vand.u32 %v1501, 2147483648
    %v1514 = vor.u32 1.1754944e-38, %v1513
    %v1515 = vsel %vm1512, %v1514, %v1510
    %v1516 = vmul.f32 1.0, %v1515
    %v1517 = vtanh.pop %v1477
    %v1518 = vxor.u32 %v1478, 2147483648
    %v1519 = vmul.f32 %v1518, 1.442695
    %v1520 = vpow.pop %v1519
    %v1521 = vadd.f32 %v1520, 1.0
    %v1522 = vrcp.pop %v1521
    %v1523 = vmul.f32 %v1521, %v1522
    %v1524 = vsub.f32 1.0, %v1523
    %v1525 = vmul.f32 %v1522, %v1524
    %v1526 = vadd.f32 %v1522, %v1525
    %vm1527 = vweird.f32 %v1521
    %vm1528 = vweird.f32 %v1522
    %vm1529 = vmor %vm1527, %vm1528
    %v1530 = vsel %vm1529, %v1522, %v1526
    %v1531 = vand.u32 2147483647, %v1521
    %vm1532 = vcmp.eq.f32.partialorder %v1531, 8.507059e+37
    %v1533 = vand.u32 %v1521, 2147483648
    %v1534 = vor.u32 1.1754944e-38, %v1533
    %v1535 = vsel %vm1532, %v1534, %v1530
    %v1536 = vmul.f32 1.0, %v1535
    %v1537 = vmul.f32 %v1516, %v1387
    %v1538 = vmul.f32 %v1497, %v1517
    %v1539 = vadd.f32 %v1537, %v1538
    %v1540 = vtanh.pop %v1539
    %v1541 = vmul.f32 %v1536, %v1540
    %s1542 = scalar_lea.vmem [#allocation2], 160
    %v1543 = vld [vmem:[%s1542] sm:$0xff]
    %v1544 = vld [vmem:[%s1542 + $0x8] sm:$0xff]
    %v1545 = vld [vmem:[%s1542 + $0x10] sm:$0xff]
    %v1546 = vld [vmem:[%s1542 + $0x18] sm:$0xff]
    %1547 = vmatpush.xpose.msra.mxu0 %v724
    %1548 = vmatpush.xpose.msra.mxu0 %v723
    %1549 = vmatpush.xpose.msra.mxu0 %v722
    %1550 = vmatpush.xpose.msra.mxu0 %v721
    %1551 = vmatpush.xpose.msra.mxu0 %v720
    %1552 = vmatpush.xpose.msra.mxu0 %v719
    %1553 = vmatpush.xpose.msra.mxu0 %v718
    %1554 = vmatpush.xpose.msra.mxu0 %v717
    %1555 = vmatpush.xpose.msra.mxu0 %v716
    %1556 = vmatpush.xpose.msra.mxu0 %v715
    %1557 = vmatpush.xpose.msra.mxu0 %v714
    %1558 = vmatpush.xpose.msra.mxu0 %v713
    %1559 = vmatpush.xpose.msra.mxu0 %v712
    %1560 = vmatpush.xpose.msra.mxu0 %v711
    %1561 = vmatpush.xpose.msra.mxu0 %v710
    %1562 = vmatpush.xpose.msra.mxu0 %v709
    %1563 = vmatmul.f32.gmra.mxu0 %v1541
    %v1564 = vpop.f32.mrf.mxu0
    %v1565 = vadd.f32 %v775, %v1564
    %1566 = vdwg.mxu0
    %1567 = vmatpush.xpose.msra.mxu0 %v740
    %1568 = vmatpush.xpose.msra.mxu0 %v739
    %1569 = vmatpush.xpose.msra.mxu0 %v738
    %1570 = vmatpush.xpose.msra.mxu0 %v737
    %1571 = vmatpush.xpose.msra.mxu0 %v736
    %1572 = vmatpush.xpose.msra.mxu0 %v735
    %1573 = vmatpush.xpose.msra.mxu0 %v734
    %1574 = vmatpush.xpose.msra.mxu0 %v733
    %1575 = vmatpush.xpose.msra.mxu0 %v732
    %1576 = vmatpush.xpose.msra.mxu0 %v731
    %1577 = vmatpush.xpose.msra.mxu0 %v730
    %1578 = vmatpush.xpose.msra.mxu0 %v729
    %1579 = vmatpush.xpose.msra.mxu0 %v728
    %1580 = vmatpush.xpose.msra.mxu0 %v727
    %1581 = vmatpush.xpose.msra.mxu0 %v726
    %1582 = vmatpush.xpose.msra.mxu0 %v725
    %1583 = vmatmul.f32.gmra.mxu0 %v1541
    %v1584 = vpop.f32.mrf.mxu0
    %v1585 = vadd.f32 %v776, %v1584
    %1586 = vdwg.mxu0
    %1587 = vmatpush.xpose.msra.mxu0 %v756
    %1588 = vmatpush.xpose.msra.mxu0 %v755
    %1589 = vmatpush.xpose.msra.mxu0 %v754
    %1590 = vmatpush.xpose.msra.mxu0 %v753
    %1591 = vmatpush.xpose.msra.mxu0 %v752
    %1592 = vmatpush.xpose.msra.mxu0 %v751
    %1593 = vmatpush.xpose.msra.mxu0 %v750
    %1594 = vmatpush.xpose.msra.mxu0 %v749
    %1595 = vmatpush.xpose.msra.mxu0 %v748
    %1596 = vmatpush.xpose.msra.mxu0 %v747
    %1597 = vmatpush.xpose.msra.mxu0 %v746
    %1598 = vmatpush.xpose.msra.mxu0 %v745
    %1599 = vmatpush.xpose.msra.mxu0 %v744
    %1600 = vmatpush.xpose.msra.mxu0 %v743
    %1601 = vmatpush.xpose.msra.mxu0 %v742
    %1602 = vmatpush.xpose.msra.mxu0 %v741
    %1603 = vmatmul.f32.gmra.mxu0 %v1541
    %v1604 = vpop.f32.mrf.mxu0
    %v1605 = vadd.f32 %v777, %v1604
    %1606 = vdwg.mxu0
    %1607 = vmatpush.xpose.msra.mxu0 %v772
    %1608 = vmatpush.xpose.msra.mxu0 %v771
    %1609 = vmatpush.xpose.msra.mxu0 %v770
    %1610 = vmatpush.xpose.msra.mxu0 %v769
    %1611 = vmatpush.xpose.msra.mxu0 %v768
    %1612 = vmatpush.xpose.msra.mxu0 %v767
    %1613 = vmatpush.xpose.msra.mxu0 %v766
    %1614 = vmatpush.xpose.msra.mxu0 %v765
    %1615 = vmatpush.xpose.msra.mxu0 %v764
    %1616 = vmatpush.xpose.msra.mxu0 %v763
    %1617 = vmatpush.xpose.msra.mxu0 %v762
    %1618 = vmatpush.xpose.msra.mxu0 %v761
    %1619 = vmatpush.xpose.msra.mxu0 %v760
    %1620 = vmatpush.xpose.msra.mxu0 %v759
    %1621 = vmatpush.xpose.msra.mxu0 %v758
    %1622 = vmatpush.xpose.msra.mxu0 %v757
    %1623 = vmatmul.f32.gmra.mxu0 %v1541
    %v1624 = vpop.f32.mrf.mxu0
    %v1625 = vadd.f32 %v778, %v1624
    %1626 = vdwg.mxu0
    %v1627 = vadd.f32 %v1565, %v1543
    %v1628 = vadd.f32 %v1585, %v1544
    %v1629 = vadd.f32 %v1605, %v1545
    %v1630 = vadd.f32 %v1625, %v1546
    %v1631 = vxor.u32 %v1627, 2147483648
    %v1632 = vmul.f32 %v1631, 1.442695
    %v1633 = vpow.pop %v1632
    %v1634 = vadd.f32 %v1633, 1.0
    %v1635 = vrcp.pop %v1634
    %v1636 = vmul.f32 %v1634, %v1635
    %v1637 = vsub.f32 1.0, %v1636
    %v1638 = vmul.f32 %v1635, %v1637
    %v1639 = vadd.f32 %v1635, %v1638
    %vm1640 = vweird.f32 %v1634
    %vm1641 = vweird.f32 %v1635
    %vm1642 = vmor %vm1640, %vm1641
    %v1643 = vsel %vm1642, %v1635, %v1639
    %v1644 = vand.u32 2147483647, %v1634
    %vm1645 = vcmp.eq.f32.partialorder %v1644, 8.507059e+37
    %v1646 = vand.u32 %v1634, 2147483648
    %v1647 = vor.u32 1.1754944e-38, %v1646
    %v1648 = vsel %vm1645, %v1647, %v1643
    %v1649 = vmul.f32 1.0, %v1648
    %v1650 = vxor.u32 %v1628, 2147483648
    %v1651 = vmul.f32 %v1650, 1.442695
    %v1652 = vpow.pop %v1651
    %v1653 = vadd.f32 %v1652, 1.0
    %v1654 = vrcp.pop %v1653
    %v1655 = vmul.f32 %v1653, %v1654
    %v1656 = vsub.f32 1.0, %v1655
    %v1657 = vmul.f32 %v1654, %v1656
    %v1658 = vadd.f32 %v1654, %v1657
    %vm1659 = vweird.f32 %v1653
    %vm1660 = vweird.f32 %v1654
    %vm1661 = vmor %vm1659, %vm1660
    %v1662 = vsel %vm1661, %v1654, %v1658
    %v1663 = vand.u32 2147483647, %v1653
    %vm1664 = vcmp.eq.f32.partialorder %v1663, 8.507059e+37
    %v1665 = vand.u32 %v1653, 2147483648
    %v1666 = vor.u32 1.1754944e-38, %v1665
    %v1667 = vsel %vm1664, %v1666, %v1662
    %v1668 = vmul.f32 1.0, %v1667
    %v1669 = vtanh.pop %v1629
    %v1670 = vxor.u32 %v1630, 2147483648
    %v1671 = vmul.f32 %v1670, 1.442695
    %v1672 = vpow.pop %v1671
    %v1673 = vadd.f32 %v1672, 1.0
    %v1674 = vrcp.pop %v1673
    %v1675 = vmul.f32 %v1673, %v1674
    %v1676 = vsub.f32 1.0, %v1675
    %v1677 = vmul.f32 %v1674, %v1676
    %v1678 = vadd.f32 %v1674, %v1677
    %vm1679 = vweird.f32 %v1673
    %vm1680 = vweird.f32 %v1674
    %vm1681 = vmor %vm1679, %vm1680
    %v1682 = vsel %vm1681, %v1674, %v1678
    %v1683 = vand.u32 2147483647, %v1673
    %vm1684 = vcmp.eq.f32.partialorder %v1683, 8.507059e+37
    %v1685 = vand.u32 %v1673, 2147483648
    %v1686 = vor.u32 1.1754944e-38, %v1685
    %v1687 = vsel %vm1684, %v1686, %v1682
    %v1688 = vmul.f32 1.0, %v1687
    %v1689 = vmul.f32 %v1668, %v1539
    %v1690 = vmul.f32 %v1649, %v1669
    %v1691 = vadd.f32 %v1689, %v1690
    %v1692 = vtanh.pop %v1691
    %v1693 = vmul.f32 %v1688, %v1692
    %s1694 = scalar_lea.vmem [#allocation2], 192
    %v1695 = vld [vmem:[%s1694] sm:$0xff]
    %v1696 = vld [vmem:[%s1694 + $0x8] sm:$0xff]
    %v1697 = vld [vmem:[%s1694 + $0x10] sm:$0xff]
    %v1698 = vld [vmem:[%s1694 + $0x18] sm:$0xff]
    %1699 = vmatpush.xpose.msra.mxu0 %v724
    %1700 = vmatpush.xpose.msra.mxu0 %v723
    %1701 = vmatpush.xpose.msra.mxu0 %v722
    %1702 = vmatpush.xpose.msra.mxu0 %v721
    %1703 = vmatpush.xpose.msra.mxu0 %v720
    %1704 = vmatpush.xpose.msra.mxu0 %v719
    %1705 = vmatpush.xpose.msra.mxu0 %v718
    %1706 = vmatpush.xpose.msra.mxu0 %v717
    %1707 = vmatpush.xpose.msra.mxu0 %v716
    %1708 = vmatpush.xpose.msra.mxu0 %v715
    %1709 = vmatpush.xpose.msra.mxu0 %v714
    %1710 = vmatpush.xpose.msra.mxu0 %v713
    %1711 = vmatpush.xpose.msra.mxu0 %v712
    %1712 = vmatpush.xpose.msra.mxu0 %v711
    %1713 = vmatpush.xpose.msra.mxu0 %v710
    %1714 = vmatpush.xpose.msra.mxu0 %v709
    %1715 = vmatmul.f32.gmra.mxu0 %v1693
    %v1716 = vpop.f32.mrf.mxu0
    %v1717 = vadd.f32 %v775, %v1716
    %1718 = vdwg.mxu0
    %1719 = vmatpush.xpose.msra.mxu0 %v740
    %1720 = vmatpush.xpose.msra.mxu0 %v739
    %1721 = vmatpush.xpose.msra.mxu0 %v738
    %1722 = vmatpush.xpose.msra.mxu0 %v737
    %1723 = vmatpush.xpose.msra.mxu0 %v736
    %1724 = vmatpush.xpose.msra.mxu0 %v735
    %1725 = vmatpush.xpose.msra.mxu0 %v734
    %1726 = vmatpush.xpose.msra.mxu0 %v733
    %1727 = vmatpush.xpose.msra.mxu0 %v732
    %1728 = vmatpush.xpose.msra.mxu0 %v731
    %1729 = vmatpush.xpose.msra.mxu0 %v730
    %1730 = vmatpush.xpose.msra.mxu0 %v729
    %1731 = vmatpush.xpose.msra.mxu0 %v728
    %1732 = vmatpush.xpose.msra.mxu0 %v727
    %1733 = vmatpush.xpose.msra.mxu0 %v726
    %1734 = vmatpush.xpose.msra.mxu0 %v725
    %1735 = vmatmul.f32.gmra.mxu0 %v1693
    %v1736 = vpop.f32.mrf.mxu0
    %v1737 = vadd.f32 %v776, %v1736
    %1738 = vdwg.mxu0
    %1739 = vmatpush.xpose.msra.mxu0 %v756
    %1740 = vmatpush.xpose.msra.mxu0 %v755
    %1741 = vmatpush.xpose.msra.mxu0 %v754
    %1742 = vmatpush.xpose.msra.mxu0 %v753
    %1743 = vmatpush.xpose.msra.mxu0 %v752
    %1744 = vmatpush.xpose.msra.mxu0 %v751
    %1745 = vmatpush.xpose.msra.mxu0 %v750
    %1746 = vmatpush.xpose.msra.mxu0 %v749
    %1747 = vmatpush.xpose.msra.mxu0 %v748
    %1748 = vmatpush.xpose.msra.mxu0 %v747
    %1749 = vmatpush.xpose.msra.mxu0 %v746
    %1750 = vmatpush.xpose.msra.mxu0 %v745
    %1751 = vmatpush.xpose.msra.mxu0 %v744
    %1752 = vmatpush.xpose.msra.mxu0 %v743
    %1753 = vmatpush.xpose.msra.mxu0 %v742
    %1754 = vmatpush.xpose.msra.mxu0 %v741
    %1755 = vmatmul.f32.gmra.mxu0 %v1693
    %v1756 = vpop.f32.mrf.mxu0
    %v1757 = vadd.f32 %v777, %v1756
    %1758 = vdwg.mxu0
    %1759 = vmatpush.xpose.msra.mxu0 %v772
    %1760 = vmatpush.xpose.msra.mxu0 %v771
    %1761 = vmatpush.xpose.msra.mxu0 %v770
    %1762 = vmatpush.xpose.msra.mxu0 %v769
    %1763 = vmatpush.xpose.msra.mxu0 %v768
    %1764 = vmatpush.xpose.msra.mxu0 %v767
    %1765 = vmatpush.xpose.msra.mxu0 %v766
    %1766 = vmatpush.xpose.msra.mxu0 %v765
    %1767 = vmatpush.xpose.msra.mxu0 %v764
    %1768 = vmatpush.xpose.msra.mxu0 %v763
    %1769 = vmatpush.xpose.msra.mxu0 %v762
    %1770 = vmatpush.xpose.msra.mxu0 %v761
    %1771 = vmatpush.xpose.msra.mxu0 %v760
    %1772 = vmatpush.xpose.msra.mxu0 %v759
    %1773 = vmatpush.xpose.msra.mxu0 %v758
    %1774 = vmatpush.xpose.msra.mxu0 %v757
    %1775 = vmatmul.f32.gmra.mxu0 %v1693
    %v1776 = vpop.f32.mrf.mxu0
    %v1777 = vadd.f32 %v778, %v1776
    %1778 = vdwg.mxu0
    %v1779 = vadd.f32 %v1717, %v1695
    %v1780 = vadd.f32 %v1737, %v1696
    %v1781 = vadd.f32 %v1757, %v1697
    %v1782 = vadd.f32 %v1777, %v1698
    %v1783 = vxor.u32 %v1779, 2147483648
    %v1784 = vmul.f32 %v1783, 1.442695
    %v1785 = vpow.pop %v1784
    %v1786 = vadd.f32 %v1785, 1.0
    %v1787 = vrcp.pop %v1786
    %v1788 = vmul.f32 %v1786, %v1787
    %v1789 = vsub.f32 1.0, %v1788
    %v1790 = vmul.f32 %v1787, %v1789
    %v1791 = vadd.f32 %v1787, %v1790
    %vm1792 = vweird.f32 %v1786
    %vm1793 = vweird.f32 %v1787
    %vm1794 = vmor %vm1792, %vm1793
    %v1795 = vsel %vm1794, %v1787, %v1791
    %v1796 = vand.u32 2147483647, %v1786
    %vm1797 = vcmp.eq.f32.partialorder %v1796, 8.507059e+37
    %v1798 = vand.u32 %v1786, 2147483648
    %v1799 = vor.u32 1.1754944e-38, %v1798
    %v1800 = vsel %vm1797, %v1799, %v1795
    %v1801 = vmul.f32 1.0, %v1800
    %v1802 = vxor.u32 %v1780, 2147483648
    %v1803 = vmul.f32 %v1802, 1.442695
    %v1804 = vpow.pop %v1803
    %v1805 = vadd.f32 %v1804, 1.0
    %v1806 = vrcp.pop %v1805
    %v1807 = vmul.f32 %v1805, %v1806
    %v1808 = vsub.f32 1.0, %v1807
    %v1809 = vmul.f32 %v1806, %v1808
    %v1810 = vadd.f32 %v1806, %v1809
    %vm1811 = vweird.f32 %v1805
    %vm1812 = vweird.f32 %v1806
    %vm1813 = vmor %vm1811, %vm1812
    %v1814 = vsel %vm1813, %v1806, %v1810
    %v1815 = vand.u32 2147483647, %v1805
    %vm1816 = vcmp.eq.f32.partialorder %v1815, 8.507059e+37
    %v1817 = vand.u32 %v1805, 2147483648
    %v1818 = vor.u32 1.1754944e-38, %v1817
    %v1819 = vsel %vm1816, %v1818, %v1814
    %v1820 = vmul.f32 1.0, %v1819
    %v1821 = vtanh.pop %v1781
    %v1822 = vxor.u32 %v1782, 2147483648
    %v1823 = vmul.f32 %v1822, 1.442695
    %v1824 = vpow.pop %v1823
    %v1825 = vadd.f32 %v1824, 1.0
    %v1826 = vrcp.pop %v1825
    %v1827 = vmul.f32 %v1825, %v1826
    %v1828 = vsub.f32 1.0, %v1827
    %v1829 = vmul.f32 %v1826, %v1828
    %v1830 = vadd.f32 %v1826, %v1829
    %vm1831 = vweird.f32 %v1825
    %vm1832 = vweird.f32 %v1826
    %vm1833 = vmor %vm1831, %vm1832
    %v1834 = vsel %vm1833, %v1826, %v1830
    %v1835 = vand.u32 2147483647, %v1825
    %vm1836 = vcmp.eq.f32.partialorder %v1835, 8.507059e+37
    %v1837 = vand.u32 %v1825, 2147483648
    %v1838 = vor.u32 1.1754944e-38, %v1837
    %v1839 = vsel %vm1836, %v1838, %v1834
    %v1840 = vmul.f32 1.0, %v1839
    %v1841 = vmul.f32 %v1820, %v1691
    %v1842 = vmul.f32 %v1801, %v1821
    %v1843 = vadd.f32 %v1841, %v1842
    %v1844 = vtanh.pop %v1843
    %v1845 = vmul.f32 %v1840, %v1844
    %s1846 = scalar_lea.vmem [#allocation2], 224
    %v1847 = vld [vmem:[%s1846] sm:$0xff]
    %v1848 = vld [vmem:[%s1846 + $0x8] sm:$0xff]
    %v1849 = vld [vmem:[%s1846 + $0x10] sm:$0xff]
    %v1850 = vld [vmem:[%s1846 + $0x18] sm:$0xff]
    %1851 = vmatpush.xpose.msra.mxu0 %v724
    %1852 = vmatpush.xpose.msra.mxu0 %v723
    %1853 = vmatpush.xpose.msra.mxu0 %v722
    %1854 = vmatpush.xpose.msra.mxu0 %v721
    %1855 = vmatpush.xpose.msra.mxu0 %v720
    %1856 = vmatpush.xpose.msra.mxu0 %v719
    %1857 = vmatpush.xpose.msra.mxu0 %v718
    %1858 = vmatpush.xpose.msra.mxu0 %v717
    %1859 = vmatpush.xpose.msra.mxu0 %v716
    %1860 = vmatpush.xpose.msra.mxu0 %v715
    %1861 = vmatpush.xpose.msra.mxu0 %v714
    %1862 = vmatpush.xpose.msra.mxu0 %v713
    %1863 = vmatpush.xpose.msra.mxu0 %v712
    %1864 = vmatpush.xpose.msra.mxu0 %v711
    %1865 = vmatpush.xpose.msra.mxu0 %v710
    %1866 = vmatpush.xpose.msra.mxu0 %v709
    %1867 = vmatmul.f32.gmra.mxu0 %v1845
    %v1868 = vpop.f32.mrf.mxu0
    %v1869 = vadd.f32 %v775, %v1868
    %1870 = vdwg.mxu0
    %1871 = vmatpush.xpose.msra.mxu0 %v740
    %1872 = vmatpush.xpose.msra.mxu0 %v739
    %1873 = vmatpush.xpose.msra.mxu0 %v738
    %1874 = vmatpush.xpose.msra.mxu0 %v737
    %1875 = vmatpush.xpose.msra.mxu0 %v736
    %1876 = vmatpush.xpose.msra.mxu0 %v735
    %1877 = vmatpush.xpose.msra.mxu0 %v734
    %1878 = vmatpush.xpose.msra.mxu0 %v733
    %1879 = vmatpush.xpose.msra.mxu0 %v732
    %1880 = vmatpush.xpose.msra.mxu0 %v731
    %1881 = vmatpush.xpose.msra.mxu0 %v730
    %1882 = vmatpush.xpose.msra.mxu0 %v729
    %1883 = vmatpush.xpose.msra.mxu0 %v728
    %1884 = vmatpush.xpose.msra.mxu0 %v727
    %1885 = vmatpush.xpose.msra.mxu0 %v726
    %1886 = vmatpush.xpose.msra.mxu0 %v725
    %1887 = vmatmul.f32.gmra.mxu0 %v1845
    %v1888 = vpop.f32.mrf.mxu0
    %v1889 = vadd.f32 %v776, %v1888
    %1890 = vdwg.mxu0
    %1891 = vmatpush.xpose.msra.mxu0 %v756
    %1892 = vmatpush.xpose.msra.mxu0 %v755
    %1893 = vmatpush.xpose.msra.mxu0 %v754
    %1894 = vmatpush.xpose.msra.mxu0 %v753
    %1895 = vmatpush.xpose.msra.mxu0 %v752
    %1896 = vmatpush.xpose.msra.mxu0 %v751
    %1897 = vmatpush.xpose.msra.mxu0 %v750
    %1898 = vmatpush.xpose.msra.mxu0 %v749
    %1899 = vmatpush.xpose.msra.mxu0 %v748
    %1900 = vmatpush.xpose.msra.mxu0 %v747
    %1901 = vmatpush.xpose.msra.mxu0 %v746
    %1902 = vmatpush.xpose.msra.mxu0 %v745
    %1903 = vmatpush.xpose.msra.mxu0 %v744
    %1904 = vmatpush.xpose.msra.mxu0 %v743
    %1905 = vmatpush.xpose.msra.mxu0 %v742
    %1906 = vmatpush.xpose.msra.mxu0 %v741
    %1907 = vmatmul.f32.gmra.mxu0 %v1845
    %v1908 = vpop.f32.mrf.mxu0
    %v1909 = vadd.f32 %v777, %v1908
    %1910 = vdwg.mxu0
    %1911 = vmatpush.xpose.msra.mxu0 %v772
    %1912 = vmatpush.xpose.msra.mxu0 %v771
    %1913 = vmatpush.xpose.msra.mxu0 %v770
    %1914 = vmatpush.xpose.msra.mxu0 %v769
    %1915 = vmatpush.xpose.msra.mxu0 %v768
    %1916 = vmatpush.xpose.msra.mxu0 %v767
    %1917 = vmatpush.xpose.msra.mxu0 %v766
    %1918 = vmatpush.xpose.msra.mxu0 %v765
    %1919 = vmatpush.xpose.msra.mxu0 %v764
    %1920 = vmatpush.xpose.msra.mxu0 %v763
    %1921 = vmatpush.xpose.msra.mxu0 %v762
    %1922 = vmatpush.xpose.msra.mxu0 %v761
    %1923 = vmatpush.xpose.msra.mxu0 %v760
    %1924 = vmatpush.xpose.msra.mxu0 %v759
    %1925 = vmatpush.xpose.msra.mxu0 %v758
    %1926 = vmatpush.xpose.msra.mxu0 %v757
    %1927 = vmatmul.f32.gmra.mxu0 %v1845
    %v1928 = vpop.f32.mrf.mxu0
    %v1929 = vadd.f32 %v778, %v1928
    %1930 = vdwg.mxu0
    %v1931 = vadd.f32 %v1869, %v1847
    %v1932 = vadd.f32 %v1889, %v1848
    %v1933 = vadd.f32 %v1909, %v1849
    %v1934 = vadd.f32 %v1929, %v1850
    %v1935 = vxor.u32 %v1931, 2147483648
    %v1936 = vmul.f32 %v1935, 1.442695
    %v1937 = vpow.pop %v1936
    %v1938 = vadd.f32 %v1937, 1.0
    %v1939 = vrcp.pop %v1938
    %v1940 = vmul.f32 %v1938, %v1939
    %v1941 = vsub.f32 1.0, %v1940
    %v1942 = vmul.f32 %v1939, %v1941
    %v1943 = vadd.f32 %v1939, %v1942
    %vm1944 = vweird.f32 %v1938
    %vm1945 = vweird.f32 %v1939
    %vm1946 = vmor %vm1944, %vm1945
    %v1947 = vsel %vm1946, %v1939, %v1943
    %v1948 = vand.u32 2147483647, %v1938
    %vm1949 = vcmp.eq.f32.partialorder %v1948, 8.507059e+37
    %v1950 = vand.u32 %v1938, 2147483648
    %v1951 = vor.u32 1.1754944e-38, %v1950
    %v1952 = vsel %vm1949, %v1951, %v1947
    %v1953 = vmul.f32 1.0, %v1952
    %v1954 = vxor.u32 %v1932, 2147483648
    %v1955 = vmul.f32 %v1954, 1.442695
    %v1956 = vpow.pop %v1955
    %v1957 = vadd.f32 %v1956, 1.0
    %v1958 = vrcp.pop %v1957
    %v1959 = vmul.f32 %v1957, %v1958
    %v1960 = vsub.f32 1.0, %v1959
    %v1961 = vmul.f32 %v1958, %v1960
    %v1962 = vadd.f32 %v1958, %v1961
    %vm1963 = vweird.f32 %v1957
    %vm1964 = vweird.f32 %v1958
    %vm1965 = vmor %vm1963, %vm1964
    %v1966 = vsel %vm1965, %v1958, %v1962
    %v1967 = vand.u32 2147483647, %v1957
    %vm1968 = vcmp.eq.f32.partialorder %v1967, 8.507059e+37
    %v1969 = vand.u32 %v1957, 2147483648
    %v1970 = vor.u32 1.1754944e-38, %v1969
    %v1971 = vsel %vm1968, %v1970, %v1966
    %v1972 = vmul.f32 1.0, %v1971
    %v1973 = vtanh.pop %v1933
    %v1974 = vxor.u32 %v1934, 2147483648
    %v1975 = vmul.f32 %v1974, 1.442695
    %v1976 = vpow.pop %v1975
    %v1977 = vadd.f32 %v1976, 1.0
    %v1978 = vrcp.pop %v1977
    %v1979 = vmul.f32 %v1977, %v1978
    %v1980 = vsub.f32 1.0, %v1979
    %v1981 = vmul.f32 %v1978, %v1980
    %v1982 = vadd.f32 %v1978, %v1981
    %vm1983 = vweird.f32 %v1977
    %vm1984 = vweird.f32 %v1978
    %vm1985 = vmor %vm1983, %vm1984
    %v1986 = vsel %vm1985, %v1978, %v1982
    %v1987 = vand.u32 2147483647, %v1977
    %vm1988 = vcmp.eq.f32.partialorder %v1987, 8.507059e+37
    %v1989 = vand.u32 %v1977, 2147483648
    %v1990 = vor.u32 1.1754944e-38, %v1989
    %v1991 = vsel %vm1988, %v1990, %v1986
    %v1992 = vmul.f32 1.0, %v1991
    %v1993 = vmul.f32 %v1972, %v1843
    %v1994 = vmul.f32 %v1953, %v1973
    %v1995 = vadd.f32 %v1993, %v1994
    %v1996 = vtanh.pop %v1995
    %v1997 = vmul.f32 %v1992, %v1996
    %v1998 = vld [vmem:[%s680] sm:$0xff]
    %v1999 = vld [vmem:[%s680 + $0x8] sm:$0xff]
    %v2000 = vld [vmem:[%s680 + $0x10] sm:$0xff]
    %v2001 = vld [vmem:[%s680 + $0x18] sm:$0xff]
    %2002 = vmatpush.xpose.msra.mxu0 %v724
    %2003 = vmatpush.xpose.msra.mxu0 %v723
    %2004 = vmatpush.xpose.msra.mxu0 %v722
    %2005 = vmatpush.xpose.msra.mxu0 %v721
    %2006 = vmatpush.xpose.msra.mxu0 %v720
    %2007 = vmatpush.xpose.msra.mxu0 %v719
    %2008 = vmatpush.xpose.msra.mxu0 %v718
    %2009 = vmatpush.xpose.msra.mxu0 %v717
    %2010 = vmatpush.xpose.msra.mxu0 %v716
    %2011 = vmatpush.xpose.msra.mxu0 %v715
    %2012 = vmatpush.xpose.msra.mxu0 %v714
    %2013 = vmatpush.xpose.msra.mxu0 %v713
    %2014 = vmatpush.xpose.msra.mxu0 %v712
    %2015 = vmatpush.xpose.msra.mxu0 %v711
    %2016 = vmatpush.xpose.msra.mxu0 %v710
    %2017 = vmatpush.xpose.msra.mxu0 %v709
    %2018 = vmatmul.f32.gmra.mxu0 %v1997
    %v2019 = vpop.f32.mrf.mxu0
    %v2020 = vadd.f32 %v775, %v2019
    %2021 = vdwg.mxu0
    %2022 = vmatpush.xpose.msra.mxu0 %v740
    %2023 = vmatpush.xpose.msra.mxu0 %v739
    %2024 = vmatpush.xpose.msra.mxu0 %v738
    %2025 = vmatpush.xpose.msra.mxu0 %v737
    %2026 = vmatpush.xpose.msra.mxu0 %v736
    %2027 = vmatpush.xpose.msra.mxu0 %v735
    %2028 = vmatpush.xpose.msra.mxu0 %v734
    %2029 = vmatpush.xpose.msra.mxu0 %v733
    %2030 = vmatpush.xpose.msra.mxu0 %v732
    %2031 = vmatpush.xpose.msra.mxu0 %v731
    %2032 = vmatpush.xpose.msra.mxu0 %v730
    %2033 = vmatpush.xpose.msra.mxu0 %v729
    %2034 = vmatpush.xpose.msra.mxu0 %v728
    %2035 = vmatpush.xpose.msra.mxu0 %v727
    %2036 = vmatpush.xpose.msra.mxu0 %v726
    %2037 = vmatpush.xpose.msra.mxu0 %v725
    %2038 = vmatmul.f32.gmra.mxu0 %v1997
    %v2039 = vpop.f32.mrf.mxu0
    %v2040 = vadd.f32 %v776, %v2039
    %2041 = vdwg.mxu0
    %2042 = vmatpush.xpose.msra.mxu0 %v756
    %2043 = vmatpush.xpose.msra.mxu0 %v755
    %2044 = vmatpush.xpose.msra.mxu0 %v754
    %2045 = vmatpush.xpose.msra.mxu0 %v753
    %2046 = vmatpush.xpose.msra.mxu0 %v752
    %2047 = vmatpush.xpose.msra.mxu0 %v751
    %2048 = vmatpush.xpose.msra.mxu0 %v750
    %2049 = vmatpush.xpose.msra.mxu0 %v749
    %2050 = vmatpush.xpose.msra.mxu0 %v748
    %2051 = vmatpush.xpose.msra.mxu0 %v747
    %2052 = vmatpush.xpose.msra.mxu0 %v746
    %2053 = vmatpush.xpose.msra.mxu0 %v745
    %2054 = vmatpush.xpose.msra.mxu0 %v744
    %2055 = vmatpush.xpose.msra.mxu0 %v743
    %2056 = vmatpush.xpose.msra.mxu0 %v742
    %2057 = vmatpush.xpose.msra.mxu0 %v741
    %2058 = vmatmul.f32.gmra.mxu0 %v1997
    %v2059 = vpop.f32.mrf.mxu0
    %v2060 = vadd.f32 %v777, %v2059
    %2061 = vdwg.mxu0
    %2062 = vmatpush.xpose.msra.mxu0 %v772
    %2063 = vmatpush.xpose.msra.mxu0 %v771
    %2064 = vmatpush.xpose.msra.mxu0 %v770
    %2065 = vmatpush.xpose.msra.mxu0 %v769
    %2066 = vmatpush.xpose.msra.mxu0 %v768
    %2067 = vmatpush.xpose.msra.mxu0 %v767
    %2068 = vmatpush.xpose.msra.mxu0 %v766
    %2069 = vmatpush.xpose.msra.mxu0 %v765
    %2070 = vmatpush.xpose.msra.mxu0 %v764
    %2071 = vmatpush.xpose.msra.mxu0 %v763
    %2072 = vmatpush.xpose.msra.mxu0 %v762
    %2073 = vmatpush.xpose.msra.mxu0 %v761
    %2074 = vmatpush.xpose.msra.mxu0 %v760
    %2075 = vmatpush.xpose.msra.mxu0 %v759
    %2076 = vmatpush.xpose.msra.mxu0 %v758
    %2077 = vmatpush.xpose.msra.mxu0 %v757
    %2078 = vmatmul.f32.gmra.mxu0 %v1997
    %v2079 = vpop.f32.mrf.mxu0
    %v2080 = vadd.f32 %v778, %v2079
    %2081 = vdwg.mxu0
    %v2082 = vadd.f32 %v2020, %v1998
    %v2083 = vadd.f32 %v2040, %v1999
    %v2084 = vadd.f32 %v2060, %v2000
    %v2085 = vadd.f32 %v2080, %v2001
    %v2086 = vxor.u32 %v2082, 2147483648
    %v2087 = vmul.f32 %v2086, 1.442695
    %v2088 = vpow.pop %v2087
    %v2089 = vadd.f32 %v2088, 1.0
    %v2090 = vrcp.pop %v2089
    %v2091 = vmul.f32 %v2089, %v2090
    %v2092 = vsub.f32 1.0, %v2091
    %v2093 = vmul.f32 %v2090, %v2092
    %v2094 = vadd.f32 %v2090, %v2093
    %vm2095 = vweird.f32 %v2089
    %vm2096 = vweird.f32 %v2090
    %vm2097 = vmor %vm2095, %vm2096
    %v2098 = vsel %vm2097, %v2090, %v2094
    %v2099 = vand.u32 2147483647, %v2089
    %vm2100 = vcmp.eq.f32.partialorder %v2099, 8.507059e+37
    %v2101 = vand.u32 %v2089, 2147483648
    %v2102 = vor.u32 1.1754944e-38, %v2101
    %v2103 = vsel %vm2100, %v2102, %v2098
    %v2104 = vmul.f32 1.0, %v2103
    %v2105 = vxor.u32 %v2083, 2147483648
    %v2106 = vmul.f32 %v2105, 1.442695
    %v2107 = vpow.pop %v2106
    %v2108 = vadd.f32 %v2107, 1.0
    %v2109 = vrcp.pop %v2108
    %v2110 = vmul.f32 %v2108, %v2109
    %v2111 = vsub.f32 1.0, %v2110
    %v2112 = vmul.f32 %v2109, %v2111
    %v2113 = vadd.f32 %v2109, %v2112
    %vm2114 = vweird.f32 %v2108
    %vm2115 = vweird.f32 %v2109
    %vm2116 = vmor %vm2114, %vm2115
    %v2117 = vsel %vm2116, %v2109, %v2113
    %v2118 = vand.u32 2147483647, %v2108
    %vm2119 = vcmp.eq.f32.partialorder %v2118, 8.507059e+37
    %v2120 = vand.u32 %v2108, 2147483648
    %v2121 = vor.u32 1.1754944e-38, %v2120
    %v2122 = vsel %vm2119, %v2121, %v2117
    %v2123 = vmul.f32 1.0, %v2122
    %v2124 = vtanh.pop %v2084
    %v2125 = vxor.u32 %v2085, 2147483648
    %v2126 = vmul.f32 %v2125, 1.442695
    %v2127 = vpow.pop %v2126
    %v2128 = vadd.f32 %v2127, 1.0
    %v2129 = vrcp.pop %v2128
    %v2130 = vmul.f32 %v2128, %v2129
    %v2131 = vsub.f32 1.0, %v2130
    %v2132 = vmul.f32 %v2129, %v2131
    %v2133 = vadd.f32 %v2129, %v2132
    %vm2134 = vweird.f32 %v2128
    %vm2135 = vweird.f32 %v2129
    %vm2136 = vmor %vm2134, %vm2135
    %v2137 = vsel %vm2136, %v2129, %v2133
    %v2138 = vand.u32 2147483647, %v2128
    %vm2139 = vcmp.eq.f32.partialorder %v2138, 8.507059e+37
    %v2140 = vand.u32 %v2128, 2147483648
    %v2141 = vor.u32 1.1754944e-38, %v2140
    %v2142 = vsel %vm2139, %v2141, %v2137
    %v2143 = vmul.f32 1.0, %v2142
    %v2144 = vmul.f32 %v2123, %v1995
    %v2145 = vmul.f32 %v2104, %v2124
    %v2146 = vadd.f32 %v2144, %v2145
    %v2147 = vtanh.pop %v2146
    %v2148 = vmul.f32 %v2143, %v2147
    %2149 = vst [vmem:[%s6] sm:$0xff] %v2148
    %s2150 = scalar_lea.vmem [#allocation2], 288
    %v2151 = vld [vmem:[%s2150] sm:$0xff]
    %v2152 = vld [vmem:[%s2150 + $0x8] sm:$0xff]
    %v2153 = vld [vmem:[%s2150 + $0x10] sm:$0xff]
    %v2154 = vld [vmem:[%s2150 + $0x18] sm:$0xff]
    %2155 = vmatpush.xpose.msra.mxu0 %v724
    %2156 = vmatpush.xpose.msra.mxu0 %v723
    %2157 = vmatpush.xpose.msra.mxu0 %v722
    %2158 = vmatpush.xpose.msra.mxu0 %v721
    %2159 = vmatpush.xpose.msra.mxu0 %v720
    %2160 = vmatpush.xpose.msra.mxu0 %v719
    %2161 = vmatpush.xpose.msra.mxu0 %v718
    %2162 = vmatpush.xpose.msra.mxu0 %v717
    %2163 = vmatpush.xpose.msra.mxu0 %v716
    %2164 = vmatpush.xpose.msra.mxu0 %v715
    %2165 = vmatpush.xpose.msra.mxu0 %v714
    %2166 = vmatpush.xpose.msra.mxu0 %v713
    %2167 = vmatpush.xpose.msra.mxu0 %v712
    %2168 = vmatpush.xpose.msra.mxu0 %v711
    %2169 = vmatpush.xpose.msra.mxu0 %v710
    %2170 = vmatpush.xpose.msra.mxu0 %v709
    %2171 = vmatmul.f32.gmra.mxu0 %v2148
    %v2172 = vpop.f32.mrf.mxu0
    %v2173 = vadd.f32 %v775, %v2172
    %2174 = vdwg.mxu0
    %2175 = vmatpush.xpose.msra.mxu0 %v740
    %2176 = vmatpush.xpose.msra.mxu0 %v739
    %2177 = vmatpush.xpose.msra.mxu0 %v738
    %2178 = vmatpush.xpose.msra.mxu0 %v737
    %2179 = vmatpush.xpose.msra.mxu0 %v736
    %2180 = vmatpush.xpose.msra.mxu0 %v735
    %2181 = vmatpush.xpose.msra.mxu0 %v734
    %2182 = vmatpush.xpose.msra.mxu0 %v733
    %2183 = vmatpush.xpose.msra.mxu0 %v732
    %2184 = vmatpush.xpose.msra.mxu0 %v731
    %2185 = vmatpush.xpose.msra.mxu0 %v730
    %2186 = vmatpush.xpose.msra.mxu0 %v729
    %2187 = vmatpush.xpose.msra.mxu0 %v728
    %2188 = vmatpush.xpose.msra.mxu0 %v727
    %2189 = vmatpush.xpose.msra.mxu0 %v726
    %2190 = vmatpush.xpose.msra.mxu0 %v725
    %2191 = vmatmul.f32.gmra.mxu0 %v2148
    %v2192 = vpop.f32.mrf.mxu0
    %v2193 = vadd.f32 %v776, %v2192
    %2194 = vdwg.mxu0
    %2195 = vmatpush.xpose.msra.mxu0 %v756
    %2196 = vmatpush.xpose.msra.mxu0 %v755
    %2197 = vmatpush.xpose.msra.mxu0 %v754
    %2198 = vmatpush.xpose.msra.mxu0 %v753
    %2199 = vmatpush.xpose.msra.mxu0 %v752
    %2200 = vmatpush.xpose.msra.mxu0 %v751
    %2201 = vmatpush.xpose.msra.mxu0 %v750
    %2202 = vmatpush.xpose.msra.mxu0 %v749
    %2203 = vmatpush.xpose.msra.mxu0 %v748
    %2204 = vmatpush.xpose.msra.mxu0 %v747
    %2205 = vmatpush.xpose.msra.mxu0 %v746
    %2206 = vmatpush.xpose.msra.mxu0 %v745
    %2207 = vmatpush.xpose.msra.mxu0 %v744
    %2208 = vmatpush.xpose.msra.mxu0 %v743
    %2209 = vmatpush.xpose.msra.mxu0 %v742
    %2210 = vmatpush.xpose.msra.mxu0 %v741
    %2211 = vmatmul.f32.gmra.mxu0 %v2148
    %v2212 = vpop.f32.mrf.mxu0
    %v2213 = vadd.f32 %v777, %v2212
    %2214 = vdwg.mxu0
    %2215 = vmatpush.xpose.msra.mxu0 %v772
    %2216 = vmatpush.xpose.msra.mxu0 %v771
    %2217 = vmatpush.xpose.msra.mxu0 %v770
    %2218 = vmatpush.xpose.msra.mxu0 %v769
    %2219 = vmatpush.xpose.msra.mxu0 %v768
    %2220 = vmatpush.xpose.msra.mxu0 %v767
    %2221 = vmatpush.xpose.msra.mxu0 %v766
    %2222 = vmatpush.xpose.msra.mxu0 %v765
    %2223 = vmatpush.xpose.msra.mxu0 %v764
    %2224 = vmatpush.xpose.msra.mxu0 %v763
    %2225 = vmatpush.xpose.msra.mxu0 %v762
    %2226 = vmatpush.xpose.msra.mxu0 %v761
    %2227 = vmatpush.xpose.msra.mxu0 %v760
    %2228 = vmatpush.xpose.msra.mxu0 %v759
    %2229 = vmatpush.xpose.msra.mxu0 %v758
    %2230 = vmatpush.xpose.msra.mxu0 %v757
    %2231 = vmatmul.f32.gmra.mxu0 %v2148
    %v2232 = vpop.f32.mrf.mxu0
    %v2233 = vadd.f32 %v778, %v2232
    %2234 = vdwg.mxu0
    %v2235 = vadd.f32 %v2173, %v2151
    %v2236 = vadd.f32 %v2193, %v2152
    %v2237 = vadd.f32 %v2213, %v2153
    %v2238 = vadd.f32 %v2233, %v2154
    %v2239 = vxor.u32 %v2235, 2147483648
    %v2240 = vmul.f32 %v2239, 1.442695
    %v2241 = vpow.pop %v2240
    %v2242 = vadd.f32 %v2241, 1.0
    %v2243 = vrcp.pop %v2242
    %v2244 = vmul.f32 %v2242, %v2243
    %v2245 = vsub.f32 1.0, %v2244
    %v2246 = vmul.f32 %v2243, %v2245
    %v2247 = vadd.f32 %v2243, %v2246
    %vm2248 = vweird.f32 %v2242
    %vm2249 = vweird.f32 %v2243
    %vm2250 = vmor %vm2248, %vm2249
    %v2251 = vsel %vm2250, %v2243, %v2247
    %v2252 = vand.u32 2147483647, %v2242
    %vm2253 = vcmp.eq.f32.partialorder %v2252, 8.507059e+37
    %v2254 = vand.u32 %v2242, 2147483648
    %v2255 = vor.u32 1.1754944e-38, %v2254
    %v2256 = vsel %vm2253, %v2255, %v2251
    %v2257 = vmul.f32 1.0, %v2256
    %v2258 = vxor.u32 %v2236, 2147483648
    %v2259 = vmul.f32 %v2258, 1.442695
    %v2260 = vpow.pop %v2259
    %v2261 = vadd.f32 %v2260, 1.0
    %v2262 = vrcp.pop %v2261
    %v2263 = vmul.f32 %v2261, %v2262
    %v2264 = vsub.f32 1.0, %v2263
    %v2265 = vmul.f32 %v2262, %v2264
    %v2266 = vadd.f32 %v2262, %v2265
    %vm2267 = vweird.f32 %v2261
    %vm2268 = vweird.f32 %v2262
    %vm2269 = vmor %vm2267, %vm2268
    %v2270 = vsel %vm2269, %v2262, %v2266
    %v2271 = vand.u32 2147483647, %v2261
    %vm2272 = vcmp.eq.f32.partialorder %v2271, 8.507059e+37
    %v2273 = vand.u32 %v2261, 2147483648
    %v2274 = vor.u32 1.1754944e-38, %v2273
    %v2275 = vsel %vm2272, %v2274, %v2270
    %v2276 = vmul.f32 1.0, %v2275
    %v2277 = vtanh.pop %v2237
    %v2278 = vxor.u32 %v2238, 2147483648
    %v2279 = vmul.f32 %v2278, 1.442695
    %v2280 = vpow.pop %v2279
    %v2281 = vadd.f32 %v2280, 1.0
    %v2282 = vrcp.pop %v2281
    %v2283 = vmul.f32 %v2281, %v2282
    %v2284 = vsub.f32 1.0, %v2283
    %v2285 = vmul.f32 %v2282, %v2284
    %v2286 = vadd.f32 %v2282, %v2285
    %vm2287 = vweird.f32 %v2281
    %vm2288 = vweird.f32 %v2282
    %vm2289 = vmor %vm2287, %vm2288
    %v2290 = vsel %vm2289, %v2282, %v2286
    %v2291 = vand.u32 2147483647, %v2281
    %vm2292 = vcmp.eq.f32.partialorder %v2291, 8.507059e+37
    %v2293 = vand.u32 %v2281, 2147483648
    %v2294 = vor.u32 1.1754944e-38, %v2293
    %v2295 = vsel %vm2292, %v2294, %v2290
    %v2296 = vmul.f32 1.0, %v2295
    %v2297 = vmul.f32 %v2276, %v2146
    %v2298 = vmul.f32 %v2257, %v2277
    %v2299 = vadd.f32 %v2297, %v2298
    %v2300 = vtanh.pop %v2299
    %v2301 = vmul.f32 %v2296, %v2300
    %s2302 = scalar_lea.vmem %s6, 8
    %2303 = vst [vmem:[%s2302] sm:$0xff] %v2301
    %s2304 = scalar_lea.vmem [#allocation2], 320
    %v2305 = vld [vmem:[%s2304] sm:$0xff]
    %v2306 = vld [vmem:[%s2304 + $0x8] sm:$0xff]
    %v2307 = vld [vmem:[%s2304 + $0x10] sm:$0xff]
    %v2308 = vld [vmem:[%s2304 + $0x18] sm:$0xff]
    %2309 = vmatpush.xpose.msra.mxu0 %v724
    %2310 = vmatpush.xpose.msra.mxu0 %v723
    %2311 = vmatpush.xpose.msra.mxu0 %v722
    %2312 = vmatpush.xpose.msra.mxu0 %v721
    %2313 = vmatpush.xpose.msra.mxu0 %v720
    %2314 = vmatpush.xpose.msra.mxu0 %v719
    %2315 = vmatpush.xpose.msra.mxu0 %v718
    %2316 = vmatpush.xpose.msra.mxu0 %v717
    %2317 = vmatpush.xpose.msra.mxu0 %v716
    %2318 = vmatpush.xpose.msra.mxu0 %v715
    %2319 = vmatpush.xpose.msra.mxu0 %v714
    %2320 = vmatpush.xpose.msra.mxu0 %v713
    %2321 = vmatpush.xpose.msra.mxu0 %v712
    %2322 = vmatpush.xpose.msra.mxu0 %v711
    %2323 = vmatpush.xpose.msra.mxu0 %v710
    %2324 = vmatpush.xpose.msra.mxu0 %v709
    %2325 = vmatmul.f32.gmra.mxu0 %v2301
    %v2326 = vpop.f32.mrf.mxu0
    %v2327 = vadd.f32 %v775, %v2326
    %2328 = vdwg.mxu0
    %2329 = vmatpush.xpose.msra.mxu0 %v740
    %2330 = vmatpush.xpose.msra.mxu0 %v739
    %2331 = vmatpush.xpose.msra.mxu0 %v738
    %2332 = vmatpush.xpose.msra.mxu0 %v737
    %2333 = vmatpush.xpose.msra.mxu0 %v736
    %2334 = vmatpush.xpose.msra.mxu0 %v735
    %2335 = vmatpush.xpose.msra.mxu0 %v734
    %2336 = vmatpush.xpose.msra.mxu0 %v733
    %2337 = vmatpush.xpose.msra.mxu0 %v732
    %2338 = vmatpush.xpose.msra.mxu0 %v731
    %2339 = vmatpush.xpose.msra.mxu0 %v730
    %2340 = vmatpush.xpose.msra.mxu0 %v729
    %2341 = vmatpush.xpose.msra.mxu0 %v728
    %2342 = vmatpush.xpose.msra.mxu0 %v727
    %2343 = vmatpush.xpose.msra.mxu0 %v726
    %2344 = vmatpush.xpose.msra.mxu0 %v725
    %2345 = vmatmul.f32.gmra.mxu0 %v2301
    %v2346 = vpop.f32.mrf.mxu0
    %v2347 = vadd.f32 %v776, %v2346
    %2348 = vdwg.mxu0
    %2349 = vmatpush.xpose.msra.mxu0 %v756
    %2350 = vmatpush.xpose.msra.mxu0 %v755
    %2351 = vmatpush.xpose.msra.mxu0 %v754
    %2352 = vmatpush.xpose.msra.mxu0 %v753
    %2353 = vmatpush.xpose.msra.mxu0 %v752
    %2354 = vmatpush.xpose.msra.mxu0 %v751
    %2355 = vmatpush.xpose.msra.mxu0 %v750
    %2356 = vmatpush.xpose.msra.mxu0 %v749
    %2357 = vmatpush.xpose.msra.mxu0 %v748
    %2358 = vmatpush.xpose.msra.mxu0 %v747
    %2359 = vmatpush.xpose.msra.mxu0 %v746
    %2360 = vmatpush.xpose.msra.mxu0 %v745
    %2361 = vmatpush.xpose.msra.mxu0 %v744
    %2362 = vmatpush.xpose.msra.mxu0 %v743
    %2363 = vmatpush.xpose.msra.mxu0 %v742
    %2364 = vmatpush.xpose.msra.mxu0 %v741
    %2365 = vmatmul.f32.gmra.mxu0 %v2301
    %v2366 = vpop.f32.mrf.mxu0
    %v2367 = vadd.f32 %v777, %v2366
    %2368 = vdwg.mxu0
    %2369 = vmatpush.xpose.msra.mxu0 %v772
    %2370 = vmatpush.xpose.msra.mxu0 %v771
    %2371 = vmatpush.xpose.msra.mxu0 %v770
    %2372 = vmatpush.xpose.msra.mxu0 %v769
    %2373 = vmatpush.xpose.msra.mxu0 %v768
    %2374 = vmatpush.xpose.msra.mxu0 %v767
    %2375 = vmatpush.xpose.msra.mxu0 %v766
    %2376 = vmatpush.xpose.msra.mxu0 %v765
    %2377 = vmatpush.xpose.msra.mxu0 %v764
    %2378 = vmatpush.xpose.msra.mxu0 %v763
    %2379 = vmatpush.xpose.msra.mxu0 %v762
    %2380 = vmatpush.xpose.msra.mxu0 %v761
    %2381 = vmatpush.xpose.msra.mxu0 %v760
    %2382 = vmatpush.xpose.msra.mxu0 %v759
    %2383 = vmatpush.xpose.msra.mxu0 %v758
    %2384 = vmatpush.xpose.msra.mxu0 %v757
    %2385 = vmatmul.f32.gmra.mxu0 %v2301
    %v2386 = vpop.f32.mrf.mxu0
    %v2387 = vadd.f32 %v778, %v2386
    %2388 = vdwg.mxu0
    %v2389 = vadd.f32 %v2327, %v2305
    %v2390 = vadd.f32 %v2347, %v2306
    %v2391 = vadd.f32 %v2367, %v2307
    %v2392 = vadd.f32 %v2387, %v2308
    %v2393 = vxor.u32 %v2389, 2147483648
    %v2394 = vmul.f32 %v2393, 1.442695
    %v2395 = vpow.pop %v2394
    %v2396 = vadd.f32 %v2395, 1.0
    %v2397 = vrcp.pop %v2396
    %v2398 = vmul.f32 %v2396, %v2397
    %v2399 = vsub.f32 1.0, %v2398
    %v2400 = vmul.f32 %v2397, %v2399
    %v2401 = vadd.f32 %v2397, %v2400
    %vm2402 = vweird.f32 %v2396
    %vm2403 = vweird.f32 %v2397
    %vm2404 = vmor %vm2402, %vm2403
    %v2405 = vsel %vm2404, %v2397, %v2401
    %v2406 = vand.u32 2147483647, %v2396
    %vm2407 = vcmp.eq.f32.partialorder %v2406, 8.507059e+37
    %v2408 = vand.u32 %v2396, 2147483648
    %v2409 = vor.u32 1.1754944e-38, %v2408
    %v2410 = vsel %vm2407, %v2409, %v2405
    %v2411 = vmul.f32 1.0, %v2410
    %v2412 = vxor.u32 %v2390, 2147483648
    %v2413 = vmul.f32 %v2412, 1.442695
    %v2414 = vpow.pop %v2413
    %v2415 = vadd.f32 %v2414, 1.0
    %v2416 = vrcp.pop %v2415
    %v2417 = vmul.f32 %v2415, %v2416
    %v2418 = vsub.f32 1.0, %v2417
    %v2419 = vmul.f32 %v2416, %v2418
    %v2420 = vadd.f32 %v2416, %v2419
    %vm2421 = vweird.f32 %v2415
    %vm2422 = vweird.f32 %v2416
    %vm2423 = vmor %vm2421, %vm2422
    %v2424 = vsel %vm2423, %v2416, %v2420
    %v2425 = vand.u32 2147483647, %v2415
    %vm2426 = vcmp.eq.f32.partialorder %v2425, 8.507059e+37
    %v2427 = vand.u32 %v2415, 2147483648
    %v2428 = vor.u32 1.1754944e-38, %v2427
    %v2429 = vsel %vm2426, %v2428, %v2424
    %v2430 = vmul.f32 1.0, %v2429
    %v2431 = vtanh.pop %v2391
    %v2432 = vxor.u32 %v2392, 2147483648
    %v2433 = vmul.f32 %v2432, 1.442695
    %v2434 = vpow.pop %v2433
    %v2435 = vadd.f32 %v2434, 1.0
    %v2436 = vrcp.pop %v2435
    %v2437 = vmul.f32 %v2435, %v2436
    %v2438 = vsub.f32 1.0, %v2437
    %v2439 = vmul.f32 %v2436, %v2438
    %v2440 = vadd.f32 %v2436, %v2439
    %vm2441 = vweird.f32 %v2435
    %vm2442 = vweird.f32 %v2436
    %vm2443 = vmor %vm2441, %vm2442
    %v2444 = vsel %vm2443, %v2436, %v2440
    %v2445 = vand.u32 2147483647, %v2435
    %vm2446 = vcmp.eq.f32.partialorder %v2445, 8.507059e+37
    %v2447 = vand.u32 %v2435, 2147483648
    %v2448 = vor.u32 1.1754944e-38, %v2447
    %v2449 = vsel %vm2446, %v2448, %v2444
    %v2450 = vmul.f32 1.0, %v2449
    %v2451 = vmul.f32 %v2430, %v2299
    %v2452 = vmul.f32 %v2411, %v2431
    %v2453 = vadd.f32 %v2451, %v2452
    %v2454 = vtanh.pop %v2453
    %v2455 = vmul.f32 %v2450, %v2454
    %s2456 = scalar_lea.vmem %s6, 16
    %2457 = vst [vmem:[%s2456] sm:$0xff] %v2455
    %s2458 = scalar_lea.vmem [#allocation2], 352
    %v2459 = vld [vmem:[%s2458] sm:$0xff]
    %v2460 = vld [vmem:[%s2458 + $0x8] sm:$0xff]
    %v2461 = vld [vmem:[%s2458 + $0x10] sm:$0xff]
    %v2462 = vld [vmem:[%s2458 + $0x18] sm:$0xff]
    %2463 = vmatpush.xpose.msra.mxu0 %v724
    %2464 = vmatpush.xpose.msra.mxu0 %v723
    %2465 = vmatpush.xpose.msra.mxu0 %v722
    %2466 = vmatpush.xpose.msra.mxu0 %v721
    %2467 = vmatpush.xpose.msra.mxu0 %v720
    %2468 = vmatpush.xpose.msra.mxu0 %v719
    %2469 = vmatpush.xpose.msra.mxu0 %v718
    %2470 = vmatpush.xpose.msra.mxu0 %v717
    %2471 = vmatpush.xpose.msra.mxu0 %v716
    %2472 = vmatpush.xpose.msra.mxu0 %v715
    %2473 = vmatpush.xpose.msra.mxu0 %v714
    %2474 = vmatpush.xpose.msra.mxu0 %v713
    %2475 = vmatpush.xpose.msra.mxu0 %v712
    %2476 = vmatpush.xpose.msra.mxu0 %v711
    %2477 = vmatpush.xpose.msra.mxu0 %v710
    %2478 = vmatpush.xpose.msra.mxu0 %v709
    %2479 = vmatmul.f32.gmra.mxu0 %v2455
    %v2480 = vpop.f32.mrf.mxu0
    %v2481 = vadd.f32 %v775, %v2480
    %2482 = vdwg.mxu0
    %2483 = vmatpush.xpose.msra.mxu0 %v740
    %2484 = vmatpush.xpose.msra.mxu0 %v739
    %2485 = vmatpush.xpose.msra.mxu0 %v738
    %2486 = vmatpush.xpose.msra.mxu0 %v737
    %2487 = vmatpush.xpose.msra.mxu0 %v736
    %2488 = vmatpush.xpose.msra.mxu0 %v735
    %2489 = vmatpush.xpose.msra.mxu0 %v734
    %2490 = vmatpush.xpose.msra.mxu0 %v733
    %2491 = vmatpush.xpose.msra.mxu0 %v732
    %2492 = vmatpush.xpose.msra.mxu0 %v731
    %2493 = vmatpush.xpose.msra.mxu0 %v730
    %2494 = vmatpush.xpose.msra.mxu0 %v729
    %2495 = vmatpush.xpose.msra.mxu0 %v728
    %2496 = vmatpush.xpose.msra.mxu0 %v727
    %2497 = vmatpush.xpose.msra.mxu0 %v726
    %2498 = vmatpush.xpose.msra.mxu0 %v725
    %2499 = vmatmul.f32.gmra.mxu0 %v2455
    %v2500 = vpop.f32.mrf.mxu0
    %v2501 = vadd.f32 %v776, %v2500
    %2502 = vdwg.mxu0
    %2503 = vmatpush.xpose.msra.mxu0 %v756
    %2504 = vmatpush.xpose.msra.mxu0 %v755
    %2505 = vmatpush.xpose.msra.mxu0 %v754
    %2506 = vmatpush.xpose.msra.mxu0 %v753
    %2507 = vmatpush.xpose.msra.mxu0 %v752
    %2508 = vmatpush.xpose.msra.mxu0 %v751
    %2509 = vmatpush.xpose.msra.mxu0 %v750
    %2510 = vmatpush.xpose.msra.mxu0 %v749
    %2511 = vmatpush.xpose.msra.mxu0 %v748
    %2512 = vmatpush.xpose.msra.mxu0 %v747
    %2513 = vmatpush.xpose.msra.mxu0 %v746
    %2514 = vmatpush.xpose.msra.mxu0 %v745
    %2515 = vmatpush.xpose.msra.mxu0 %v744
    %2516 = vmatpush.xpose.msra.mxu0 %v743
    %2517 = vmatpush.xpose.msra.mxu0 %v742
    %2518 = vmatpush.xpose.msra.mxu0 %v741
    %2519 = vmatmul.f32.gmra.mxu0 %v2455
    %v2520 = vpop.f32.mrf.mxu0
    %v2521 = vadd.f32 %v777, %v2520
    %2522 = vdwg.mxu0
    %2523 = vmatpush.xpose.msra.mxu0 %v772
    %2524 = vmatpush.xpose.msra.mxu0 %v771
    %2525 = vmatpush.xpose.msra.mxu0 %v770
    %2526 = vmatpush.xpose.msra.mxu0 %v769
    %2527 = vmatpush.xpose.msra.mxu0 %v768
    %2528 = vmatpush.xpose.msra.mxu0 %v767
    %2529 = vmatpush.xpose.msra.mxu0 %v766
    %2530 = vmatpush.xpose.msra.mxu0 %v765
    %2531 = vmatpush.xpose.msra.mxu0 %v764
    %2532 = vmatpush.xpose.msra.mxu0 %v763
    %2533 = vmatpush.xpose.msra.mxu0 %v762
    %2534 = vmatpush.xpose.msra.mxu0 %v761
    %2535 = vmatpush.xpose.msra.mxu0 %v760
    %2536 = vmatpush.xpose.msra.mxu0 %v759
    %2537 = vmatpush.xpose.msra.mxu0 %v758
    %2538 = vmatpush.xpose.msra.mxu0 %v757
    %2539 = vmatmul.f32.gmra.mxu0 %v2455
    %v2540 = vpop.f32.mrf.mxu0
    %v2541 = vadd.f32 %v778, %v2540
    %2542 = vdwg.mxu0
    %v2543 = vadd.f32 %v2481, %v2459
    %v2544 = vadd.f32 %v2501, %v2460
    %v2545 = vadd.f32 %v2521, %v2461
    %v2546 = vadd.f32 %v2541, %v2462
    %v2547 = vxor.u32 %v2543, 2147483648
    %v2548 = vmul.f32 %v2547, 1.442695
    %v2549 = vpow.pop %v2548
    %v2550 = vadd.f32 %v2549, 1.0
    %v2551 = vrcp.pop %v2550
    %v2552 = vmul.f32 %v2550, %v2551
    %v2553 = vsub.f32 1.0, %v2552
    %v2554 = vmul.f32 %v2551, %v2553
    %v2555 = vadd.f32 %v2551, %v2554
    %vm2556 = vweird.f32 %v2550
    %vm2557 = vweird.f32 %v2551
    %vm2558 = vmor %vm2556, %vm2557
    %v2559 = vsel %vm2558, %v2551, %v2555
    %v2560 = vand.u32 2147483647, %v2550
    %vm2561 = vcmp.eq.f32.partialorder %v2560, 8.507059e+37
    %v2562 = vand.u32 %v2550, 2147483648
    %v2563 = vor.u32 1.1754944e-38, %v2562
    %v2564 = vsel %vm2561, %v2563, %v2559
    %v2565 = vmul.f32 1.0, %v2564
    %v2566 = vxor.u32 %v2544, 2147483648
    %v2567 = vmul.f32 %v2566, 1.442695
    %v2568 = vpow.pop %v2567
    %v2569 = vadd.f32 %v2568, 1.0
    %v2570 = vrcp.pop %v2569
    %v2571 = vmul.f32 %v2569, %v2570
    %v2572 = vsub.f32 1.0, %v2571
    %v2573 = vmul.f32 %v2570, %v2572
    %v2574 = vadd.f32 %v2570, %v2573
    %vm2575 = vweird.f32 %v2569
    %vm2576 = vweird.f32 %v2570
    %vm2577 = vmor %vm2575, %vm2576
    %v2578 = vsel %vm2577, %v2570, %v2574
    %v2579 = vand.u32 2147483647, %v2569
    %vm2580 = vcmp.eq.f32.partialorder %v2579, 8.507059e+37
    %v2581 = vand.u32 %v2569, 2147483648
    %v2582 = vor.u32 1.1754944e-38, %v2581
    %v2583 = vsel %vm2580, %v2582, %v2578
    %v2584 = vmul.f32 1.0, %v2583
    %v2585 = vtanh.pop %v2545
    %v2586 = vxor.u32 %v2546, 2147483648
    %v2587 = vmul.f32 %v2586, 1.442695
    %v2588 = vpow.pop %v2587
    %v2589 = vadd.f32 %v2588, 1.0
    %v2590 = vrcp.pop %v2589
    %v2591 = vmul.f32 %v2589, %v2590
    %v2592 = vsub.f32 1.0, %v2591
    %v2593 = vmul.f32 %v2590, %v2592
    %v2594 = vadd.f32 %v2590, %v2593
    %vm2595 = vweird.f32 %v2589
    %vm2596 = vweird.f32 %v2590
    %vm2597 = vmor %vm2595, %vm2596
    %v2598 = vsel %vm2597, %v2590, %v2594
    %v2599 = vand.u32 2147483647, %v2589
    %vm2600 = vcmp.eq.f32.partialorder %v2599, 8.507059e+37
    %v2601 = vand.u32 %v2589, 2147483648
    %v2602 = vor.u32 1.1754944e-38, %v2601
    %v2603 = vsel %vm2600, %v2602, %v2598
    %v2604 = vmul.f32 1.0, %v2603
    %v2605 = vmul.f32 %v2584, %v2453
    %v2606 = vmul.f32 %v2565, %v2585
    %v2607 = vadd.f32 %v2605, %v2606
    %v2608 = vtanh.pop %v2607
    %v2609 = vmul.f32 %v2604, %v2608
    %s2610 = scalar_lea.vmem %s6, 24
    %2611 = vst [vmem:[%s2610] sm:$0xff] %v2609
    %s2612 = scalar_lea.vmem [#allocation2], 384
    %v2613 = vld [vmem:[%s2612] sm:$0xff]
    %v2614 = vld [vmem:[%s2612 + $0x8] sm:$0xff]
    %v2615 = vld [vmem:[%s2612 + $0x10] sm:$0xff]
    %v2616 = vld [vmem:[%s2612 + $0x18] sm:$0xff]
    %2617 = vmatpush.xpose.msra.mxu0 %v724
    %2618 = vmatpush.xpose.msra.mxu0 %v723
    %2619 = vmatpush.xpose.msra.mxu0 %v722
    %2620 = vmatpush.xpose.msra.mxu0 %v721
    %2621 = vmatpush.xpose.msra.mxu0 %v720
    %2622 = vmatpush.xpose.msra.mxu0 %v719
    %2623 = vmatpush.xpose.msra.mxu0 %v718
    %2624 = vmatpush.xpose.msra.mxu0 %v717
    %2625 = vmatpush.xpose.msra.mxu0 %v716
    %2626 = vmatpush.xpose.msra.mxu0 %v715
    %2627 = vmatpush.xpose.msra.mxu0 %v714
    %2628 = vmatpush.xpose.msra.mxu0 %v713
    %2629 = vmatpush.xpose.msra.mxu0 %v712
    %2630 = vmatpush.xpose.msra.mxu0 %v711
    %2631 = vmatpush.xpose.msra.mxu0 %v710
    %2632 = vmatpush.xpose.msra.mxu0 %v709
    %2633 = vmatmul.f32.gmra.mxu0 %v2609
    %v2634 = vpop.f32.mrf.mxu0
    %v2635 = vadd.f32 %v775, %v2634
    %2636 = vdwg.mxu0
    %2637 = vmatpush.xpose.msra.mxu0 %v740
    %2638 = vmatpush.xpose.msra.mxu0 %v739
    %2639 = vmatpush.xpose.msra.mxu0 %v738
    %2640 = vmatpush.xpose.msra.mxu0 %v737
    %2641 = vmatpush.xpose.msra.mxu0 %v736
    %2642 = vmatpush.xpose.msra.mxu0 %v735
    %2643 = vmatpush.xpose.msra.mxu0 %v734
    %2644 = vmatpush.xpose.msra.mxu0 %v733
    %2645 = vmatpush.xpose.msra.mxu0 %v732
    %2646 = vmatpush.xpose.msra.mxu0 %v731
    %2647 = vmatpush.xpose.msra.mxu0 %v730
    %2648 = vmatpush.xpose.msra.mxu0 %v729
    %2649 = vmatpush.xpose.msra.mxu0 %v728
    %2650 = vmatpush.xpose.msra.mxu0 %v727
    %2651 = vmatpush.xpose.msra.mxu0 %v726
    %2652 = vmatpush.xpose.msra.mxu0 %v725
    %2653 = vmatmul.f32.gmra.mxu0 %v2609
    %v2654 = vpop.f32.mrf.mxu0
    %v2655 = vadd.f32 %v776, %v2654
    %2656 = vdwg.mxu0
    %2657 = vmatpush.xpose.msra.mxu0 %v756
    %2658 = vmatpush.xpose.msra.mxu0 %v755
    %2659 = vmatpush.xpose.msra.mxu0 %v754
    %2660 = vmatpush.xpose.msra.mxu0 %v753
    %2661 = vmatpush.xpose.msra.mxu0 %v752
    %2662 = vmatpush.xpose.msra.mxu0 %v751
    %2663 = vmatpush.xpose.msra.mxu0 %v750
    %2664 = vmatpush.xpose.msra.mxu0 %v749
    %2665 = vmatpush.xpose.msra.mxu0 %v748
    %2666 = vmatpush.xpose.msra.mxu0 %v747
    %2667 = vmatpush.xpose.msra.mxu0 %v746
    %2668 = vmatpush.xpose.msra.mxu0 %v745
    %2669 = vmatpush.xpose.msra.mxu0 %v744
    %2670 = vmatpush.xpose.msra.mxu0 %v743
    %2671 = vmatpush.xpose.msra.mxu0 %v742
    %2672 = vmatpush.xpose.msra.mxu0 %v741
    %2673 = vmatmul.f32.gmra.mxu0 %v2609
    %v2674 = vpop.f32.mrf.mxu0
    %v2675 = vadd.f32 %v777, %v2674
    %2676 = vdwg.mxu0
    %2677 = vmatpush.xpose.msra.mxu0 %v772
    %2678 = vmatpush.xpose.msra.mxu0 %v771
    %2679 = vmatpush.xpose.msra.mxu0 %v770
    %2680 = vmatpush.xpose.msra.mxu0 %v769
    %2681 = vmatpush.xpose.msra.mxu0 %v768
    %2682 = vmatpush.xpose.msra.mxu0 %v767
    %2683 = vmatpush.xpose.msra.mxu0 %v766
    %2684 = vmatpush.xpose.msra.mxu0 %v765
    %2685 = vmatpush.xpose.msra.mxu0 %v764
    %2686 = vmatpush.xpose.msra.mxu0 %v763
    %2687 = vmatpush.xpose.msra.mxu0 %v762
    %2688 = vmatpush.xpose.msra.mxu0 %v761
    %2689 = vmatpush.xpose.msra.mxu0 %v760
    %2690 = vmatpush.xpose.msra.mxu0 %v759
    %2691 = vmatpush.xpose.msra.mxu0 %v758
    %2692 = vmatpush.xpose.msra.mxu0 %v757
    %2693 = vmatmul.f32.gmra.mxu0 %v2609
    %v2694 = vpop.f32.mrf.mxu0
    %v2695 = vadd.f32 %v778, %v2694
    %2696 = vdwg.mxu0
    %v2697 = vadd.f32 %v2635, %v2613
    %v2698 = vadd.f32 %v2655, %v2614
    %v2699 = vadd.f32 %v2675, %v2615
    %v2700 = vadd.f32 %v2695, %v2616
    %v2701 = vxor.u32 %v2697, 2147483648
    %v2702 = vmul.f32 %v2701, 1.442695
    %v2703 = vpow.pop %v2702
    %v2704 = vadd.f32 %v2703, 1.0
    %v2705 = vrcp.pop %v2704
    %v2706 = vmul.f32 %v2704, %v2705
    %v2707 = vsub.f32 1.0, %v2706
    %v2708 = vmul.f32 %v2705, %v2707
    %v2709 = vadd.f32 %v2705, %v2708
    %vm2710 = vweird.f32 %v2704
    %vm2711 = vweird.f32 %v2705
    %vm2712 = vmor %vm2710, %vm2711
    %v2713 = vsel %vm2712, %v2705, %v2709
    %v2714 = vand.u32 2147483647, %v2704
    %vm2715 = vcmp.eq.f32.partialorder %v2714, 8.507059e+37
    %v2716 = vand.u32 %v2704, 2147483648
    %v2717 = vor.u32 1.1754944e-38, %v2716
    %v2718 = vsel %vm2715, %v2717, %v2713
    %v2719 = vmul.f32 1.0, %v2718
    %v2720 = vxor.u32 %v2698, 2147483648
    %v2721 = vmul.f32 %v2720, 1.442695
    %v2722 = vpow.pop %v2721
    %v2723 = vadd.f32 %v2722, 1.0
    %v2724 = vrcp.pop %v2723
    %v2725 = vmul.f32 %v2723, %v2724
    %v2726 = vsub.f32 1.0, %v2725
    %v2727 = vmul.f32 %v2724, %v2726
    %v2728 = vadd.f32 %v2724, %v2727
    %vm2729 = vweird.f32 %v2723
    %vm2730 = vweird.f32 %v2724
    %vm2731 = vmor %vm2729, %vm2730
    %v2732 = vsel %vm2731, %v2724, %v2728
    %v2733 = vand.u32 2147483647, %v2723
    %vm2734 = vcmp.eq.f32.partialorder %v2733, 8.507059e+37
    %v2735 = vand.u32 %v2723, 2147483648
    %v2736 = vor.u32 1.1754944e-38, %v2735
    %v2737 = vsel %vm2734, %v2736, %v2732
    %v2738 = vmul.f32 1.0, %v2737
    %v2739 = vtanh.pop %v2699
    %v2740 = vxor.u32 %v2700, 2147483648
    %v2741 = vmul.f32 %v2740, 1.442695
    %v2742 = vpow.pop %v2741
    %v2743 = vadd.f32 %v2742, 1.0
    %v2744 = vrcp.pop %v2743
    %v2745 = vmul.f32 %v2743, %v2744
    %v2746 = vsub.f32 1.0, %v2745
    %v2747 = vmul.f32 %v2744, %v2746
    %v2748 = vadd.f32 %v2744, %v2747
    %vm2749 = vweird.f32 %v2743
    %vm2750 = vweird.f32 %v2744
    %vm2751 = vmor %vm2749, %vm2750
    %v2752 = vsel %vm2751, %v2744, %v2748
    %v2753 = vand.u32 2147483647, %v2743
    %vm2754 = vcmp.eq.f32.partialorder %v2753, 8.507059e+37
    %v2755 = vand.u32 %v2743, 2147483648
    %v2756 = vor.u32 1.1754944e-38, %v2755
    %v2757 = vsel %vm2754, %v2756, %v2752
    %v2758 = vmul.f32 1.0, %v2757
    %v2759 = vmul.f32 %v2738, %v2607
    %v2760 = vmul.f32 %v2719, %v2739
    %v2761 = vadd.f32 %v2759, %v2760
    %v2762 = vtanh.pop %v2761
    %v2763 = vmul.f32 %v2758, %v2762
    %s2764 = scalar_lea.vmem %s6, 32
    %2765 = vst [vmem:[%s2764] sm:$0xff] %v2763
    %s2766 = scalar_lea.vmem [#allocation2], 416
    %v2767 = vld [vmem:[%s2766] sm:$0xff]
    %v2768 = vld [vmem:[%s2766 + $0x8] sm:$0xff]
    %v2769 = vld [vmem:[%s2766 + $0x10] sm:$0xff]
    %v2770 = vld [vmem:[%s2766 + $0x18] sm:$0xff]
    %2771 = vmatpush.xpose.msra.mxu0 %v724
    %2772 = vmatpush.xpose.msra.mxu0 %v723
    %2773 = vmatpush.xpose.msra.mxu0 %v722
    %2774 = vmatpush.xpose.msra.mxu0 %v721
    %2775 = vmatpush.xpose.msra.mxu0 %v720
    %2776 = vmatpush.xpose.msra.mxu0 %v719
    %2777 = vmatpush.xpose.msra.mxu0 %v718
    %2778 = vmatpush.xpose.msra.mxu0 %v717
    %2779 = vmatpush.xpose.msra.mxu0 %v716
    %2780 = vmatpush.xpose.msra.mxu0 %v715
    %2781 = vmatpush.xpose.msra.mxu0 %v714
    %2782 = vmatpush.xpose.msra.mxu0 %v713
    %2783 = vmatpush.xpose.msra.mxu0 %v712
    %2784 = vmatpush.xpose.msra.mxu0 %v711
    %2785 = vmatpush.xpose.msra.mxu0 %v710
    %2786 = vmatpush.xpose.msra.mxu0 %v709
    %2787 = vmatmul.f32.gmra.mxu0 %v2763
    %v2788 = vpop.f32.mrf.mxu0
    %v2789 = vadd.f32 %v775, %v2788
    %2790 = vdwg.mxu0
    %2791 = vmatpush.xpose.msra.mxu0 %v740
    %2792 = vmatpush.xpose.msra.mxu0 %v739
    %2793 = vmatpush.xpose.msra.mxu0 %v738
    %2794 = vmatpush.xpose.msra.mxu0 %v737
    %2795 = vmatpush.xpose.msra.mxu0 %v736
    %2796 = vmatpush.xpose.msra.mxu0 %v735
    %2797 = vmatpush.xpose.msra.mxu0 %v734
    %2798 = vmatpush.xpose.msra.mxu0 %v733
    %2799 = vmatpush.xpose.msra.mxu0 %v732
    %2800 = vmatpush.xpose.msra.mxu0 %v731
    %2801 = vmatpush.xpose.msra.mxu0 %v730
    %2802 = vmatpush.xpose.msra.mxu0 %v729
    %2803 = vmatpush.xpose.msra.mxu0 %v728
    %2804 = vmatpush.xpose.msra.mxu0 %v727
    %2805 = vmatpush.xpose.msra.mxu0 %v726
    %2806 = vmatpush.xpose.msra.mxu0 %v725
    %2807 = vmatmul.f32.gmra.mxu0 %v2763
    %v2808 = vpop.f32.mrf.mxu0
    %v2809 = vadd.f32 %v776, %v2808
    %2810 = vdwg.mxu0
    %2811 = vmatpush.xpose.msra.mxu0 %v756
    %2812 = vmatpush.xpose.msra.mxu0 %v755
    %2813 = vmatpush.xpose.msra.mxu0 %v754
    %2814 = vmatpush.xpose.msra.mxu0 %v753
    %2815 = vmatpush.xpose.msra.mxu0 %v752
    %2816 = vmatpush.xpose.msra.mxu0 %v751
    %2817 = vmatpush.xpose.msra.mxu0 %v750
    %2818 = vmatpush.xpose.msra.mxu0 %v749
    %2819 = vmatpush.xpose.msra.mxu0 %v748
    %2820 = vmatpush.xpose.msra.mxu0 %v747
    %2821 = vmatpush.xpose.msra.mxu0 %v746
    %2822 = vmatpush.xpose.msra.mxu0 %v745
    %2823 = vmatpush.xpose.msra.mxu0 %v744
    %2824 = vmatpush.xpose.msra.mxu0 %v743
    %2825 = vmatpush.xpose.msra.mxu0 %v742
    %2826 = vmatpush.xpose.msra.mxu0 %v741
    %2827 = vmatmul.f32.gmra.mxu0 %v2763
    %v2828 = vpop.f32.mrf.mxu0
    %v2829 = vadd.f32 %v777, %v2828
    %2830 = vdwg.mxu0
    %2831 = vmatpush.xpose.msra.mxu0 %v772
    %2832 = vmatpush.xpose.msra.mxu0 %v771
    %2833 = vmatpush.xpose.msra.mxu0 %v770
    %2834 = vmatpush.xpose.msra.mxu0 %v769
    %2835 = vmatpush.xpose.msra.mxu0 %v768
    %2836 = vmatpush.xpose.msra.mxu0 %v767
    %2837 = vmatpush.xpose.msra.mxu0 %v766
    %2838 = vmatpush.xpose.msra.mxu0 %v765
    %2839 = vmatpush.xpose.msra.mxu0 %v764
    %2840 = vmatpush.xpose.msra.mxu0 %v763
    %2841 = vmatpush.xpose.msra.mxu0 %v762
    %2842 = vmatpush.xpose.msra.mxu0 %v761
    %2843 = vmatpush.xpose.msra.mxu0 %v760
    %2844 = vmatpush.xpose.msra.mxu0 %v759
    %2845 = vmatpush.xpose.msra.mxu0 %v758
    %2846 = vmatpush.xpose.msra.mxu0 %v757
    %2847 = vmatmul.f32.gmra.mxu0 %v2763
    %v2848 = vpop.f32.mrf.mxu0
    %v2849 = vadd.f32 %v778, %v2848
    %2850 = vdwg.mxu0
    %v2851 = vadd.f32 %v2789, %v2767
    %v2852 = vadd.f32 %v2809, %v2768
    %v2853 = vadd.f32 %v2829, %v2769
    %v2854 = vadd.f32 %v2849, %v2770
    %v2855 = vxor.u32 %v2851, 2147483648
    %v2856 = vmul.f32 %v2855, 1.442695
    %v2857 = vpow.pop %v2856
    %v2858 = vadd.f32 %v2857, 1.0
    %v2859 = vrcp.pop %v2858
    %v2860 = vmul.f32 %v2858, %v2859
    %v2861 = vsub.f32 1.0, %v2860
    %v2862 = vmul.f32 %v2859, %v2861
    %v2863 = vadd.f32 %v2859, %v2862
    %vm2864 = vweird.f32 %v2858
    %vm2865 = vweird.f32 %v2859
    %vm2866 = vmor %vm2864, %vm2865
    %v2867 = vsel %vm2866, %v2859, %v2863
    %v2868 = vand.u32 2147483647, %v2858
    %vm2869 = vcmp.eq.f32.partialorder %v2868, 8.507059e+37
    %v2870 = vand.u32 %v2858, 2147483648
    %v2871 = vor.u32 1.1754944e-38, %v2870
    %v2872 = vsel %vm2869, %v2871, %v2867
    %v2873 = vmul.f32 1.0, %v2872
    %v2874 = vxor.u32 %v2852, 2147483648
    %v2875 = vmul.f32 %v2874, 1.442695
    %v2876 = vpow.pop %v2875
    %v2877 = vadd.f32 %v2876, 1.0
    %v2878 = vrcp.pop %v2877
    %v2879 = vmul.f32 %v2877, %v2878
    %v2880 = vsub.f32 1.0, %v2879
    %v2881 = vmul.f32 %v2878, %v2880
    %v2882 = vadd.f32 %v2878, %v2881
    %vm2883 = vweird.f32 %v2877
    %vm2884 = vweird.f32 %v2878
    %vm2885 = vmor %vm2883, %vm2884
    %v2886 = vsel %vm2885, %v2878, %v2882
    %v2887 = vand.u32 2147483647, %v2877
    %vm2888 = vcmp.eq.f32.partialorder %v2887, 8.507059e+37
    %v2889 = vand.u32 %v2877, 2147483648
    %v2890 = vor.u32 1.1754944e-38, %v2889
    %v2891 = vsel %vm2888, %v2890, %v2886
    %v2892 = vmul.f32 1.0, %v2891
    %v2893 = vtanh.pop %v2853
    %v2894 = vxor.u32 %v2854, 2147483648
    %v2895 = vmul.f32 %v2894, 1.442695
    %v2896 = vpow.pop %v2895
    %v2897 = vadd.f32 %v2896, 1.0
    %v2898 = vrcp.pop %v2897
    %v2899 = vmul.f32 %v2897, %v2898
    %v2900 = vsub.f32 1.0, %v2899
    %v2901 = vmul.f32 %v2898, %v2900
    %v2902 = vadd.f32 %v2898, %v2901
    %vm2903 = vweird.f32 %v2897
    %vm2904 = vweird.f32 %v2898
    %vm2905 = vmor %vm2903, %vm2904
    %v2906 = vsel %vm2905, %v2898, %v2902
    %v2907 = vand.u32 2147483647, %v2897
    %vm2908 = vcmp.eq.f32.partialorder %v2907, 8.507059e+37
    %v2909 = vand.u32 %v2897, 2147483648
    %v2910 = vor.u32 1.1754944e-38, %v2909
    %v2911 = vsel %vm2908, %v2910, %v2906
    %v2912 = vmul.f32 1.0, %v2911
    %v2913 = vmul.f32 %v2892, %v2761
    %v2914 = vmul.f32 %v2873, %v2893
    %v2915 = vadd.f32 %v2913, %v2914
    %v2916 = vtanh.pop %v2915
    %v2917 = vmul.f32 %v2912, %v2916
    %s2918 = scalar_lea.vmem %s6, 40
    %2919 = vst [vmem:[%s2918] sm:$0xff] %v2917
    %s2920 = scalar_lea.vmem [#allocation2], 448
    %v2921 = vld [vmem:[%s2920] sm:$0xff]
    %v2922 = vld [vmem:[%s2920 + $0x8] sm:$0xff]
    %v2923 = vld [vmem:[%s2920 + $0x10] sm:$0xff]
    %v2924 = vld [vmem:[%s2920 + $0x18] sm:$0xff]
    %2925 = vmatpush.xpose.msra.mxu0 %v724
    %2926 = vmatpush.xpose.msra.mxu0 %v723
    %2927 = vmatpush.xpose.msra.mxu0 %v722
    %2928 = vmatpush.xpose.msra.mxu0 %v721
    %2929 = vmatpush.xpose.msra.mxu0 %v720
    %2930 = vmatpush.xpose.msra.mxu0 %v719
    %2931 = vmatpush.xpose.msra.mxu0 %v718
    %2932 = vmatpush.xpose.msra.mxu0 %v717
    %2933 = vmatpush.xpose.msra.mxu0 %v716
    %2934 = vmatpush.xpose.msra.mxu0 %v715
    %2935 = vmatpush.xpose.msra.mxu0 %v714
    %2936 = vmatpush.xpose.msra.mxu0 %v713
    %2937 = vmatpush.xpose.msra.mxu0 %v712
    %2938 = vmatpush.xpose.msra.mxu0 %v711
    %2939 = vmatpush.xpose.msra.mxu0 %v710
    %2940 = vmatpush.xpose.msra.mxu0 %v709
    %2941 = vmatmul.f32.gmra.mxu0 %v2917
    %v2942 = vpop.f32.mrf.mxu0
    %v2943 = vadd.f32 %v775, %v2942
    %2944 = vdwg.mxu0
    %2945 = vmatpush.xpose.msra.mxu0 %v740
    %2946 = vmatpush.xpose.msra.mxu0 %v739
    %2947 = vmatpush.xpose.msra.mxu0 %v738
    %2948 = vmatpush.xpose.msra.mxu0 %v737
    %2949 = vmatpush.xpose.msra.mxu0 %v736
    %2950 = vmatpush.xpose.msra.mxu0 %v735
    %2951 = vmatpush.xpose.msra.mxu0 %v734
    %2952 = vmatpush.xpose.msra.mxu0 %v733
    %2953 = vmatpush.xpose.msra.mxu0 %v732
    %2954 = vmatpush.xpose.msra.mxu0 %v731
    %2955 = vmatpush.xpose.msra.mxu0 %v730
    %2956 = vmatpush.xpose.msra.mxu0 %v729
    %2957 = vmatpush.xpose.msra.mxu0 %v728
    %2958 = vmatpush.xpose.msra.mxu0 %v727
    %2959 = vmatpush.xpose.msra.mxu0 %v726
    %2960 = vmatpush.xpose.msra.mxu0 %v725
    %2961 = vmatmul.f32.gmra.mxu0 %v2917
    %v2962 = vpop.f32.mrf.mxu0
    %v2963 = vadd.f32 %v776, %v2962
    %2964 = vdwg.mxu0
    %2965 = vmatpush.xpose.msra.mxu0 %v756
    %2966 = vmatpush.xpose.msra.mxu0 %v755
    %2967 = vmatpush.xpose.msra.mxu0 %v754
    %2968 = vmatpush.xpose.msra.mxu0 %v753
    %2969 = vmatpush.xpose.msra.mxu0 %v752
    %2970 = vmatpush.xpose.msra.mxu0 %v751
    %2971 = vmatpush.xpose.msra.mxu0 %v750
    %2972 = vmatpush.xpose.msra.mxu0 %v749
    %2973 = vmatpush.xpose.msra.mxu0 %v748
    %2974 = vmatpush.xpose.msra.mxu0 %v747
    %2975 = vmatpush.xpose.msra.mxu0 %v746
    %2976 = vmatpush.xpose.msra.mxu0 %v745
    %2977 = vmatpush.xpose.msra.mxu0 %v744
    %2978 = vmatpush.xpose.msra.mxu0 %v743
    %2979 = vmatpush.xpose.msra.mxu0 %v742
    %2980 = vmatpush.xpose.msra.mxu0 %v741
    %2981 = vmatmul.f32.gmra.mxu0 %v2917
    %v2982 = vpop.f32.mrf.mxu0
    %v2983 = vadd.f32 %v777, %v2982
    %2984 = vdwg.mxu0
    %2985 = vmatpush.xpose.msra.mxu0 %v772
    %2986 = vmatpush.xpose.msra.mxu0 %v771
    %2987 = vmatpush.xpose.msra.mxu0 %v770
    %2988 = vmatpush.xpose.msra.mxu0 %v769
    %2989 = vmatpush.xpose.msra.mxu0 %v768
    %2990 = vmatpush.xpose.msra.mxu0 %v767
    %2991 = vmatpush.xpose.msra.mxu0 %v766
    %2992 = vmatpush.xpose.msra.mxu0 %v765
    %2993 = vmatpush.xpose.msra.mxu0 %v764
    %2994 = vmatpush.xpose.msra.mxu0 %v763
    %2995 = vmatpush.xpose.msra.mxu0 %v762
    %2996 = vmatpush.xpose.msra.mxu0 %v761
    %2997 = vmatpush.xpose.msra.mxu0 %v760
    %2998 = vmatpush.xpose.msra.mxu0 %v759
    %2999 = vmatpush.xpose.msra.mxu0 %v758
    %3000 = vmatpush.xpose.msra.mxu0 %v757
    %3001 = vmatmul.f32.gmra.mxu0 %v2917
    %v3002 = vpop.f32.mrf.mxu0
    %v3003 = vadd.f32 %v778, %v3002
    %3004 = vdwg.mxu0
    %v3005 = vadd.f32 %v2943, %v2921
    %v3006 = vadd.f32 %v2963, %v2922
    %v3007 = vadd.f32 %v2983, %v2923
    %v3008 = vadd.f32 %v3003, %v2924
    %v3009 = vxor.u32 %v3005, 2147483648
    %v3010 = vmul.f32 %v3009, 1.442695
    %v3011 = vpow.pop %v3010
    %v3012 = vadd.f32 %v3011, 1.0
    %v3013 = vrcp.pop %v3012
    %v3014 = vmul.f32 %v3012, %v3013
    %v3015 = vsub.f32 1.0, %v3014
    %v3016 = vmul.f32 %v3013, %v3015
    %v3017 = vadd.f32 %v3013, %v3016
    %vm3018 = vweird.f32 %v3012
    %vm3019 = vweird.f32 %v3013
    %vm3020 = vmor %vm3018, %vm3019
    %v3021 = vsel %vm3020, %v3013, %v3017
    %v3022 = vand.u32 2147483647, %v3012
    %vm3023 = vcmp.eq.f32.partialorder %v3022, 8.507059e+37
    %v3024 = vand.u32 %v3012, 2147483648
    %v3025 = vor.u32 1.1754944e-38, %v3024
    %v3026 = vsel %vm3023, %v3025, %v3021
    %v3027 = vmul.f32 1.0, %v3026
    %v3028 = vxor.u32 %v3006, 2147483648
    %v3029 = vmul.f32 %v3028, 1.442695
    %v3030 = vpow.pop %v3029
    %v3031 = vadd.f32 %v3030, 1.0
    %v3032 = vrcp.pop %v3031
    %v3033 = vmul.f32 %v3031, %v3032
    %v3034 = vsub.f32 1.0, %v3033
    %v3035 = vmul.f32 %v3032, %v3034
    %v3036 = vadd.f32 %v3032, %v3035
    %vm3037 = vweird.f32 %v3031
    %vm3038 = vweird.f32 %v3032
    %vm3039 = vmor %vm3037, %vm3038
    %v3040 = vsel %vm3039, %v3032, %v3036
    %v3041 = vand.u32 2147483647, %v3031
    %vm3042 = vcmp.eq.f32.partialorder %v3041, 8.507059e+37
    %v3043 = vand.u32 %v3031, 2147483648
    %v3044 = vor.u32 1.1754944e-38, %v3043
    %v3045 = vsel %vm3042, %v3044, %v3040
    %v3046 = vmul.f32 1.0, %v3045
    %v3047 = vtanh.pop %v3007
    %v3048 = vxor.u32 %v3008, 2147483648
    %v3049 = vmul.f32 %v3048, 1.442695
    %v3050 = vpow.pop %v3049
    %v3051 = vadd.f32 %v3050, 1.0
    %v3052 = vrcp.pop %v3051
    %v3053 = vmul.f32 %v3051, %v3052
    %v3054 = vsub.f32 1.0, %v3053
    %v3055 = vmul.f32 %v3052, %v3054
    %v3056 = vadd.f32 %v3052, %v3055
    %vm3057 = vweird.f32 %v3051
    %vm3058 = vweird.f32 %v3052
    %vm3059 = vmor %vm3057, %vm3058
    %v3060 = vsel %vm3059, %v3052, %v3056
    %v3061 = vand.u32 2147483647, %v3051
    %vm3062 = vcmp.eq.f32.partialorder %v3061, 8.507059e+37
    %v3063 = vand.u32 %v3051, 2147483648
    %v3064 = vor.u32 1.1754944e-38, %v3063
    %v3065 = vsel %vm3062, %v3064, %v3060
    %v3066 = vmul.f32 1.0, %v3065
    %v3067 = vmul.f32 %v3046, %v2915
    %v3068 = vmul.f32 %v3027, %v3047
    %v3069 = vadd.f32 %v3067, %v3068
    %v3070 = vtanh.pop %v3069
    %v3071 = vmul.f32 %v3066, %v3070
    %s3072 = scalar_lea.vmem %s6, 48
    %3073 = vst [vmem:[%s3072] sm:$0xff] %v3071
    // Predicated region
    $region38: #{seq2seq_forward.6} parent=1 // pred_check
      _
    $region39: #{seq2seq_forward.6} parent=1 // pred_check_branch
      %3075 = sbr.rel (0) target = $region41
    $region40: #{seq2seq_forward.6} parent=1 // pred_region
      _
    $region41: #{seq2seq_forward.6} parent=1 // pred_fallthru
      _
    // Predicated region
    $region42: #{seq2seq_forward.6} parent=1 // pred_check
      _
    $region43: #{seq2seq_forward.6} parent=1 // pred_check_branch
      %3077 = sbr.rel (0) target = $region45
    $region44: #{seq2seq_forward.6} parent=1 // pred_region
      _
    $region45: #{seq2seq_forward.6} parent=1 // pred_fallthru
      _
    %3078 = vsyncpa [#allocation4], 1
    %3079 = vsyncpa [#allocation6], 1

</llo_original>
